<compile_context>
chip_gen: v5e
topology: v5e:2x2
jax: 0.10.0
libtpu: 0.0.40
codegen_flags: <defaults>
</compile_context>

<pallas_src>
import jax
import jax.numpy as jnp
import numpy as np
from jax.experimental import pallas as pl
from jax.experimental.pallas import tpu as pltpu

_C_OUT = 128   # channels of the last conv == feature size of the encoder


def _encoder_kernel(x_ref, w1_ref, b1_ref, w2_ref, b2_ref,
                    w3_ref, b3_ref, w4_ref, b4_ref, out_ref):
    # x_ref:  (1, 3, Nt) f32 input points for this (batch, point-half).
    # w*_ref: folded conv+BN weights, bf16, shape (C_out, C_in).
    # b*_ref: folded biases, f32, shape (C_out, 1).
    # out_ref: (1, 1, 1, 128) lane-dense partial channel-max for this block.
    x = x_ref[0].astype(jnp.bfloat16)                                    # (3, Nt)

    # layer 1: Conv1d(3->64) + BN + ReLU   (BN folded into W/b)
    h = jnp.dot(w1_ref[...], x, preferred_element_type=jnp.float32)     # (64, Nt)
    h = jnp.maximum(h + b1_ref[...], 0.0)

    # layer 2: Conv1d(64->128) + BN + ReLU
    h = jnp.dot(w2_ref[...], h.astype(jnp.bfloat16),
                preferred_element_type=jnp.float32)                     # (128, Nt)
    h = jnp.maximum(h + b2_ref[...], 0.0)

    # layer 3: Conv1d(128->256) + BN + ReLU
    h = jnp.dot(w3_ref[...], h.astype(jnp.bfloat16),
                preferred_element_type=jnp.float32)                     # (256, Nt)
    h = jnp.maximum(h + b3_ref[...], 0.0)

    # layer 4: Conv1d(256->128) + BN (no ReLU)
    h = jnp.dot(w4_ref[...], h.astype(jnp.bfloat16),
                preferred_element_type=jnp.float32)                     # (128, Nt)
    h = h + b4_ref[...]

    # Global max over the point (lane) axis -> (128, 1) channel column, then
    # lay the channel vector onto lanes with one square XLU transpose so the
    # output store is a single lane-dense (1, 128) row (channels on lanes).
    cmax = jnp.max(h, axis=1, keepdims=True)                            # (128, 1)
    cmax_sq = jnp.broadcast_to(cmax, (_C_OUT, _C_OUT))                  # rows const
    out_ref[0, 0] = cmax_sq.T[0:1, :]                                   # (1, 128)


def encoder_forward(x, layers, *, eps=1e-5, point_splits=None):
    """x: (B, 3, N) float32, N == 2048 (the module hard-codes MaxPool1d(2048)).

    layers: list of 4 tuples (W, b, gamma, beta, running_mean, running_var)
            with W of shape (C_out, C_in) (Conv1d kernel_size=1 squeezed).
    Returns (B, 128) float32, matching Encoder.forward's view(-1, 128).
    """
    B, c_in, N = x.shape
    assert c_in == 3, "Encoder expects 3 input channels"
    assert N == 2048, "Encoder's MaxPool1d(2048) assumes exactly 2048 points"
    if point_splits is None:
        # One full-N tile per batch item when the batch axis alone can feed
        # both v7x TensorCores; otherwise split points into 2 parallel halves.
        point_splits = 1 if B % 2 == 0 else 2
    assert N % point_splits == 0
    n_tile = N // point_splits
    assert n_tile % 128 == 0

    # Fold inference-mode BatchNorm into the conv weight/bias:
    #   y = s * (W x + b - mean) + beta,  s = gamma / sqrt(var + eps)
    folded = []
    for (W, b, gamma, beta, mean, var) in layers:
        s = gamma * jax.lax.rsqrt(var + eps)
        Wf = (W * s[:, None]).astype(jnp.bfloat16)      # bf16 MXU operands
        bf = (s * (b - mean) + beta).astype(jnp.float32).reshape(-1, 1)
        folded.append((Wf, bf))
    (w1, b1), (w2, b2), (w3, b3), (w4, b4) = folded

    full = lambda bi, si: (0, 0)   # weights/biases: one resident full block

    partial = pl.pallas_call(
        _encoder_kernel,
        out_shape=jax.ShapeDtypeStruct((B, point_splits, 1, _C_OUT), jnp.float32),
        grid=(B, point_splits),
        in_specs=[
            pl.BlockSpec((1, c_in, n_tile), lambda bi, si: (bi, 0, si)),
            pl.BlockSpec(w1.shape, full), pl.BlockSpec(b1.shape, full),
            pl.BlockSpec(w2.shape, full), pl.BlockSpec(b2.shape, full),
            pl.BlockSpec(w3.shape, full), pl.BlockSpec(b3.shape, full),
            pl.BlockSpec(w4.shape, full), pl.BlockSpec(b4.shape, full),
        ],
        out_specs=pl.BlockSpec((1, 1, 1, _C_OUT), lambda bi, si: (bi, si, 0, 0)),
        compiler_params=pltpu.CompilerParams(
            dimension_semantics=("parallel", "parallel")),
    )(x, w1, b1, w2, b2, w3, b3, w4, b4)

    # Combine per-half partial maxima (a no-op reduction when point_splits == 1).
    return jnp.max(partial[:, :, 0, :], axis=1)                         # (B, 128)


def _encoder_ref(x, layers, eps=1e-5):
    """Pure-JAX f32 reference mirroring the PyTorch Encoder (BN in eval mode)."""
    h = x
    for i, (W, b, gamma, beta, mean, var) in enumerate(layers):
        h = jnp.einsum('oc,bcn->bon', W, h) + b[None, :, None]
        scale = (gamma * jax.lax.rsqrt(var + eps))[None, :, None]
        h = (h - mean[None, :, None]) * scale + beta[None, :, None]
        if i < 3:
            h = jnp.maximum(h, 0.0)
    # MaxPool1d(2048) over N == 2048 points, then view(-1, 128)
    return jnp.max(h, axis=-1)


if __name__ == "__main__":
    key = jax.random.PRNGKey(0)

    chans = [(3, 64), (64, 128), (128, 256), (256, 128)]
    layers = []
    for (cin, cout) in chans:
        key, kw, kb, kg, kbe, km, kv = jax.random.split(key, 7)
        W = jax.random.normal(kw, (cout, cin), jnp.float32) / np.sqrt(cin)
        b = 0.1 * jax.random.normal(kb, (cout,), jnp.float32)
        gamma = jax.random.uniform(kg, (cout,), jnp.float32, minval=0.5, maxval=1.5)
        beta = 0.1 * jax.random.normal(kbe, (cout,), jnp.float32)
        mean = 0.1 * jax.random.normal(km, (cout,), jnp.float32)
        var = jax.random.uniform(kv, (cout,), jnp.float32, minval=0.5, maxval=1.5)
        layers.append((W, b, gamma, beta, mean, var))

    N = 2048   # fixed by MaxPool1d(2048)
    # B=2 exercises the full-2048-point-tile path (grid (B, 1));
    # B=1 exercises the two-parallel-point-halves path (grid (1, 2), for v7x).
    for B in (2, 1):
        key, kx = jax.random.split(key)
        x = jax.random.normal(kx, (B, 3, N), dtype=jnp.float32)

        out = jax.block_until_ready(encoder_forward(x, layers))
        ref = _encoder_ref(x, layers)

        assert out.shape == (B, 128), out.shape
        # bf16 MXU operands (f32 accumulation) -> bf16-level tolerance.
        np.testing.assert_allclose(np.asarray(out), np.asarray(ref),
                                   rtol=3e-2, atol=3e-2)

    print("KERNEL_OK")
</pallas_src>

<mosaic_0001>
module attributes {stable_mosaic.version = 11 : i64} {
  func.func @_encoder_kernel(%arg0: i32, %arg1: i32, %arg2: memref<1x3x2048xf32, #tpu.memory_space<vmem>>, %arg3: memref<64x3xbf16, #tpu.memory_space<vmem>>, %arg4: memref<64x1xf32, #tpu.memory_space<vmem>>, %arg5: memref<128x64xbf16, #tpu.memory_space<vmem>>, %arg6: memref<128x1xf32, #tpu.memory_space<vmem>>, %arg7: memref<256x128xbf16, #tpu.memory_space<vmem>>, %arg8: memref<256x1xf32, #tpu.memory_space<vmem>>, %arg9: memref<128x256xbf16, #tpu.memory_space<vmem>>, %arg10: memref<128x1xf32, #tpu.memory_space<vmem>>, %arg11: memref<1x1x1x128xf32, #tpu.memory_space<vmem>>) attributes {dimension_semantics = [#tpu.dimension_semantics<parallel>, #tpu.dimension_semantics<parallel>], iteration_bounds = array<i64: 2, 1>, scalar_prefetch = 0 : i64, scratch_operands = 0 : i64, tpu.core_type = #tpu.core_type<tc>, window_params = [{transform_indices = @transform_0, window_bounds = array<i64: 1, 3, 2048>}, {pipeline_mode = #tpu.pipeline_mode<synchronous>, transform_indices = @transform_1, window_bounds = array<i64: 64, 3>}, {pipeline_mode = #tpu.pipeline_mode<synchronous>, transform_indices = @transform_2, window_bounds = array<i64: 64, 1>}, {pipeline_mode = #tpu.pipeline_mode<synchronous>, transform_indices = @transform_3, window_bounds = array<i64: 128, 64>}, {pipeline_mode = #tpu.pipeline_mode<synchronous>, transform_indices = @transform_4, window_bounds = array<i64: 128, 1>}, {pipeline_mode = #tpu.pipeline_mode<synchronous>, transform_indices = @transform_5, window_bounds = array<i64: 256, 128>}, {pipeline_mode = #tpu.pipeline_mode<synchronous>, transform_indices = @transform_6, window_bounds = array<i64: 256, 1>}, {pipeline_mode = #tpu.pipeline_mode<synchronous>, transform_indices = @transform_7, window_bounds = array<i64: 128, 256>}, {pipeline_mode = #tpu.pipeline_mode<synchronous>, transform_indices = @transform_8, window_bounds = array<i64: 128, 1>}, {transform_indices = @transform_9, window_bounds = array<i64: 1, 1, 1, 128>}]} {
    %c0 = arith.constant 0 : index
    %c0_0 = arith.constant 0 : index
    %c0_1 = arith.constant 0 : index
    %0 = vector.load %arg2[%c0, %c0_0, %c0_1] : memref<1x3x2048xf32, #tpu.memory_space<vmem>>, vector<1x3x2048xf32>
    %1 = vector.shape_cast %0 : vector<1x3x2048xf32> to vector<3x2048xf32>
    %2 = arith.truncf %1 : vector<3x2048xf32> to vector<3x2048xbf16>
    %c0_2 = arith.constant 0 : index
    %c0_3 = arith.constant 0 : index
    %3 = vector.load %arg3[%c0_2, %c0_3] : memref<64x3xbf16, #tpu.memory_space<vmem>>, vector<64x3xbf16>
    %cst = arith.constant dense<0.000000e+00> : vector<64x2048xf32>
    %4 = tpu.matmul %3, %2, %cst {dimension_numbers = #tpu.dot_dimension_numbers<[1], [0], [0], [1], [0, 0, 1, 1], [], []>} : vector<64x3xbf16>, vector<3x2048xbf16>, vector<64x2048xf32> -> vector<64x2048xf32>
    %c0_4 = arith.constant 0 : index
    %c0_5 = arith.constant 0 : index
    %5 = vector.load %arg4[%c0_4, %c0_5] : memref<64x1xf32, #tpu.memory_space<vmem>>, vector<64x1xf32>
    %6 = vector.broadcast %5 : vector<64x1xf32> to vector<64x2048xf32>
    %7 = arith.addf %4, %6 : vector<64x2048xf32>
    %cst_6 = arith.constant 0.000000e+00 : f32
    %8 = vector.broadcast %cst_6 : f32 to vector<64x2048xf32>
    %9 = arith.maximumf %7, %8 : vector<64x2048xf32>
    %c0_7 = arith.constant 0 : index
    %c0_8 = arith.constant 0 : index
    %10 = vector.load %arg5[%c0_7, %c0_8] : memref<128x64xbf16, #tpu.memory_space<vmem>>, vector<128x64xbf16>
    %11 = arith.truncf %9 : vector<64x2048xf32> to vector<64x2048xbf16>
    %cst_9 = arith.constant dense<0.000000e+00> : vector<128x2048xf32>
    %12 = tpu.matmul %10, %11, %cst_9 {dimension_numbers = #tpu.dot_dimension_numbers<[1], [0], [0], [1], [0, 0, 1, 1], [], []>} : vector<128x64xbf16>, vector<64x2048xbf16>, vector<128x2048xf32> -> vector<128x2048xf32>
    %c0_10 = arith.constant 0 : index
    %c0_11 = arith.constant 0 : index
    %13 = vector.load %arg6[%c0_10, %c0_11] : memref<128x1xf32, #tpu.memory_space<vmem>>, vector<128x1xf32>
    %14 = vector.broadcast %13 : vector<128x1xf32> to vector<128x2048xf32>
    %15 = arith.addf %12, %14 : vector<128x2048xf32>
    %cst_12 = arith.constant 0.000000e+00 : f32
    %16 = vector.broadcast %cst_12 : f32 to vector<128x2048xf32>
    %17 = arith.maximumf %15, %16 : vector<128x2048xf32>
    %c0_13 = arith.constant 0 : index
    %c0_14 = arith.constant 0 : index
    %18 = vector.load %arg7[%c0_13, %c0_14] : memref<256x128xbf16, #tpu.memory_space<vmem>>, vector<256x128xbf16>
    %19 = arith.truncf %17 : vector<128x2048xf32> to vector<128x2048xbf16>
    %cst_15 = arith.constant dense<0.000000e+00> : vector<256x2048xf32>
    %20 = tpu.matmul %18, %19, %cst_15 {dimension_numbers = #tpu.dot_dimension_numbers<[1], [0], [0], [1], [0, 0, 1, 1], [], []>} : vector<256x128xbf16>, vector<128x2048xbf16>, vector<256x2048xf32> -> vector<256x2048xf32>
    %c0_16 = arith.constant 0 : index
    %c0_17 = arith.constant 0 : index
    %21 = vector.load %arg8[%c0_16, %c0_17] : memref<256x1xf32, #tpu.memory_space<vmem>>, vector<256x1xf32>
    %22 = vector.broadcast %21 : vector<256x1xf32> to vector<256x2048xf32>
    %23 = arith.addf %20, %22 : vector<256x2048xf32>
    %cst_18 = arith.constant 0.000000e+00 : f32
    %24 = vector.broadcast %cst_18 : f32 to vector<256x2048xf32>
    %25 = arith.maximumf %23, %24 : vector<256x2048xf32>
    %c0_19 = arith.constant 0 : index
    %c0_20 = arith.constant 0 : index
    %26 = vector.load %arg9[%c0_19, %c0_20] : memref<128x256xbf16, #tpu.memory_space<vmem>>, vector<128x256xbf16>
    %27 = arith.truncf %25 : vector<256x2048xf32> to vector<256x2048xbf16>
    %cst_21 = arith.constant dense<0.000000e+00> : vector<128x2048xf32>
    %28 = tpu.matmul %26, %27, %cst_21 {dimension_numbers = #tpu.dot_dimension_numbers<[1], [0], [0], [1], [0, 0, 1, 1], [], []>} : vector<128x256xbf16>, vector<256x2048xbf16>, vector<128x2048xf32> -> vector<128x2048xf32>
    %c0_22 = arith.constant 0 : index
    %c0_23 = arith.constant 0 : index
    %29 = vector.load %arg10[%c0_22, %c0_23] : memref<128x1xf32, #tpu.memory_space<vmem>>, vector<128x1xf32>
    %30 = vector.broadcast %29 : vector<128x1xf32> to vector<128x2048xf32>
    %31 = arith.addf %28, %30 : vector<128x2048xf32>
    %cst_24 = arith.constant dense<0xFF800000> : vector<128xf32>
    %32 = vector.multi_reduction <maximumf>, %31, %cst_24 [1] : vector<128x2048xf32> to vector<128xf32>
    %33 = vector.shape_cast %32 : vector<128xf32> to vector<128x1xf32>
    %34 = vector.shape_cast %33 : vector<128x1xf32> to vector<128x1xf32>
    %35 = vector.broadcast %34 : vector<128x1xf32> to vector<128x128xf32>
    %36 = tpu.transpose %35, [1, 0] : vector<128x128xf32> -> vector<128x128xf32>
    %37 = vector.extract_strided_slice %36 {offsets = [0, 0], sizes = [1, 128], strides = [1, 1]} : vector<128x128xf32> to vector<1x128xf32>
    %c0_25 = arith.constant 0 : index
    %c0_26 = arith.constant 0 : index
    %c0_27 = arith.constant 0 : index
    %c0_28 = arith.constant 0 : index
    %38 = vector.load %arg11[%c0_25, %c0_26, %c0_27, %c0_28] : memref<1x1x1x128xf32, #tpu.memory_space<vmem>>, vector<1x1x1x128xf32>
    %39 = vector.shape_cast %38 : vector<1x1x1x128xf32> to vector<1x128xf32>
    %40 = vector.shape_cast %37 : vector<1x128xf32> to vector<1x1x1x128xf32>
    tpu.vector_store %arg11[%c0_25, %c0_26, %c0_27, %c0_28], %40 {strides = array<i32>} : memref<1x1x1x128xf32, #tpu.memory_space<vmem>>, vector<1x1x1x128xf32>,
    return
  }
  func.func @transform_0(%arg0: i32, %arg1: i32) -> (i32, i32, i32) {
    %c0_i32 = arith.constant 0 : i32
    %c0_i32_0 = arith.constant 0 : i32
    return %arg0, %c0_i32, %arg1 : i32, i32, i32
  }
  func.func @transform_1(%arg0: i32, %arg1: i32) -> (i32, i32) {
    %c0_i32 = arith.constant 0 : i32
    %c0_i32_0 = arith.constant 0 : i32
    %c0_i32_1 = arith.constant 0 : i32
    return %c0_i32, %c0_i32_0 : i32, i32
  }
  func.func @transform_2(%arg0: i32, %arg1: i32) -> (i32, i32) {
    %c0_i32 = arith.constant 0 : i32
    %c0_i32_0 = arith.constant 0 : i32
    %c0_i32_1 = arith.constant 0 : i32
    return %c0_i32, %c0_i32_0 : i32, i32
  }
  func.func @transform_3(%arg0: i32, %arg1: i32) -> (i32, i32) {
    %c0_i32 = arith.constant 0 : i32
    %c0_i32_0 = arith.constant 0 : i32
    %c0_i32_1 = arith.constant 0 : i32
    return %c0_i32, %c0_i32_0 : i32, i32
  }
  func.func @transform_4(%arg0: i32, %arg1: i32) -> (i32, i32) {
    %c0_i32 = arith.constant 0 : i32
    %c0_i32_0 = arith.constant 0 : i32
    %c0_i32_1 = arith.constant 0 : i32
    return %c0_i32, %c0_i32_0 : i32, i32
  }
  func.func @transform_5(%arg0: i32, %arg1: i32) -> (i32, i32) {
    %c0_i32 = arith.constant 0 : i32
    %c0_i32_0 = arith.constant 0 : i32
    %c0_i32_1 = arith.constant 0 : i32
    return %c0_i32, %c0_i32_0 : i32, i32
  }
  func.func @transform_6(%arg0: i32, %arg1: i32) -> (i32, i32) {
    %c0_i32 = arith.constant 0 : i32
    %c0_i32_0 = arith.constant 0 : i32
    %c0_i32_1 = arith.constant 0 : i32
    return %c0_i32, %c0_i32_0 : i32, i32
  }
  func.func @transform_7(%arg0: i32, %arg1: i32) -> (i32, i32) {
    %c0_i32 = arith.constant 0 : i32
    %c0_i32_0 = arith.constant 0 : i32
    %c0_i32_1 = arith.constant 0 : i32
    return %c0_i32, %c0_i32_0 : i32, i32
  }
  func.func @transform_8(%arg0: i32, %arg1: i32) -> (i32, i32) {
    %c0_i32 = arith.constant 0 : i32
    %c0_i32_0 = arith.constant 0 : i32
    %c0_i32_1 = arith.constant 0 : i32
    return %c0_i32, %c0_i32_0 : i32, i32
  }
  func.func @transform_9(%arg0: i32, %arg1: i32) -> (i32, i32, i32, i32) {
    %c0_i32 = arith.constant 0 : i32
    %c0_i32_0 = arith.constant 0 : i32
    %c0_i32_1 = arith.constant 0 : i32
    return %arg0, %arg1, %c0_i32, %c0_i32_0 : i32, i32, i32, i32
  }
}

</mosaic_0001>

<llo_original>
// kernel: tpu_custom_call.1
$region0: #{tpu_custom_call.1}
  #allocation0 [shape = 'u32[]', space=smem, size = 0x4, offset = 0x4, fixed_abs, tag = 'smem constant byte address 0x4 - core index']
  #allocation1 [shape = 'u32[72,128]{1,0:T(1,128)}', space=vmem, size = 0x9000, scoped, tag = 'internal scratch']
  %s0 = inlined_call_operand.vmem [shape: f32[2,3,2048], index: 0, kind: input, shape index: {}]
  %s1 = inlined_call_operand.vmem [shape: bf16[64,3], index: 1, kind: input, shape index: {}]
  %s2 = inlined_call_operand.vmem [shape: f32[64,1], index: 2, kind: input, shape index: {}]
  %s3 = inlined_call_operand.vmem [shape: bf16[128,64], index: 3, kind: input, shape index: {}]
  %s4 = inlined_call_operand.vmem [shape: f32[128,1], index: 4, kind: input, shape index: {}]
  %s5 = inlined_call_operand.vmem [shape: bf16[256,128], index: 5, kind: input, shape index: {}]
  %s6 = inlined_call_operand.vmem [shape: f32[256,1], index: 6, kind: input, shape index: {}]
  %s7 = inlined_call_operand.vmem [shape: bf16[128,256], index: 7, kind: input, shape index: {}]
  %s8 = inlined_call_operand.vmem [shape: f32[128,1], index: 8, kind: input, shape index: {}]
  %s9 = inlined_call_operand.hbm [shape: f32[2,1,1,128], index: 9, kind: output, shape index: {}]
  %s10 = sld [smem:[#allocation0]]
  $region69: #{tpu_custom_call.1} parent=0
    _
  %s12 = ssub.s32 1, %s10
  %s13 = scalar_select 0, %s12, %s10
  $region1: #{tpu_custom_call.1} parent=0
    #allocation2 [shape = 'u8[1024]{0}', space=vmem, size = 0x400, scoped, tag = 'output window, operand 0']
    #allocation3 [shape = 's32[2]{0}', space=sflag, size = 0x8, scoped, tag = 'scoped memory for tpu_custom_call.1']
    %14 = vsyncpa [#allocation3], 0
    %s15 = scalar_lea.sflag [#allocation3], 1
    %16 = vsyncpa %s15, 0
    loop: start=0, step=1, limit=4
    $region2: #{tpu_custom_call.1} parent=1 // loop_pre_header
      _
    $region3: #{tpu_custom_call.1} parent=1 // loop_header
      %s18 = sphi 0, %s22
      %p19 = scmp.ge.s32.totalorder %s18, 4
      %s25 = sphi 0, %s37
      %s26 = sphi 0, %s33
      %s27 = sphi 0, %s25
      %s28 = sphi 0, %s26
      %s29 = sphi 0, %s27
      %s30 = sphi 0, %s28
      %s42 = sphi 0, %s44
      %s45 = sphi 0, %s42
      %s46 = sphi 0, %s45
      %s62 = sphi 0, %s46
      %s66 = sphi 0, %s66
      %s68 = sphi 0, %s66
      %s69 = sphi 0, %s68
      %s83 = sphi 0, %s69
      %s87 = sphi 0, %s87
      %s89 = sphi 0, %s87
      %s90 = sphi 0, %s89
      %s104 = sphi 0, %s90
      %s108 = sphi 0, %s108
      %s110 = sphi 0, %s108
      %s111 = sphi 0, %s110
      %s125 = sphi 0, %s111
      %s129 = sphi 0, %s129
      %s131 = sphi 0, %s129
      %s132 = sphi 0, %s131
      %s146 = sphi 0, %s132
      %s150 = sphi 0, %s150
      %s152 = sphi 0, %s150
      %s153 = sphi 0, %s152
      %s167 = sphi 0, %s153
      %s171 = sphi 0, %s171
      %s173 = sphi 0, %s171
      %s174 = sphi 0, %s173
      %s188 = sphi 0, %s174
      %s192 = sphi 0, %s192
      %s194 = sphi 0, %s192
      %s195 = sphi 0, %s194
      %s209 = sphi 0, %s195
      %s213 = sphi 0, %s213
      %s215 = sphi 0, %s213
      %s216 = sphi 0, %s215
      %s230 = sphi 0, %s216
      %s238 = sphi 0, %s240
      %s241 = sphi 0, %s238
      %s242 = sphi 0, %s241
      %s258 = sphi 0, %s242
    $region4: #{tpu_custom_call.1} parent=1 // loop_header_branch
      %21 = sbr.rel (%p19) target = $region8
    $region5: #{tpu_custom_call.1} parent=1 // loop_body
      %s23 = ssub.s32 %s18, 1
      %s24 = ssub.s32 %s18, 2
      %s31 = sadd.s32 1, %s26
      %p32 = scmp.ge.s32.totalorder %s31, 1
      %s33 = scalar_select %p32, 0, %s31
      %s34 = sadd.s32 1, %s25
      %s35 = scalar_select %p32, %s34, %s25
      %p36 = scmp.ge.s32.totalorder %s35, 2
      %s37 = scalar_select %p36, 0, %s35
      %s38 = ssub.s32 %s25, %s37
      %s39 = ssub.s32 %s26, %s33
      %s40 = sor.u32 %s38, %s39
      %p41 = scmp.eq.s32.totalorder %s40, 0
      %s43 = sadd.s32 %s42, 1
      %s44 = scalar_select %p41, %s42, %s43
      %p47 = pneg %p41
      %p48 = scmp.eq.s32.totalorder %s18, 1
      %p49 = por %p47, %p48
      %p50 = scmp.ne.s32.totalorder %s42, %s45
      %p51 = scmp.eq.s32.totalorder %s18, 0
      %p52 = por %p50, %p51
      %p53 = scmp.ne.s32.totalorder %s42, %s45
      %p54 = scmp.eq.s32.totalorder %s23, 1
      %p55 = por %p53, %p54
      %p56 = scmp.ne.s32.totalorder %s45, %s46
      %p57 = scmp.eq.s32.totalorder %s23, 0
      %p58 = por %p56, %p57
      %p59 = scmp.ne.s32.totalorder %s45, %s46
      %p60 = scmp.eq.s32.totalorder %s24, 1
      %p61 = por %p59, %p60
      %p63 = scmp.ne.s32.totalorder %s46, %s62
      %p64 = scmp.eq.s32.totalorder %s24, 0
      %p65 = por %p63, %p64
      %s67 = sadd.s32 %s66, 1
      %p70 = scmp.eq.s32.totalorder %s18, 1
      %p71 = scmp.ne.s32.totalorder %s66, %s68
      %p72 = scmp.eq.s32.totalorder %s18, 0
      %p73 = por %p71, %p72
      %p74 = scmp.ne.s32.totalorder %s66, %s68
      %p75 = scmp.eq.s32.totalorder %s23, 1
      %p76 = por %p74, %p75
      %p77 = scmp.ne.s32.totalorder %s68, %s69
      %p78 = scmp.eq.s32.totalorder %s23, 0
      %p79 = por %p77, %p78
      %p80 = scmp.ne.s32.totalorder %s68, %s69
      %p81 = scmp.eq.s32.totalorder %s24, 1
      %p82 = por %p80, %p81
      %p84 = scmp.ne.s32.totalorder %s69, %s83
      %p85 = scmp.eq.s32.totalorder %s24, 0
      %p86 = por %p84, %p85
      %s88 = sadd.s32 %s87, 1
      %p91 = scmp.eq.s32.totalorder %s18, 1
      %p92 = scmp.ne.s32.totalorder %s87, %s89
      %p93 = scmp.eq.s32.totalorder %s18, 0
      %p94 = por %p92, %p93
      %p95 = scmp.ne.s32.totalorder %s87, %s89
      %p96 = scmp.eq.s32.totalorder %s23, 1
      %p97 = por %p95, %p96
      %p98 = scmp.ne.s32.totalorder %s89, %s90
      %p99 = scmp.eq.s32.totalorder %s23, 0
      %p100 = por %p98, %p99
      %p101 = scmp.ne.s32.totalorder %s89, %s90
      %p102 = scmp.eq.s32.totalorder %s24, 1
      %p103 = por %p101, %p102
      %p105 = scmp.ne.s32.totalorder %s90, %s104
      %p106 = scmp.eq.s32.totalorder %s24, 0
      %p107 = por %p105, %p106
      %s109 = sadd.s32 %s108, 1
      %p112 = scmp.eq.s32.totalorder %s18, 1
      %p113 = scmp.ne.s32.totalorder %s108, %s110
      %p114 = scmp.eq.s32.totalorder %s18, 0
      %p115 = por %p113, %p114
      %p116 = scmp.ne.s32.totalorder %s108, %s110
      %p117 = scmp.eq.s32.totalorder %s23, 1
      %p118 = por %p116, %p117
      %p119 = scmp.ne.s32.totalorder %s110, %s111
      %p120 = scmp.eq.s32.totalorder %s23, 0
      %p121 = por %p119, %p120
      %p122 = scmp.ne.s32.totalorder %s110, %s111
      %p123 = scmp.eq.s32.totalorder %s24, 1
      %p124 = por %p122, %p123
      %p126 = scmp.ne.s32.totalorder %s111, %s125
      %p127 = scmp.eq.s32.totalorder %s24, 0
      %p128 = por %p126, %p127
      %s130 = sadd.s32 %s129, 1
      %p133 = scmp.eq.s32.totalorder %s18, 1
      %p134 = scmp.ne.s32.totalorder %s129, %s131
      %p135 = scmp.eq.s32.totalorder %s18, 0
      %p136 = por %p134, %p135
      %p137 = scmp.ne.s32.totalorder %s129, %s131
      %p138 = scmp.eq.s32.totalorder %s23, 1
      %p139 = por %p137, %p138
      %p140 = scmp.ne.s32.totalorder %s131, %s132
      %p141 = scmp.eq.s32.totalorder %s23, 0
      %p142 = por %p140, %p141
      %p143 = scmp.ne.s32.totalorder %s131, %s132
      %p144 = scmp.eq.s32.totalorder %s24, 1
      %p145 = por %p143, %p144
      %p147 = scmp.ne.s32.totalorder %s132, %s146
      %p148 = scmp.eq.s32.totalorder %s24, 0
      %p149 = por %p147, %p148
      %s151 = sadd.s32 %s150, 1
      %p154 = scmp.eq.s32.totalorder %s18, 1
      %p155 = scmp.ne.s32.totalorder %s150, %s152
      %p156 = scmp.eq.s32.totalorder %s18, 0
      %p157 = por %p155, %p156
      %p158 = scmp.ne.s32.totalorder %s150, %s152
      %p159 = scmp.eq.s32.totalorder %s23, 1
      %p160 = por %p158, %p159
      %p161 = scmp.ne.s32.totalorder %s152, %s153
      %p162 = scmp.eq.s32.totalorder %s23, 0
      %p163 = por %p161, %p162
      %p164 = scmp.ne.s32.totalorder %s152, %s153
      %p165 = scmp.eq.s32.totalorder %s24, 1
      %p166 = por %p164, %p165
      %p168 = scmp.ne.s32.totalorder %s153, %s167
      %p169 = scmp.eq.s32.totalorder %s24, 0
      %p170 = por %p168, %p169
      %s172 = sadd.s32 %s171, 1
      %p175 = scmp.eq.s32.totalorder %s18, 1
      %p176 = scmp.ne.s32.totalorder %s171, %s173
      %p177 = scmp.eq.s32.totalorder %s18, 0
      %p178 = por %p176, %p177
      %p179 = scmp.ne.s32.totalorder %s171, %s173
      %p180 = scmp.eq.s32.totalorder %s23, 1
      %p181 = por %p179, %p180
      %p182 = scmp.ne.s32.totalorder %s173, %s174
      %p183 = scmp.eq.s32.totalorder %s23, 0
      %p184 = por %p182, %p183
      %p185 = scmp.ne.s32.totalorder %s173, %s174
      %p186 = scmp.eq.s32.totalorder %s24, 1
      %p187 = por %p185, %p186
      %p189 = scmp.ne.s32.totalorder %s174, %s188
      %p190 = scmp.eq.s32.totalorder %s24, 0
      %p191 = por %p189, %p190
      %s193 = sadd.s32 %s192, 1
      %p196 = scmp.eq.s32.totalorder %s18, 1
      %p197 = scmp.ne.s32.totalorder %s192, %s194
      %p198 = scmp.eq.s32.totalorder %s18, 0
      %p199 = por %p197, %p198
      %p200 = scmp.ne.s32.totalorder %s192, %s194
      %p201 = scmp.eq.s32.totalorder %s23, 1
      %p202 = por %p200, %p201
      %p203 = scmp.ne.s32.totalorder %s194, %s195
      %p204 = scmp.eq.s32.totalorder %s23, 0
      %p205 = por %p203, %p204
      %p206 = scmp.ne.s32.totalorder %s194, %s195
      %p207 = scmp.eq.s32.totalorder %s24, 1
      %p208 = por %p206, %p207
      %p210 = scmp.ne.s32.totalorder %s195, %s209
      %p211 = scmp.eq.s32.totalorder %s24, 0
      %p212 = por %p210, %p211
      %s214 = sadd.s32 %s213, 1
      %p217 = scmp.eq.s32.totalorder %s18, 1
      %p218 = scmp.ne.s32.totalorder %s213, %s215
      %p219 = scmp.eq.s32.totalorder %s18, 0
      %p220 = por %p218, %p219
      %p221 = scmp.ne.s32.totalorder %s213, %s215
      %p222 = scmp.eq.s32.totalorder %s23, 1
      %p223 = por %p221, %p222
      %p224 = scmp.ne.s32.totalorder %s215, %s216
      %p225 = scmp.eq.s32.totalorder %s23, 0
      %p226 = por %p224, %p225
      %p227 = scmp.ne.s32.totalorder %s215, %s216
      %p228 = scmp.eq.s32.totalorder %s24, 1
      %p229 = por %p227, %p228
      %p231 = scmp.ne.s32.totalorder %s216, %s230
      %p232 = scmp.eq.s32.totalorder %s24, 0
      %p233 = por %p231, %p232
      %s234 = ssub.s32 %s25, %s37
      %s235 = ssub.s32 %s26, %s33
      %s236 = sor.u32 %s234, %s235
      %p237 = scmp.eq.s32.totalorder %s236, 0
      %s239 = sadd.s32 %s238, 1
      %s240 = scalar_select %p237, %s238, %s239
      %p243 = pneg %p237
      %p244 = scmp.eq.s32.totalorder %s18, 1
      %p245 = por %p243, %p244
      %p246 = scmp.ne.s32.totalorder %s238, %s241
      %p247 = scmp.eq.s32.totalorder %s18, 0
      %p248 = por %p246, %p247
      %p249 = scmp.ne.s32.totalorder %s238, %s241
      %p250 = scmp.eq.s32.totalorder %s23, 1
      %p251 = por %p249, %p250
      %p252 = scmp.ne.s32.totalorder %s241, %s242
      %p253 = scmp.eq.s32.totalorder %s23, 0
      %p254 = por %p252, %p253
      %p255 = scmp.ne.s32.totalorder %s241, %s242
      %p256 = scmp.eq.s32.totalorder %s24, 1
      %p257 = por %p255, %p256
      %p259 = scmp.ne.s32.totalorder %s242, %s258
      %p260 = scmp.eq.s32.totalorder %s24, 0
      %p261 = por %p259, %p260
      %p262 = scmp.le.s32.totalorder 1, %s18
      %p263 = scmp.lt.s32.totalorder %s18, 3
      %p264 = pnand %p262, %p263
      %p265 = pneg %p264
      // Predicated region
      $region9: #{tpu_custom_call.1} parent=5 // pred_check
        _
      $region10: #{tpu_custom_call.1} parent=5 // pred_check_branch
        %267 = sbr.rel (%p264) target = $region12
      $region11: #{tpu_custom_call.1} parent=5 // pred_region
        %s268 = ssub.s32 %s18, 1
        // Predicated region
        $region13: #{tpu_custom_call.1} parent=11 // pred_check
          %p269 = pneg %p79
        $region14: #{tpu_custom_call.1} parent=11 // pred_check_branch
          %271 = sbr.rel (%p269) target = $region16
        $region15: #{tpu_custom_call.1} parent=11 // pred_region
          _
        $region16: #{tpu_custom_call.1} parent=11 // pred_fallthru
          _
        // Predicated region
        $region17: #{tpu_custom_call.1} parent=11 // pred_check
          %p272 = pneg %p100
        $region18: #{tpu_custom_call.1} parent=11 // pred_check_branch
          %274 = sbr.rel (%p272) target = $region20
        $region19: #{tpu_custom_call.1} parent=11 // pred_region
          _
        $region20: #{tpu_custom_call.1} parent=11 // pred_fallthru
          _
        // Predicated region
        $region21: #{tpu_custom_call.1} parent=11 // pred_check
          %p275 = pneg %p121
        $region22: #{tpu_custom_call.1} parent=11 // pred_check_branch
          %277 = sbr.rel (%p275) target = $region24
        $region23: #{tpu_custom_call.1} parent=11 // pred_region
          _
        $region24: #{tpu_custom_call.1} parent=11 // pred_fallthru
          _
        // Predicated region
        $region25: #{tpu_custom_call.1} parent=11 // pred_check
          %p278 = pneg %p142
        $region26: #{tpu_custom_call.1} parent=11 // pred_check_branch
          %280 = sbr.rel (%p278) target = $region28
        $region27: #{tpu_custom_call.1} parent=11 // pred_region
          _
        $region28: #{tpu_custom_call.1} parent=11 // pred_fallthru
          _
        // Predicated region
        $region29: #{tpu_custom_call.1} parent=11 // pred_check
          %p281 = pneg %p163
        $region30: #{tpu_custom_call.1} parent=11 // pred_check_branch
          %283 = sbr.rel (%p281) target = $region32
        $region31: #{tpu_custom_call.1} parent=11 // pred_region
          _
        $region32: #{tpu_custom_call.1} parent=11 // pred_fallthru
          _
        // Predicated region
        $region33: #{tpu_custom_call.1} parent=11 // pred_check
          %p284 = pneg %p184
        $region34: #{tpu_custom_call.1} parent=11 // pred_check_branch
          %286 = sbr.rel (%p284) target = $region36
        $region35: #{tpu_custom_call.1} parent=11 // pred_region
          _
        $region36: #{tpu_custom_call.1} parent=11 // pred_fallthru
          _
        // Predicated region
        $region37: #{tpu_custom_call.1} parent=11 // pred_check
          %p287 = pneg %p205
        $region38: #{tpu_custom_call.1} parent=11 // pred_check_branch
          %289 = sbr.rel (%p287) target = $region40
        $region39: #{tpu_custom_call.1} parent=11 // pred_region
          _
        $region40: #{tpu_custom_call.1} parent=11 // pred_fallthru
          _
        // Predicated region
        $region41: #{tpu_custom_call.1} parent=11 // pred_check
          %p290 = pneg %p226
        $region42: #{tpu_custom_call.1} parent=11 // pred_check_branch
          %292 = sbr.rel (%p290) target = $region44
        $region43: #{tpu_custom_call.1} parent=11 // pred_region
          _
        $region44: #{tpu_custom_call.1} parent=11 // pred_fallthru
          _
      $region12: #{tpu_custom_call.1} parent=5 // pred_fallthru
        _
      %p293 = scmp.lt.s32.totalorder %s18, 2
      // Predicated region
      $region45: #{tpu_custom_call.1} parent=5 // pred_check
        %p294 = pneg %p293
      $region46: #{tpu_custom_call.1} parent=5 // pred_check_branch
        %296 = sbr.rel (%p294) target = $region48
      $region47: #{tpu_custom_call.1} parent=5 // pred_region
        // Predicated region
        $region49: #{tpu_custom_call.1} parent=47 // pred_check
          %p297 = pneg %p52
        $region50: #{tpu_custom_call.1} parent=47 // pred_check_branch
          %299 = sbr.rel (%p297) target = $region52
        $region51: #{tpu_custom_call.1} parent=47 // pred_region
          %s300 = smul.u32 16, %s26
          %p301 = scmp.lt.s32.totalorder %s25, 1
          %s302 = scalar_select %p301, %s25, 1
          %p303 = scmp.lt.s32.totalorder %s300, 15
          %s304 = scalar_select %p303, %s300, 15
          %s305 = smul.addr %s302, 16
          %s306 = sadd.s32 %s304, %s305
          %s307 = smul.addr %s306, 4
          %s308 = scalar_lea.vmem %s0, %s307
          %s309 = smul.u32 16, %s26
        $region52: #{tpu_custom_call.1} parent=47 // pred_fallthru
          _
      $region48: #{tpu_custom_call.1} parent=5 // pred_fallthru
        _
      %p310 = scmp.le.s32.totalorder 1, %s18
      %p311 = scmp.lt.s32.totalorder %s18, 3
      %p312 = pnand %p310, %p311
      %p313 = pneg %p312
      // Predicated region
      $region53: #{tpu_custom_call.1} parent=5 // pred_check
        _
      $region54: #{tpu_custom_call.1} parent=5 // pred_check_branch
        %315 = sbr.rel (%p312) target = $region56
      $region55: #{tpu_custom_call.1} parent=5 // pred_region
        %s316 = ssub.s32 %s18, 1
        %s317 = smul.u32 16, %s28
        %p318 = scmp.lt.s32.totalorder %s27, 1
        %s319 = scalar_select %p318, %s27, 1
        %p320 = scmp.lt.s32.totalorder %s317, 15
        %s321 = scalar_select %p320, %s317, 15
        %s322 = smul.addr %s319, 16
        %s323 = sadd.s32 %s321, %s322
        %s324 = smul.addr %s323, 4
        %s325 = scalar_lea.vmem %s0, %s324
        %p326 = pneg %p58
        %p327 = pneg %p55
        %p328 = pneg %p79
        %p329 = pneg %p76
        %p330 = pneg %p100
        %p331 = pneg %p97
        %p332 = pneg %p121
        %p333 = pneg %p118
        %p334 = pneg %p142
        %p335 = pneg %p139
        %p336 = pneg %p163
        %p337 = pneg %p160
        %p338 = pneg %p184
        %p339 = pneg %p181
        %p340 = pneg %p205
        %p341 = pneg %p202
        %p342 = pneg %p226
        %p343 = pneg %p223
        %p344 = pneg %p254
        %p345 = pneg %p251
        %s346 = sand.u32 %s241, 1
        %s347 = scalar_lea.sflag [#allocation3], %s346
        %s348 = sand.u32 %s241, 1
        %s349 = scalar_lea.vmem [#allocation2], %s348
        %s350 = smul.u32 16, %s28
        %p351 = scmp.lt.s32.totalorder %s27, 1
        %s352 = scalar_select %p351, %s27, 1
        %p353 = scmp.lt.s32.totalorder %s350, 15
        %s354 = scalar_select %p353, %s350, 15
        %s355 = smul.addr %s352, 16
        %s356 = sadd.s32 %s354, %s355
        %s357 = smul.addr %s356, 4
        %s358 = scalar_lea.vmem %s0, %s357
        %s359 = smul.u32 16, %s28
        %v361 = vld [vmem:[%s358] sm:$0x77]
        %v362 = vld [vmem:[%s358 + $0x8] sm:$0x77]
        %v363 = vld [vmem:[%s358 + $0x10] sm:$0x77]
        %v364 = vld [vmem:[%s358 + $0x18] sm:$0x77]
        %v365 = vld [vmem:[%s358 + $0x20] sm:$0x77]
        %v366 = vld [vmem:[%s358 + $0x28] sm:$0x77]
        %v367 = vld [vmem:[%s358 + $0x30] sm:$0x77]
        %v368 = vld [vmem:[%s358 + $0x38] sm:$0x77]
        %377 = vst [vmem:[#allocation1] ss:$2 sm:$0xff] %v361
        %s378 = scalar_lea.vmem [#allocation1], 16
        %379 = vst [vmem:[%s378] ss:$2 sm:$0xff] %v362
        %s380 = scalar_lea.vmem [#allocation1], 32
        %381 = vst [vmem:[%s380] ss:$2 sm:$0xff] %v363
        %s382 = scalar_lea.vmem [#allocation1], 48
        %383 = vst [vmem:[%s382] ss:$2 sm:$0xff] %v364
        %v384 = vld.sshfl [vmem:[#allocation1] sm:$0xff pattern:$0x75316420]
        %v385 = vld.sshfl [vmem:[#allocation1 + $0x8] sm:$0xff pattern:$0x75316420]
        %v386 = vld.sshfl [vmem:[#allocation1 + $0x10] sm:$0xff pattern:$0x75316420]
        %v387 = vld.sshfl [vmem:[#allocation1 + $0x18] sm:$0xff pattern:$0x75316420]
        %v388 = vld.sshfl [vmem:[#allocation1 + $0x20] sm:$0xff pattern:$0x75316420]
        %v389 = vld.sshfl [vmem:[#allocation1 + $0x28] sm:$0xff pattern:$0x75316420]
        %v390 = vld.sshfl [vmem:[#allocation1 + $0x30] sm:$0xff pattern:$0x75316420]
        %v391 = vld.sshfl [vmem:[#allocation1 + $0x38] sm:$0xff pattern:$0x75316420]
        %392 = vst [vmem:[#allocation1] ss:$2 sm:$0xff] %v365
        %393 = vst [vmem:[%s378] ss:$2 sm:$0xff] %v366
        %394 = vst [vmem:[%s380] ss:$2 sm:$0xff] %v367
        %395 = vst [vmem:[%s382] ss:$2 sm:$0xff] %v368
        %v396 = vld.sshfl [vmem:[#allocation1] sm:$0xff pattern:$0x75316420]
        %v397 = vld.sshfl [vmem:[#allocation1 + $0x8] sm:$0xff pattern:$0x75316420]
        %v398 = vld.sshfl [vmem:[#allocation1 + $0x10] sm:$0xff pattern:$0x75316420]
        %v399 = vld.sshfl [vmem:[#allocation1 + $0x18] sm:$0xff pattern:$0x75316420]
        %v400 = vld.sshfl [vmem:[#allocation1 + $0x20] sm:$0xff pattern:$0x75316420]
        %v401 = vld.sshfl [vmem:[#allocation1 + $0x28] sm:$0xff pattern:$0x75316420]
        %v402 = vld.sshfl [vmem:[#allocation1 + $0x30] sm:$0xff pattern:$0x75316420]
        %v403 = vld.sshfl [vmem:[#allocation1 + $0x38] sm:$0xff pattern:$0x75316420]
        %v420 = vpack.c.bf16 %v384, %v384
        %v421 = vpack.c.bf16 %v385, %v385
        %v422 = vpack.c.bf16 %v386, %v386
        %v423 = vpack.c.bf16 %v387, %v387
        %v424 = vpack.c.bf16 %v388, %v388
        %v425 = vpack.c.bf16 %v389, %v389
        %v426 = vpack.c.bf16 %v390, %v390
        %v427 = vpack.c.bf16 %v391, %v391
        %v428 = vpack.c.bf16 %v396, %v396
        %v429 = vpack.c.bf16 %v397, %v397
        %v430 = vpack.c.bf16 %v398, %v398
        %v431 = vpack.c.bf16 %v399, %v399
        %v432 = vpack.c.bf16 %v400, %v400
        %v433 = vpack.c.bf16 %v401, %v401
        %v434 = vpack.c.bf16 %v402, %v402
        %v435 = vpack.c.bf16 %v403, %v403
        %v436 = vld [vmem:[%s1] sm:$0xf]
        %v437 = vld [vmem:[%s1 + $0x4] sm:$0xf]
        %v438 = vld [vmem:[%s1 + $0x8] sm:$0xf]
        %v439 = vld [vmem:[%s1 + $0xc] sm:$0xf]
        %v440 = vld [vmem:[%s1 + $0x10] sm:$0xf]
        %v441 = vld [vmem:[%s1 + $0x14] sm:$0xf]
        %v442 = vld [vmem:[%s1 + $0x18] sm:$0xf]
        %v443 = vld [vmem:[%s1 + $0x1c] sm:$0xf]
        %v444 = vld [vmem:[%s2] sm:$0xff]
        %v445 = vld [vmem:[%s2 + $0x8] sm:$0xff]
        %v446 = vld [vmem:[%s2 + $0x10] sm:$0xff]
        %v447 = vld [vmem:[%s2 + $0x18] sm:$0xff]
        %v448 = vld [vmem:[%s2 + $0x20] sm:$0xff]
        %v449 = vld [vmem:[%s2 + $0x28] sm:$0xff]
        %v450 = vld [vmem:[%s2 + $0x30] sm:$0xff]
        %v451 = vld [vmem:[%s2 + $0x38] sm:$0xff]
        %453 = vset.pattern.permute.xlu0 0
        %454 = vperm.xlu0 %453, %v444
        %v455 = vpop.permute.xlu0 %454
        %458 = vset.pattern.permute.xlu0 0
        %459 = vperm.xlu0 %458, %v445
        %v460 = vpop.permute.xlu0 %459
        %463 = vset.pattern.permute.xlu0 0
        %464 = vperm.xlu0 %463, %v446
        %v465 = vpop.permute.xlu0 %464
        %468 = vset.pattern.permute.xlu0 0
        %469 = vperm.xlu0 %468, %v447
        %v470 = vpop.permute.xlu0 %469
        %473 = vset.pattern.permute.xlu0 0
        %474 = vperm.xlu0 %473, %v448
        %v475 = vpop.permute.xlu0 %474
        %478 = vset.pattern.permute.xlu0 0
        %479 = vperm.xlu0 %478, %v449
        %v480 = vpop.permute.xlu0 %479
        %483 = vset.pattern.permute.xlu0 0
        %484 = vperm.xlu0 %483, %v450
        %v485 = vpop.permute.xlu0 %484
        %488 = vset.pattern.permute.xlu0 0
        %489 = vperm.xlu0 %488, %v451
        %v490 = vpop.permute.xlu0 %489
        %v500 = vunpack.c.l.b16 %v436
        %v501 = vunpack.c.l.b16 %v437
        %v502 = vunpack.c.l.b16 %v438
        %v503 = vunpack.c.l.b16 %v439
        %v504 = vunpack.c.l.b16 %v440
        %v505 = vunpack.c.l.b16 %v441
        %v506 = vunpack.c.l.b16 %v442
        %v507 = vunpack.c.l.b16 %v443
        %v508 = vpack.c.b16 %v501, %v500
        %v509 = vpack.c.b16 %v503, %v502
        %v510 = vpack.c.b16 %v505, %v504
        %v511 = vpack.c.b16 %v507, %v506
        %vm512 = vcmask 23552
        %v514 = vsel %vm512, %v508, 0
        %v517 = vsel %vm512, %v509, 0
        %v520 = vsel %vm512, %v510, 0
        %v523 = vsel %vm512, %v511, 0
        %vm525 = vcmask 1040384
        %vm526 = vcmask 1041408
        %v527 = vsel %vm525, 4294967295, 65535
        %v528 = vsel %vm526, %v527, 0
        %v530 = vand.u32 %v420, %v528
        %v533 = vand.u32 %v421, %v528
        %v536 = vand.u32 %v422, %v528
        %v539 = vand.u32 %v423, %v528
        %v542 = vand.u32 %v424, %v528
        %v545 = vand.u32 %v425, %v528
        %v548 = vand.u32 %v426, %v528
        %v551 = vand.u32 %v427, %v528
        %v554 = vand.u32 %v428, %v528
        %v557 = vand.u32 %v429, %v528
        %v560 = vand.u32 %v430, %v528
        %v563 = vand.u32 %v431, %v528
        %v566 = vand.u32 %v432, %v528
        %v569 = vand.u32 %v433, %v528
        %v572 = vand.u32 %v434, %v528
        %v575 = vand.u32 %v435, %v528
        %577 = vmatpush.bf16.msra.mxu0 0
        %578 = vmatpush.bf16.msra.mxu0 0
        %579 = vmatpush.bf16.msra.mxu0 0
        %580 = vmatpush.bf16.msra.mxu0 0
        %581 = vmatpush.bf16.msra.mxu0 0
        %582 = vmatpush.bf16.msra.mxu0 0
        %583 = vmatpush.bf16.msra.mxu0 0
        %584 = vmatpush.bf16.msra.mxu0 %v530
        %585 = vmatmul.bf16.gmra.mxu0 %v514
        %v586 = vpop.f32.mrf.mxu0
        %v587 = vadd.f32 %v455, %v586
        %v588 = vpop.f32.mrf.mxu0
        %v589 = vadd.f32 %v460, %v588
        %590 = vmatmul.bf16.gmra.mxu0 %v517
        %v591 = vpop.f32.mrf.mxu0
        %v592 = vadd.f32 %v465, %v591
        %v593 = vpop.f32.mrf.mxu0
        %v594 = vadd.f32 %v470, %v593
        %595 = vmatmul.bf16.gmra.mxu0 %v520
        %v596 = vpop.f32.mrf.mxu0
        %v597 = vadd.f32 %v475, %v596
        %v598 = vpop.f32.mrf.mxu0
        %v599 = vadd.f32 %v480, %v598
        %600 = vmatmul.bf16.gmra.mxu0 %v523
        %v601 = vpop.f32.mrf.mxu0
        %v602 = vadd.f32 %v485, %v601
        %v603 = vpop.f32.mrf.mxu0
        %v604 = vadd.f32 %v490, %v603
        %605 = vdwg.mxu0
        %606 = vmatpush.bf16.msra.mxu0 0
        %607 = vmatpush.bf16.msra.mxu0 0
        %608 = vmatpush.bf16.msra.mxu0 0
        %609 = vmatpush.bf16.msra.mxu0 0
        %610 = vmatpush.bf16.msra.mxu0 0
        %611 = vmatpush.bf16.msra.mxu0 0
        %612 = vmatpush.bf16.msra.mxu0 0
        %613 = vmatpush.bf16.msra.mxu0 %v533
        %614 = vmatmul.bf16.gmra.mxu0 %v514
        %v615 = vpop.f32.mrf.mxu0
        %v616 = vadd.f32 %v455, %v615
        %v617 = vpop.f32.mrf.mxu0
        %v618 = vadd.f32 %v460, %v617
        %619 = vmatmul.bf16.gmra.mxu0 %v517
        %v620 = vpop.f32.mrf.mxu0
        %v621 = vadd.f32 %v465, %v620
        %v622 = vpop.f32.mrf.mxu0
        %v623 = vadd.f32 %v470, %v622
        %624 = vmatmul.bf16.gmra.mxu0 %v520
        %v625 = vpop.f32.mrf.mxu0
        %v626 = vadd.f32 %v475, %v625
        %v627 = vpop.f32.mrf.mxu0
        %v628 = vadd.f32 %v480, %v627
        %629 = vmatmul.bf16.gmra.mxu0 %v523
        %v630 = vpop.f32.mrf.mxu0
        %v631 = vadd.f32 %v485, %v630
        %v632 = vpop.f32.mrf.mxu0
        %v633 = vadd.f32 %v490, %v632
        %634 = vdwg.mxu0
        %635 = vmatpush.bf16.msra.mxu0 0
        %636 = vmatpush.bf16.msra.mxu0 0
        %637 = vmatpush.bf16.msra.mxu0 0
        %638 = vmatpush.bf16.msra.mxu0 0
        %639 = vmatpush.bf16.msra.mxu0 0
        %640 = vmatpush.bf16.msra.mxu0 0
        %641 = vmatpush.bf16.msra.mxu0 0
        %642 = vmatpush.bf16.msra.mxu0 %v536
        %643 = vmatmul.bf16.gmra.mxu0 %v514
        %v644 = vpop.f32.mrf.mxu0
        %v645 = vadd.f32 %v455, %v644
        %v646 = vpop.f32.mrf.mxu0
        %v647 = vadd.f32 %v460, %v646
        %648 = vmatmul.bf16.gmra.mxu0 %v517
        %v649 = vpop.f32.mrf.mxu0
        %v650 = vadd.f32 %v465, %v649
        %v651 = vpop.f32.mrf.mxu0
        %v652 = vadd.f32 %v470, %v651
        %653 = vmatmul.bf16.gmra.mxu0 %v520
        %v654 = vpop.f32.mrf.mxu0
        %v655 = vadd.f32 %v475, %v654
        %v656 = vpop.f32.mrf.mxu0
        %v657 = vadd.f32 %v480, %v656
        %658 = vmatmul.bf16.gmra.mxu0 %v523
        %v659 = vpop.f32.mrf.mxu0
        %v660 = vadd.f32 %v485, %v659
        %v661 = vpop.f32.mrf.mxu0
        %v662 = vadd.f32 %v490, %v661
        %663 = vdwg.mxu0
        %664 = vmatpush.bf16.msra.mxu0 0
        %665 = vmatpush.bf16.msra.mxu0 0
        %666 = vmatpush.bf16.msra.mxu0 0
        %667 = vmatpush.bf16.msra.mxu0 0
        %668 = vmatpush.bf16.msra.mxu0 0
        %669 = vmatpush.bf16.msra.mxu0 0
        %670 = vmatpush.bf16.msra.mxu0 0
        %671 = vmatpush.bf16.msra.mxu0 %v539
        %672 = vmatmul.bf16.gmra.mxu0 %v514
        %v673 = vpop.f32.mrf.mxu0
        %v674 = vadd.f32 %v455, %v673
        %v675 = vpop.f32.mrf.mxu0
        %v676 = vadd.f32 %v460, %v675
        %677 = vmatmul.bf16.gmra.mxu0 %v517
        %v678 = vpop.f32.mrf.mxu0
        %v679 = vadd.f32 %v465, %v678
        %v680 = vpop.f32.mrf.mxu0
        %v681 = vadd.f32 %v470, %v680
        %682 = vmatmul.bf16.gmra.mxu0 %v520
        %v683 = vpop.f32.mrf.mxu0
        %v684 = vadd.f32 %v475, %v683
        %v685 = vpop.f32.mrf.mxu0
        %v686 = vadd.f32 %v480, %v685
        %687 = vmatmul.bf16.gmra.mxu0 %v523
        %v688 = vpop.f32.mrf.mxu0
        %v689 = vadd.f32 %v485, %v688
        %v690 = vpop.f32.mrf.mxu0
        %v691 = vadd.f32 %v490, %v690
        %692 = vdwg.mxu0
        %693 = vmatpush.bf16.msra.mxu0 0
        %694 = vmatpush.bf16.msra.mxu0 0
        %695 = vmatpush.bf16.msra.mxu0 0
        %696 = vmatpush.bf16.msra.mxu0 0
        %697 = vmatpush.bf16.msra.mxu0 0
        %698 = vmatpush.bf16.msra.mxu0 0
        %699 = vmatpush.bf16.msra.mxu0 0
        %700 = vmatpush.bf16.msra.mxu0 %v542
        %701 = vmatmul.bf16.gmra.mxu0 %v514
        %v702 = vpop.f32.mrf.mxu0
        %v703 = vadd.f32 %v455, %v702
        %v704 = vpop.f32.mrf.mxu0
        %v705 = vadd.f32 %v460, %v704
        %706 = vmatmul.bf16.gmra.mxu0 %v517
        %v707 = vpop.f32.mrf.mxu0
        %v708 = vadd.f32 %v465, %v707
        %v709 = vpop.f32.mrf.mxu0
        %v710 = vadd.f32 %v470, %v709
        %711 = vmatmul.bf16.gmra.mxu0 %v520
        %v712 = vpop.f32.mrf.mxu0
        %v713 = vadd.f32 %v475, %v712
        %v714 = vpop.f32.mrf.mxu0
        %v715 = vadd.f32 %v480, %v714
        %716 = vmatmul.bf16.gmra.mxu0 %v523
        %v717 = vpop.f32.mrf.mxu0
        %v718 = vadd.f32 %v485, %v717
        %v719 = vpop.f32.mrf.mxu0
        %v720 = vadd.f32 %v490, %v719
        %721 = vdwg.mxu0
        %722 = vmatpush.bf16.msra.mxu0 0
        %723 = vmatpush.bf16.msra.mxu0 0
        %724 = vmatpush.bf16.msra.mxu0 0
        %725 = vmatpush.bf16.msra.mxu0 0
        %726 = vmatpush.bf16.msra.mxu0 0
        %727 = vmatpush.bf16.msra.mxu0 0
        %728 = vmatpush.bf16.msra.mxu0 0
        %729 = vmatpush.bf16.msra.mxu0 %v545
        %730 = vmatmul.bf16.gmra.mxu0 %v514
        %v731 = vpop.f32.mrf.mxu0
        %v732 = vadd.f32 %v455, %v731
        %v733 = vpop.f32.mrf.mxu0
        %v734 = vadd.f32 %v460, %v733
        %735 = vmatmul.bf16.gmra.mxu0 %v517
        %v736 = vpop.f32.mrf.mxu0
        %v737 = vadd.f32 %v465, %v736
        %v738 = vpop.f32.mrf.mxu0
        %v739 = vadd.f32 %v470, %v738
        %740 = vmatmul.bf16.gmra.mxu0 %v520
        %v741 = vpop.f32.mrf.mxu0
        %v742 = vadd.f32 %v475, %v741
        %v743 = vpop.f32.mrf.mxu0
        %v744 = vadd.f32 %v480, %v743
        %745 = vmatmul.bf16.gmra.mxu0 %v523
        %v746 = vpop.f32.mrf.mxu0
        %v747 = vadd.f32 %v485, %v746
        %v748 = vpop.f32.mrf.mxu0
        %v749 = vadd.f32 %v490, %v748
        %750 = vdwg.mxu0
        %751 = vmatpush.bf16.msra.mxu0 0
        %752 = vmatpush.bf16.msra.mxu0 0
        %753 = vmatpush.bf16.msra.mxu0 0
        %754 = vmatpush.bf16.msra.mxu0 0
        %755 = vmatpush.bf16.msra.mxu0 0
        %756 = vmatpush.bf16.msra.mxu0 0
        %757 = vmatpush.bf16.msra.mxu0 0
        %758 = vmatpush.bf16.msra.mxu0 %v548
        %759 = vmatmul.bf16.gmra.mxu0 %v514
        %v760 = vpop.f32.mrf.mxu0
        %v761 = vadd.f32 %v455, %v760
        %v762 = vpop.f32.mrf.mxu0
        %v763 = vadd.f32 %v460, %v762
        %764 = vmatmul.bf16.gmra.mxu0 %v517
        %v765 = vpop.f32.mrf.mxu0
        %v766 = vadd.f32 %v465, %v765
        %v767 = vpop.f32.mrf.mxu0
        %v768 = vadd.f32 %v470, %v767
        %769 = vmatmul.bf16.gmra.mxu0 %v520
        %v770 = vpop.f32.mrf.mxu0
        %v771 = vadd.f32 %v475, %v770
        %v772 = vpop.f32.mrf.mxu0
        %v773 = vadd.f32 %v480, %v772
        %774 = vmatmul.bf16.gmra.mxu0 %v523
        %v775 = vpop.f32.mrf.mxu0
        %v776 = vadd.f32 %v485, %v775
        %v777 = vpop.f32.mrf.mxu0
        %v778 = vadd.f32 %v490, %v777
        %779 = vdwg.mxu0
        %780 = vmatpush.bf16.msra.mxu0 0
        %781 = vmatpush.bf16.msra.mxu0 0
        %782 = vmatpush.bf16.msra.mxu0 0
        %783 = vmatpush.bf16.msra.mxu0 0
        %784 = vmatpush.bf16.msra.mxu0 0
        %785 = vmatpush.bf16.msra.mxu0 0
        %786 = vmatpush.bf16.msra.mxu0 0
        %787 = vmatpush.bf16.msra.mxu0 %v551
        %788 = vmatmul.bf16.gmra.mxu0 %v514
        %v789 = vpop.f32.mrf.mxu0
        %v790 = vadd.f32 %v455, %v789
        %v791 = vpop.f32.mrf.mxu0
        %v792 = vadd.f32 %v460, %v791
        %793 = vmatmul.bf16.gmra.mxu0 %v517
        %v794 = vpop.f32.mrf.mxu0
        %v795 = vadd.f32 %v465, %v794
        %v796 = vpop.f32.mrf.mxu0
        %v797 = vadd.f32 %v470, %v796
        %798 = vmatmul.bf16.gmra.mxu0 %v520
        %v799 = vpop.f32.mrf.mxu0
        %v800 = vadd.f32 %v475, %v799
        %v801 = vpop.f32.mrf.mxu0
        %v802 = vadd.f32 %v480, %v801
        %803 = vmatmul.bf16.gmra.mxu0 %v523
        %v804 = vpop.f32.mrf.mxu0
        %v805 = vadd.f32 %v485, %v804
        %v806 = vpop.f32.mrf.mxu0
        %v807 = vadd.f32 %v490, %v806
        %808 = vdwg.mxu0
        %809 = vmatpush.bf16.msra.mxu0 0
        %810 = vmatpush.bf16.msra.mxu0 0
        %811 = vmatpush.bf16.msra.mxu0 0
        %812 = vmatpush.bf16.msra.mxu0 0
        %813 = vmatpush.bf16.msra.mxu0 0
        %814 = vmatpush.bf16.msra.mxu0 0
        %815 = vmatpush.bf16.msra.mxu0 0
        %816 = vmatpush.bf16.msra.mxu0 %v554
        %817 = vmatmul.bf16.gmra.mxu0 %v514
        %v818 = vpop.f32.mrf.mxu0
        %v819 = vadd.f32 %v455, %v818
        %v820 = vpop.f32.mrf.mxu0
        %v821 = vadd.f32 %v460, %v820
        %822 = vmatmul.bf16.gmra.mxu0 %v517
        %v823 = vpop.f32.mrf.mxu0
        %v824 = vadd.f32 %v465, %v823
        %v825 = vpop.f32.mrf.mxu0
        %v826 = vadd.f32 %v470, %v825
        %827 = vmatmul.bf16.gmra.mxu0 %v520
        %v828 = vpop.f32.mrf.mxu0
        %v829 = vadd.f32 %v475, %v828
        %v830 = vpop.f32.mrf.mxu0
        %v831 = vadd.f32 %v480, %v830
        %832 = vmatmul.bf16.gmra.mxu0 %v523
        %v833 = vpop.f32.mrf.mxu0
        %v834 = vadd.f32 %v485, %v833
        %v835 = vpop.f32.mrf.mxu0
        %v836 = vadd.f32 %v490, %v835
        %837 = vdwg.mxu0
        %838 = vmatpush.bf16.msra.mxu0 0
        %839 = vmatpush.bf16.msra.mxu0 0
        %840 = vmatpush.bf16.msra.mxu0 0
        %841 = vmatpush.bf16.msra.mxu0 0
        %842 = vmatpush.bf16.msra.mxu0 0
        %843 = vmatpush.bf16.msra.mxu0 0
        %844 = vmatpush.bf16.msra.mxu0 0
        %845 = vmatpush.bf16.msra.mxu0 %v557
        %846 = vmatmul.bf16.gmra.mxu0 %v514
        %v847 = vpop.f32.mrf.mxu0
        %v848 = vadd.f32 %v455, %v847
        %v849 = vpop.f32.mrf.mxu0
        %v850 = vadd.f32 %v460, %v849
        %851 = vmatmul.bf16.gmra.mxu0 %v517
        %v852 = vpop.f32.mrf.mxu0
        %v853 = vadd.f32 %v465, %v852
        %v854 = vpop.f32.mrf.mxu0
        %v855 = vadd.f32 %v470, %v854
        %856 = vmatmul.bf16.gmra.mxu0 %v520
        %v857 = vpop.f32.mrf.mxu0
        %v858 = vadd.f32 %v475, %v857
        %v859 = vpop.f32.mrf.mxu0
        %v860 = vadd.f32 %v480, %v859
        %861 = vmatmul.bf16.gmra.mxu0 %v523
        %v862 = vpop.f32.mrf.mxu0
        %v863 = vadd.f32 %v485, %v862
        %v864 = vpop.f32.mrf.mxu0
        %v865 = vadd.f32 %v490, %v864
        %866 = vdwg.mxu0
        %867 = vmatpush.bf16.msra.mxu0 0
        %868 = vmatpush.bf16.msra.mxu0 0
        %869 = vmatpush.bf16.msra.mxu0 0
        %870 = vmatpush.bf16.msra.mxu0 0
        %871 = vmatpush.bf16.msra.mxu0 0
        %872 = vmatpush.bf16.msra.mxu0 0
        %873 = vmatpush.bf16.msra.mxu0 0
        %874 = vmatpush.bf16.msra.mxu0 %v560
        %875 = vmatmul.bf16.gmra.mxu0 %v514
        %v876 = vpop.f32.mrf.mxu0
        %v877 = vadd.f32 %v455, %v876
        %v878 = vpop.f32.mrf.mxu0
        %v879 = vadd.f32 %v460, %v878
        %880 = vmatmul.bf16.gmra.mxu0 %v517
        %v881 = vpop.f32.mrf.mxu0
        %v882 = vadd.f32 %v465, %v881
        %v883 = vpop.f32.mrf.mxu0
        %v884 = vadd.f32 %v470, %v883
        %885 = vmatmul.bf16.gmra.mxu0 %v520
        %v886 = vpop.f32.mrf.mxu0
        %v887 = vadd.f32 %v475, %v886
        %v888 = vpop.f32.mrf.mxu0
        %v889 = vadd.f32 %v480, %v888
        %890 = vmatmul.bf16.gmra.mxu0 %v523
        %v891 = vpop.f32.mrf.mxu0
        %v892 = vadd.f32 %v485, %v891
        %v893 = vpop.f32.mrf.mxu0
        %v894 = vadd.f32 %v490, %v893
        %895 = vdwg.mxu0
        %896 = vmatpush.bf16.msra.mxu0 0
        %897 = vmatpush.bf16.msra.mxu0 0
        %898 = vmatpush.bf16.msra.mxu0 0
        %899 = vmatpush.bf16.msra.mxu0 0
        %900 = vmatpush.bf16.msra.mxu0 0
        %901 = vmatpush.bf16.msra.mxu0 0
        %902 = vmatpush.bf16.msra.mxu0 0
        %903 = vmatpush.bf16.msra.mxu0 %v563
        %904 = vmatmul.bf16.gmra.mxu0 %v514
        %v905 = vpop.f32.mrf.mxu0
        %v906 = vadd.f32 %v455, %v905
        %v907 = vpop.f32.mrf.mxu0
        %v908 = vadd.f32 %v460, %v907
        %909 = vmatmul.bf16.gmra.mxu0 %v517
        %v910 = vpop.f32.mrf.mxu0
        %v911 = vadd.f32 %v465, %v910
        %v912 = vpop.f32.mrf.mxu0
        %v913 = vadd.f32 %v470, %v912
        %914 = vmatmul.bf16.gmra.mxu0 %v520
        %v915 = vpop.f32.mrf.mxu0
        %v916 = vadd.f32 %v475, %v915
        %v917 = vpop.f32.mrf.mxu0
        %v918 = vadd.f32 %v480, %v917
        %919 = vmatmul.bf16.gmra.mxu0 %v523
        %v920 = vpop.f32.mrf.mxu0
        %v921 = vadd.f32 %v485, %v920
        %v922 = vpop.f32.mrf.mxu0
        %v923 = vadd.f32 %v490, %v922
        %924 = vdwg.mxu0
        %925 = vmatpush.bf16.msra.mxu0 0
        %926 = vmatpush.bf16.msra.mxu0 0
        %927 = vmatpush.bf16.msra.mxu0 0
        %928 = vmatpush.bf16.msra.mxu0 0
        %929 = vmatpush.bf16.msra.mxu0 0
        %930 = vmatpush.bf16.msra.mxu0 0
        %931 = vmatpush.bf16.msra.mxu0 0
        %932 = vmatpush.bf16.msra.mxu0 %v566
        %933 = vmatmul.bf16.gmra.mxu0 %v514
        %v934 = vpop.f32.mrf.mxu0
        %v935 = vadd.f32 %v455, %v934
        %v936 = vpop.f32.mrf.mxu0
        %v937 = vadd.f32 %v460, %v936
        %938 = vmatmul.bf16.gmra.mxu0 %v517
        %v939 = vpop.f32.mrf.mxu0
        %v940 = vadd.f32 %v465, %v939
        %v941 = vpop.f32.mrf.mxu0
        %v942 = vadd.f32 %v470, %v941
        %943 = vmatmul.bf16.gmra.mxu0 %v520
        %v944 = vpop.f32.mrf.mxu0
        %v945 = vadd.f32 %v475, %v944
        %v946 = vpop.f32.mrf.mxu0
        %v947 = vadd.f32 %v480, %v946
        %948 = vmatmul.bf16.gmra.mxu0 %v523
        %v949 = vpop.f32.mrf.mxu0
        %v950 = vadd.f32 %v485, %v949
        %v951 = vpop.f32.mrf.mxu0
        %v952 = vadd.f32 %v490, %v951
        %953 = vdwg.mxu0
        %954 = vmatpush.bf16.msra.mxu0 0
        %955 = vmatpush.bf16.msra.mxu0 0
        %956 = vmatpush.bf16.msra.mxu0 0
        %957 = vmatpush.bf16.msra.mxu0 0
        %958 = vmatpush.bf16.msra.mxu0 0
        %959 = vmatpush.bf16.msra.mxu0 0
        %960 = vmatpush.bf16.msra.mxu0 0
        %961 = vmatpush.bf16.msra.mxu0 %v569
        %962 = vmatmul.bf16.gmra.mxu0 %v514
        %v963 = vpop.f32.mrf.mxu0
        %v964 = vadd.f32 %v455, %v963
        %v965 = vpop.f32.mrf.mxu0
        %v966 = vadd.f32 %v460, %v965
        %967 = vmatmul.bf16.gmra.mxu0 %v517
        %v968 = vpop.f32.mrf.mxu0
        %v969 = vadd.f32 %v465, %v968
        %v970 = vpop.f32.mrf.mxu0
        %v971 = vadd.f32 %v470, %v970
        %972 = vmatmul.bf16.gmra.mxu0 %v520
        %v973 = vpop.f32.mrf.mxu0
        %v974 = vadd.f32 %v475, %v973
        %v975 = vpop.f32.mrf.mxu0
        %v976 = vadd.f32 %v480, %v975
        %977 = vmatmul.bf16.gmra.mxu0 %v523
        %v978 = vpop.f32.mrf.mxu0
        %v979 = vadd.f32 %v485, %v978
        %v980 = vpop.f32.mrf.mxu0
        %v981 = vadd.f32 %v490, %v980
        %982 = vdwg.mxu0
        %983 = vmatpush.bf16.msra.mxu0 0
        %984 = vmatpush.bf16.msra.mxu0 0
        %985 = vmatpush.bf16.msra.mxu0 0
        %986 = vmatpush.bf16.msra.mxu0 0
        %987 = vmatpush.bf16.msra.mxu0 0
        %988 = vmatpush.bf16.msra.mxu0 0
        %989 = vmatpush.bf16.msra.mxu0 0
        %990 = vmatpush.bf16.msra.mxu0 %v572
        %991 = vmatmul.bf16.gmra.mxu0 %v514
        %v992 = vpop.f32.mrf.mxu0
        %v993 = vadd.f32 %v455, %v992
        %v994 = vpop.f32.mrf.mxu0
        %v995 = vadd.f32 %v460, %v994
        %996 = vmatmul.bf16.gmra.mxu0 %v517
        %v997 = vpop.f32.mrf.mxu0
        %v998 = vadd.f32 %v465, %v997
        %v999 = vpop.f32.mrf.mxu0
        %v1000 = vadd.f32 %v470, %v999
        %1001 = vmatmul.bf16.gmra.mxu0 %v520
        %v1002 = vpop.f32.mrf.mxu0
        %v1003 = vadd.f32 %v475, %v1002
        %v1004 = vpop.f32.mrf.mxu0
        %v1005 = vadd.f32 %v480, %v1004
        %1006 = vmatmul.bf16.gmra.mxu0 %v523
        %v1007 = vpop.f32.mrf.mxu0
        %v1008 = vadd.f32 %v485, %v1007
        %v1009 = vpop.f32.mrf.mxu0
        %v1010 = vadd.f32 %v490, %v1009
        %1011 = vdwg.mxu0
        %1012 = vmatpush.bf16.msra.mxu0 0
        %1013 = vmatpush.bf16.msra.mxu0 0
        %1014 = vmatpush.bf16.msra.mxu0 0
        %1015 = vmatpush.bf16.msra.mxu0 0
        %1016 = vmatpush.bf16.msra.mxu0 0
        %1017 = vmatpush.bf16.msra.mxu0 0
        %1018 = vmatpush.bf16.msra.mxu0 0
        %1019 = vmatpush.bf16.msra.mxu0 %v575
        %1020 = vmatmul.bf16.gmra.mxu0 %v514
        %v1021 = vpop.f32.mrf.mxu0
        %v1022 = vadd.f32 %v455, %v1021
        %v1023 = vpop.f32.mrf.mxu0
        %v1024 = vadd.f32 %v460, %v1023
        %1025 = vmatmul.bf16.gmra.mxu0 %v517
        %v1026 = vpop.f32.mrf.mxu0
        %v1027 = vadd.f32 %v465, %v1026
        %v1028 = vpop.f32.mrf.mxu0
        %v1029 = vadd.f32 %v470, %v1028
        %1030 = vmatmul.bf16.gmra.mxu0 %v520
        %v1031 = vpop.f32.mrf.mxu0
        %v1032 = vadd.f32 %v475, %v1031
        %v1033 = vpop.f32.mrf.mxu0
        %v1034 = vadd.f32 %v480, %v1033
        %1035 = vmatmul.bf16.gmra.mxu0 %v523
        %v1036 = vpop.f32.mrf.mxu0
        %v1037 = vadd.f32 %v485, %v1036
        %v1038 = vpop.f32.mrf.mxu0
        %v1039 = vadd.f32 %v490, %v1038
        %1040 = vdwg.mxu0
        %v1041 = vmax.f32 %v587, 0.0
        %v1042 = vmax.f32 %v616, 0.0
        %v1043 = vmax.f32 %v645, 0.0
        %v1044 = vmax.f32 %v674, 0.0
        %v1045 = vmax.f32 %v703, 0.0
        %v1046 = vmax.f32 %v732, 0.0
        %v1047 = vmax.f32 %v761, 0.0
        %v1048 = vmax.f32 %v790, 0.0
        %v1049 = vmax.f32 %v819, 0.0
        %v1050 = vmax.f32 %v848, 0.0
        %v1051 = vmax.f32 %v877, 0.0
        %v1052 = vmax.f32 %v906, 0.0
        %v1053 = vmax.f32 %v935, 0.0
        %v1054 = vmax.f32 %v964, 0.0
        %v1055 = vmax.f32 %v993, 0.0
        %v1056 = vmax.f32 %v1022, 0.0
        %v1057 = vmax.f32 %v589, 0.0
        %v1058 = vmax.f32 %v618, 0.0
        %v1059 = vmax.f32 %v647, 0.0
        %v1060 = vmax.f32 %v676, 0.0
        %v1061 = vmax.f32 %v705, 0.0
        %v1062 = vmax.f32 %v734, 0.0
        %v1063 = vmax.f32 %v763, 0.0
        %v1064 = vmax.f32 %v792, 0.0
        %v1065 = vmax.f32 %v821, 0.0
        %v1066 = vmax.f32 %v850, 0.0
        %v1067 = vmax.f32 %v879, 0.0
        %v1068 = vmax.f32 %v908, 0.0
        %v1069 = vmax.f32 %v937, 0.0
        %v1070 = vmax.f32 %v966, 0.0
        %v1071 = vmax.f32 %v995, 0.0
        %v1072 = vmax.f32 %v1024, 0.0
        %v1073 = vmax.f32 %v592, 0.0
        %v1074 = vmax.f32 %v621, 0.0
        %v1075 = vmax.f32 %v650, 0.0
        %v1076 = vmax.f32 %v679, 0.0
        %v1077 = vmax.f32 %v708, 0.0
        %v1078 = vmax.f32 %v737, 0.0
        %v1079 = vmax.f32 %v766, 0.0
        %v1080 = vmax.f32 %v795, 0.0
        %v1081 = vmax.f32 %v824, 0.0
        %v1082 = vmax.f32 %v853, 0.0
        %v1083 = vmax.f32 %v882, 0.0
        %v1084 = vmax.f32 %v911, 0.0
        %v1085 = vmax.f32 %v940, 0.0
        %v1086 = vmax.f32 %v969, 0.0
        %v1087 = vmax.f32 %v998, 0.0
        %v1088 = vmax.f32 %v1027, 0.0
        %v1089 = vmax.f32 %v594, 0.0
        %v1090 = vmax.f32 %v623, 0.0
        %v1091 = vmax.f32 %v652, 0.0
        %v1092 = vmax.f32 %v681, 0.0
        %v1093 = vmax.f32 %v710, 0.0
        %v1094 = vmax.f32 %v739, 0.0
        %v1095 = vmax.f32 %v768, 0.0
        %v1096 = vmax.f32 %v797, 0.0
        %v1097 = vmax.f32 %v826, 0.0
        %v1098 = vmax.f32 %v855, 0.0
        %v1099 = vmax.f32 %v884, 0.0
        %v1100 = vmax.f32 %v913, 0.0
        %v1101 = vmax.f32 %v942, 0.0
        %v1102 = vmax.f32 %v971, 0.0
        %v1103 = vmax.f32 %v1000, 0.0
        %v1104 = vmax.f32 %v1029, 0.0
        %v1105 = vmax.f32 %v597, 0.0
        %v1106 = vmax.f32 %v626, 0.0
        %v1107 = vmax.f32 %v655, 0.0
        %v1108 = vmax.f32 %v684, 0.0
        %v1109 = vmax.f32 %v713, 0.0
        %v1110 = vmax.f32 %v742, 0.0
        %v1111 = vmax.f32 %v771, 0.0
        %v1112 = vmax.f32 %v800, 0.0
        %v1113 = vmax.f32 %v829, 0.0
        %v1114 = vmax.f32 %v858, 0.0
        %v1115 = vmax.f32 %v887, 0.0
        %v1116 = vmax.f32 %v916, 0.0
        %v1117 = vmax.f32 %v945, 0.0
        %v1118 = vmax.f32 %v974, 0.0
        %v1119 = vmax.f32 %v1003, 0.0
        %v1120 = vmax.f32 %v1032, 0.0
        %v1121 = vmax.f32 %v599, 0.0
        %v1122 = vmax.f32 %v628, 0.0
        %v1123 = vmax.f32 %v657, 0.0
        %v1124 = vmax.f32 %v686, 0.0
        %v1125 = vmax.f32 %v715, 0.0
        %v1126 = vmax.f32 %v744, 0.0
        %v1127 = vmax.f32 %v773, 0.0
        %v1128 = vmax.f32 %v802, 0.0
        %v1129 = vmax.f32 %v831, 0.0
        %v1130 = vmax.f32 %v860, 0.0
        %v1131 = vmax.f32 %v889, 0.0
        %v1132 = vmax.f32 %v918, 0.0
        %v1133 = vmax.f32 %v947, 0.0
        %v1134 = vmax.f32 %v976, 0.0
        %v1135 = vmax.f32 %v1005, 0.0
        %v1136 = vmax.f32 %v1034, 0.0
        %v1137 = vmax.f32 %v602, 0.0
        %v1138 = vmax.f32 %v631, 0.0
        %v1139 = vmax.f32 %v660, 0.0
        %v1140 = vmax.f32 %v689, 0.0
        %v1141 = vmax.f32 %v718, 0.0
        %v1142 = vmax.f32 %v747, 0.0
        %v1143 = vmax.f32 %v776, 0.0
        %v1144 = vmax.f32 %v805, 0.0
        %v1145 = vmax.f32 %v834, 0.0
        %v1146 = vmax.f32 %v863, 0.0
        %v1147 = vmax.f32 %v892, 0.0
        %v1148 = vmax.f32 %v921, 0.0
        %v1149 = vmax.f32 %v950, 0.0
        %v1150 = vmax.f32 %v979, 0.0
        %v1151 = vmax.f32 %v1008, 0.0
        %v1152 = vmax.f32 %v1037, 0.0
        %v1153 = vmax.f32 %v604, 0.0
        %v1154 = vmax.f32 %v633, 0.0
        %v1155 = vmax.f32 %v662, 0.0
        %v1156 = vmax.f32 %v691, 0.0
        %v1157 = vmax.f32 %v720, 0.0
        %v1158 = vmax.f32 %v749, 0.0
        %v1159 = vmax.f32 %v778, 0.0
        %v1160 = vmax.f32 %v807, 0.0
        %v1161 = vmax.f32 %v836, 0.0
        %v1162 = vmax.f32 %v865, 0.0
        %v1163 = vmax.f32 %v894, 0.0
        %v1164 = vmax.f32 %v923, 0.0
        %v1165 = vmax.f32 %v952, 0.0
        %v1166 = vmax.f32 %v981, 0.0
        %v1167 = vmax.f32 %v1010, 0.0
        %v1168 = vmax.f32 %v1039, 0.0
        %v1169 = vld [vmem:[%s3] sm:$0xf]
        %v1170 = vld [vmem:[%s3 + $0x4] sm:$0xf]
        %v1171 = vld [vmem:[%s3 + $0x8] sm:$0xf]
        %v1172 = vld [vmem:[%s3 + $0xc] sm:$0xf]
        %v1173 = vld [vmem:[%s3 + $0x10] sm:$0xf]
        %v1174 = vld [vmem:[%s3 + $0x14] sm:$0xf]
        %v1175 = vld [vmem:[%s3 + $0x18] sm:$0xf]
        %v1176 = vld [vmem:[%s3 + $0x1c] sm:$0xf]
        %v1177 = vld [vmem:[%s3 + $0x20] sm:$0xf]
        %v1178 = vld [vmem:[%s3 + $0x24] sm:$0xf]
        %v1179 = vld [vmem:[%s3 + $0x28] sm:$0xf]
        %v1180 = vld [vmem:[%s3 + $0x2c] sm:$0xf]
        %v1181 = vld [vmem:[%s3 + $0x30] sm:$0xf]
        %v1182 = vld [vmem:[%s3 + $0x34] sm:$0xf]
        %v1183 = vld [vmem:[%s3 + $0x38] sm:$0xf]
        %v1184 = vld [vmem:[%s3 + $0x3c] sm:$0xf]
        %v1185 = vpack.c.bf16 %v1057, %v1041
        %v1186 = vpack.c.bf16 %v1058, %v1042
        %v1187 = vpack.c.bf16 %v1059, %v1043
        %v1188 = vpack.c.bf16 %v1060, %v1044
        %v1189 = vpack.c.bf16 %v1061, %v1045
        %v1190 = vpack.c.bf16 %v1062, %v1046
        %v1191 = vpack.c.bf16 %v1063, %v1047
        %v1192 = vpack.c.bf16 %v1064, %v1048
        %v1193 = vpack.c.bf16 %v1065, %v1049
        %v1194 = vpack.c.bf16 %v1066, %v1050
        %v1195 = vpack.c.bf16 %v1067, %v1051
        %v1196 = vpack.c.bf16 %v1068, %v1052
        %v1197 = vpack.c.bf16 %v1069, %v1053
        %v1198 = vpack.c.bf16 %v1070, %v1054
        %v1199 = vpack.c.bf16 %v1071, %v1055
        %v1200 = vpack.c.bf16 %v1072, %v1056
        %v1201 = vpack.c.bf16 %v1089, %v1073
        %v1202 = vpack.c.bf16 %v1090, %v1074
        %v1203 = vpack.c.bf16 %v1091, %v1075
        %v1204 = vpack.c.bf16 %v1092, %v1076
        %v1205 = vpack.c.bf16 %v1093, %v1077
        %v1206 = vpack.c.bf16 %v1094, %v1078
        %v1207 = vpack.c.bf16 %v1095, %v1079
        %v1208 = vpack.c.bf16 %v1096, %v1080
        %v1209 = vpack.c.bf16 %v1097, %v1081
        %v1210 = vpack.c.bf16 %v1098, %v1082
        %v1211 = vpack.c.bf16 %v1099, %v1083
        %v1212 = vpack.c.bf16 %v1100, %v1084
        %v1213 = vpack.c.bf16 %v1101, %v1085
        %v1214 = vpack.c.bf16 %v1102, %v1086
        %v1215 = vpack.c.bf16 %v1103, %v1087
        %v1216 = vpack.c.bf16 %v1104, %v1088
        %v1217 = vpack.c.bf16 %v1121, %v1105
        %v1218 = vpack.c.bf16 %v1122, %v1106
        %v1219 = vpack.c.bf16 %v1123, %v1107
        %v1220 = vpack.c.bf16 %v1124, %v1108
        %v1221 = vpack.c.bf16 %v1125, %v1109
        %v1222 = vpack.c.bf16 %v1126, %v1110
        %v1223 = vpack.c.bf16 %v1127, %v1111
        %v1224 = vpack.c.bf16 %v1128, %v1112
        %v1225 = vpack.c.bf16 %v1129, %v1113
        %v1226 = vpack.c.bf16 %v1130, %v1114
        %v1227 = vpack.c.bf16 %v1131, %v1115
        %v1228 = vpack.c.bf16 %v1132, %v1116
        %v1229 = vpack.c.bf16 %v1133, %v1117
        %v1230 = vpack.c.bf16 %v1134, %v1118
        %v1231 = vpack.c.bf16 %v1135, %v1119
        %v1232 = vpack.c.bf16 %v1136, %v1120
        %v1233 = vpack.c.bf16 %v1153, %v1137
        %v1234 = vpack.c.bf16 %v1154, %v1138
        %v1235 = vpack.c.bf16 %v1155, %v1139
        %v1236 = vpack.c.bf16 %v1156, %v1140
        %v1237 = vpack.c.bf16 %v1157, %v1141
        %v1238 = vpack.c.bf16 %v1158, %v1142
        %v1239 = vpack.c.bf16 %v1159, %v1143
        %v1240 = vpack.c.bf16 %v1160, %v1144
        %v1241 = vpack.c.bf16 %v1161, %v1145
        %v1242 = vpack.c.bf16 %v1162, %v1146
        %v1243 = vpack.c.bf16 %v1163, %v1147
        %v1244 = vpack.c.bf16 %v1164, %v1148
        %v1245 = vpack.c.bf16 %v1165, %v1149
        %v1246 = vpack.c.bf16 %v1166, %v1150
        %v1247 = vpack.c.bf16 %v1167, %v1151
        %v1248 = vpack.c.bf16 %v1168, %v1152
        %v1249 = vld [vmem:[%s4] sm:$0xff]
        %v1250 = vld [vmem:[%s4 + $0x8] sm:$0xff]
        %v1251 = vld [vmem:[%s4 + $0x10] sm:$0xff]
        %v1252 = vld [vmem:[%s4 + $0x18] sm:$0xff]
        %v1253 = vld [vmem:[%s4 + $0x20] sm:$0xff]
        %v1254 = vld [vmem:[%s4 + $0x28] sm:$0xff]
        %v1255 = vld [vmem:[%s4 + $0x30] sm:$0xff]
        %v1256 = vld [vmem:[%s4 + $0x38] sm:$0xff]
        %v1257 = vld [vmem:[%s4 + $0x40] sm:$0xff]
        %v1258 = vld [vmem:[%s4 + $0x48] sm:$0xff]
        %v1259 = vld [vmem:[%s4 + $0x50] sm:$0xff]
        %v1260 = vld [vmem:[%s4 + $0x58] sm:$0xff]
        %v1261 = vld [vmem:[%s4 + $0x60] sm:$0xff]
        %v1262 = vld [vmem:[%s4 + $0x68] sm:$0xff]
        %v1263 = vld [vmem:[%s4 + $0x70] sm:$0xff]
        %v1264 = vld [vmem:[%s4 + $0x78] sm:$0xff]
        %1266 = vset.pattern.permute.xlu0 0
        %1267 = vperm.xlu0 %1266, %v1249
        %v1268 = vpop.permute.xlu0 %1267
        %1271 = vset.pattern.permute.xlu0 0
        %1272 = vperm.xlu0 %1271, %v1250
        %v1273 = vpop.permute.xlu0 %1272
        %1276 = vset.pattern.permute.xlu0 0
        %1277 = vperm.xlu0 %1276, %v1251
        %v1278 = vpop.permute.xlu0 %1277
        %1281 = vset.pattern.permute.xlu0 0
        %1282 = vperm.xlu0 %1281, %v1252
        %v1283 = vpop.permute.xlu0 %1282
        %1286 = vset.pattern.permute.xlu0 0
        %1287 = vperm.xlu0 %1286, %v1253
        %v1288 = vpop.permute.xlu0 %1287
        %1291 = vset.pattern.permute.xlu0 0
        %1292 = vperm.xlu0 %1291, %v1254
        %v1293 = vpop.permute.xlu0 %1292
        %1296 = vset.pattern.permute.xlu0 0
        %1297 = vperm.xlu0 %1296, %v1255
        %v1298 = vpop.permute.xlu0 %1297
        %1301 = vset.pattern.permute.xlu0 0
        %1302 = vperm.xlu0 %1301, %v1256
        %v1303 = vpop.permute.xlu0 %1302
        %1306 = vset.pattern.permute.xlu0 0
        %1307 = vperm.xlu0 %1306, %v1257
        %v1308 = vpop.permute.xlu0 %1307
        %1311 = vset.pattern.permute.xlu0 0
        %1312 = vperm.xlu0 %1311, %v1258
        %v1313 = vpop.permute.xlu0 %1312
        %1316 = vset.pattern.permute.xlu0 0
        %1317 = vperm.xlu0 %1316, %v1259
        %v1318 = vpop.permute.xlu0 %1317
        %1321 = vset.pattern.permute.xlu0 0
        %1322 = vperm.xlu0 %1321, %v1260
        %v1323 = vpop.permute.xlu0 %1322
        %1326 = vset.pattern.permute.xlu0 0
        %1327 = vperm.xlu0 %1326, %v1261
        %v1328 = vpop.permute.xlu0 %1327
        %1331 = vset.pattern.permute.xlu0 0
        %1332 = vperm.xlu0 %1331, %v1262
        %v1333 = vpop.permute.xlu0 %1332
        %1336 = vset.pattern.permute.xlu0 0
        %1337 = vperm.xlu0 %1336, %v1263
        %v1338 = vpop.permute.xlu0 %1337
        %1341 = vset.pattern.permute.xlu0 0
        %1342 = vperm.xlu0 %1341, %v1264
        %v1343 = vpop.permute.xlu0 %1342
        %v1361 = vunpack.c.l.b16 %v1169
        %v1362 = vunpack.c.l.b16 %v1170
        %v1363 = vunpack.c.l.b16 %v1171
        %v1364 = vunpack.c.l.b16 %v1172
        %v1365 = vunpack.c.l.b16 %v1173
        %v1366 = vunpack.c.l.b16 %v1174
        %v1367 = vunpack.c.l.b16 %v1175
        %v1368 = vunpack.c.l.b16 %v1176
        %v1369 = vunpack.c.l.b16 %v1177
        %v1370 = vunpack.c.l.b16 %v1178
        %v1371 = vunpack.c.l.b16 %v1179
        %v1372 = vunpack.c.l.b16 %v1180
        %v1373 = vunpack.c.l.b16 %v1181
        %v1374 = vunpack.c.l.b16 %v1182
        %v1375 = vunpack.c.l.b16 %v1183
        %v1376 = vunpack.c.l.b16 %v1184
        %v1377 = vpack.c.b16 %v1362, %v1361
        %v1378 = vpack.c.b16 %v1364, %v1363
        %v1379 = vpack.c.b16 %v1366, %v1365
        %v1380 = vpack.c.b16 %v1368, %v1367
        %v1381 = vpack.c.b16 %v1370, %v1369
        %v1382 = vpack.c.b16 %v1372, %v1371
        %v1383 = vpack.c.b16 %v1374, %v1373
        %v1384 = vpack.c.b16 %v1376, %v1375
        %vm1385 = vcmask 523264
        %v1387 = vsel %vm1385, %v1377, 0
        %v1390 = vsel %vm1385, %v1378, 0
        %v1393 = vsel %vm1385, %v1379, 0
        %v1396 = vsel %vm1385, %v1380, 0
        %v1399 = vsel %vm1385, %v1381, 0
        %v1402 = vsel %vm1385, %v1382, 0
        %v1405 = vsel %vm1385, %v1383, 0
        %v1408 = vsel %vm1385, %v1384, 0
        %1410 = vmatpush.bf16.msra.mxu0 0
        %1411 = vmatpush.bf16.msra.mxu0 0
        %1412 = vmatpush.bf16.msra.mxu0 0
        %1413 = vmatpush.bf16.msra.mxu0 0
        %1414 = vmatpush.bf16.msra.mxu0 %v1233
        %1415 = vmatpush.bf16.msra.mxu0 %v1217
        %1416 = vmatpush.bf16.msra.mxu0 %v1201
        %1417 = vmatpush.bf16.msra.mxu0 %v1185
        %1418 = vmatmul.bf16.gmra.mxu0 %v1387
        %v1419 = vpop.f32.mrf.mxu0
        %v1420 = vadd.f32 %v1268, %v1419
        %v1421 = vpop.f32.mrf.mxu0
        %v1422 = vadd.f32 %v1273, %v1421
        %1423 = vmatmul.bf16.gmra.mxu0 %v1390
        %v1424 = vpop.f32.mrf.mxu0
        %v1425 = vadd.f32 %v1278, %v1424
        %v1426 = vpop.f32.mrf.mxu0
        %v1427 = vadd.f32 %v1283, %v1426
        %1428 = vmatmul.bf16.gmra.mxu0 %v1393
        %v1429 = vpop.f32.mrf.mxu0
        %v1430 = vadd.f32 %v1288, %v1429
        %v1431 = vpop.f32.mrf.mxu0
        %v1432 = vadd.f32 %v1293, %v1431
        %1433 = vmatmul.bf16.gmra.mxu0 %v1396
        %v1434 = vpop.f32.mrf.mxu0
        %v1435 = vadd.f32 %v1298, %v1434
        %v1436 = vpop.f32.mrf.mxu0
        %v1437 = vadd.f32 %v1303, %v1436
        %1438 = vmatmul.bf16.gmra.mxu0 %v1399
        %v1439 = vpop.f32.mrf.mxu0
        %v1440 = vadd.f32 %v1308, %v1439
        %v1441 = vpop.f32.mrf.mxu0
        %v1442 = vadd.f32 %v1313, %v1441
        %1443 = vmatmul.bf16.gmra.mxu0 %v1402
        %v1444 = vpop.f32.mrf.mxu0
        %v1445 = vadd.f32 %v1318, %v1444
        %v1446 = vpop.f32.mrf.mxu0
        %v1447 = vadd.f32 %v1323, %v1446
        %1448 = vmatmul.bf16.gmra.mxu0 %v1405
        %v1449 = vpop.f32.mrf.mxu0
        %v1450 = vadd.f32 %v1328, %v1449
        %v1451 = vpop.f32.mrf.mxu0
        %v1452 = vadd.f32 %v1333, %v1451
        %1453 = vmatmul.bf16.gmra.mxu0 %v1408
        %v1454 = vpop.f32.mrf.mxu0
        %v1455 = vadd.f32 %v1338, %v1454
        %v1456 = vpop.f32.mrf.mxu0
        %v1457 = vadd.f32 %v1343, %v1456
        %1458 = vdwg.mxu0
        %1459 = vmatpush.bf16.msra.mxu0 0
        %1460 = vmatpush.bf16.msra.mxu0 0
        %1461 = vmatpush.bf16.msra.mxu0 0
        %1462 = vmatpush.bf16.msra.mxu0 0
        %1463 = vmatpush.bf16.msra.mxu0 %v1234
        %1464 = vmatpush.bf16.msra.mxu0 %v1218
        %1465 = vmatpush.bf16.msra.mxu0 %v1202
        %1466 = vmatpush.bf16.msra.mxu0 %v1186
        %1467 = vmatmul.bf16.gmra.mxu0 %v1387
        %v1468 = vpop.f32.mrf.mxu0
        %v1469 = vadd.f32 %v1268, %v1468
        %v1470 = vpop.f32.mrf.mxu0
        %v1471 = vadd.f32 %v1273, %v1470
        %1472 = vmatmul.bf16.gmra.mxu0 %v1390
        %v1473 = vpop.f32.mrf.mxu0
        %v1474 = vadd.f32 %v1278, %v1473
        %v1475 = vpop.f32.mrf.mxu0
        %v1476 = vadd.f32 %v1283, %v1475
        %1477 = vmatmul.bf16.gmra.mxu0 %v1393
        %v1478 = vpop.f32.mrf.mxu0
        %v1479 = vadd.f32 %v1288, %v1478
        %v1480 = vpop.f32.mrf.mxu0
        %v1481 = vadd.f32 %v1293, %v1480
        %1482 = vmatmul.bf16.gmra.mxu0 %v1396
        %v1483 = vpop.f32.mrf.mxu0
        %v1484 = vadd.f32 %v1298, %v1483
        %v1485 = vpop.f32.mrf.mxu0
        %v1486 = vadd.f32 %v1303, %v1485
        %1487 = vmatmul.bf16.gmra.mxu0 %v1399
        %v1488 = vpop.f32.mrf.mxu0
        %v1489 = vadd.f32 %v1308, %v1488
        %v1490 = vpop.f32.mrf.mxu0
        %v1491 = vadd.f32 %v1313, %v1490
        %1492 = vmatmul.bf16.gmra.mxu0 %v1402
        %v1493 = vpop.f32.mrf.mxu0
        %v1494 = vadd.f32 %v1318, %v1493
        %v1495 = vpop.f32.mrf.mxu0
        %v1496 = vadd.f32 %v1323, %v1495
        %1497 = vmatmul.bf16.gmra.mxu0 %v1405
        %v1498 = vpop.f32.mrf.mxu0
        %v1499 = vadd.f32 %v1328, %v1498
        %v1500 = vpop.f32.mrf.mxu0
        %v1501 = vadd.f32 %v1333, %v1500
        %1502 = vmatmul.bf16.gmra.mxu0 %v1408
        %v1503 = vpop.f32.mrf.mxu0
        %v1504 = vadd.f32 %v1338, %v1503
        %v1505 = vpop.f32.mrf.mxu0
        %v1506 = vadd.f32 %v1343, %v1505
        %1507 = vdwg.mxu0
        %1508 = vmatpush.bf16.msra.mxu0 0
        %1509 = vmatpush.bf16.msra.mxu0 0
        %1510 = vmatpush.bf16.msra.mxu0 0
        %1511 = vmatpush.bf16.msra.mxu0 0
        %1512 = vmatpush.bf16.msra.mxu0 %v1235
        %1513 = vmatpush.bf16.msra.mxu0 %v1219
        %1514 = vmatpush.bf16.msra.mxu0 %v1203
        %1515 = vmatpush.bf16.msra.mxu0 %v1187
        %1516 = vmatmul.bf16.gmra.mxu0 %v1387
        %v1517 = vpop.f32.mrf.mxu0
        %v1518 = vadd.f32 %v1268, %v1517
        %v1519 = vpop.f32.mrf.mxu0
        %v1520 = vadd.f32 %v1273, %v1519
        %1521 = vmatmul.bf16.gmra.mxu0 %v1390
        %v1522 = vpop.f32.mrf.mxu0
        %v1523 = vadd.f32 %v1278, %v1522
        %v1524 = vpop.f32.mrf.mxu0
        %v1525 = vadd.f32 %v1283, %v1524
        %1526 = vmatmul.bf16.gmra.mxu0 %v1393
        %v1527 = vpop.f32.mrf.mxu0
        %v1528 = vadd.f32 %v1288, %v1527
        %v1529 = vpop.f32.mrf.mxu0
        %v1530 = vadd.f32 %v1293, %v1529
        %1531 = vmatmul.bf16.gmra.mxu0 %v1396
        %v1532 = vpop.f32.mrf.mxu0
        %v1533 = vadd.f32 %v1298, %v1532
        %v1534 = vpop.f32.mrf.mxu0
        %v1535 = vadd.f32 %v1303, %v1534
        %1536 = vmatmul.bf16.gmra.mxu0 %v1399
        %v1537 = vpop.f32.mrf.mxu0
        %v1538 = vadd.f32 %v1308, %v1537
        %v1539 = vpop.f32.mrf.mxu0
        %v1540 = vadd.f32 %v1313, %v1539
        %1541 = vmatmul.bf16.gmra.mxu0 %v1402
        %v1542 = vpop.f32.mrf.mxu0
        %v1543 = vadd.f32 %v1318, %v1542
        %v1544 = vpop.f32.mrf.mxu0
        %v1545 = vadd.f32 %v1323, %v1544
        %1546 = vmatmul.bf16.gmra.mxu0 %v1405
        %v1547 = vpop.f32.mrf.mxu0
        %v1548 = vadd.f32 %v1328, %v1547
        %v1549 = vpop.f32.mrf.mxu0
        %v1550 = vadd.f32 %v1333, %v1549
        %1551 = vmatmul.bf16.gmra.mxu0 %v1408
        %v1552 = vpop.f32.mrf.mxu0
        %v1553 = vadd.f32 %v1338, %v1552
        %v1554 = vpop.f32.mrf.mxu0
        %v1555 = vadd.f32 %v1343, %v1554
        %1556 = vdwg.mxu0
        %1557 = vmatpush.bf16.msra.mxu0 0
        %1558 = vmatpush.bf16.msra.mxu0 0
        %1559 = vmatpush.bf16.msra.mxu0 0
        %1560 = vmatpush.bf16.msra.mxu0 0
        %1561 = vmatpush.bf16.msra.mxu0 %v1236
        %1562 = vmatpush.bf16.msra.mxu0 %v1220
        %1563 = vmatpush.bf16.msra.mxu0 %v1204
        %1564 = vmatpush.bf16.msra.mxu0 %v1188
        %1565 = vmatmul.bf16.gmra.mxu0 %v1387
        %v1566 = vpop.f32.mrf.mxu0
        %v1567 = vadd.f32 %v1268, %v1566
        %v1568 = vpop.f32.mrf.mxu0
        %v1569 = vadd.f32 %v1273, %v1568
        %1570 = vmatmul.bf16.gmra.mxu0 %v1390
        %v1571 = vpop.f32.mrf.mxu0
        %v1572 = vadd.f32 %v1278, %v1571
        %v1573 = vpop.f32.mrf.mxu0
        %v1574 = vadd.f32 %v1283, %v1573
        %1575 = vmatmul.bf16.gmra.mxu0 %v1393
        %v1576 = vpop.f32.mrf.mxu0
        %v1577 = vadd.f32 %v1288, %v1576
        %v1578 = vpop.f32.mrf.mxu0
        %v1579 = vadd.f32 %v1293, %v1578
        %1580 = vmatmul.bf16.gmra.mxu0 %v1396
        %v1581 = vpop.f32.mrf.mxu0
        %v1582 = vadd.f32 %v1298, %v1581
        %v1583 = vpop.f32.mrf.mxu0
        %v1584 = vadd.f32 %v1303, %v1583
        %1585 = vmatmul.bf16.gmra.mxu0 %v1399
        %v1586 = vpop.f32.mrf.mxu0
        %v1587 = vadd.f32 %v1308, %v1586
        %v1588 = vpop.f32.mrf.mxu0
        %v1589 = vadd.f32 %v1313, %v1588
        %1590 = vmatmul.bf16.gmra.mxu0 %v1402
        %v1591 = vpop.f32.mrf.mxu0
        %v1592 = vadd.f32 %v1318, %v1591
        %v1593 = vpop.f32.mrf.mxu0
        %v1594 = vadd.f32 %v1323, %v1593
        %1595 = vmatmul.bf16.gmra.mxu0 %v1405
        %v1596 = vpop.f32.mrf.mxu0
        %v1597 = vadd.f32 %v1328, %v1596
        %v1598 = vpop.f32.mrf.mxu0
        %v1599 = vadd.f32 %v1333, %v1598
        %1600 = vmatmul.bf16.gmra.mxu0 %v1408
        %v1601 = vpop.f32.mrf.mxu0
        %v1602 = vadd.f32 %v1338, %v1601
        %v1603 = vpop.f32.mrf.mxu0
        %v1604 = vadd.f32 %v1343, %v1603
        %1605 = vdwg.mxu0
        %1606 = vmatpush.bf16.msra.mxu0 0
        %1607 = vmatpush.bf16.msra.mxu0 0
        %1608 = vmatpush.bf16.msra.mxu0 0
        %1609 = vmatpush.bf16.msra.mxu0 0
        %1610 = vmatpush.bf16.msra.mxu0 %v1237
        %1611 = vmatpush.bf16.msra.mxu0 %v1221
        %1612 = vmatpush.bf16.msra.mxu0 %v1205
        %1613 = vmatpush.bf16.msra.mxu0 %v1189
        %1614 = vmatmul.bf16.gmra.mxu0 %v1387
        %v1615 = vpop.f32.mrf.mxu0
        %v1616 = vadd.f32 %v1268, %v1615
        %v1617 = vpop.f32.mrf.mxu0
        %v1618 = vadd.f32 %v1273, %v1617
        %1619 = vmatmul.bf16.gmra.mxu0 %v1390
        %v1620 = vpop.f32.mrf.mxu0
        %v1621 = vadd.f32 %v1278, %v1620
        %v1622 = vpop.f32.mrf.mxu0
        %v1623 = vadd.f32 %v1283, %v1622
        %1624 = vmatmul.bf16.gmra.mxu0 %v1393
        %v1625 = vpop.f32.mrf.mxu0
        %v1626 = vadd.f32 %v1288, %v1625
        %v1627 = vpop.f32.mrf.mxu0
        %v1628 = vadd.f32 %v1293, %v1627
        %1629 = vmatmul.bf16.gmra.mxu0 %v1396
        %v1630 = vpop.f32.mrf.mxu0
        %v1631 = vadd.f32 %v1298, %v1630
        %v1632 = vpop.f32.mrf.mxu0
        %v1633 = vadd.f32 %v1303, %v1632
        %1634 = vmatmul.bf16.gmra.mxu0 %v1399
        %v1635 = vpop.f32.mrf.mxu0
        %v1636 = vadd.f32 %v1308, %v1635
        %v1637 = vpop.f32.mrf.mxu0
        %v1638 = vadd.f32 %v1313, %v1637
        %1639 = vmatmul.bf16.gmra.mxu0 %v1402
        %v1640 = vpop.f32.mrf.mxu0
        %v1641 = vadd.f32 %v1318, %v1640
        %v1642 = vpop.f32.mrf.mxu0
        %v1643 = vadd.f32 %v1323, %v1642
        %1644 = vmatmul.bf16.gmra.mxu0 %v1405
        %v1645 = vpop.f32.mrf.mxu0
        %v1646 = vadd.f32 %v1328, %v1645
        %v1647 = vpop.f32.mrf.mxu0
        %v1648 = vadd.f32 %v1333, %v1647
        %1649 = vmatmul.bf16.gmra.mxu0 %v1408
        %v1650 = vpop.f32.mrf.mxu0
        %v1651 = vadd.f32 %v1338, %v1650
        %v1652 = vpop.f32.mrf.mxu0
        %v1653 = vadd.f32 %v1343, %v1652
        %1654 = vdwg.mxu0
        %1655 = vmatpush.bf16.msra.mxu0 0
        %1656 = vmatpush.bf16.msra.mxu0 0
        %1657 = vmatpush.bf16.msra.mxu0 0
        %1658 = vmatpush.bf16.msra.mxu0 0
        %1659 = vmatpush.bf16.msra.mxu0 %v1238
        %1660 = vmatpush.bf16.msra.mxu0 %v1222
        %1661 = vmatpush.bf16.msra.mxu0 %v1206
        %1662 = vmatpush.bf16.msra.mxu0 %v1190
        %1663 = vmatmul.bf16.gmra.mxu0 %v1387
        %v1664 = vpop.f32.mrf.mxu0
        %v1665 = vadd.f32 %v1268, %v1664
        %v1666 = vpop.f32.mrf.mxu0
        %v1667 = vadd.f32 %v1273, %v1666
        %1668 = vmatmul.bf16.gmra.mxu0 %v1390
        %v1669 = vpop.f32.mrf.mxu0
        %v1670 = vadd.f32 %v1278, %v1669
        %v1671 = vpop.f32.mrf.mxu0
        %v1672 = vadd.f32 %v1283, %v1671
        %1673 = vmatmul.bf16.gmra.mxu0 %v1393
        %v1674 = vpop.f32.mrf.mxu0
        %v1675 = vadd.f32 %v1288, %v1674
        %v1676 = vpop.f32.mrf.mxu0
        %v1677 = vadd.f32 %v1293, %v1676
        %1678 = vmatmul.bf16.gmra.mxu0 %v1396
        %v1679 = vpop.f32.mrf.mxu0
        %v1680 = vadd.f32 %v1298, %v1679
        %v1681 = vpop.f32.mrf.mxu0
        %v1682 = vadd.f32 %v1303, %v1681
        %1683 = vmatmul.bf16.gmra.mxu0 %v1399
        %v1684 = vpop.f32.mrf.mxu0
        %v1685 = vadd.f32 %v1308, %v1684
        %v1686 = vpop.f32.mrf.mxu0
        %v1687 = vadd.f32 %v1313, %v1686
        %1688 = vmatmul.bf16.gmra.mxu0 %v1402
        %v1689 = vpop.f32.mrf.mxu0
        %v1690 = vadd.f32 %v1318, %v1689
        %v1691 = vpop.f32.mrf.mxu0
        %v1692 = vadd.f32 %v1323, %v1691
        %1693 = vmatmul.bf16.gmra.mxu0 %v1405
        %v1694 = vpop.f32.mrf.mxu0
        %v1695 = vadd.f32 %v1328, %v1694
        %v1696 = vpop.f32.mrf.mxu0
        %v1697 = vadd.f32 %v1333, %v1696
        %1698 = vmatmul.bf16.gmra.mxu0 %v1408
        %v1699 = vpop.f32.mrf.mxu0
        %v1700 = vadd.f32 %v1338, %v1699
        %v1701 = vpop.f32.mrf.mxu0
        %v1702 = vadd.f32 %v1343, %v1701
        %1703 = vdwg.mxu0
        %1704 = vmatpush.bf16.msra.mxu0 0
        %1705 = vmatpush.bf16.msra.mxu0 0
        %1706 = vmatpush.bf16.msra.mxu0 0
        %1707 = vmatpush.bf16.msra.mxu0 0
        %1708 = vmatpush.bf16.msra.mxu0 %v1239
        %1709 = vmatpush.bf16.msra.mxu0 %v1223
        %1710 = vmatpush.bf16.msra.mxu0 %v1207
        %1711 = vmatpush.bf16.msra.mxu0 %v1191
        %1712 = vmatmul.bf16.gmra.mxu0 %v1387
        %v1713 = vpop.f32.mrf.mxu0
        %v1714 = vadd.f32 %v1268, %v1713
        %v1715 = vpop.f32.mrf.mxu0
        %v1716 = vadd.f32 %v1273, %v1715
        %1717 = vmatmul.bf16.gmra.mxu0 %v1390
        %v1718 = vpop.f32.mrf.mxu0
        %v1719 = vadd.f32 %v1278, %v1718
        %v1720 = vpop.f32.mrf.mxu0
        %v1721 = vadd.f32 %v1283, %v1720
        %1722 = vmatmul.bf16.gmra.mxu0 %v1393
        %v1723 = vpop.f32.mrf.mxu0
        %v1724 = vadd.f32 %v1288, %v1723
        %v1725 = vpop.f32.mrf.mxu0
        %v1726 = vadd.f32 %v1293, %v1725
        %1727 = vmatmul.bf16.gmra.mxu0 %v1396
        %v1728 = vpop.f32.mrf.mxu0
        %v1729 = vadd.f32 %v1298, %v1728
        %v1730 = vpop.f32.mrf.mxu0
        %v1731 = vadd.f32 %v1303, %v1730
        %1732 = vmatmul.bf16.gmra.mxu0 %v1399
        %v1733 = vpop.f32.mrf.mxu0
        %v1734 = vadd.f32 %v1308, %v1733
        %v1735 = vpop.f32.mrf.mxu0
        %v1736 = vadd.f32 %v1313, %v1735
        %1737 = vmatmul.bf16.gmra.mxu0 %v1402
        %v1738 = vpop.f32.mrf.mxu0
        %v1739 = vadd.f32 %v1318, %v1738
        %v1740 = vpop.f32.mrf.mxu0
        %v1741 = vadd.f32 %v1323, %v1740
        %1742 = vmatmul.bf16.gmra.mxu0 %v1405
        %v1743 = vpop.f32.mrf.mxu0
        %v1744 = vadd.f32 %v1328, %v1743
        %v1745 = vpop.f32.mrf.mxu0
        %v1746 = vadd.f32 %v1333, %v1745
        %1747 = vmatmul.bf16.gmra.mxu0 %v1408
        %v1748 = vpop.f32.mrf.mxu0
        %v1749 = vadd.f32 %v1338, %v1748
        %v1750 = vpop.f32.mrf.mxu0
        %v1751 = vadd.f32 %v1343, %v1750
        %1752 = vdwg.mxu0
        %1753 = vmatpush.bf16.msra.mxu0 0
        %1754 = vmatpush.bf16.msra.mxu0 0
        %1755 = vmatpush.bf16.msra.mxu0 0
        %1756 = vmatpush.bf16.msra.mxu0 0
        %1757 = vmatpush.bf16.msra.mxu0 %v1240
        %1758 = vmatpush.bf16.msra.mxu0 %v1224
        %1759 = vmatpush.bf16.msra.mxu0 %v1208
        %1760 = vmatpush.bf16.msra.mxu0 %v1192
        %1761 = vmatmul.bf16.gmra.mxu0 %v1387
        %v1762 = vpop.f32.mrf.mxu0
        %v1763 = vadd.f32 %v1268, %v1762
        %v1764 = vpop.f32.mrf.mxu0
        %v1765 = vadd.f32 %v1273, %v1764
        %1766 = vmatmul.bf16.gmra.mxu0 %v1390
        %v1767 = vpop.f32.mrf.mxu0
        %v1768 = vadd.f32 %v1278, %v1767
        %v1769 = vpop.f32.mrf.mxu0
        %v1770 = vadd.f32 %v1283, %v1769
        %1771 = vmatmul.bf16.gmra.mxu0 %v1393
        %v1772 = vpop.f32.mrf.mxu0
        %v1773 = vadd.f32 %v1288, %v1772
        %v1774 = vpop.f32.mrf.mxu0
        %v1775 = vadd.f32 %v1293, %v1774
        %1776 = vmatmul.bf16.gmra.mxu0 %v1396
        %v1777 = vpop.f32.mrf.mxu0
        %v1778 = vadd.f32 %v1298, %v1777
        %v1779 = vpop.f32.mrf.mxu0
        %v1780 = vadd.f32 %v1303, %v1779
        %1781 = vmatmul.bf16.gmra.mxu0 %v1399
        %v1782 = vpop.f32.mrf.mxu0
        %v1783 = vadd.f32 %v1308, %v1782
        %v1784 = vpop.f32.mrf.mxu0
        %v1785 = vadd.f32 %v1313, %v1784
        %1786 = vmatmul.bf16.gmra.mxu0 %v1402
        %v1787 = vpop.f32.mrf.mxu0
        %v1788 = vadd.f32 %v1318, %v1787
        %v1789 = vpop.f32.mrf.mxu0
        %v1790 = vadd.f32 %v1323, %v1789
        %1791 = vmatmul.bf16.gmra.mxu0 %v1405
        %v1792 = vpop.f32.mrf.mxu0
        %v1793 = vadd.f32 %v1328, %v1792
        %v1794 = vpop.f32.mrf.mxu0
        %v1795 = vadd.f32 %v1333, %v1794
        %1796 = vmatmul.bf16.gmra.mxu0 %v1408
        %v1797 = vpop.f32.mrf.mxu0
        %v1798 = vadd.f32 %v1338, %v1797
        %v1799 = vpop.f32.mrf.mxu0
        %v1800 = vadd.f32 %v1343, %v1799
        %1801 = vdwg.mxu0
        %1802 = vmatpush.bf16.msra.mxu0 0
        %1803 = vmatpush.bf16.msra.mxu0 0
        %1804 = vmatpush.bf16.msra.mxu0 0
        %1805 = vmatpush.bf16.msra.mxu0 0
        %1806 = vmatpush.bf16.msra.mxu0 %v1241
        %1807 = vmatpush.bf16.msra.mxu0 %v1225
        %1808 = vmatpush.bf16.msra.mxu0 %v1209
        %1809 = vmatpush.bf16.msra.mxu0 %v1193
        %1810 = vmatmul.bf16.gmra.mxu0 %v1387
        %v1811 = vpop.f32.mrf.mxu0
        %v1812 = vadd.f32 %v1268, %v1811
        %v1813 = vpop.f32.mrf.mxu0
        %v1814 = vadd.f32 %v1273, %v1813
        %1815 = vmatmul.bf16.gmra.mxu0 %v1390
        %v1816 = vpop.f32.mrf.mxu0
        %v1817 = vadd.f32 %v1278, %v1816
        %v1818 = vpop.f32.mrf.mxu0
        %v1819 = vadd.f32 %v1283, %v1818
        %1820 = vmatmul.bf16.gmra.mxu0 %v1393
        %v1821 = vpop.f32.mrf.mxu0
        %v1822 = vadd.f32 %v1288, %v1821
        %v1823 = vpop.f32.mrf.mxu0
        %v1824 = vadd.f32 %v1293, %v1823
        %1825 = vmatmul.bf16.gmra.mxu0 %v1396
        %v1826 = vpop.f32.mrf.mxu0
        %v1827 = vadd.f32 %v1298, %v1826
        %v1828 = vpop.f32.mrf.mxu0
        %v1829 = vadd.f32 %v1303, %v1828
        %1830 = vmatmul.bf16.gmra.mxu0 %v1399
        %v1831 = vpop.f32.mrf.mxu0
        %v1832 = vadd.f32 %v1308, %v1831
        %v1833 = vpop.f32.mrf.mxu0
        %v1834 = vadd.f32 %v1313, %v1833
        %1835 = vmatmul.bf16.gmra.mxu0 %v1402
        %v1836 = vpop.f32.mrf.mxu0
        %v1837 = vadd.f32 %v1318, %v1836
        %v1838 = vpop.f32.mrf.mxu0
        %v1839 = vadd.f32 %v1323, %v1838
        %1840 = vmatmul.bf16.gmra.mxu0 %v1405
        %v1841 = vpop.f32.mrf.mxu0
        %v1842 = vadd.f32 %v1328, %v1841
        %v1843 = vpop.f32.mrf.mxu0
        %v1844 = vadd.f32 %v1333, %v1843
        %1845 = vmatmul.bf16.gmra.mxu0 %v1408
        %v1846 = vpop.f32.mrf.mxu0
        %v1847 = vadd.f32 %v1338, %v1846
        %v1848 = vpop.f32.mrf.mxu0
        %v1849 = vadd.f32 %v1343, %v1848
        %1850 = vdwg.mxu0
        %1851 = vmatpush.bf16.msra.mxu0 0
        %1852 = vmatpush.bf16.msra.mxu0 0
        %1853 = vmatpush.bf16.msra.mxu0 0
        %1854 = vmatpush.bf16.msra.mxu0 0
        %1855 = vmatpush.bf16.msra.mxu0 %v1242
        %1856 = vmatpush.bf16.msra.mxu0 %v1226
        %1857 = vmatpush.bf16.msra.mxu0 %v1210
        %1858 = vmatpush.bf16.msra.mxu0 %v1194
        %1859 = vmatmul.bf16.gmra.mxu0 %v1387
        %v1860 = vpop.f32.mrf.mxu0
        %v1861 = vadd.f32 %v1268, %v1860
        %v1862 = vpop.f32.mrf.mxu0
        %v1863 = vadd.f32 %v1273, %v1862
        %1864 = vmatmul.bf16.gmra.mxu0 %v1390
        %v1865 = vpop.f32.mrf.mxu0
        %v1866 = vadd.f32 %v1278, %v1865
        %v1867 = vpop.f32.mrf.mxu0
        %v1868 = vadd.f32 %v1283, %v1867
        %1869 = vmatmul.bf16.gmra.mxu0 %v1393
        %v1870 = vpop.f32.mrf.mxu0
        %v1871 = vadd.f32 %v1288, %v1870
        %v1872 = vpop.f32.mrf.mxu0
        %v1873 = vadd.f32 %v1293, %v1872
        %1874 = vmatmul.bf16.gmra.mxu0 %v1396
        %v1875 = vpop.f32.mrf.mxu0
        %v1876 = vadd.f32 %v1298, %v1875
        %v1877 = vpop.f32.mrf.mxu0
        %v1878 = vadd.f32 %v1303, %v1877
        %1879 = vmatmul.bf16.gmra.mxu0 %v1399
        %v1880 = vpop.f32.mrf.mxu0
        %v1881 = vadd.f32 %v1308, %v1880
        %v1882 = vpop.f32.mrf.mxu0
        %v1883 = vadd.f32 %v1313, %v1882
        %1884 = vmatmul.bf16.gmra.mxu0 %v1402
        %v1885 = vpop.f32.mrf.mxu0
        %v1886 = vadd.f32 %v1318, %v1885
        %v1887 = vpop.f32.mrf.mxu0
        %v1888 = vadd.f32 %v1323, %v1887
        %1889 = vmatmul.bf16.gmra.mxu0 %v1405
        %v1890 = vpop.f32.mrf.mxu0
        %v1891 = vadd.f32 %v1328, %v1890
        %v1892 = vpop.f32.mrf.mxu0
        %v1893 = vadd.f32 %v1333, %v1892
        %1894 = vmatmul.bf16.gmra.mxu0 %v1408
        %v1895 = vpop.f32.mrf.mxu0
        %v1896 = vadd.f32 %v1338, %v1895
        %v1897 = vpop.f32.mrf.mxu0
        %v1898 = vadd.f32 %v1343, %v1897
        %1899 = vdwg.mxu0
        %1900 = vmatpush.bf16.msra.mxu0 0
        %1901 = vmatpush.bf16.msra.mxu0 0
        %1902 = vmatpush.bf16.msra.mxu0 0
        %1903 = vmatpush.bf16.msra.mxu0 0
        %1904 = vmatpush.bf16.msra.mxu0 %v1243
        %1905 = vmatpush.bf16.msra.mxu0 %v1227
        %1906 = vmatpush.bf16.msra.mxu0 %v1211
        %1907 = vmatpush.bf16.msra.mxu0 %v1195
        %1908 = vmatmul.bf16.gmra.mxu0 %v1387
        %v1909 = vpop.f32.mrf.mxu0
        %v1910 = vadd.f32 %v1268, %v1909
        %v1911 = vpop.f32.mrf.mxu0
        %v1912 = vadd.f32 %v1273, %v1911
        %1913 = vmatmul.bf16.gmra.mxu0 %v1390
        %v1914 = vpop.f32.mrf.mxu0
        %v1915 = vadd.f32 %v1278, %v1914
        %v1916 = vpop.f32.mrf.mxu0
        %v1917 = vadd.f32 %v1283, %v1916
        %1918 = vmatmul.bf16.gmra.mxu0 %v1393
        %v1919 = vpop.f32.mrf.mxu0
        %v1920 = vadd.f32 %v1288, %v1919
        %v1921 = vpop.f32.mrf.mxu0
        %v1922 = vadd.f32 %v1293, %v1921
        %1923 = vmatmul.bf16.gmra.mxu0 %v1396
        %v1924 = vpop.f32.mrf.mxu0
        %v1925 = vadd.f32 %v1298, %v1924
        %v1926 = vpop.f32.mrf.mxu0
        %v1927 = vadd.f32 %v1303, %v1926
        %1928 = vmatmul.bf16.gmra.mxu0 %v1399
        %v1929 = vpop.f32.mrf.mxu0
        %v1930 = vadd.f32 %v1308, %v1929
        %v1931 = vpop.f32.mrf.mxu0
        %v1932 = vadd.f32 %v1313, %v1931
        %1933 = vmatmul.bf16.gmra.mxu0 %v1402
        %v1934 = vpop.f32.mrf.mxu0
        %v1935 = vadd.f32 %v1318, %v1934
        %v1936 = vpop.f32.mrf.mxu0
        %v1937 = vadd.f32 %v1323, %v1936
        %1938 = vmatmul.bf16.gmra.mxu0 %v1405
        %v1939 = vpop.f32.mrf.mxu0
        %v1940 = vadd.f32 %v1328, %v1939
        %v1941 = vpop.f32.mrf.mxu0
        %v1942 = vadd.f32 %v1333, %v1941
        %1943 = vmatmul.bf16.gmra.mxu0 %v1408
        %v1944 = vpop.f32.mrf.mxu0
        %v1945 = vadd.f32 %v1338, %v1944
        %v1946 = vpop.f32.mrf.mxu0
        %v1947 = vadd.f32 %v1343, %v1946
        %1948 = vdwg.mxu0
        %1949 = vmatpush.bf16.msra.mxu0 0
        %1950 = vmatpush.bf16.msra.mxu0 0
        %1951 = vmatpush.bf16.msra.mxu0 0
        %1952 = vmatpush.bf16.msra.mxu0 0
        %1953 = vmatpush.bf16.msra.mxu0 %v1244
        %1954 = vmatpush.bf16.msra.mxu0 %v1228
        %1955 = vmatpush.bf16.msra.mxu0 %v1212
        %1956 = vmatpush.bf16.msra.mxu0 %v1196
        %1957 = vmatmul.bf16.gmra.mxu0 %v1387
        %v1958 = vpop.f32.mrf.mxu0
        %v1959 = vadd.f32 %v1268, %v1958
        %v1960 = vpop.f32.mrf.mxu0
        %v1961 = vadd.f32 %v1273, %v1960
        %1962 = vmatmul.bf16.gmra.mxu0 %v1390
        %v1963 = vpop.f32.mrf.mxu0
        %v1964 = vadd.f32 %v1278, %v1963
        %v1965 = vpop.f32.mrf.mxu0
        %v1966 = vadd.f32 %v1283, %v1965
        %1967 = vmatmul.bf16.gmra.mxu0 %v1393
        %v1968 = vpop.f32.mrf.mxu0
        %v1969 = vadd.f32 %v1288, %v1968
        %v1970 = vpop.f32.mrf.mxu0
        %v1971 = vadd.f32 %v1293, %v1970
        %1972 = vmatmul.bf16.gmra.mxu0 %v1396
        %v1973 = vpop.f32.mrf.mxu0
        %v1974 = vadd.f32 %v1298, %v1973
        %v1975 = vpop.f32.mrf.mxu0
        %v1976 = vadd.f32 %v1303, %v1975
        %1977 = vmatmul.bf16.gmra.mxu0 %v1399
        %v1978 = vpop.f32.mrf.mxu0
        %v1979 = vadd.f32 %v1308, %v1978
        %v1980 = vpop.f32.mrf.mxu0
        %v1981 = vadd.f32 %v1313, %v1980
        %1982 = vmatmul.bf16.gmra.mxu0 %v1402
        %v1983 = vpop.f32.mrf.mxu0
        %v1984 = vadd.f32 %v1318, %v1983
        %v1985 = vpop.f32.mrf.mxu0
        %v1986 = vadd.f32 %v1323, %v1985
        %1987 = vmatmul.bf16.gmra.mxu0 %v1405
        %v1988 = vpop.f32.mrf.mxu0
        %v1989 = vadd.f32 %v1328, %v1988
        %v1990 = vpop.f32.mrf.mxu0
        %v1991 = vadd.f32 %v1333, %v1990
        %1992 = vmatmul.bf16.gmra.mxu0 %v1408
        %v1993 = vpop.f32.mrf.mxu0
        %v1994 = vadd.f32 %v1338, %v1993
        %v1995 = vpop.f32.mrf.mxu0
        %v1996 = vadd.f32 %v1343, %v1995
        %1997 = vdwg.mxu0
        %1998 = vmatpush.bf16.msra.mxu0 0
        %1999 = vmatpush.bf16.msra.mxu0 0
        %2000 = vmatpush.bf16.msra.mxu0 0
        %2001 = vmatpush.bf16.msra.mxu0 0
        %2002 = vmatpush.bf16.msra.mxu0 %v1245
        %2003 = vmatpush.bf16.msra.mxu0 %v1229
        %2004 = vmatpush.bf16.msra.mxu0 %v1213
        %2005 = vmatpush.bf16.msra.mxu0 %v1197
        %2006 = vmatmul.bf16.gmra.mxu0 %v1387
        %v2007 = vpop.f32.mrf.mxu0
        %v2008 = vadd.f32 %v1268, %v2007
        %v2009 = vpop.f32.mrf.mxu0
        %v2010 = vadd.f32 %v1273, %v2009
        %2011 = vmatmul.bf16.gmra.mxu0 %v1390
        %v2012 = vpop.f32.mrf.mxu0
        %v2013 = vadd.f32 %v1278, %v2012
        %v2014 = vpop.f32.mrf.mxu0
        %v2015 = vadd.f32 %v1283, %v2014
        %2016 = vmatmul.bf16.gmra.mxu0 %v1393
        %v2017 = vpop.f32.mrf.mxu0
        %v2018 = vadd.f32 %v1288, %v2017
        %v2019 = vpop.f32.mrf.mxu0
        %v2020 = vadd.f32 %v1293, %v2019
        %2021 = vmatmul.bf16.gmra.mxu0 %v1396
        %v2022 = vpop.f32.mrf.mxu0
        %v2023 = vadd.f32 %v1298, %v2022
        %v2024 = vpop.f32.mrf.mxu0
        %v2025 = vadd.f32 %v1303, %v2024
        %2026 = vmatmul.bf16.gmra.mxu0 %v1399
        %v2027 = vpop.f32.mrf.mxu0
        %v2028 = vadd.f32 %v1308, %v2027
        %v2029 = vpop.f32.mrf.mxu0
        %v2030 = vadd.f32 %v1313, %v2029
        %2031 = vmatmul.bf16.gmra.mxu0 %v1402
        %v2032 = vpop.f32.mrf.mxu0
        %v2033 = vadd.f32 %v1318, %v2032
        %v2034 = vpop.f32.mrf.mxu0
        %v2035 = vadd.f32 %v1323, %v2034
        %2036 = vmatmul.bf16.gmra.mxu0 %v1405
        %v2037 = vpop.f32.mrf.mxu0
        %v2038 = vadd.f32 %v1328, %v2037
        %v2039 = vpop.f32.mrf.mxu0
        %v2040 = vadd.f32 %v1333, %v2039
        %2041 = vmatmul.bf16.gmra.mxu0 %v1408
        %v2042 = vpop.f32.mrf.mxu0
        %v2043 = vadd.f32 %v1338, %v2042
        %v2044 = vpop.f32.mrf.mxu0
        %v2045 = vadd.f32 %v1343, %v2044
        %2046 = vdwg.mxu0
        %2047 = vmatpush.bf16.msra.mxu0 0
        %2048 = vmatpush.bf16.msra.mxu0 0
        %2049 = vmatpush.bf16.msra.mxu0 0
        %2050 = vmatpush.bf16.msra.mxu0 0
        %2051 = vmatpush.bf16.msra.mxu0 %v1246
        %2052 = vmatpush.bf16.msra.mxu0 %v1230
        %2053 = vmatpush.bf16.msra.mxu0 %v1214
        %2054 = vmatpush.bf16.msra.mxu0 %v1198
        %2055 = vmatmul.bf16.gmra.mxu0 %v1387
        %v2056 = vpop.f32.mrf.mxu0
        %v2057 = vadd.f32 %v1268, %v2056
        %v2058 = vpop.f32.mrf.mxu0
        %v2059 = vadd.f32 %v1273, %v2058
        %2060 = vmatmul.bf16.gmra.mxu0 %v1390
        %v2061 = vpop.f32.mrf.mxu0
        %v2062 = vadd.f32 %v1278, %v2061
        %v2063 = vpop.f32.mrf.mxu0
        %v2064 = vadd.f32 %v1283, %v2063
        %2065 = vmatmul.bf16.gmra.mxu0 %v1393
        %v2066 = vpop.f32.mrf.mxu0
        %v2067 = vadd.f32 %v1288, %v2066
        %v2068 = vpop.f32.mrf.mxu0
        %v2069 = vadd.f32 %v1293, %v2068
        %2070 = vmatmul.bf16.gmra.mxu0 %v1396
        %v2071 = vpop.f32.mrf.mxu0
        %v2072 = vadd.f32 %v1298, %v2071
        %v2073 = vpop.f32.mrf.mxu0
        %v2074 = vadd.f32 %v1303, %v2073
        %2075 = vmatmul.bf16.gmra.mxu0 %v1399
        %v2076 = vpop.f32.mrf.mxu0
        %v2077 = vadd.f32 %v1308, %v2076
        %v2078 = vpop.f32.mrf.mxu0
        %v2079 = vadd.f32 %v1313, %v2078
        %2080 = vmatmul.bf16.gmra.mxu0 %v1402
        %v2081 = vpop.f32.mrf.mxu0
        %v2082 = vadd.f32 %v1318, %v2081
        %v2083 = vpop.f32.mrf.mxu0
        %v2084 = vadd.f32 %v1323, %v2083
        %2085 = vmatmul.bf16.gmra.mxu0 %v1405
        %v2086 = vpop.f32.mrf.mxu0
        %v2087 = vadd.f32 %v1328, %v2086
        %v2088 = vpop.f32.mrf.mxu0
        %v2089 = vadd.f32 %v1333, %v2088
        %2090 = vmatmul.bf16.gmra.mxu0 %v1408
        %v2091 = vpop.f32.mrf.mxu0
        %v2092 = vadd.f32 %v1338, %v2091
        %v2093 = vpop.f32.mrf.mxu0
        %v2094 = vadd.f32 %v1343, %v2093
        %2095 = vdwg.mxu0
        %2096 = vmatpush.bf16.msra.mxu0 0
        %2097 = vmatpush.bf16.msra.mxu0 0
        %2098 = vmatpush.bf16.msra.mxu0 0
        %2099 = vmatpush.bf16.msra.mxu0 0
        %2100 = vmatpush.bf16.msra.mxu0 %v1247
        %2101 = vmatpush.bf16.msra.mxu0 %v1231
        %2102 = vmatpush.bf16.msra.mxu0 %v1215
        %2103 = vmatpush.bf16.msra.mxu0 %v1199
        %2104 = vmatmul.bf16.gmra.mxu0 %v1387
        %v2105 = vpop.f32.mrf.mxu0
        %v2106 = vadd.f32 %v1268, %v2105
        %v2107 = vpop.f32.mrf.mxu0
        %v2108 = vadd.f32 %v1273, %v2107
        %2109 = vmatmul.bf16.gmra.mxu0 %v1390
        %v2110 = vpop.f32.mrf.mxu0
        %v2111 = vadd.f32 %v1278, %v2110
        %v2112 = vpop.f32.mrf.mxu0
        %v2113 = vadd.f32 %v1283, %v2112
        %2114 = vmatmul.bf16.gmra.mxu0 %v1393
        %v2115 = vpop.f32.mrf.mxu0
        %v2116 = vadd.f32 %v1288, %v2115
        %v2117 = vpop.f32.mrf.mxu0
        %v2118 = vadd.f32 %v1293, %v2117
        %2119 = vmatmul.bf16.gmra.mxu0 %v1396
        %v2120 = vpop.f32.mrf.mxu0
        %v2121 = vadd.f32 %v1298, %v2120
        %v2122 = vpop.f32.mrf.mxu0
        %v2123 = vadd.f32 %v1303, %v2122
        %2124 = vmatmul.bf16.gmra.mxu0 %v1399
        %v2125 = vpop.f32.mrf.mxu0
        %v2126 = vadd.f32 %v1308, %v2125
        %v2127 = vpop.f32.mrf.mxu0
        %v2128 = vadd.f32 %v1313, %v2127
        %2129 = vmatmul.bf16.gmra.mxu0 %v1402
        %v2130 = vpop.f32.mrf.mxu0
        %v2131 = vadd.f32 %v1318, %v2130
        %v2132 = vpop.f32.mrf.mxu0
        %v2133 = vadd.f32 %v1323, %v2132
        %2134 = vmatmul.bf16.gmra.mxu0 %v1405
        %v2135 = vpop.f32.mrf.mxu0
        %v2136 = vadd.f32 %v1328, %v2135
        %v2137 = vpop.f32.mrf.mxu0
        %v2138 = vadd.f32 %v1333, %v2137
        %2139 = vmatmul.bf16.gmra.mxu0 %v1408
        %v2140 = vpop.f32.mrf.mxu0
        %v2141 = vadd.f32 %v1338, %v2140
        %v2142 = vpop.f32.mrf.mxu0
        %v2143 = vadd.f32 %v1343, %v2142
        %2144 = vdwg.mxu0
        %2145 = vmatpush.bf16.msra.mxu0 0
        %2146 = vmatpush.bf16.msra.mxu0 0
        %2147 = vmatpush.bf16.msra.mxu0 0
        %2148 = vmatpush.bf16.msra.mxu0 0
        %2149 = vmatpush.bf16.msra.mxu0 %v1248
        %2150 = vmatpush.bf16.msra.mxu0 %v1232
        %2151 = vmatpush.bf16.msra.mxu0 %v1216
        %2152 = vmatpush.bf16.msra.mxu0 %v1200
        %2153 = vmatmul.bf16.gmra.mxu0 %v1387
        %v2154 = vpop.f32.mrf.mxu0
        %v2155 = vadd.f32 %v1268, %v2154
        %v2156 = vpop.f32.mrf.mxu0
        %v2157 = vadd.f32 %v1273, %v2156
        %2158 = vmatmul.bf16.gmra.mxu0 %v1390
        %v2159 = vpop.f32.mrf.mxu0
        %v2160 = vadd.f32 %v1278, %v2159
        %v2161 = vpop.f32.mrf.mxu0
        %v2162 = vadd.f32 %v1283, %v2161
        %2163 = vmatmul.bf16.gmra.mxu0 %v1393
        %v2164 = vpop.f32.mrf.mxu0
        %v2165 = vadd.f32 %v1288, %v2164
        %v2166 = vpop.f32.mrf.mxu0
        %v2167 = vadd.f32 %v1293, %v2166
        %2168 = vmatmul.bf16.gmra.mxu0 %v1396
        %v2169 = vpop.f32.mrf.mxu0
        %v2170 = vadd.f32 %v1298, %v2169
        %v2171 = vpop.f32.mrf.mxu0
        %v2172 = vadd.f32 %v1303, %v2171
        %2173 = vmatmul.bf16.gmra.mxu0 %v1399
        %v2174 = vpop.f32.mrf.mxu0
        %v2175 = vadd.f32 %v1308, %v2174
        %v2176 = vpop.f32.mrf.mxu0
        %v2177 = vadd.f32 %v1313, %v2176
        %2178 = vmatmul.bf16.gmra.mxu0 %v1402
        %v2179 = vpop.f32.mrf.mxu0
        %v2180 = vadd.f32 %v1318, %v2179
        %v2181 = vpop.f32.mrf.mxu0
        %v2182 = vadd.f32 %v1323, %v2181
        %2183 = vmatmul.bf16.gmra.mxu0 %v1405
        %v2184 = vpop.f32.mrf.mxu0
        %v2185 = vadd.f32 %v1328, %v2184
        %v2186 = vpop.f32.mrf.mxu0
        %v2187 = vadd.f32 %v1333, %v2186
        %2188 = vmatmul.bf16.gmra.mxu0 %v1408
        %v2189 = vpop.f32.mrf.mxu0
        %v2190 = vadd.f32 %v1338, %v2189
        %v2191 = vpop.f32.mrf.mxu0
        %v2192 = vadd.f32 %v1343, %v2191
        %2193 = vdwg.mxu0
        %v2194 = vmax.f32 %v1420, 0.0
        %v2195 = vmax.f32 %v1469, 0.0
        %v2196 = vmax.f32 %v1518, 0.0
        %v2197 = vmax.f32 %v1567, 0.0
        %v2198 = vmax.f32 %v1616, 0.0
        %v2199 = vmax.f32 %v1665, 0.0
        %v2200 = vmax.f32 %v1714, 0.0
        %v2201 = vmax.f32 %v1763, 0.0
        %v2202 = vmax.f32 %v1812, 0.0
        %v2203 = vmax.f32 %v1861, 0.0
        %v2204 = vmax.f32 %v1910, 0.0
        %v2205 = vmax.f32 %v1959, 0.0
        %v2206 = vmax.f32 %v2008, 0.0
        %v2207 = vmax.f32 %v2057, 0.0
        %v2208 = vmax.f32 %v2106, 0.0
        %v2209 = vmax.f32 %v2155, 0.0
        %v2210 = vmax.f32 %v1422, 0.0
        %v2211 = vmax.f32 %v1471, 0.0
        %v2212 = vmax.f32 %v1520, 0.0
        %v2213 = vmax.f32 %v1569, 0.0
        %v2214 = vmax.f32 %v1618, 0.0
        %v2215 = vmax.f32 %v1667, 0.0
        %v2216 = vmax.f32 %v1716, 0.0
        %v2217 = vmax.f32 %v1765, 0.0
        %v2218 = vmax.f32 %v1814, 0.0
        %v2219 = vmax.f32 %v1863, 0.0
        %v2220 = vmax.f32 %v1912, 0.0
        %v2221 = vmax.f32 %v1961, 0.0
        %v2222 = vmax.f32 %v2010, 0.0
        %v2223 = vmax.f32 %v2059, 0.0
        %v2224 = vmax.f32 %v2108, 0.0
        %v2225 = vmax.f32 %v2157, 0.0
        %v2226 = vmax.f32 %v1425, 0.0
        %v2227 = vmax.f32 %v1474, 0.0
        %v2228 = vmax.f32 %v1523, 0.0
        %v2229 = vmax.f32 %v1572, 0.0
        %v2230 = vmax.f32 %v1621, 0.0
        %v2231 = vmax.f32 %v1670, 0.0
        %v2232 = vmax.f32 %v1719, 0.0
        %v2233 = vmax.f32 %v1768, 0.0
        %v2234 = vmax.f32 %v1817, 0.0
        %v2235 = vmax.f32 %v1866, 0.0
        %v2236 = vmax.f32 %v1915, 0.0
        %v2237 = vmax.f32 %v1964, 0.0
        %v2238 = vmax.f32 %v2013, 0.0
        %v2239 = vmax.f32 %v2062, 0.0
        %v2240 = vmax.f32 %v2111, 0.0
        %v2241 = vmax.f32 %v2160, 0.0
        %v2242 = vmax.f32 %v1427, 0.0
        %v2243 = vmax.f32 %v1476, 0.0
        %v2244 = vmax.f32 %v1525, 0.0
        %v2245 = vmax.f32 %v1574, 0.0
        %v2246 = vmax.f32 %v1623, 0.0
        %v2247 = vmax.f32 %v1672, 0.0
        %v2248 = vmax.f32 %v1721, 0.0
        %v2249 = vmax.f32 %v1770, 0.0
        %v2250 = vmax.f32 %v1819, 0.0
        %v2251 = vmax.f32 %v1868, 0.0
        %v2252 = vmax.f32 %v1917, 0.0
        %v2253 = vmax.f32 %v1966, 0.0
        %v2254 = vmax.f32 %v2015, 0.0
        %v2255 = vmax.f32 %v2064, 0.0
        %v2256 = vmax.f32 %v2113, 0.0
        %v2257 = vmax.f32 %v2162, 0.0
        %v2258 = vmax.f32 %v1430, 0.0
        %v2259 = vmax.f32 %v1479, 0.0
        %v2260 = vmax.f32 %v1528, 0.0
        %v2261 = vmax.f32 %v1577, 0.0
        %v2262 = vmax.f32 %v1626, 0.0
        %v2263 = vmax.f32 %v1675, 0.0
        %v2264 = vmax.f32 %v1724, 0.0
        %v2265 = vmax.f32 %v1773, 0.0
        %v2266 = vmax.f32 %v1822, 0.0
        %v2267 = vmax.f32 %v1871, 0.0
        %v2268 = vmax.f32 %v1920, 0.0
        %v2269 = vmax.f32 %v1969, 0.0
        %v2270 = vmax.f32 %v2018, 0.0
        %v2271 = vmax.f32 %v2067, 0.0
        %v2272 = vmax.f32 %v2116, 0.0
        %v2273 = vmax.f32 %v2165, 0.0
        %v2274 = vmax.f32 %v1432, 0.0
        %v2275 = vmax.f32 %v1481, 0.0
        %v2276 = vmax.f32 %v1530, 0.0
        %v2277 = vmax.f32 %v1579, 0.0
        %v2278 = vmax.f32 %v1628, 0.0
        %v2279 = vmax.f32 %v1677, 0.0
        %v2280 = vmax.f32 %v1726, 0.0
        %v2281 = vmax.f32 %v1775, 0.0
        %v2282 = vmax.f32 %v1824, 0.0
        %v2283 = vmax.f32 %v1873, 0.0
        %v2284 = vmax.f32 %v1922, 0.0
        %v2285 = vmax.f32 %v1971, 0.0
        %v2286 = vmax.f32 %v2020, 0.0
        %v2287 = vmax.f32 %v2069, 0.0
        %v2288 = vmax.f32 %v2118, 0.0
        %v2289 = vmax.f32 %v2167, 0.0
        %v2290 = vmax.f32 %v1435, 0.0
        %v2291 = vmax.f32 %v1484, 0.0
        %v2292 = vmax.f32 %v1533, 0.0
        %v2293 = vmax.f32 %v1582, 0.0
        %v2294 = vmax.f32 %v1631, 0.0
        %v2295 = vmax.f32 %v1680, 0.0
        %v2296 = vmax.f32 %v1729, 0.0
        %v2297 = vmax.f32 %v1778, 0.0
        %v2298 = vmax.f32 %v1827, 0.0
        %v2299 = vmax.f32 %v1876, 0.0
        %v2300 = vmax.f32 %v1925, 0.0
        %v2301 = vmax.f32 %v1974, 0.0
        %v2302 = vmax.f32 %v2023, 0.0
        %v2303 = vmax.f32 %v2072, 0.0
        %v2304 = vmax.f32 %v2121, 0.0
        %v2305 = vmax.f32 %v2170, 0.0
        %v2306 = vmax.f32 %v1437, 0.0
        %v2307 = vmax.f32 %v1486, 0.0
        %v2308 = vmax.f32 %v1535, 0.0
        %v2309 = vmax.f32 %v1584, 0.0
        %v2310 = vmax.f32 %v1633, 0.0
        %v2311 = vmax.f32 %v1682, 0.0
        %v2312 = vmax.f32 %v1731, 0.0
        %v2313 = vmax.f32 %v1780, 0.0
        %v2314 = vmax.f32 %v1829, 0.0
        %v2315 = vmax.f32 %v1878, 0.0
        %v2316 = vmax.f32 %v1927, 0.0
        %v2317 = vmax.f32 %v1976, 0.0
        %v2318 = vmax.f32 %v2025, 0.0
        %v2319 = vmax.f32 %v2074, 0.0
        %v2320 = vmax.f32 %v2123, 0.0
        %v2321 = vmax.f32 %v2172, 0.0
        %v2322 = vmax.f32 %v1440, 0.0
        %v2323 = vmax.f32 %v1489, 0.0
        %v2324 = vmax.f32 %v1538, 0.0
        %v2325 = vmax.f32 %v1587, 0.0
        %v2326 = vmax.f32 %v1636, 0.0
        %v2327 = vmax.f32 %v1685, 0.0
        %v2328 = vmax.f32 %v1734, 0.0
        %v2329 = vmax.f32 %v1783, 0.0
        %v2330 = vmax.f32 %v1832, 0.0
        %v2331 = vmax.f32 %v1881, 0.0
        %v2332 = vmax.f32 %v1930, 0.0
        %v2333 = vmax.f32 %v1979, 0.0
        %v2334 = vmax.f32 %v2028, 0.0
        %v2335 = vmax.f32 %v2077, 0.0
        %v2336 = vmax.f32 %v2126, 0.0
        %v2337 = vmax.f32 %v2175, 0.0
        %v2338 = vmax.f32 %v1442, 0.0
        %v2339 = vmax.f32 %v1491, 0.0
        %v2340 = vmax.f32 %v1540, 0.0
        %v2341 = vmax.f32 %v1589, 0.0
        %v2342 = vmax.f32 %v1638, 0.0
        %v2343 = vmax.f32 %v1687, 0.0
        %v2344 = vmax.f32 %v1736, 0.0
        %v2345 = vmax.f32 %v1785, 0.0
        %v2346 = vmax.f32 %v1834, 0.0
        %v2347 = vmax.f32 %v1883, 0.0
        %v2348 = vmax.f32 %v1932, 0.0
        %v2349 = vmax.f32 %v1981, 0.0
        %v2350 = vmax.f32 %v2030, 0.0
        %v2351 = vmax.f32 %v2079, 0.0
        %v2352 = vmax.f32 %v2128, 0.0
        %v2353 = vmax.f32 %v2177, 0.0
        %v2354 = vmax.f32 %v1445, 0.0
        %v2355 = vmax.f32 %v1494, 0.0
        %v2356 = vmax.f32 %v1543, 0.0
        %v2357 = vmax.f32 %v1592, 0.0
        %v2358 = vmax.f32 %v1641, 0.0
        %v2359 = vmax.f32 %v1690, 0.0
        %v2360 = vmax.f32 %v1739, 0.0
        %v2361 = vmax.f32 %v1788, 0.0
        %v2362 = vmax.f32 %v1837, 0.0
        %v2363 = vmax.f32 %v1886, 0.0
        %v2364 = vmax.f32 %v1935, 0.0
        %v2365 = vmax.f32 %v1984, 0.0
        %v2366 = vmax.f32 %v2033, 0.0
        %v2367 = vmax.f32 %v2082, 0.0
        %v2368 = vmax.f32 %v2131, 0.0
        %v2369 = vmax.f32 %v2180, 0.0
        %v2370 = vmax.f32 %v1447, 0.0
        %v2371 = vmax.f32 %v1496, 0.0
        %v2372 = vmax.f32 %v1545, 0.0
        %v2373 = vmax.f32 %v1594, 0.0
        %v2374 = vmax.f32 %v1643, 0.0
        %v2375 = vmax.f32 %v1692, 0.0
        %v2376 = vmax.f32 %v1741, 0.0
        %v2377 = vmax.f32 %v1790, 0.0
        %v2378 = vmax.f32 %v1839, 0.0
        %v2379 = vmax.f32 %v1888, 0.0
        %v2380 = vmax.f32 %v1937, 0.0
        %v2381 = vmax.f32 %v1986, 0.0
        %v2382 = vmax.f32 %v2035, 0.0
        %v2383 = vmax.f32 %v2084, 0.0
        %v2384 = vmax.f32 %v2133, 0.0
        %v2385 = vmax.f32 %v2182, 0.0
        %v2386 = vmax.f32 %v1450, 0.0
        %v2387 = vmax.f32 %v1499, 0.0
        %v2388 = vmax.f32 %v1548, 0.0
        %v2389 = vmax.f32 %v1597, 0.0
        %v2390 = vmax.f32 %v1646, 0.0
        %v2391 = vmax.f32 %v1695, 0.0
        %v2392 = vmax.f32 %v1744, 0.0
        %v2393 = vmax.f32 %v1793, 0.0
        %v2394 = vmax.f32 %v1842, 0.0
        %v2395 = vmax.f32 %v1891, 0.0
        %v2396 = vmax.f32 %v1940, 0.0
        %v2397 = vmax.f32 %v1989, 0.0
        %v2398 = vmax.f32 %v2038, 0.0
        %v2399 = vmax.f32 %v2087, 0.0
        %v2400 = vmax.f32 %v2136, 0.0
        %v2401 = vmax.f32 %v2185, 0.0
        %v2402 = vmax.f32 %v1452, 0.0
        %v2403 = vmax.f32 %v1501, 0.0
        %v2404 = vmax.f32 %v1550, 0.0
        %v2405 = vmax.f32 %v1599, 0.0
        %v2406 = vmax.f32 %v1648, 0.0
        %v2407 = vmax.f32 %v1697, 0.0
        %v2408 = vmax.f32 %v1746, 0.0
        %v2409 = vmax.f32 %v1795, 0.0
        %v2410 = vmax.f32 %v1844, 0.0
        %v2411 = vmax.f32 %v1893, 0.0
        %v2412 = vmax.f32 %v1942, 0.0
        %v2413 = vmax.f32 %v1991, 0.0
        %v2414 = vmax.f32 %v2040, 0.0
        %v2415 = vmax.f32 %v2089, 0.0
        %v2416 = vmax.f32 %v2138, 0.0
        %v2417 = vmax.f32 %v2187, 0.0
        %v2418 = vmax.f32 %v1455, 0.0
        %v2419 = vmax.f32 %v1504, 0.0
        %v2420 = vmax.f32 %v1553, 0.0
        %v2421 = vmax.f32 %v1602, 0.0
        %v2422 = vmax.f32 %v1651, 0.0
        %v2423 = vmax.f32 %v1700, 0.0
        %v2424 = vmax.f32 %v1749, 0.0
        %v2425 = vmax.f32 %v1798, 0.0
        %v2426 = vmax.f32 %v1847, 0.0
        %v2427 = vmax.f32 %v1896, 0.0
        %v2428 = vmax.f32 %v1945, 0.0
        %v2429 = vmax.f32 %v1994, 0.0
        %v2430 = vmax.f32 %v2043, 0.0
        %v2431 = vmax.f32 %v2092, 0.0
        %v2432 = vmax.f32 %v2141, 0.0
        %v2433 = vmax.f32 %v2190, 0.0
        %v2434 = vmax.f32 %v1457, 0.0
        %v2435 = vmax.f32 %v1506, 0.0
        %v2436 = vmax.f32 %v1555, 0.0
        %v2437 = vmax.f32 %v1604, 0.0
        %v2438 = vmax.f32 %v1653, 0.0
        %v2439 = vmax.f32 %v1702, 0.0
        %v2440 = vmax.f32 %v1751, 0.0
        %v2441 = vmax.f32 %v1800, 0.0
        %v2442 = vmax.f32 %v1849, 0.0
        %v2443 = vmax.f32 %v1898, 0.0
        %v2444 = vmax.f32 %v1947, 0.0
        %v2445 = vmax.f32 %v1996, 0.0
        %v2446 = vmax.f32 %v2045, 0.0
        %v2447 = vmax.f32 %v2094, 0.0
        %v2448 = vmax.f32 %v2143, 0.0
        %v2449 = vmax.f32 %v2192, 0.0
        %v2450 = vld [vmem:[%s5] sm:$0xf]
        %v2451 = vld [vmem:[%s5 + $0x4] sm:$0xf]
        %v2452 = vld [vmem:[%s5 + $0x8] sm:$0xf]
        %v2453 = vld [vmem:[%s5 + $0xc] sm:$0xf]
        %v2454 = vld [vmem:[%s5 + $0x10] sm:$0xf]
        %v2455 = vld [vmem:[%s5 + $0x14] sm:$0xf]
        %v2456 = vld [vmem:[%s5 + $0x18] sm:$0xf]
        %v2457 = vld [vmem:[%s5 + $0x1c] sm:$0xf]
        %v2458 = vld [vmem:[%s5 + $0x20] sm:$0xf]
        %v2459 = vld [vmem:[%s5 + $0x24] sm:$0xf]
        %v2460 = vld [vmem:[%s5 + $0x28] sm:$0xf]
        %v2461 = vld [vmem:[%s5 + $0x2c] sm:$0xf]
        %v2462 = vld [vmem:[%s5 + $0x30] sm:$0xf]
        %v2463 = vld [vmem:[%s5 + $0x34] sm:$0xf]
        %v2464 = vld [vmem:[%s5 + $0x38] sm:$0xf]
        %v2465 = vld [vmem:[%s5 + $0x3c] sm:$0xf]
        %v2466 = vld [vmem:[%s5 + $0x40] sm:$0xf]
        %v2467 = vld [vmem:[%s5 + $0x44] sm:$0xf]
        %v2468 = vld [vmem:[%s5 + $0x48] sm:$0xf]
        %v2469 = vld [vmem:[%s5 + $0x4c] sm:$0xf]
        %v2470 = vld [vmem:[%s5 + $0x50] sm:$0xf]
        %v2471 = vld [vmem:[%s5 + $0x54] sm:$0xf]
        %v2472 = vld [vmem:[%s5 + $0x58] sm:$0xf]
        %v2473 = vld [vmem:[%s5 + $0x5c] sm:$0xf]
        %v2474 = vld [vmem:[%s5 + $0x60] sm:$0xf]
        %v2475 = vld [vmem:[%s5 + $0x64] sm:$0xf]
        %v2476 = vld [vmem:[%s5 + $0x68] sm:$0xf]
        %v2477 = vld [vmem:[%s5 + $0x6c] sm:$0xf]
        %v2478 = vld [vmem:[%s5 + $0x70] sm:$0xf]
        %v2479 = vld [vmem:[%s5 + $0x74] sm:$0xf]
        %v2480 = vld [vmem:[%s5 + $0x78] sm:$0xf]
        %v2481 = vld [vmem:[%s5 + $0x7c] sm:$0xf]
        %v2482 = vpack.c.bf16 %v2210, %v2194
        %v2483 = vpack.c.bf16 %v2211, %v2195
        %v2484 = vpack.c.bf16 %v2212, %v2196
        %v2485 = vpack.c.bf16 %v2213, %v2197
        %v2486 = vpack.c.bf16 %v2214, %v2198
        %v2487 = vpack.c.bf16 %v2215, %v2199
        %v2488 = vpack.c.bf16 %v2216, %v2200
        %v2489 = vpack.c.bf16 %v2217, %v2201
        %v2490 = vpack.c.bf16 %v2218, %v2202
        %v2491 = vpack.c.bf16 %v2219, %v2203
        %v2492 = vpack.c.bf16 %v2220, %v2204
        %v2493 = vpack.c.bf16 %v2221, %v2205
        %v2494 = vpack.c.bf16 %v2222, %v2206
        %v2495 = vpack.c.bf16 %v2223, %v2207
        %v2496 = vpack.c.bf16 %v2224, %v2208
        %v2497 = vpack.c.bf16 %v2225, %v2209
        %v2498 = vpack.c.bf16 %v2242, %v2226
        %v2499 = vpack.c.bf16 %v2243, %v2227
        %v2500 = vpack.c.bf16 %v2244, %v2228
        %v2501 = vpack.c.bf16 %v2245, %v2229
        %v2502 = vpack.c.bf16 %v2246, %v2230
        %v2503 = vpack.c.bf16 %v2247, %v2231
        %v2504 = vpack.c.bf16 %v2248, %v2232
        %v2505 = vpack.c.bf16 %v2249, %v2233
        %v2506 = vpack.c.bf16 %v2250, %v2234
        %v2507 = vpack.c.bf16 %v2251, %v2235
        %v2508 = vpack.c.bf16 %v2252, %v2236
        %v2509 = vpack.c.bf16 %v2253, %v2237
        %v2510 = vpack.c.bf16 %v2254, %v2238
        %v2511 = vpack.c.bf16 %v2255, %v2239
        %v2512 = vpack.c.bf16 %v2256, %v2240
        %v2513 = vpack.c.bf16 %v2257, %v2241
        %v2514 = vpack.c.bf16 %v2274, %v2258
        %v2515 = vpack.c.bf16 %v2275, %v2259
        %v2516 = vpack.c.bf16 %v2276, %v2260
        %v2517 = vpack.c.bf16 %v2277, %v2261
        %v2518 = vpack.c.bf16 %v2278, %v2262
        %v2519 = vpack.c.bf16 %v2279, %v2263
        %v2520 = vpack.c.bf16 %v2280, %v2264
        %v2521 = vpack.c.bf16 %v2281, %v2265
        %v2522 = vpack.c.bf16 %v2282, %v2266
        %v2523 = vpack.c.bf16 %v2283, %v2267
        %v2524 = vpack.c.bf16 %v2284, %v2268
        %v2525 = vpack.c.bf16 %v2285, %v2269
        %v2526 = vpack.c.bf16 %v2286, %v2270
        %v2527 = vpack.c.bf16 %v2287, %v2271
        %v2528 = vpack.c.bf16 %v2288, %v2272
        %v2529 = vpack.c.bf16 %v2289, %v2273
        %v2530 = vpack.c.bf16 %v2306, %v2290
        %v2531 = vpack.c.bf16 %v2307, %v2291
        %v2532 = vpack.c.bf16 %v2308, %v2292
        %v2533 = vpack.c.bf16 %v2309, %v2293
        %v2534 = vpack.c.bf16 %v2310, %v2294
        %v2535 = vpack.c.bf16 %v2311, %v2295
        %v2536 = vpack.c.bf16 %v2312, %v2296
        %v2537 = vpack.c.bf16 %v2313, %v2297
        %v2538 = vpack.c.bf16 %v2314, %v2298
        %v2539 = vpack.c.bf16 %v2315, %v2299
        %v2540 = vpack.c.bf16 %v2316, %v2300
        %v2541 = vpack.c.bf16 %v2317, %v2301
        %v2542 = vpack.c.bf16 %v2318, %v2302
        %v2543 = vpack.c.bf16 %v2319, %v2303
        %v2544 = vpack.c.bf16 %v2320, %v2304
        %v2545 = vpack.c.bf16 %v2321, %v2305
        %v2546 = vpack.c.bf16 %v2338, %v2322
        %v2547 = vpack.c.bf16 %v2339, %v2323
        %v2548 = vpack.c.bf16 %v2340, %v2324
        %v2549 = vpack.c.bf16 %v2341, %v2325
        %v2550 = vpack.c.bf16 %v2342, %v2326
        %v2551 = vpack.c.bf16 %v2343, %v2327
        %v2552 = vpack.c.bf16 %v2344, %v2328
        %v2553 = vpack.c.bf16 %v2345, %v2329
        %v2554 = vpack.c.bf16 %v2346, %v2330
        %v2555 = vpack.c.bf16 %v2347, %v2331
        %v2556 = vpack.c.bf16 %v2348, %v2332
        %v2557 = vpack.c.bf16 %v2349, %v2333
        %v2558 = vpack.c.bf16 %v2350, %v2334
        %v2559 = vpack.c.bf16 %v2351, %v2335
        %v2560 = vpack.c.bf16 %v2352, %v2336
        %v2561 = vpack.c.bf16 %v2353, %v2337
        %v2562 = vpack.c.bf16 %v2370, %v2354
        %v2563 = vpack.c.bf16 %v2371, %v2355
        %v2564 = vpack.c.bf16 %v2372, %v2356
        %v2565 = vpack.c.bf16 %v2373, %v2357
        %v2566 = vpack.c.bf16 %v2374, %v2358
        %v2567 = vpack.c.bf16 %v2375, %v2359
        %v2568 = vpack.c.bf16 %v2376, %v2360
        %v2569 = vpack.c.bf16 %v2377, %v2361
        %v2570 = vpack.c.bf16 %v2378, %v2362
        %v2571 = vpack.c.bf16 %v2379, %v2363
        %v2572 = vpack.c.bf16 %v2380, %v2364
        %v2573 = vpack.c.bf16 %v2381, %v2365
        %v2574 = vpack.c.bf16 %v2382, %v2366
        %v2575 = vpack.c.bf16 %v2383, %v2367
        %v2576 = vpack.c.bf16 %v2384, %v2368
        %v2577 = vpack.c.bf16 %v2385, %v2369
        %v2578 = vpack.c.bf16 %v2402, %v2386
        %v2579 = vpack.c.bf16 %v2403, %v2387
        %v2580 = vpack.c.bf16 %v2404, %v2388
        %v2581 = vpack.c.bf16 %v2405, %v2389
        %v2582 = vpack.c.bf16 %v2406, %v2390
        %v2583 = vpack.c.bf16 %v2407, %v2391
        %v2584 = vpack.c.bf16 %v2408, %v2392
        %v2585 = vpack.c.bf16 %v2409, %v2393
        %v2586 = vpack.c.bf16 %v2410, %v2394
        %v2587 = vpack.c.bf16 %v2411, %v2395
        %v2588 = vpack.c.bf16 %v2412, %v2396
        %v2589 = vpack.c.bf16 %v2413, %v2397
        %v2590 = vpack.c.bf16 %v2414, %v2398
        %v2591 = vpack.c.bf16 %v2415, %v2399
        %v2592 = vpack.c.bf16 %v2416, %v2400
        %v2593 = vpack.c.bf16 %v2417, %v2401
        %v2594 = vpack.c.bf16 %v2434, %v2418
        %v2595 = vpack.c.bf16 %v2435, %v2419
        %v2596 = vpack.c.bf16 %v2436, %v2420
        %v2597 = vpack.c.bf16 %v2437, %v2421
        %v2598 = vpack.c.bf16 %v2438, %v2422
        %v2599 = vpack.c.bf16 %v2439, %v2423
        %v2600 = vpack.c.bf16 %v2440, %v2424
        %v2601 = vpack.c.bf16 %v2441, %v2425
        %v2602 = vpack.c.bf16 %v2442, %v2426
        %v2603 = vpack.c.bf16 %v2443, %v2427
        %v2604 = vpack.c.bf16 %v2444, %v2428
        %v2605 = vpack.c.bf16 %v2445, %v2429
        %v2606 = vpack.c.bf16 %v2446, %v2430
        %v2607 = vpack.c.bf16 %v2447, %v2431
        %v2608 = vpack.c.bf16 %v2448, %v2432
        %v2609 = vpack.c.bf16 %v2449, %v2433
        %v2610 = vld [vmem:[%s6] sm:$0xff]
        %v2611 = vld [vmem:[%s6 + $0x8] sm:$0xff]
        %v2612 = vld [vmem:[%s6 + $0x10] sm:$0xff]
        %v2613 = vld [vmem:[%s6 + $0x18] sm:$0xff]
        %v2614 = vld [vmem:[%s6 + $0x20] sm:$0xff]
        %v2615 = vld [vmem:[%s6 + $0x28] sm:$0xff]
        %v2616 = vld [vmem:[%s6 + $0x30] sm:$0xff]
        %v2617 = vld [vmem:[%s6 + $0x38] sm:$0xff]
        %v2618 = vld [vmem:[%s6 + $0x40] sm:$0xff]
        %v2619 = vld [vmem:[%s6 + $0x48] sm:$0xff]
        %v2620 = vld [vmem:[%s6 + $0x50] sm:$0xff]
        %v2621 = vld [vmem:[%s6 + $0x58] sm:$0xff]
        %v2622 = vld [vmem:[%s6 + $0x60] sm:$0xff]
        %v2623 = vld [vmem:[%s6 + $0x68] sm:$0xff]
        %v2624 = vld [vmem:[%s6 + $0x70] sm:$0xff]
        %v2625 = vld [vmem:[%s6 + $0x78] sm:$0xff]
        %v2626 = vld [vmem:[%s6 + $0x80] sm:$0xff]
        %v2627 = vld [vmem:[%s6 + $0x88] sm:$0xff]
        %v2628 = vld [vmem:[%s6 + $0x90] sm:$0xff]
        %v2629 = vld [vmem:[%s6 + $0x98] sm:$0xff]
        %v2630 = vld [vmem:[%s6 + $0xa0] sm:$0xff]
        %v2631 = vld [vmem:[%s6 + $0xa8] sm:$0xff]
        %v2632 = vld [vmem:[%s6 + $0xb0] sm:$0xff]
        %v2633 = vld [vmem:[%s6 + $0xb8] sm:$0xff]
        %v2634 = vld [vmem:[%s6 + $0xc0] sm:$0xff]
        %v2635 = vld [vmem:[%s6 + $0xc8] sm:$0xff]
        %v2636 = vld [vmem:[%s6 + $0xd0] sm:$0xff]
        %v2637 = vld [vmem:[%s6 + $0xd8] sm:$0xff]
        %v2638 = vld [vmem:[%s6 + $0xe0] sm:$0xff]
        %v2639 = vld [vmem:[%s6 + $0xe8] sm:$0xff]
        %v2640 = vld [vmem:[%s6 + $0xf0] sm:$0xff]
        %v2641 = vld [vmem:[%s6 + $0xf8] sm:$0xff]
        %2643 = vset.pattern.permute.xlu0 0
        %2644 = vperm.xlu0 %2643, %v2610
        %v2645 = vpop.permute.xlu0 %2644
        %2648 = vset.pattern.permute.xlu0 0
        %2649 = vperm.xlu0 %2648, %v2611
        %v2650 = vpop.permute.xlu0 %2649
        %2653 = vset.pattern.permute.xlu0 0
        %2654 = vperm.xlu0 %2653, %v2612
        %v2655 = vpop.permute.xlu0 %2654
        %2658 = vset.pattern.permute.xlu0 0
        %2659 = vperm.xlu0 %2658, %v2613
        %v2660 = vpop.permute.xlu0 %2659
        %2663 = vset.pattern.permute.xlu0 0
        %2664 = vperm.xlu0 %2663, %v2614
        %v2665 = vpop.permute.xlu0 %2664
        %2668 = vset.pattern.permute.xlu0 0
        %2669 = vperm.xlu0 %2668, %v2615
        %v2670 = vpop.permute.xlu0 %2669
        %2673 = vset.pattern.permute.xlu0 0
        %2674 = vperm.xlu0 %2673, %v2616
        %v2675 = vpop.permute.xlu0 %2674
        %2678 = vset.pattern.permute.xlu0 0
        %2679 = vperm.xlu0 %2678, %v2617
        %v2680 = vpop.permute.xlu0 %2679
        %2683 = vset.pattern.permute.xlu0 0
        %2684 = vperm.xlu0 %2683, %v2618
        %v2685 = vpop.permute.xlu0 %2684
        %2688 = vset.pattern.permute.xlu0 0
        %2689 = vperm.xlu0 %2688, %v2619
        %v2690 = vpop.permute.xlu0 %2689
        %2693 = vset.pattern.permute.xlu0 0
        %2694 = vperm.xlu0 %2693, %v2620
        %v2695 = vpop.permute.xlu0 %2694
        %2698 = vset.pattern.permute.xlu0 0
        %2699 = vperm.xlu0 %2698, %v2621
        %v2700 = vpop.permute.xlu0 %2699
        %2703 = vset.pattern.permute.xlu0 0
        %2704 = vperm.xlu0 %2703, %v2622
        %v2705 = vpop.permute.xlu0 %2704
        %2708 = vset.pattern.permute.xlu0 0
        %2709 = vperm.xlu0 %2708, %v2623
        %v2710 = vpop.permute.xlu0 %2709
        %2713 = vset.pattern.permute.xlu0 0
        %2714 = vperm.xlu0 %2713, %v2624
        %v2715 = vpop.permute.xlu0 %2714
        %2718 = vset.pattern.permute.xlu0 0
        %2719 = vperm.xlu0 %2718, %v2625
        %v2720 = vpop.permute.xlu0 %2719
        %2723 = vset.pattern.permute.xlu0 0
        %2724 = vperm.xlu0 %2723, %v2626
        %v2725 = vpop.permute.xlu0 %2724
        %2728 = vset.pattern.permute.xlu0 0
        %2729 = vperm.xlu0 %2728, %v2627
        %v2730 = vpop.permute.xlu0 %2729
        %2733 = vset.pattern.permute.xlu0 0
        %2734 = vperm.xlu0 %2733, %v2628
        %v2735 = vpop.permute.xlu0 %2734
        %2738 = vset.pattern.permute.xlu0 0
        %2739 = vperm.xlu0 %2738, %v2629
        %v2740 = vpop.permute.xlu0 %2739
        %2743 = vset.pattern.permute.xlu0 0
        %2744 = vperm.xlu0 %2743, %v2630
        %v2745 = vpop.permute.xlu0 %2744
        %2748 = vset.pattern.permute.xlu0 0
        %2749 = vperm.xlu0 %2748, %v2631
        %v2750 = vpop.permute.xlu0 %2749
        %2753 = vset.pattern.permute.xlu0 0
        %2754 = vperm.xlu0 %2753, %v2632
        %v2755 = vpop.permute.xlu0 %2754
        %2758 = vset.pattern.permute.xlu0 0
        %2759 = vperm.xlu0 %2758, %v2633
        %v2760 = vpop.permute.xlu0 %2759
        %2763 = vset.pattern.permute.xlu0 0
        %2764 = vperm.xlu0 %2763, %v2634
        %v2765 = vpop.permute.xlu0 %2764
        %2768 = vset.pattern.permute.xlu0 0
        %2769 = vperm.xlu0 %2768, %v2635
        %v2770 = vpop.permute.xlu0 %2769
        %2773 = vset.pattern.permute.xlu0 0
        %2774 = vperm.xlu0 %2773, %v2636
        %v2775 = vpop.permute.xlu0 %2774
        %2778 = vset.pattern.permute.xlu0 0
        %2779 = vperm.xlu0 %2778, %v2637
        %v2780 = vpop.permute.xlu0 %2779
        %2783 = vset.pattern.permute.xlu0 0
        %2784 = vperm.xlu0 %2783, %v2638
        %v2785 = vpop.permute.xlu0 %2784
        %2788 = vset.pattern.permute.xlu0 0
        %2789 = vperm.xlu0 %2788, %v2639
        %v2790 = vpop.permute.xlu0 %2789
        %2793 = vset.pattern.permute.xlu0 0
        %2794 = vperm.xlu0 %2793, %v2640
        %v2795 = vpop.permute.xlu0 %2794
        %2798 = vset.pattern.permute.xlu0 0
        %2799 = vperm.xlu0 %2798, %v2641
        %v2800 = vpop.permute.xlu0 %2799
        %v2834 = vunpack.c.l.b16 %v2450
        %v2835 = vunpack.c.l.b16 %v2451
        %v2836 = vunpack.c.l.b16 %v2452
        %v2837 = vunpack.c.l.b16 %v2453
        %v2838 = vunpack.c.l.b16 %v2454
        %v2839 = vunpack.c.l.b16 %v2455
        %v2840 = vunpack.c.l.b16 %v2456
        %v2841 = vunpack.c.l.b16 %v2457
        %v2842 = vunpack.c.l.b16 %v2458
        %v2843 = vunpack.c.l.b16 %v2459
        %v2844 = vunpack.c.l.b16 %v2460
        %v2845 = vunpack.c.l.b16 %v2461
        %v2846 = vunpack.c.l.b16 %v2462
        %v2847 = vunpack.c.l.b16 %v2463
        %v2848 = vunpack.c.l.b16 %v2464
        %v2849 = vunpack.c.l.b16 %v2465
        %v2850 = vunpack.c.l.b16 %v2466
        %v2851 = vunpack.c.l.b16 %v2467
        %v2852 = vunpack.c.l.b16 %v2468
        %v2853 = vunpack.c.l.b16 %v2469
        %v2854 = vunpack.c.l.b16 %v2470
        %v2855 = vunpack.c.l.b16 %v2471
        %v2856 = vunpack.c.l.b16 %v2472
        %v2857 = vunpack.c.l.b16 %v2473
        %v2858 = vunpack.c.l.b16 %v2474
        %v2859 = vunpack.c.l.b16 %v2475
        %v2860 = vunpack.c.l.b16 %v2476
        %v2861 = vunpack.c.l.b16 %v2477
        %v2862 = vunpack.c.l.b16 %v2478
        %v2863 = vunpack.c.l.b16 %v2479
        %v2864 = vunpack.c.l.b16 %v2480
        %v2865 = vunpack.c.l.b16 %v2481
        %v2866 = vpack.c.b16 %v2835, %v2834
        %v2867 = vpack.c.b16 %v2837, %v2836
        %v2868 = vpack.c.b16 %v2839, %v2838
        %v2869 = vpack.c.b16 %v2841, %v2840
        %v2870 = vpack.c.b16 %v2843, %v2842
        %v2871 = vpack.c.b16 %v2845, %v2844
        %v2872 = vpack.c.b16 %v2847, %v2846
        %v2873 = vpack.c.b16 %v2849, %v2848
        %v2874 = vpack.c.b16 %v2851, %v2850
        %v2875 = vpack.c.b16 %v2853, %v2852
        %v2876 = vpack.c.b16 %v2855, %v2854
        %v2877 = vpack.c.b16 %v2857, %v2856
        %v2878 = vpack.c.b16 %v2859, %v2858
        %v2879 = vpack.c.b16 %v2861, %v2860
        %v2880 = vpack.c.b16 %v2863, %v2862
        %v2881 = vpack.c.b16 %v2865, %v2864
        %2898 = vmatpush.bf16.msra.mxu0 %v2594
        %2899 = vmatpush.bf16.msra.mxu0 %v2578
        %2900 = vmatpush.bf16.msra.mxu0 %v2562
        %2901 = vmatpush.bf16.msra.mxu0 %v2546
        %2902 = vmatpush.bf16.msra.mxu0 %v2530
        %2903 = vmatpush.bf16.msra.mxu0 %v2514
        %2904 = vmatpush.bf16.msra.mxu0 %v2498
        %2905 = vmatpush.bf16.msra.mxu0 %v2482
        %2906 = vmatmul.bf16.gmra.mxu0 %v2866
        %v2907 = vpop.f32.mrf.mxu0
        %v2908 = vadd.f32 %v2645, %v2907
        %v2909 = vpop.f32.mrf.mxu0
        %v2910 = vadd.f32 %v2650, %v2909
        %2911 = vmatmul.bf16.gmra.mxu0 %v2867
        %v2912 = vpop.f32.mrf.mxu0
        %v2913 = vadd.f32 %v2655, %v2912
        %v2914 = vpop.f32.mrf.mxu0
        %v2915 = vadd.f32 %v2660, %v2914
        %2916 = vmatmul.bf16.gmra.mxu0 %v2868
        %v2917 = vpop.f32.mrf.mxu0
        %v2918 = vadd.f32 %v2665, %v2917
        %v2919 = vpop.f32.mrf.mxu0
        %v2920 = vadd.f32 %v2670, %v2919
        %2921 = vmatmul.bf16.gmra.mxu0 %v2869
        %v2922 = vpop.f32.mrf.mxu0
        %v2923 = vadd.f32 %v2675, %v2922
        %v2924 = vpop.f32.mrf.mxu0
        %v2925 = vadd.f32 %v2680, %v2924
        %2926 = vmatmul.bf16.gmra.mxu0 %v2870
        %v2927 = vpop.f32.mrf.mxu0
        %v2928 = vadd.f32 %v2685, %v2927
        %v2929 = vpop.f32.mrf.mxu0
        %v2930 = vadd.f32 %v2690, %v2929
        %2931 = vmatmul.bf16.gmra.mxu0 %v2871
        %v2932 = vpop.f32.mrf.mxu0
        %v2933 = vadd.f32 %v2695, %v2932
        %v2934 = vpop.f32.mrf.mxu0
        %v2935 = vadd.f32 %v2700, %v2934
        %2936 = vmatmul.bf16.gmra.mxu0 %v2872
        %v2937 = vpop.f32.mrf.mxu0
        %v2938 = vadd.f32 %v2705, %v2937
        %v2939 = vpop.f32.mrf.mxu0
        %v2940 = vadd.f32 %v2710, %v2939
        %2941 = vmatmul.bf16.gmra.mxu0 %v2873
        %v2942 = vpop.f32.mrf.mxu0
        %v2943 = vadd.f32 %v2715, %v2942
        %v2944 = vpop.f32.mrf.mxu0
        %v2945 = vadd.f32 %v2720, %v2944
        %2946 = vmatmul.bf16.gmra.mxu0 %v2874
        %v2947 = vpop.f32.mrf.mxu0
        %v2948 = vadd.f32 %v2725, %v2947
        %v2949 = vpop.f32.mrf.mxu0
        %v2950 = vadd.f32 %v2730, %v2949
        %2951 = vmatmul.bf16.gmra.mxu0 %v2875
        %v2952 = vpop.f32.mrf.mxu0
        %v2953 = vadd.f32 %v2735, %v2952
        %v2954 = vpop.f32.mrf.mxu0
        %v2955 = vadd.f32 %v2740, %v2954
        %2956 = vmatmul.bf16.gmra.mxu0 %v2876
        %v2957 = vpop.f32.mrf.mxu0
        %v2958 = vadd.f32 %v2745, %v2957
        %v2959 = vpop.f32.mrf.mxu0
        %v2960 = vadd.f32 %v2750, %v2959
        %2961 = vmatmul.bf16.gmra.mxu0 %v2877
        %v2962 = vpop.f32.mrf.mxu0
        %v2963 = vadd.f32 %v2755, %v2962
        %v2964 = vpop.f32.mrf.mxu0
        %v2965 = vadd.f32 %v2760, %v2964
        %2966 = vmatmul.bf16.gmra.mxu0 %v2878
        %v2967 = vpop.f32.mrf.mxu0
        %v2968 = vadd.f32 %v2765, %v2967
        %v2969 = vpop.f32.mrf.mxu0
        %v2970 = vadd.f32 %v2770, %v2969
        %2971 = vmatmul.bf16.gmra.mxu0 %v2879
        %v2972 = vpop.f32.mrf.mxu0
        %v2973 = vadd.f32 %v2775, %v2972
        %v2974 = vpop.f32.mrf.mxu0
        %v2975 = vadd.f32 %v2780, %v2974
        %2976 = vmatmul.bf16.gmra.mxu0 %v2880
        %v2977 = vpop.f32.mrf.mxu0
        %v2978 = vadd.f32 %v2785, %v2977
        %v2979 = vpop.f32.mrf.mxu0
        %v2980 = vadd.f32 %v2790, %v2979
        %2981 = vmatmul.bf16.gmra.mxu0 %v2881
        %v2982 = vpop.f32.mrf.mxu0
        %v2983 = vadd.f32 %v2795, %v2982
        %v2984 = vpop.f32.mrf.mxu0
        %v2985 = vadd.f32 %v2800, %v2984
        %2986 = vdwg.mxu0
        %2987 = vmatpush.bf16.msra.mxu0 %v2595
        %2988 = vmatpush.bf16.msra.mxu0 %v2579
        %2989 = vmatpush.bf16.msra.mxu0 %v2563
        %2990 = vmatpush.bf16.msra.mxu0 %v2547
        %2991 = vmatpush.bf16.msra.mxu0 %v2531
        %2992 = vmatpush.bf16.msra.mxu0 %v2515
        %2993 = vmatpush.bf16.msra.mxu0 %v2499
        %2994 = vmatpush.bf16.msra.mxu0 %v2483
        %2995 = vmatmul.bf16.gmra.mxu0 %v2866
        %v2996 = vpop.f32.mrf.mxu0
        %v2997 = vadd.f32 %v2645, %v2996
        %v2998 = vpop.f32.mrf.mxu0
        %v2999 = vadd.f32 %v2650, %v2998
        %3000 = vmatmul.bf16.gmra.mxu0 %v2867
        %v3001 = vpop.f32.mrf.mxu0
        %v3002 = vadd.f32 %v2655, %v3001
        %v3003 = vpop.f32.mrf.mxu0
        %v3004 = vadd.f32 %v2660, %v3003
        %3005 = vmatmul.bf16.gmra.mxu0 %v2868
        %v3006 = vpop.f32.mrf.mxu0
        %v3007 = vadd.f32 %v2665, %v3006
        %v3008 = vpop.f32.mrf.mxu0
        %v3009 = vadd.f32 %v2670, %v3008
        %3010 = vmatmul.bf16.gmra.mxu0 %v2869
        %v3011 = vpop.f32.mrf.mxu0
        %v3012 = vadd.f32 %v2675, %v3011
        %v3013 = vpop.f32.mrf.mxu0
        %v3014 = vadd.f32 %v2680, %v3013
        %3015 = vmatmul.bf16.gmra.mxu0 %v2870
        %v3016 = vpop.f32.mrf.mxu0
        %v3017 = vadd.f32 %v2685, %v3016
        %v3018 = vpop.f32.mrf.mxu0
        %v3019 = vadd.f32 %v2690, %v3018
        %3020 = vmatmul.bf16.gmra.mxu0 %v2871
        %v3021 = vpop.f32.mrf.mxu0
        %v3022 = vadd.f32 %v2695, %v3021
        %v3023 = vpop.f32.mrf.mxu0
        %v3024 = vadd.f32 %v2700, %v3023
        %3025 = vmatmul.bf16.gmra.mxu0 %v2872
        %v3026 = vpop.f32.mrf.mxu0
        %v3027 = vadd.f32 %v2705, %v3026
        %v3028 = vpop.f32.mrf.mxu0
        %v3029 = vadd.f32 %v2710, %v3028
        %3030 = vmatmul.bf16.gmra.mxu0 %v2873
        %v3031 = vpop.f32.mrf.mxu0
        %v3032 = vadd.f32 %v2715, %v3031
        %v3033 = vpop.f32.mrf.mxu0
        %v3034 = vadd.f32 %v2720, %v3033
        %3035 = vmatmul.bf16.gmra.mxu0 %v2874
        %v3036 = vpop.f32.mrf.mxu0
        %v3037 = vadd.f32 %v2725, %v3036
        %v3038 = vpop.f32.mrf.mxu0
        %v3039 = vadd.f32 %v2730, %v3038
        %3040 = vmatmul.bf16.gmra.mxu0 %v2875
        %v3041 = vpop.f32.mrf.mxu0
        %v3042 = vadd.f32 %v2735, %v3041
        %v3043 = vpop.f32.mrf.mxu0
        %v3044 = vadd.f32 %v2740, %v3043
        %3045 = vmatmul.bf16.gmra.mxu0 %v2876
        %v3046 = vpop.f32.mrf.mxu0
        %v3047 = vadd.f32 %v2745, %v3046
        %v3048 = vpop.f32.mrf.mxu0
        %v3049 = vadd.f32 %v2750, %v3048
        %3050 = vmatmul.bf16.gmra.mxu0 %v2877
        %v3051 = vpop.f32.mrf.mxu0
        %v3052 = vadd.f32 %v2755, %v3051
        %v3053 = vpop.f32.mrf.mxu0
        %v3054 = vadd.f32 %v2760, %v3053
        %3055 = vmatmul.bf16.gmra.mxu0 %v2878
        %v3056 = vpop.f32.mrf.mxu0
        %v3057 = vadd.f32 %v2765, %v3056
        %v3058 = vpop.f32.mrf.mxu0
        %v3059 = vadd.f32 %v2770, %v3058
        %3060 = vmatmul.bf16.gmra.mxu0 %v2879
        %v3061 = vpop.f32.mrf.mxu0
        %v3062 = vadd.f32 %v2775, %v3061
        %v3063 = vpop.f32.mrf.mxu0
        %v3064 = vadd.f32 %v2780, %v3063
        %3065 = vmatmul.bf16.gmra.mxu0 %v2880
        %v3066 = vpop.f32.mrf.mxu0
        %v3067 = vadd.f32 %v2785, %v3066
        %v3068 = vpop.f32.mrf.mxu0
        %v3069 = vadd.f32 %v2790, %v3068
        %3070 = vmatmul.bf16.gmra.mxu0 %v2881
        %v3071 = vpop.f32.mrf.mxu0
        %v3072 = vadd.f32 %v2795, %v3071
        %v3073 = vpop.f32.mrf.mxu0
        %v3074 = vadd.f32 %v2800, %v3073
        %3075 = vdwg.mxu0
        %3076 = vmatpush.bf16.msra.mxu0 %v2596
        %3077 = vmatpush.bf16.msra.mxu0 %v2580
        %3078 = vmatpush.bf16.msra.mxu0 %v2564
        %3079 = vmatpush.bf16.msra.mxu0 %v2548
        %3080 = vmatpush.bf16.msra.mxu0 %v2532
        %3081 = vmatpush.bf16.msra.mxu0 %v2516
        %3082 = vmatpush.bf16.msra.mxu0 %v2500
        %3083 = vmatpush.bf16.msra.mxu0 %v2484
        %3084 = vmatmul.bf16.gmra.mxu0 %v2866
        %v3085 = vpop.f32.mrf.mxu0
        %v3086 = vadd.f32 %v2645, %v3085
        %v3087 = vpop.f32.mrf.mxu0
        %v3088 = vadd.f32 %v2650, %v3087
        %3089 = vmatmul.bf16.gmra.mxu0 %v2867
        %v3090 = vpop.f32.mrf.mxu0
        %v3091 = vadd.f32 %v2655, %v3090
        %v3092 = vpop.f32.mrf.mxu0
        %v3093 = vadd.f32 %v2660, %v3092
        %3094 = vmatmul.bf16.gmra.mxu0 %v2868
        %v3095 = vpop.f32.mrf.mxu0
        %v3096 = vadd.f32 %v2665, %v3095
        %v3097 = vpop.f32.mrf.mxu0
        %v3098 = vadd.f32 %v2670, %v3097
        %3099 = vmatmul.bf16.gmra.mxu0 %v2869
        %v3100 = vpop.f32.mrf.mxu0
        %v3101 = vadd.f32 %v2675, %v3100
        %v3102 = vpop.f32.mrf.mxu0
        %v3103 = vadd.f32 %v2680, %v3102
        %3104 = vmatmul.bf16.gmra.mxu0 %v2870
        %v3105 = vpop.f32.mrf.mxu0
        %v3106 = vadd.f32 %v2685, %v3105
        %v3107 = vpop.f32.mrf.mxu0
        %v3108 = vadd.f32 %v2690, %v3107
        %3109 = vmatmul.bf16.gmra.mxu0 %v2871
        %v3110 = vpop.f32.mrf.mxu0
        %v3111 = vadd.f32 %v2695, %v3110
        %v3112 = vpop.f32.mrf.mxu0
        %v3113 = vadd.f32 %v2700, %v3112
        %3114 = vmatmul.bf16.gmra.mxu0 %v2872
        %v3115 = vpop.f32.mrf.mxu0
        %v3116 = vadd.f32 %v2705, %v3115
        %v3117 = vpop.f32.mrf.mxu0
        %v3118 = vadd.f32 %v2710, %v3117
        %3119 = vmatmul.bf16.gmra.mxu0 %v2873
        %v3120 = vpop.f32.mrf.mxu0
        %v3121 = vadd.f32 %v2715, %v3120
        %v3122 = vpop.f32.mrf.mxu0
        %v3123 = vadd.f32 %v2720, %v3122
        %3124 = vmatmul.bf16.gmra.mxu0 %v2874
        %v3125 = vpop.f32.mrf.mxu0
        %v3126 = vadd.f32 %v2725, %v3125
        %v3127 = vpop.f32.mrf.mxu0
        %v3128 = vadd.f32 %v2730, %v3127
        %3129 = vmatmul.bf16.gmra.mxu0 %v2875
        %v3130 = vpop.f32.mrf.mxu0
        %v3131 = vadd.f32 %v2735, %v3130
        %v3132 = vpop.f32.mrf.mxu0
        %v3133 = vadd.f32 %v2740, %v3132
        %3134 = vmatmul.bf16.gmra.mxu0 %v2876
        %v3135 = vpop.f32.mrf.mxu0
        %v3136 = vadd.f32 %v2745, %v3135
        %v3137 = vpop.f32.mrf.mxu0
        %v3138 = vadd.f32 %v2750, %v3137
        %3139 = vmatmul.bf16.gmra.mxu0 %v2877
        %v3140 = vpop.f32.mrf.mxu0
        %v3141 = vadd.f32 %v2755, %v3140
        %v3142 = vpop.f32.mrf.mxu0
        %v3143 = vadd.f32 %v2760, %v3142
        %3144 = vmatmul.bf16.gmra.mxu0 %v2878
        %v3145 = vpop.f32.mrf.mxu0
        %v3146 = vadd.f32 %v2765, %v3145
        %v3147 = vpop.f32.mrf.mxu0
        %v3148 = vadd.f32 %v2770, %v3147
        %3149 = vmatmul.bf16.gmra.mxu0 %v2879
        %v3150 = vpop.f32.mrf.mxu0
        %v3151 = vadd.f32 %v2775, %v3150
        %v3152 = vpop.f32.mrf.mxu0
        %v3153 = vadd.f32 %v2780, %v3152
        %3154 = vmatmul.bf16.gmra.mxu0 %v2880
        %v3155 = vpop.f32.mrf.mxu0
        %v3156 = vadd.f32 %v2785, %v3155
        %v3157 = vpop.f32.mrf.mxu0
        %v3158 = vadd.f32 %v2790, %v3157
        %3159 = vmatmul.bf16.gmra.mxu0 %v2881
        %v3160 = vpop.f32.mrf.mxu0
        %v3161 = vadd.f32 %v2795, %v3160
        %v3162 = vpop.f32.mrf.mxu0
        %v3163 = vadd.f32 %v2800, %v3162
        %3164 = vdwg.mxu0
        %3165 = vmatpush.bf16.msra.mxu0 %v2597
        %3166 = vmatpush.bf16.msra.mxu0 %v2581
        %3167 = vmatpush.bf16.msra.mxu0 %v2565
        %3168 = vmatpush.bf16.msra.mxu0 %v2549
        %3169 = vmatpush.bf16.msra.mxu0 %v2533
        %3170 = vmatpush.bf16.msra.mxu0 %v2517
        %3171 = vmatpush.bf16.msra.mxu0 %v2501
        %3172 = vmatpush.bf16.msra.mxu0 %v2485
        %3173 = vmatmul.bf16.gmra.mxu0 %v2866
        %v3174 = vpop.f32.mrf.mxu0
        %v3175 = vadd.f32 %v2645, %v3174
        %v3176 = vpop.f32.mrf.mxu0
        %v3177 = vadd.f32 %v2650, %v3176
        %3178 = vmatmul.bf16.gmra.mxu0 %v2867
        %v3179 = vpop.f32.mrf.mxu0
        %v3180 = vadd.f32 %v2655, %v3179
        %v3181 = vpop.f32.mrf.mxu0
        %v3182 = vadd.f32 %v2660, %v3181
        %3183 = vmatmul.bf16.gmra.mxu0 %v2868
        %v3184 = vpop.f32.mrf.mxu0
        %v3185 = vadd.f32 %v2665, %v3184
        %v3186 = vpop.f32.mrf.mxu0
        %v3187 = vadd.f32 %v2670, %v3186
        %3188 = vmatmul.bf16.gmra.mxu0 %v2869
        %v3189 = vpop.f32.mrf.mxu0
        %v3190 = vadd.f32 %v2675, %v3189
        %v3191 = vpop.f32.mrf.mxu0
        %v3192 = vadd.f32 %v2680, %v3191
        %3193 = vmatmul.bf16.gmra.mxu0 %v2870
        %v3194 = vpop.f32.mrf.mxu0
        %v3195 = vadd.f32 %v2685, %v3194
        %v3196 = vpop.f32.mrf.mxu0
        %v3197 = vadd.f32 %v2690, %v3196
        %3198 = vmatmul.bf16.gmra.mxu0 %v2871
        %v3199 = vpop.f32.mrf.mxu0
        %v3200 = vadd.f32 %v2695, %v3199
        %v3201 = vpop.f32.mrf.mxu0
        %v3202 = vadd.f32 %v2700, %v3201
        %3203 = vmatmul.bf16.gmra.mxu0 %v2872
        %v3204 = vpop.f32.mrf.mxu0
        %v3205 = vadd.f32 %v2705, %v3204
        %v3206 = vpop.f32.mrf.mxu0
        %v3207 = vadd.f32 %v2710, %v3206
        %3208 = vmatmul.bf16.gmra.mxu0 %v2873
        %v3209 = vpop.f32.mrf.mxu0
        %v3210 = vadd.f32 %v2715, %v3209
        %v3211 = vpop.f32.mrf.mxu0
        %v3212 = vadd.f32 %v2720, %v3211
        %3213 = vmatmul.bf16.gmra.mxu0 %v2874
        %v3214 = vpop.f32.mrf.mxu0
        %v3215 = vadd.f32 %v2725, %v3214
        %v3216 = vpop.f32.mrf.mxu0
        %v3217 = vadd.f32 %v2730, %v3216
        %3218 = vmatmul.bf16.gmra.mxu0 %v2875
        %v3219 = vpop.f32.mrf.mxu0
        %v3220 = vadd.f32 %v2735, %v3219
        %v3221 = vpop.f32.mrf.mxu0
        %v3222 = vadd.f32 %v2740, %v3221
        %3223 = vmatmul.bf16.gmra.mxu0 %v2876
        %v3224 = vpop.f32.mrf.mxu0
        %v3225 = vadd.f32 %v2745, %v3224
        %v3226 = vpop.f32.mrf.mxu0
        %v3227 = vadd.f32 %v2750, %v3226
        %3228 = vmatmul.bf16.gmra.mxu0 %v2877
        %v3229 = vpop.f32.mrf.mxu0
        %v3230 = vadd.f32 %v2755, %v3229
        %v3231 = vpop.f32.mrf.mxu0
        %v3232 = vadd.f32 %v2760, %v3231
        %3233 = vmatmul.bf16.gmra.mxu0 %v2878
        %v3234 = vpop.f32.mrf.mxu0
        %v3235 = vadd.f32 %v2765, %v3234
        %v3236 = vpop.f32.mrf.mxu0
        %v3237 = vadd.f32 %v2770, %v3236
        %3238 = vmatmul.bf16.gmra.mxu0 %v2879
        %v3239 = vpop.f32.mrf.mxu0
        %v3240 = vadd.f32 %v2775, %v3239
        %v3241 = vpop.f32.mrf.mxu0
        %v3242 = vadd.f32 %v2780, %v3241
        %3243 = vmatmul.bf16.gmra.mxu0 %v2880
        %v3244 = vpop.f32.mrf.mxu0
        %v3245 = vadd.f32 %v2785, %v3244
        %v3246 = vpop.f32.mrf.mxu0
        %v3247 = vadd.f32 %v2790, %v3246
        %3248 = vmatmul.bf16.gmra.mxu0 %v2881
        %v3249 = vpop.f32.mrf.mxu0
        %v3250 = vadd.f32 %v2795, %v3249
        %v3251 = vpop.f32.mrf.mxu0
        %v3252 = vadd.f32 %v2800, %v3251
        %3253 = vdwg.mxu0
        %3254 = vmatpush.bf16.msra.mxu0 %v2598
        %3255 = vmatpush.bf16.msra.mxu0 %v2582
        %3256 = vmatpush.bf16.msra.mxu0 %v2566
        %3257 = vmatpush.bf16.msra.mxu0 %v2550
        %3258 = vmatpush.bf16.msra.mxu0 %v2534
        %3259 = vmatpush.bf16.msra.mxu0 %v2518
        %3260 = vmatpush.bf16.msra.mxu0 %v2502
        %3261 = vmatpush.bf16.msra.mxu0 %v2486
        %3262 = vmatmul.bf16.gmra.mxu0 %v2866
        %v3263 = vpop.f32.mrf.mxu0
        %v3264 = vadd.f32 %v2645, %v3263
        %v3265 = vpop.f32.mrf.mxu0
        %v3266 = vadd.f32 %v2650, %v3265
        %3267 = vmatmul.bf16.gmra.mxu0 %v2867
        %v3268 = vpop.f32.mrf.mxu0
        %v3269 = vadd.f32 %v2655, %v3268
        %v3270 = vpop.f32.mrf.mxu0
        %v3271 = vadd.f32 %v2660, %v3270
        %3272 = vmatmul.bf16.gmra.mxu0 %v2868
        %v3273 = vpop.f32.mrf.mxu0
        %v3274 = vadd.f32 %v2665, %v3273
        %v3275 = vpop.f32.mrf.mxu0
        %v3276 = vadd.f32 %v2670, %v3275
        %3277 = vmatmul.bf16.gmra.mxu0 %v2869
        %v3278 = vpop.f32.mrf.mxu0
        %v3279 = vadd.f32 %v2675, %v3278
        %v3280 = vpop.f32.mrf.mxu0
        %v3281 = vadd.f32 %v2680, %v3280
        %3282 = vmatmul.bf16.gmra.mxu0 %v2870
        %v3283 = vpop.f32.mrf.mxu0
        %v3284 = vadd.f32 %v2685, %v3283
        %v3285 = vpop.f32.mrf.mxu0
        %v3286 = vadd.f32 %v2690, %v3285
        %3287 = vmatmul.bf16.gmra.mxu0 %v2871
        %v3288 = vpop.f32.mrf.mxu0
        %v3289 = vadd.f32 %v2695, %v3288
        %v3290 = vpop.f32.mrf.mxu0
        %v3291 = vadd.f32 %v2700, %v3290
        %3292 = vmatmul.bf16.gmra.mxu0 %v2872
        %v3293 = vpop.f32.mrf.mxu0
        %v3294 = vadd.f32 %v2705, %v3293
        %v3295 = vpop.f32.mrf.mxu0
        %v3296 = vadd.f32 %v2710, %v3295
        %3297 = vmatmul.bf16.gmra.mxu0 %v2873
        %v3298 = vpop.f32.mrf.mxu0
        %v3299 = vadd.f32 %v2715, %v3298
        %v3300 = vpop.f32.mrf.mxu0
        %v3301 = vadd.f32 %v2720, %v3300
        %3302 = vmatmul.bf16.gmra.mxu0 %v2874
        %v3303 = vpop.f32.mrf.mxu0
        %v3304 = vadd.f32 %v2725, %v3303
        %v3305 = vpop.f32.mrf.mxu0
        %v3306 = vadd.f32 %v2730, %v3305
        %3307 = vmatmul.bf16.gmra.mxu0 %v2875
        %v3308 = vpop.f32.mrf.mxu0
        %v3309 = vadd.f32 %v2735, %v3308
        %v3310 = vpop.f32.mrf.mxu0
        %v3311 = vadd.f32 %v2740, %v3310
        %3312 = vmatmul.bf16.gmra.mxu0 %v2876
        %v3313 = vpop.f32.mrf.mxu0
        %v3314 = vadd.f32 %v2745, %v3313
        %v3315 = vpop.f32.mrf.mxu0
        %v3316 = vadd.f32 %v2750, %v3315
        %3317 = vmatmul.bf16.gmra.mxu0 %v2877
        %v3318 = vpop.f32.mrf.mxu0
        %v3319 = vadd.f32 %v2755, %v3318
        %v3320 = vpop.f32.mrf.mxu0
        %v3321 = vadd.f32 %v2760, %v3320
        %3322 = vmatmul.bf16.gmra.mxu0 %v2878
        %v3323 = vpop.f32.mrf.mxu0
        %v3324 = vadd.f32 %v2765, %v3323
        %v3325 = vpop.f32.mrf.mxu0
        %v3326 = vadd.f32 %v2770, %v3325
        %3327 = vmatmul.bf16.gmra.mxu0 %v2879
        %v3328 = vpop.f32.mrf.mxu0
        %v3329 = vadd.f32 %v2775, %v3328
        %v3330 = vpop.f32.mrf.mxu0
        %v3331 = vadd.f32 %v2780, %v3330
        %3332 = vmatmul.bf16.gmra.mxu0 %v2880
        %v3333 = vpop.f32.mrf.mxu0
        %v3334 = vadd.f32 %v2785, %v3333
        %v3335 = vpop.f32.mrf.mxu0
        %v3336 = vadd.f32 %v2790, %v3335
        %3337 = vmatmul.bf16.gmra.mxu0 %v2881
        %v3338 = vpop.f32.mrf.mxu0
        %v3339 = vadd.f32 %v2795, %v3338
        %v3340 = vpop.f32.mrf.mxu0
        %v3341 = vadd.f32 %v2800, %v3340
        %3342 = vdwg.mxu0
        %3343 = vmatpush.bf16.msra.mxu0 %v2599
        %3344 = vmatpush.bf16.msra.mxu0 %v2583
        %3345 = vmatpush.bf16.msra.mxu0 %v2567
        %3346 = vmatpush.bf16.msra.mxu0 %v2551
        %3347 = vmatpush.bf16.msra.mxu0 %v2535
        %3348 = vmatpush.bf16.msra.mxu0 %v2519
        %3349 = vmatpush.bf16.msra.mxu0 %v2503
        %3350 = vmatpush.bf16.msra.mxu0 %v2487
        %3351 = vmatmul.bf16.gmra.mxu0 %v2866
        %v3352 = vpop.f32.mrf.mxu0
        %v3353 = vadd.f32 %v2645, %v3352
        %v3354 = vpop.f32.mrf.mxu0
        %v3355 = vadd.f32 %v2650, %v3354
        %3356 = vmatmul.bf16.gmra.mxu0 %v2867
        %v3357 = vpop.f32.mrf.mxu0
        %v3358 = vadd.f32 %v2655, %v3357
        %v3359 = vpop.f32.mrf.mxu0
        %v3360 = vadd.f32 %v2660, %v3359
        %3361 = vmatmul.bf16.gmra.mxu0 %v2868
        %v3362 = vpop.f32.mrf.mxu0
        %v3363 = vadd.f32 %v2665, %v3362
        %v3364 = vpop.f32.mrf.mxu0
        %v3365 = vadd.f32 %v2670, %v3364
        %3366 = vmatmul.bf16.gmra.mxu0 %v2869
        %v3367 = vpop.f32.mrf.mxu0
        %v3368 = vadd.f32 %v2675, %v3367
        %v3369 = vpop.f32.mrf.mxu0
        %v3370 = vadd.f32 %v2680, %v3369
        %3371 = vmatmul.bf16.gmra.mxu0 %v2870
        %v3372 = vpop.f32.mrf.mxu0
        %v3373 = vadd.f32 %v2685, %v3372
        %v3374 = vpop.f32.mrf.mxu0
        %v3375 = vadd.f32 %v2690, %v3374
        %3376 = vmatmul.bf16.gmra.mxu0 %v2871
        %v3377 = vpop.f32.mrf.mxu0
        %v3378 = vadd.f32 %v2695, %v3377
        %v3379 = vpop.f32.mrf.mxu0
        %v3380 = vadd.f32 %v2700, %v3379
        %3381 = vmatmul.bf16.gmra.mxu0 %v2872
        %v3382 = vpop.f32.mrf.mxu0
        %v3383 = vadd.f32 %v2705, %v3382
        %v3384 = vpop.f32.mrf.mxu0
        %v3385 = vadd.f32 %v2710, %v3384
        %3386 = vmatmul.bf16.gmra.mxu0 %v2873
        %v3387 = vpop.f32.mrf.mxu0
        %v3388 = vadd.f32 %v2715, %v3387
        %v3389 = vpop.f32.mrf.mxu0
        %v3390 = vadd.f32 %v2720, %v3389
        %3391 = vmatmul.bf16.gmra.mxu0 %v2874
        %v3392 = vpop.f32.mrf.mxu0
        %v3393 = vadd.f32 %v2725, %v3392
        %v3394 = vpop.f32.mrf.mxu0
        %v3395 = vadd.f32 %v2730, %v3394
        %3396 = vmatmul.bf16.gmra.mxu0 %v2875
        %v3397 = vpop.f32.mrf.mxu0
        %v3398 = vadd.f32 %v2735, %v3397
        %v3399 = vpop.f32.mrf.mxu0
        %v3400 = vadd.f32 %v2740, %v3399
        %3401 = vmatmul.bf16.gmra.mxu0 %v2876
        %v3402 = vpop.f32.mrf.mxu0
        %v3403 = vadd.f32 %v2745, %v3402
        %v3404 = vpop.f32.mrf.mxu0
        %v3405 = vadd.f32 %v2750, %v3404
        %3406 = vmatmul.bf16.gmra.mxu0 %v2877
        %v3407 = vpop.f32.mrf.mxu0
        %v3408 = vadd.f32 %v2755, %v3407
        %v3409 = vpop.f32.mrf.mxu0
        %v3410 = vadd.f32 %v2760, %v3409
        %3411 = vmatmul.bf16.gmra.mxu0 %v2878
        %v3412 = vpop.f32.mrf.mxu0
        %v3413 = vadd.f32 %v2765, %v3412
        %v3414 = vpop.f32.mrf.mxu0
        %v3415 = vadd.f32 %v2770, %v3414
        %3416 = vmatmul.bf16.gmra.mxu0 %v2879
        %v3417 = vpop.f32.mrf.mxu0
        %v3418 = vadd.f32 %v2775, %v3417
        %v3419 = vpop.f32.mrf.mxu0
        %v3420 = vadd.f32 %v2780, %v3419
        %3421 = vmatmul.bf16.gmra.mxu0 %v2880
        %v3422 = vpop.f32.mrf.mxu0
        %v3423 = vadd.f32 %v2785, %v3422
        %v3424 = vpop.f32.mrf.mxu0
        %v3425 = vadd.f32 %v2790, %v3424
        %3426 = vmatmul.bf16.gmra.mxu0 %v2881
        %v3427 = vpop.f32.mrf.mxu0
        %v3428 = vadd.f32 %v2795, %v3427
        %v3429 = vpop.f32.mrf.mxu0
        %v3430 = vadd.f32 %v2800, %v3429
        %3431 = vdwg.mxu0
        %3432 = vmatpush.bf16.msra.mxu0 %v2600
        %3433 = vmatpush.bf16.msra.mxu0 %v2584
        %3434 = vmatpush.bf16.msra.mxu0 %v2568
        %3435 = vmatpush.bf16.msra.mxu0 %v2552
        %3436 = vmatpush.bf16.msra.mxu0 %v2536
        %3437 = vmatpush.bf16.msra.mxu0 %v2520
        %3438 = vmatpush.bf16.msra.mxu0 %v2504
        %3439 = vmatpush.bf16.msra.mxu0 %v2488
        %3440 = vmatmul.bf16.gmra.mxu0 %v2866
        %v3441 = vpop.f32.mrf.mxu0
        %v3442 = vadd.f32 %v2645, %v3441
        %v3443 = vpop.f32.mrf.mxu0
        %v3444 = vadd.f32 %v2650, %v3443
        %3445 = vmatmul.bf16.gmra.mxu0 %v2867
        %v3446 = vpop.f32.mrf.mxu0
        %v3447 = vadd.f32 %v2655, %v3446
        %v3448 = vpop.f32.mrf.mxu0
        %v3449 = vadd.f32 %v2660, %v3448
        %3450 = vmatmul.bf16.gmra.mxu0 %v2868
        %v3451 = vpop.f32.mrf.mxu0
        %v3452 = vadd.f32 %v2665, %v3451
        %v3453 = vpop.f32.mrf.mxu0
        %v3454 = vadd.f32 %v2670, %v3453
        %3455 = vmatmul.bf16.gmra.mxu0 %v2869
        %v3456 = vpop.f32.mrf.mxu0
        %v3457 = vadd.f32 %v2675, %v3456
        %v3458 = vpop.f32.mrf.mxu0
        %v3459 = vadd.f32 %v2680, %v3458
        %3460 = vmatmul.bf16.gmra.mxu0 %v2870
        %v3461 = vpop.f32.mrf.mxu0
        %v3462 = vadd.f32 %v2685, %v3461
        %v3463 = vpop.f32.mrf.mxu0
        %v3464 = vadd.f32 %v2690, %v3463
        %3465 = vmatmul.bf16.gmra.mxu0 %v2871
        %v3466 = vpop.f32.mrf.mxu0
        %v3467 = vadd.f32 %v2695, %v3466
        %v3468 = vpop.f32.mrf.mxu0
        %v3469 = vadd.f32 %v2700, %v3468
        %3470 = vmatmul.bf16.gmra.mxu0 %v2872
        %v3471 = vpop.f32.mrf.mxu0
        %v3472 = vadd.f32 %v2705, %v3471
        %v3473 = vpop.f32.mrf.mxu0
        %v3474 = vadd.f32 %v2710, %v3473
        %3475 = vmatmul.bf16.gmra.mxu0 %v2873
        %v3476 = vpop.f32.mrf.mxu0
        %v3477 = vadd.f32 %v2715, %v3476
        %v3478 = vpop.f32.mrf.mxu0
        %v3479 = vadd.f32 %v2720, %v3478
        %3480 = vmatmul.bf16.gmra.mxu0 %v2874
        %v3481 = vpop.f32.mrf.mxu0
        %v3482 = vadd.f32 %v2725, %v3481
        %v3483 = vpop.f32.mrf.mxu0
        %v3484 = vadd.f32 %v2730, %v3483
        %3485 = vmatmul.bf16.gmra.mxu0 %v2875
        %v3486 = vpop.f32.mrf.mxu0
        %v3487 = vadd.f32 %v2735, %v3486
        %v3488 = vpop.f32.mrf.mxu0
        %v3489 = vadd.f32 %v2740, %v3488
        %3490 = vmatmul.bf16.gmra.mxu0 %v2876
        %v3491 = vpop.f32.mrf.mxu0
        %v3492 = vadd.f32 %v2745, %v3491
        %v3493 = vpop.f32.mrf.mxu0
        %v3494 = vadd.f32 %v2750, %v3493
        %3495 = vmatmul.bf16.gmra.mxu0 %v2877
        %v3496 = vpop.f32.mrf.mxu0
        %v3497 = vadd.f32 %v2755, %v3496
        %v3498 = vpop.f32.mrf.mxu0
        %v3499 = vadd.f32 %v2760, %v3498
        %3500 = vmatmul.bf16.gmra.mxu0 %v2878
        %v3501 = vpop.f32.mrf.mxu0
        %v3502 = vadd.f32 %v2765, %v3501
        %v3503 = vpop.f32.mrf.mxu0
        %v3504 = vadd.f32 %v2770, %v3503
        %3505 = vmatmul.bf16.gmra.mxu0 %v2879
        %v3506 = vpop.f32.mrf.mxu0
        %v3507 = vadd.f32 %v2775, %v3506
        %v3508 = vpop.f32.mrf.mxu0
        %v3509 = vadd.f32 %v2780, %v3508
        %3510 = vmatmul.bf16.gmra.mxu0 %v2880
        %v3511 = vpop.f32.mrf.mxu0
        %v3512 = vadd.f32 %v2785, %v3511
        %v3513 = vpop.f32.mrf.mxu0
        %v3514 = vadd.f32 %v2790, %v3513
        %3515 = vmatmul.bf16.gmra.mxu0 %v2881
        %v3516 = vpop.f32.mrf.mxu0
        %v3517 = vadd.f32 %v2795, %v3516
        %v3518 = vpop.f32.mrf.mxu0
        %v3519 = vadd.f32 %v2800, %v3518
        %3520 = vdwg.mxu0
        %3521 = vmatpush.bf16.msra.mxu0 %v2601
        %3522 = vmatpush.bf16.msra.mxu0 %v2585
        %3523 = vmatpush.bf16.msra.mxu0 %v2569
        %3524 = vmatpush.bf16.msra.mxu0 %v2553
        %3525 = vmatpush.bf16.msra.mxu0 %v2537
        %3526 = vmatpush.bf16.msra.mxu0 %v2521
        %3527 = vmatpush.bf16.msra.mxu0 %v2505
        %3528 = vmatpush.bf16.msra.mxu0 %v2489
        %3529 = vmatmul.bf16.gmra.mxu0 %v2866
        %v3530 = vpop.f32.mrf.mxu0
        %v3531 = vadd.f32 %v2645, %v3530
        %v3532 = vpop.f32.mrf.mxu0
        %v3533 = vadd.f32 %v2650, %v3532
        %3534 = vmatmul.bf16.gmra.mxu0 %v2867
        %v3535 = vpop.f32.mrf.mxu0
        %v3536 = vadd.f32 %v2655, %v3535
        %v3537 = vpop.f32.mrf.mxu0
        %v3538 = vadd.f32 %v2660, %v3537
        %3539 = vmatmul.bf16.gmra.mxu0 %v2868
        %v3540 = vpop.f32.mrf.mxu0
        %v3541 = vadd.f32 %v2665, %v3540
        %v3542 = vpop.f32.mrf.mxu0
        %v3543 = vadd.f32 %v2670, %v3542
        %3544 = vmatmul.bf16.gmra.mxu0 %v2869
        %v3545 = vpop.f32.mrf.mxu0
        %v3546 = vadd.f32 %v2675, %v3545
        %v3547 = vpop.f32.mrf.mxu0
        %v3548 = vadd.f32 %v2680, %v3547
        %3549 = vmatmul.bf16.gmra.mxu0 %v2870
        %v3550 = vpop.f32.mrf.mxu0
        %v3551 = vadd.f32 %v2685, %v3550
        %v3552 = vpop.f32.mrf.mxu0
        %v3553 = vadd.f32 %v2690, %v3552
        %3554 = vmatmul.bf16.gmra.mxu0 %v2871
        %v3555 = vpop.f32.mrf.mxu0
        %v3556 = vadd.f32 %v2695, %v3555
        %v3557 = vpop.f32.mrf.mxu0
        %v3558 = vadd.f32 %v2700, %v3557
        %3559 = vmatmul.bf16.gmra.mxu0 %v2872
        %v3560 = vpop.f32.mrf.mxu0
        %v3561 = vadd.f32 %v2705, %v3560
        %v3562 = vpop.f32.mrf.mxu0
        %v3563 = vadd.f32 %v2710, %v3562
        %3564 = vmatmul.bf16.gmra.mxu0 %v2873
        %v3565 = vpop.f32.mrf.mxu0
        %v3566 = vadd.f32 %v2715, %v3565
        %v3567 = vpop.f32.mrf.mxu0
        %v3568 = vadd.f32 %v2720, %v3567
        %3569 = vmatmul.bf16.gmra.mxu0 %v2874
        %v3570 = vpop.f32.mrf.mxu0
        %v3571 = vadd.f32 %v2725, %v3570
        %v3572 = vpop.f32.mrf.mxu0
        %v3573 = vadd.f32 %v2730, %v3572
        %3574 = vmatmul.bf16.gmra.mxu0 %v2875
        %v3575 = vpop.f32.mrf.mxu0
        %v3576 = vadd.f32 %v2735, %v3575
        %v3577 = vpop.f32.mrf.mxu0
        %v3578 = vadd.f32 %v2740, %v3577
        %3579 = vmatmul.bf16.gmra.mxu0 %v2876
        %v3580 = vpop.f32.mrf.mxu0
        %v3581 = vadd.f32 %v2745, %v3580
        %v3582 = vpop.f32.mrf.mxu0
        %v3583 = vadd.f32 %v2750, %v3582
        %3584 = vmatmul.bf16.gmra.mxu0 %v2877
        %v3585 = vpop.f32.mrf.mxu0
        %v3586 = vadd.f32 %v2755, %v3585
        %v3587 = vpop.f32.mrf.mxu0
        %v3588 = vadd.f32 %v2760, %v3587
        %3589 = vmatmul.bf16.gmra.mxu0 %v2878
        %v3590 = vpop.f32.mrf.mxu0
        %v3591 = vadd.f32 %v2765, %v3590
        %v3592 = vpop.f32.mrf.mxu0
        %v3593 = vadd.f32 %v2770, %v3592
        %3594 = vmatmul.bf16.gmra.mxu0 %v2879
        %v3595 = vpop.f32.mrf.mxu0
        %v3596 = vadd.f32 %v2775, %v3595
        %v3597 = vpop.f32.mrf.mxu0
        %v3598 = vadd.f32 %v2780, %v3597
        %3599 = vmatmul.bf16.gmra.mxu0 %v2880
        %v3600 = vpop.f32.mrf.mxu0
        %v3601 = vadd.f32 %v2785, %v3600
        %v3602 = vpop.f32.mrf.mxu0
        %v3603 = vadd.f32 %v2790, %v3602
        %3604 = vmatmul.bf16.gmra.mxu0 %v2881
        %v3605 = vpop.f32.mrf.mxu0
        %v3606 = vadd.f32 %v2795, %v3605
        %v3607 = vpop.f32.mrf.mxu0
        %v3608 = vadd.f32 %v2800, %v3607
        %3609 = vdwg.mxu0
        %3610 = vmatpush.bf16.msra.mxu0 %v2602
        %3611 = vmatpush.bf16.msra.mxu0 %v2586
        %3612 = vmatpush.bf16.msra.mxu0 %v2570
        %3613 = vmatpush.bf16.msra.mxu0 %v2554
        %3614 = vmatpush.bf16.msra.mxu0 %v2538
        %3615 = vmatpush.bf16.msra.mxu0 %v2522
        %3616 = vmatpush.bf16.msra.mxu0 %v2506
        %3617 = vmatpush.bf16.msra.mxu0 %v2490
        %3618 = vmatmul.bf16.gmra.mxu0 %v2866
        %v3619 = vpop.f32.mrf.mxu0
        %v3620 = vadd.f32 %v2645, %v3619
        %v3621 = vpop.f32.mrf.mxu0
        %v3622 = vadd.f32 %v2650, %v3621
        %3623 = vmatmul.bf16.gmra.mxu0 %v2867
        %v3624 = vpop.f32.mrf.mxu0
        %v3625 = vadd.f32 %v2655, %v3624
        %v3626 = vpop.f32.mrf.mxu0
        %v3627 = vadd.f32 %v2660, %v3626
        %3628 = vmatmul.bf16.gmra.mxu0 %v2868
        %v3629 = vpop.f32.mrf.mxu0
        %v3630 = vadd.f32 %v2665, %v3629
        %v3631 = vpop.f32.mrf.mxu0
        %v3632 = vadd.f32 %v2670, %v3631
        %3633 = vmatmul.bf16.gmra.mxu0 %v2869
        %v3634 = vpop.f32.mrf.mxu0
        %v3635 = vadd.f32 %v2675, %v3634
        %v3636 = vpop.f32.mrf.mxu0
        %v3637 = vadd.f32 %v2680, %v3636
        %3638 = vmatmul.bf16.gmra.mxu0 %v2870
        %v3639 = vpop.f32.mrf.mxu0
        %v3640 = vadd.f32 %v2685, %v3639
        %v3641 = vpop.f32.mrf.mxu0
        %v3642 = vadd.f32 %v2690, %v3641
        %3643 = vmatmul.bf16.gmra.mxu0 %v2871
        %v3644 = vpop.f32.mrf.mxu0
        %v3645 = vadd.f32 %v2695, %v3644
        %v3646 = vpop.f32.mrf.mxu0
        %v3647 = vadd.f32 %v2700, %v3646
        %3648 = vmatmul.bf16.gmra.mxu0 %v2872
        %v3649 = vpop.f32.mrf.mxu0
        %v3650 = vadd.f32 %v2705, %v3649
        %v3651 = vpop.f32.mrf.mxu0
        %v3652 = vadd.f32 %v2710, %v3651
        %3653 = vmatmul.bf16.gmra.mxu0 %v2873
        %v3654 = vpop.f32.mrf.mxu0
        %v3655 = vadd.f32 %v2715, %v3654
        %v3656 = vpop.f32.mrf.mxu0
        %v3657 = vadd.f32 %v2720, %v3656
        %3658 = vmatmul.bf16.gmra.mxu0 %v2874
        %v3659 = vpop.f32.mrf.mxu0
        %v3660 = vadd.f32 %v2725, %v3659
        %v3661 = vpop.f32.mrf.mxu0
        %v3662 = vadd.f32 %v2730, %v3661
        %3663 = vmatmul.bf16.gmra.mxu0 %v2875
        %v3664 = vpop.f32.mrf.mxu0
        %v3665 = vadd.f32 %v2735, %v3664
        %v3666 = vpop.f32.mrf.mxu0
        %v3667 = vadd.f32 %v2740, %v3666
        %3668 = vmatmul.bf16.gmra.mxu0 %v2876
        %v3669 = vpop.f32.mrf.mxu0
        %v3670 = vadd.f32 %v2745, %v3669
        %v3671 = vpop.f32.mrf.mxu0
        %v3672 = vadd.f32 %v2750, %v3671
        %3673 = vmatmul.bf16.gmra.mxu0 %v2877
        %v3674 = vpop.f32.mrf.mxu0
        %v3675 = vadd.f32 %v2755, %v3674
        %v3676 = vpop.f32.mrf.mxu0
        %v3677 = vadd.f32 %v2760, %v3676
        %3678 = vmatmul.bf16.gmra.mxu0 %v2878
        %v3679 = vpop.f32.mrf.mxu0
        %v3680 = vadd.f32 %v2765, %v3679
        %v3681 = vpop.f32.mrf.mxu0
        %v3682 = vadd.f32 %v2770, %v3681
        %3683 = vmatmul.bf16.gmra.mxu0 %v2879
        %v3684 = vpop.f32.mrf.mxu0
        %v3685 = vadd.f32 %v2775, %v3684
        %v3686 = vpop.f32.mrf.mxu0
        %v3687 = vadd.f32 %v2780, %v3686
        %3688 = vmatmul.bf16.gmra.mxu0 %v2880
        %v3689 = vpop.f32.mrf.mxu0
        %v3690 = vadd.f32 %v2785, %v3689
        %v3691 = vpop.f32.mrf.mxu0
        %v3692 = vadd.f32 %v2790, %v3691
        %3693 = vmatmul.bf16.gmra.mxu0 %v2881
        %v3694 = vpop.f32.mrf.mxu0
        %v3695 = vadd.f32 %v2795, %v3694
        %v3696 = vpop.f32.mrf.mxu0
        %v3697 = vadd.f32 %v2800, %v3696
        %3698 = vdwg.mxu0
        %3699 = vmatpush.bf16.msra.mxu0 %v2603
        %3700 = vmatpush.bf16.msra.mxu0 %v2587
        %3701 = vmatpush.bf16.msra.mxu0 %v2571
        %3702 = vmatpush.bf16.msra.mxu0 %v2555
        %3703 = vmatpush.bf16.msra.mxu0 %v2539
        %3704 = vmatpush.bf16.msra.mxu0 %v2523
        %3705 = vmatpush.bf16.msra.mxu0 %v2507
        %3706 = vmatpush.bf16.msra.mxu0 %v2491
        %3707 = vmatmul.bf16.gmra.mxu0 %v2866
        %v3708 = vpop.f32.mrf.mxu0
        %v3709 = vadd.f32 %v2645, %v3708
        %v3710 = vpop.f32.mrf.mxu0
        %v3711 = vadd.f32 %v2650, %v3710
        %3712 = vmatmul.bf16.gmra.mxu0 %v2867
        %v3713 = vpop.f32.mrf.mxu0
        %v3714 = vadd.f32 %v2655, %v3713
        %v3715 = vpop.f32.mrf.mxu0
        %v3716 = vadd.f32 %v2660, %v3715
        %3717 = vmatmul.bf16.gmra.mxu0 %v2868
        %v3718 = vpop.f32.mrf.mxu0
        %v3719 = vadd.f32 %v2665, %v3718
        %v3720 = vpop.f32.mrf.mxu0
        %v3721 = vadd.f32 %v2670, %v3720
        %3722 = vmatmul.bf16.gmra.mxu0 %v2869
        %v3723 = vpop.f32.mrf.mxu0
        %v3724 = vadd.f32 %v2675, %v3723
        %v3725 = vpop.f32.mrf.mxu0
        %v3726 = vadd.f32 %v2680, %v3725
        %3727 = vmatmul.bf16.gmra.mxu0 %v2870
        %v3728 = vpop.f32.mrf.mxu0
        %v3729 = vadd.f32 %v2685, %v3728
        %v3730 = vpop.f32.mrf.mxu0
        %v3731 = vadd.f32 %v2690, %v3730
        %3732 = vmatmul.bf16.gmra.mxu0 %v2871
        %v3733 = vpop.f32.mrf.mxu0
        %v3734 = vadd.f32 %v2695, %v3733
        %v3735 = vpop.f32.mrf.mxu0
        %v3736 = vadd.f32 %v2700, %v3735
        %3737 = vmatmul.bf16.gmra.mxu0 %v2872
        %v3738 = vpop.f32.mrf.mxu0
        %v3739 = vadd.f32 %v2705, %v3738
        %v3740 = vpop.f32.mrf.mxu0
        %v3741 = vadd.f32 %v2710, %v3740
        %3742 = vmatmul.bf16.gmra.mxu0 %v2873
        %v3743 = vpop.f32.mrf.mxu0
        %v3744 = vadd.f32 %v2715, %v3743
        %v3745 = vpop.f32.mrf.mxu0
        %v3746 = vadd.f32 %v2720, %v3745
        %3747 = vmatmul.bf16.gmra.mxu0 %v2874
        %v3748 = vpop.f32.mrf.mxu0
        %v3749 = vadd.f32 %v2725, %v3748
        %v3750 = vpop.f32.mrf.mxu0
        %v3751 = vadd.f32 %v2730, %v3750
        %3752 = vmatmul.bf16.gmra.mxu0 %v2875
        %v3753 = vpop.f32.mrf.mxu0
        %v3754 = vadd.f32 %v2735, %v3753
        %v3755 = vpop.f32.mrf.mxu0
        %v3756 = vadd.f32 %v2740, %v3755
        %3757 = vmatmul.bf16.gmra.mxu0 %v2876
        %v3758 = vpop.f32.mrf.mxu0
        %v3759 = vadd.f32 %v2745, %v3758
        %v3760 = vpop.f32.mrf.mxu0
        %v3761 = vadd.f32 %v2750, %v3760
        %3762 = vmatmul.bf16.gmra.mxu0 %v2877
        %v3763 = vpop.f32.mrf.mxu0
        %v3764 = vadd.f32 %v2755, %v3763
        %v3765 = vpop.f32.mrf.mxu0
        %v3766 = vadd.f32 %v2760, %v3765
        %3767 = vmatmul.bf16.gmra.mxu0 %v2878
        %v3768 = vpop.f32.mrf.mxu0
        %v3769 = vadd.f32 %v2765, %v3768
        %v3770 = vpop.f32.mrf.mxu0
        %v3771 = vadd.f32 %v2770, %v3770
        %3772 = vmatmul.bf16.gmra.mxu0 %v2879
        %v3773 = vpop.f32.mrf.mxu0
        %v3774 = vadd.f32 %v2775, %v3773
        %v3775 = vpop.f32.mrf.mxu0
        %v3776 = vadd.f32 %v2780, %v3775
        %3777 = vmatmul.bf16.gmra.mxu0 %v2880
        %v3778 = vpop.f32.mrf.mxu0
        %v3779 = vadd.f32 %v2785, %v3778
        %v3780 = vpop.f32.mrf.mxu0
        %v3781 = vadd.f32 %v2790, %v3780
        %3782 = vmatmul.bf16.gmra.mxu0 %v2881
        %v3783 = vpop.f32.mrf.mxu0
        %v3784 = vadd.f32 %v2795, %v3783
        %v3785 = vpop.f32.mrf.mxu0
        %v3786 = vadd.f32 %v2800, %v3785
        %3787 = vdwg.mxu0
        %3788 = vmatpush.bf16.msra.mxu0 %v2604
        %3789 = vmatpush.bf16.msra.mxu0 %v2588
        %3790 = vmatpush.bf16.msra.mxu0 %v2572
        %3791 = vmatpush.bf16.msra.mxu0 %v2556
        %3792 = vmatpush.bf16.msra.mxu0 %v2540
        %3793 = vmatpush.bf16.msra.mxu0 %v2524
        %3794 = vmatpush.bf16.msra.mxu0 %v2508
        %3795 = vmatpush.bf16.msra.mxu0 %v2492
        %3796 = vmatmul.bf16.gmra.mxu0 %v2866
        %v3797 = vpop.f32.mrf.mxu0
        %v3798 = vadd.f32 %v2645, %v3797
        %v3799 = vpop.f32.mrf.mxu0
        %v3800 = vadd.f32 %v2650, %v3799
        %3801 = vmatmul.bf16.gmra.mxu0 %v2867
        %v3802 = vpop.f32.mrf.mxu0
        %v3803 = vadd.f32 %v2655, %v3802
        %v3804 = vpop.f32.mrf.mxu0
        %v3805 = vadd.f32 %v2660, %v3804
        %3806 = vmatmul.bf16.gmra.mxu0 %v2868
        %v3807 = vpop.f32.mrf.mxu0
        %v3808 = vadd.f32 %v2665, %v3807
        %v3809 = vpop.f32.mrf.mxu0
        %v3810 = vadd.f32 %v2670, %v3809
        %3811 = vmatmul.bf16.gmra.mxu0 %v2869
        %v3812 = vpop.f32.mrf.mxu0
        %v3813 = vadd.f32 %v2675, %v3812
        %v3814 = vpop.f32.mrf.mxu0
        %v3815 = vadd.f32 %v2680, %v3814
        %3816 = vmatmul.bf16.gmra.mxu0 %v2870
        %v3817 = vpop.f32.mrf.mxu0
        %v3818 = vadd.f32 %v2685, %v3817
        %v3819 = vpop.f32.mrf.mxu0
        %v3820 = vadd.f32 %v2690, %v3819
        %3821 = vmatmul.bf16.gmra.mxu0 %v2871
        %v3822 = vpop.f32.mrf.mxu0
        %v3823 = vadd.f32 %v2695, %v3822
        %v3824 = vpop.f32.mrf.mxu0
        %v3825 = vadd.f32 %v2700, %v3824
        %3826 = vmatmul.bf16.gmra.mxu0 %v2872
        %v3827 = vpop.f32.mrf.mxu0
        %v3828 = vadd.f32 %v2705, %v3827
        %v3829 = vpop.f32.mrf.mxu0
        %v3830 = vadd.f32 %v2710, %v3829
        %3831 = vmatmul.bf16.gmra.mxu0 %v2873
        %v3832 = vpop.f32.mrf.mxu0
        %v3833 = vadd.f32 %v2715, %v3832
        %v3834 = vpop.f32.mrf.mxu0
        %v3835 = vadd.f32 %v2720, %v3834
        %3836 = vmatmul.bf16.gmra.mxu0 %v2874
        %v3837 = vpop.f32.mrf.mxu0
        %v3838 = vadd.f32 %v2725, %v3837
        %v3839 = vpop.f32.mrf.mxu0
        %v3840 = vadd.f32 %v2730, %v3839
        %3841 = vmatmul.bf16.gmra.mxu0 %v2875
        %v3842 = vpop.f32.mrf.mxu0
        %v3843 = vadd.f32 %v2735, %v3842
        %v3844 = vpop.f32.mrf.mxu0
        %v3845 = vadd.f32 %v2740, %v3844
        %3846 = vmatmul.bf16.gmra.mxu0 %v2876
        %v3847 = vpop.f32.mrf.mxu0
        %v3848 = vadd.f32 %v2745, %v3847
        %v3849 = vpop.f32.mrf.mxu0
        %v3850 = vadd.f32 %v2750, %v3849
        %3851 = vmatmul.bf16.gmra.mxu0 %v2877
        %v3852 = vpop.f32.mrf.mxu0
        %v3853 = vadd.f32 %v2755, %v3852
        %v3854 = vpop.f32.mrf.mxu0
        %v3855 = vadd.f32 %v2760, %v3854
        %3856 = vmatmul.bf16.gmra.mxu0 %v2878
        %v3857 = vpop.f32.mrf.mxu0
        %v3858 = vadd.f32 %v2765, %v3857
        %v3859 = vpop.f32.mrf.mxu0
        %v3860 = vadd.f32 %v2770, %v3859
        %3861 = vmatmul.bf16.gmra.mxu0 %v2879
        %v3862 = vpop.f32.mrf.mxu0
        %v3863 = vadd.f32 %v2775, %v3862
        %v3864 = vpop.f32.mrf.mxu0
        %v3865 = vadd.f32 %v2780, %v3864
        %3866 = vmatmul.bf16.gmra.mxu0 %v2880
        %v3867 = vpop.f32.mrf.mxu0
        %v3868 = vadd.f32 %v2785, %v3867
        %v3869 = vpop.f32.mrf.mxu0
        %v3870 = vadd.f32 %v2790, %v3869
        %3871 = vmatmul.bf16.gmra.mxu0 %v2881
        %v3872 = vpop.f32.mrf.mxu0
        %v3873 = vadd.f32 %v2795, %v3872
        %v3874 = vpop.f32.mrf.mxu0
        %v3875 = vadd.f32 %v2800, %v3874
        %3876 = vdwg.mxu0
        %3877 = vmatpush.bf16.msra.mxu0 %v2605
        %3878 = vmatpush.bf16.msra.mxu0 %v2589
        %3879 = vmatpush.bf16.msra.mxu0 %v2573
        %3880 = vmatpush.bf16.msra.mxu0 %v2557
        %3881 = vmatpush.bf16.msra.mxu0 %v2541
        %3882 = vmatpush.bf16.msra.mxu0 %v2525
        %3883 = vmatpush.bf16.msra.mxu0 %v2509
        %3884 = vmatpush.bf16.msra.mxu0 %v2493
        %3885 = vmatmul.bf16.gmra.mxu0 %v2866
        %v3886 = vpop.f32.mrf.mxu0
        %v3887 = vadd.f32 %v2645, %v3886
        %v3888 = vpop.f32.mrf.mxu0
        %v3889 = vadd.f32 %v2650, %v3888
        %3890 = vmatmul.bf16.gmra.mxu0 %v2867
        %v3891 = vpop.f32.mrf.mxu0
        %v3892 = vadd.f32 %v2655, %v3891
        %v3893 = vpop.f32.mrf.mxu0
        %v3894 = vadd.f32 %v2660, %v3893
        %3895 = vmatmul.bf16.gmra.mxu0 %v2868
        %v3896 = vpop.f32.mrf.mxu0
        %v3897 = vadd.f32 %v2665, %v3896
        %v3898 = vpop.f32.mrf.mxu0
        %v3899 = vadd.f32 %v2670, %v3898
        %3900 = vmatmul.bf16.gmra.mxu0 %v2869
        %v3901 = vpop.f32.mrf.mxu0
        %v3902 = vadd.f32 %v2675, %v3901
        %v3903 = vpop.f32.mrf.mxu0
        %v3904 = vadd.f32 %v2680, %v3903
        %3905 = vmatmul.bf16.gmra.mxu0 %v2870
        %v3906 = vpop.f32.mrf.mxu0
        %v3907 = vadd.f32 %v2685, %v3906
        %v3908 = vpop.f32.mrf.mxu0
        %v3909 = vadd.f32 %v2690, %v3908
        %3910 = vmatmul.bf16.gmra.mxu0 %v2871
        %v3911 = vpop.f32.mrf.mxu0
        %v3912 = vadd.f32 %v2695, %v3911
        %v3913 = vpop.f32.mrf.mxu0
        %v3914 = vadd.f32 %v2700, %v3913
        %3915 = vmatmul.bf16.gmra.mxu0 %v2872
        %v3916 = vpop.f32.mrf.mxu0
        %v3917 = vadd.f32 %v2705, %v3916
        %v3918 = vpop.f32.mrf.mxu0
        %v3919 = vadd.f32 %v2710, %v3918
        %3920 = vmatmul.bf16.gmra.mxu0 %v2873
        %v3921 = vpop.f32.mrf.mxu0
        %v3922 = vadd.f32 %v2715, %v3921
        %v3923 = vpop.f32.mrf.mxu0
        %v3924 = vadd.f32 %v2720, %v3923
        %3925 = vmatmul.bf16.gmra.mxu0 %v2874
        %v3926 = vpop.f32.mrf.mxu0
        %v3927 = vadd.f32 %v2725, %v3926
        %v3928 = vpop.f32.mrf.mxu0
        %v3929 = vadd.f32 %v2730, %v3928
        %3930 = vmatmul.bf16.gmra.mxu0 %v2875
        %v3931 = vpop.f32.mrf.mxu0
        %v3932 = vadd.f32 %v2735, %v3931
        %v3933 = vpop.f32.mrf.mxu0
        %v3934 = vadd.f32 %v2740, %v3933
        %3935 = vmatmul.bf16.gmra.mxu0 %v2876
        %v3936 = vpop.f32.mrf.mxu0
        %v3937 = vadd.f32 %v2745, %v3936
        %v3938 = vpop.f32.mrf.mxu0
        %v3939 = vadd.f32 %v2750, %v3938
        %3940 = vmatmul.bf16.gmra.mxu0 %v2877
        %v3941 = vpop.f32.mrf.mxu0
        %v3942 = vadd.f32 %v2755, %v3941
        %v3943 = vpop.f32.mrf.mxu0
        %v3944 = vadd.f32 %v2760, %v3943
        %3945 = vmatmul.bf16.gmra.mxu0 %v2878
        %v3946 = vpop.f32.mrf.mxu0
        %v3947 = vadd.f32 %v2765, %v3946
        %v3948 = vpop.f32.mrf.mxu0
        %v3949 = vadd.f32 %v2770, %v3948
        %3950 = vmatmul.bf16.gmra.mxu0 %v2879
        %v3951 = vpop.f32.mrf.mxu0
        %v3952 = vadd.f32 %v2775, %v3951
        %v3953 = vpop.f32.mrf.mxu0
        %v3954 = vadd.f32 %v2780, %v3953
        %3955 = vmatmul.bf16.gmra.mxu0 %v2880
        %v3956 = vpop.f32.mrf.mxu0
        %v3957 = vadd.f32 %v2785, %v3956
        %v3958 = vpop.f32.mrf.mxu0
        %v3959 = vadd.f32 %v2790, %v3958
        %3960 = vmatmul.bf16.gmra.mxu0 %v2881
        %v3961 = vpop.f32.mrf.mxu0
        %v3962 = vadd.f32 %v2795, %v3961
        %v3963 = vpop.f32.mrf.mxu0
        %v3964 = vadd.f32 %v2800, %v3963
        %3965 = vdwg.mxu0
        %3966 = vmatpush.bf16.msra.mxu0 %v2606
        %3967 = vmatpush.bf16.msra.mxu0 %v2590
        %3968 = vmatpush.bf16.msra.mxu0 %v2574
        %3969 = vmatpush.bf16.msra.mxu0 %v2558
        %3970 = vmatpush.bf16.msra.mxu0 %v2542
        %3971 = vmatpush.bf16.msra.mxu0 %v2526
        %3972 = vmatpush.bf16.msra.mxu0 %v2510
        %3973 = vmatpush.bf16.msra.mxu0 %v2494
        %3974 = vmatmul.bf16.gmra.mxu0 %v2866
        %v3975 = vpop.f32.mrf.mxu0
        %v3976 = vadd.f32 %v2645, %v3975
        %v3977 = vpop.f32.mrf.mxu0
        %v3978 = vadd.f32 %v2650, %v3977
        %3979 = vmatmul.bf16.gmra.mxu0 %v2867
        %v3980 = vpop.f32.mrf.mxu0
        %v3981 = vadd.f32 %v2655, %v3980
        %v3982 = vpop.f32.mrf.mxu0
        %v3983 = vadd.f32 %v2660, %v3982
        %3984 = vmatmul.bf16.gmra.mxu0 %v2868
        %v3985 = vpop.f32.mrf.mxu0
        %v3986 = vadd.f32 %v2665, %v3985
        %v3987 = vpop.f32.mrf.mxu0
        %v3988 = vadd.f32 %v2670, %v3987
        %3989 = vmatmul.bf16.gmra.mxu0 %v2869
        %v3990 = vpop.f32.mrf.mxu0
        %v3991 = vadd.f32 %v2675, %v3990
        %v3992 = vpop.f32.mrf.mxu0
        %v3993 = vadd.f32 %v2680, %v3992
        %3994 = vmatmul.bf16.gmra.mxu0 %v2870
        %v3995 = vpop.f32.mrf.mxu0
        %v3996 = vadd.f32 %v2685, %v3995
        %v3997 = vpop.f32.mrf.mxu0
        %v3998 = vadd.f32 %v2690, %v3997
        %3999 = vmatmul.bf16.gmra.mxu0 %v2871
        %v4000 = vpop.f32.mrf.mxu0
        %v4001 = vadd.f32 %v2695, %v4000
        %v4002 = vpop.f32.mrf.mxu0
        %v4003 = vadd.f32 %v2700, %v4002
        %4004 = vmatmul.bf16.gmra.mxu0 %v2872
        %v4005 = vpop.f32.mrf.mxu0
        %v4006 = vadd.f32 %v2705, %v4005
        %v4007 = vpop.f32.mrf.mxu0
        %v4008 = vadd.f32 %v2710, %v4007
        %4009 = vmatmul.bf16.gmra.mxu0 %v2873
        %v4010 = vpop.f32.mrf.mxu0
        %v4011 = vadd.f32 %v2715, %v4010
        %v4012 = vpop.f32.mrf.mxu0
        %v4013 = vadd.f32 %v2720, %v4012
        %4014 = vmatmul.bf16.gmra.mxu0 %v2874
        %v4015 = vpop.f32.mrf.mxu0
        %v4016 = vadd.f32 %v2725, %v4015
        %v4017 = vpop.f32.mrf.mxu0
        %v4018 = vadd.f32 %v2730, %v4017
        %4019 = vmatmul.bf16.gmra.mxu0 %v2875
        %v4020 = vpop.f32.mrf.mxu0
        %v4021 = vadd.f32 %v2735, %v4020
        %v4022 = vpop.f32.mrf.mxu0
        %v4023 = vadd.f32 %v2740, %v4022
        %4024 = vmatmul.bf16.gmra.mxu0 %v2876
        %v4025 = vpop.f32.mrf.mxu0
        %v4026 = vadd.f32 %v2745, %v4025
        %v4027 = vpop.f32.mrf.mxu0
        %v4028 = vadd.f32 %v2750, %v4027
        %4029 = vmatmul.bf16.gmra.mxu0 %v2877
        %v4030 = vpop.f32.mrf.mxu0
        %v4031 = vadd.f32 %v2755, %v4030
        %v4032 = vpop.f32.mrf.mxu0
        %v4033 = vadd.f32 %v2760, %v4032
        %4034 = vmatmul.bf16.gmra.mxu0 %v2878
        %v4035 = vpop.f32.mrf.mxu0
        %v4036 = vadd.f32 %v2765, %v4035
        %v4037 = vpop.f32.mrf.mxu0
        %v4038 = vadd.f32 %v2770, %v4037
        %4039 = vmatmul.bf16.gmra.mxu0 %v2879
        %v4040 = vpop.f32.mrf.mxu0
        %v4041 = vadd.f32 %v2775, %v4040
        %v4042 = vpop.f32.mrf.mxu0
        %v4043 = vadd.f32 %v2780, %v4042
        %4044 = vmatmul.bf16.gmra.mxu0 %v2880
        %v4045 = vpop.f32.mrf.mxu0
        %v4046 = vadd.f32 %v2785, %v4045
        %v4047 = vpop.f32.mrf.mxu0
        %v4048 = vadd.f32 %v2790, %v4047
        %4049 = vmatmul.bf16.gmra.mxu0 %v2881
        %v4050 = vpop.f32.mrf.mxu0
        %v4051 = vadd.f32 %v2795, %v4050
        %v4052 = vpop.f32.mrf.mxu0
        %v4053 = vadd.f32 %v2800, %v4052
        %4054 = vdwg.mxu0
        %4055 = vmatpush.bf16.msra.mxu0 %v2607
        %4056 = vmatpush.bf16.msra.mxu0 %v2591
        %4057 = vmatpush.bf16.msra.mxu0 %v2575
        %4058 = vmatpush.bf16.msra.mxu0 %v2559
        %4059 = vmatpush.bf16.msra.mxu0 %v2543
        %4060 = vmatpush.bf16.msra.mxu0 %v2527
        %4061 = vmatpush.bf16.msra.mxu0 %v2511
        %4062 = vmatpush.bf16.msra.mxu0 %v2495
        %4063 = vmatmul.bf16.gmra.mxu0 %v2866
        %v4064 = vpop.f32.mrf.mxu0
        %v4065 = vadd.f32 %v2645, %v4064
        %v4066 = vpop.f32.mrf.mxu0
        %v4067 = vadd.f32 %v2650, %v4066
        %4068 = vmatmul.bf16.gmra.mxu0 %v2867
        %v4069 = vpop.f32.mrf.mxu0
        %v4070 = vadd.f32 %v2655, %v4069
        %v4071 = vpop.f32.mrf.mxu0
        %v4072 = vadd.f32 %v2660, %v4071
        %4073 = vmatmul.bf16.gmra.mxu0 %v2868
        %v4074 = vpop.f32.mrf.mxu0
        %v4075 = vadd.f32 %v2665, %v4074
        %v4076 = vpop.f32.mrf.mxu0
        %v4077 = vadd.f32 %v2670, %v4076
        %4078 = vmatmul.bf16.gmra.mxu0 %v2869
        %v4079 = vpop.f32.mrf.mxu0
        %v4080 = vadd.f32 %v2675, %v4079
        %v4081 = vpop.f32.mrf.mxu0
        %v4082 = vadd.f32 %v2680, %v4081
        %4083 = vmatmul.bf16.gmra.mxu0 %v2870
        %v4084 = vpop.f32.mrf.mxu0
        %v4085 = vadd.f32 %v2685, %v4084
        %v4086 = vpop.f32.mrf.mxu0
        %v4087 = vadd.f32 %v2690, %v4086
        %4088 = vmatmul.bf16.gmra.mxu0 %v2871
        %v4089 = vpop.f32.mrf.mxu0
        %v4090 = vadd.f32 %v2695, %v4089
        %v4091 = vpop.f32.mrf.mxu0
        %v4092 = vadd.f32 %v2700, %v4091
        %4093 = vmatmul.bf16.gmra.mxu0 %v2872
        %v4094 = vpop.f32.mrf.mxu0
        %v4095 = vadd.f32 %v2705, %v4094
        %v4096 = vpop.f32.mrf.mxu0
        %v4097 = vadd.f32 %v2710, %v4096
        %4098 = vmatmul.bf16.gmra.mxu0 %v2873
        %v4099 = vpop.f32.mrf.mxu0
        %v4100 = vadd.f32 %v2715, %v4099
        %v4101 = vpop.f32.mrf.mxu0
        %v4102 = vadd.f32 %v2720, %v4101
        %4103 = vmatmul.bf16.gmra.mxu0 %v2874
        %v4104 = vpop.f32.mrf.mxu0
        %v4105 = vadd.f32 %v2725, %v4104
        %v4106 = vpop.f32.mrf.mxu0
        %v4107 = vadd.f32 %v2730, %v4106
        %4108 = vmatmul.bf16.gmra.mxu0 %v2875
        %v4109 = vpop.f32.mrf.mxu0
        %v4110 = vadd.f32 %v2735, %v4109
        %v4111 = vpop.f32.mrf.mxu0
        %v4112 = vadd.f32 %v2740, %v4111
        %4113 = vmatmul.bf16.gmra.mxu0 %v2876
        %v4114 = vpop.f32.mrf.mxu0
        %v4115 = vadd.f32 %v2745, %v4114
        %v4116 = vpop.f32.mrf.mxu0
        %v4117 = vadd.f32 %v2750, %v4116
        %4118 = vmatmul.bf16.gmra.mxu0 %v2877
        %v4119 = vpop.f32.mrf.mxu0
        %v4120 = vadd.f32 %v2755, %v4119
        %v4121 = vpop.f32.mrf.mxu0
        %v4122 = vadd.f32 %v2760, %v4121
        %4123 = vmatmul.bf16.gmra.mxu0 %v2878
        %v4124 = vpop.f32.mrf.mxu0
        %v4125 = vadd.f32 %v2765, %v4124
        %v4126 = vpop.f32.mrf.mxu0
        %v4127 = vadd.f32 %v2770, %v4126
        %4128 = vmatmul.bf16.gmra.mxu0 %v2879
        %v4129 = vpop.f32.mrf.mxu0
        %v4130 = vadd.f32 %v2775, %v4129
        %v4131 = vpop.f32.mrf.mxu0
        %v4132 = vadd.f32 %v2780, %v4131
        %4133 = vmatmul.bf16.gmra.mxu0 %v2880
        %v4134 = vpop.f32.mrf.mxu0
        %v4135 = vadd.f32 %v2785, %v4134
        %v4136 = vpop.f32.mrf.mxu0
        %v4137 = vadd.f32 %v2790, %v4136
        %4138 = vmatmul.bf16.gmra.mxu0 %v2881
        %v4139 = vpop.f32.mrf.mxu0
        %v4140 = vadd.f32 %v2795, %v4139
        %v4141 = vpop.f32.mrf.mxu0
        %v4142 = vadd.f32 %v2800, %v4141
        %4143 = vdwg.mxu0
        %4144 = vmatpush.bf16.msra.mxu0 %v2608
        %4145 = vmatpush.bf16.msra.mxu0 %v2592
        %4146 = vmatpush.bf16.msra.mxu0 %v2576
        %4147 = vmatpush.bf16.msra.mxu0 %v2560
        %4148 = vmatpush.bf16.msra.mxu0 %v2544
        %4149 = vmatpush.bf16.msra.mxu0 %v2528
        %4150 = vmatpush.bf16.msra.mxu0 %v2512
        %4151 = vmatpush.bf16.msra.mxu0 %v2496
        %4152 = vmatmul.bf16.gmra.mxu0 %v2866
        %v4153 = vpop.f32.mrf.mxu0
        %v4154 = vadd.f32 %v2645, %v4153
        %v4155 = vpop.f32.mrf.mxu0
        %v4156 = vadd.f32 %v2650, %v4155
        %4157 = vmatmul.bf16.gmra.mxu0 %v2867
        %v4158 = vpop.f32.mrf.mxu0
        %v4159 = vadd.f32 %v2655, %v4158
        %v4160 = vpop.f32.mrf.mxu0
        %v4161 = vadd.f32 %v2660, %v4160
        %4162 = vmatmul.bf16.gmra.mxu0 %v2868
        %v4163 = vpop.f32.mrf.mxu0
        %v4164 = vadd.f32 %v2665, %v4163
        %v4165 = vpop.f32.mrf.mxu0
        %v4166 = vadd.f32 %v2670, %v4165
        %4167 = vmatmul.bf16.gmra.mxu0 %v2869
        %v4168 = vpop.f32.mrf.mxu0
        %v4169 = vadd.f32 %v2675, %v4168
        %v4170 = vpop.f32.mrf.mxu0
        %v4171 = vadd.f32 %v2680, %v4170
        %4172 = vmatmul.bf16.gmra.mxu0 %v2870
        %v4173 = vpop.f32.mrf.mxu0
        %v4174 = vadd.f32 %v2685, %v4173
        %v4175 = vpop.f32.mrf.mxu0
        %v4176 = vadd.f32 %v2690, %v4175
        %4177 = vmatmul.bf16.gmra.mxu0 %v2871
        %v4178 = vpop.f32.mrf.mxu0
        %v4179 = vadd.f32 %v2695, %v4178
        %v4180 = vpop.f32.mrf.mxu0
        %v4181 = vadd.f32 %v2700, %v4180
        %4182 = vmatmul.bf16.gmra.mxu0 %v2872
        %v4183 = vpop.f32.mrf.mxu0
        %v4184 = vadd.f32 %v2705, %v4183
        %v4185 = vpop.f32.mrf.mxu0
        %v4186 = vadd.f32 %v2710, %v4185
        %4187 = vmatmul.bf16.gmra.mxu0 %v2873
        %v4188 = vpop.f32.mrf.mxu0
        %v4189 = vadd.f32 %v2715, %v4188
        %v4190 = vpop.f32.mrf.mxu0
        %v4191 = vadd.f32 %v2720, %v4190
        %4192 = vmatmul.bf16.gmra.mxu0 %v2874
        %v4193 = vpop.f32.mrf.mxu0
        %v4194 = vadd.f32 %v2725, %v4193
        %v4195 = vpop.f32.mrf.mxu0
        %v4196 = vadd.f32 %v2730, %v4195
        %4197 = vmatmul.bf16.gmra.mxu0 %v2875
        %v4198 = vpop.f32.mrf.mxu0
        %v4199 = vadd.f32 %v2735, %v4198
        %v4200 = vpop.f32.mrf.mxu0
        %v4201 = vadd.f32 %v2740, %v4200
        %4202 = vmatmul.bf16.gmra.mxu0 %v2876
        %v4203 = vpop.f32.mrf.mxu0
        %v4204 = vadd.f32 %v2745, %v4203
        %v4205 = vpop.f32.mrf.mxu0
        %v4206 = vadd.f32 %v2750, %v4205
        %4207 = vmatmul.bf16.gmra.mxu0 %v2877
        %v4208 = vpop.f32.mrf.mxu0
        %v4209 = vadd.f32 %v2755, %v4208
        %v4210 = vpop.f32.mrf.mxu0
        %v4211 = vadd.f32 %v2760, %v4210
        %4212 = vmatmul.bf16.gmra.mxu0 %v2878
        %v4213 = vpop.f32.mrf.mxu0
        %v4214 = vadd.f32 %v2765, %v4213
        %v4215 = vpop.f32.mrf.mxu0
        %v4216 = vadd.f32 %v2770, %v4215
        %4217 = vmatmul.bf16.gmra.mxu0 %v2879
        %v4218 = vpop.f32.mrf.mxu0
        %v4219 = vadd.f32 %v2775, %v4218
        %v4220 = vpop.f32.mrf.mxu0
        %v4221 = vadd.f32 %v2780, %v4220
        %4222 = vmatmul.bf16.gmra.mxu0 %v2880
        %v4223 = vpop.f32.mrf.mxu0
        %v4224 = vadd.f32 %v2785, %v4223
        %v4225 = vpop.f32.mrf.mxu0
        %v4226 = vadd.f32 %v2790, %v4225
        %4227 = vmatmul.bf16.gmra.mxu0 %v2881
        %v4228 = vpop.f32.mrf.mxu0
        %v4229 = vadd.f32 %v2795, %v4228
        %v4230 = vpop.f32.mrf.mxu0
        %v4231 = vadd.f32 %v2800, %v4230
        %4232 = vdwg.mxu0
        %4233 = vmatpush.bf16.msra.mxu0 %v2609
        %4234 = vmatpush.bf16.msra.mxu0 %v2593
        %4235 = vmatpush.bf16.msra.mxu0 %v2577
        %4236 = vmatpush.bf16.msra.mxu0 %v2561
        %4237 = vmatpush.bf16.msra.mxu0 %v2545
        %4238 = vmatpush.bf16.msra.mxu0 %v2529
        %4239 = vmatpush.bf16.msra.mxu0 %v2513
        %4240 = vmatpush.bf16.msra.mxu0 %v2497
        %4241 = vmatmul.bf16.gmra.mxu0 %v2866
        %v4242 = vpop.f32.mrf.mxu0
        %v4243 = vadd.f32 %v2645, %v4242
        %v4244 = vpop.f32.mrf.mxu0
        %v4245 = vadd.f32 %v2650, %v4244
        %4246 = vmatmul.bf16.gmra.mxu0 %v2867
        %v4247 = vpop.f32.mrf.mxu0
        %v4248 = vadd.f32 %v2655, %v4247
        %v4249 = vpop.f32.mrf.mxu0
        %v4250 = vadd.f32 %v2660, %v4249
        %4251 = vmatmul.bf16.gmra.mxu0 %v2868
        %v4252 = vpop.f32.mrf.mxu0
        %v4253 = vadd.f32 %v2665, %v4252
        %v4254 = vpop.f32.mrf.mxu0
        %v4255 = vadd.f32 %v2670, %v4254
        %4256 = vmatmul.bf16.gmra.mxu0 %v2869
        %v4257 = vpop.f32.mrf.mxu0
        %v4258 = vadd.f32 %v2675, %v4257
        %v4259 = vpop.f32.mrf.mxu0
        %v4260 = vadd.f32 %v2680, %v4259
        %4261 = vmatmul.bf16.gmra.mxu0 %v2870
        %v4262 = vpop.f32.mrf.mxu0
        %v4263 = vadd.f32 %v2685, %v4262
        %v4264 = vpop.f32.mrf.mxu0
        %v4265 = vadd.f32 %v2690, %v4264
        %4266 = vmatmul.bf16.gmra.mxu0 %v2871
        %v4267 = vpop.f32.mrf.mxu0
        %v4268 = vadd.f32 %v2695, %v4267
        %v4269 = vpop.f32.mrf.mxu0
        %v4270 = vadd.f32 %v2700, %v4269
        %4271 = vmatmul.bf16.gmra.mxu0 %v2872
        %v4272 = vpop.f32.mrf.mxu0
        %v4273 = vadd.f32 %v2705, %v4272
        %v4274 = vpop.f32.mrf.mxu0
        %v4275 = vadd.f32 %v2710, %v4274
        %4276 = vmatmul.bf16.gmra.mxu0 %v2873
        %v4277 = vpop.f32.mrf.mxu0
        %v4278 = vadd.f32 %v2715, %v4277
        %v4279 = vpop.f32.mrf.mxu0
        %v4280 = vadd.f32 %v2720, %v4279
        %4281 = vmatmul.bf16.gmra.mxu0 %v2874
        %v4282 = vpop.f32.mrf.mxu0
        %v4283 = vadd.f32 %v2725, %v4282
        %v4284 = vpop.f32.mrf.mxu0
        %v4285 = vadd.f32 %v2730, %v4284
        %4286 = vmatmul.bf16.gmra.mxu0 %v2875
        %v4287 = vpop.f32.mrf.mxu0
        %v4288 = vadd.f32 %v2735, %v4287
        %v4289 = vpop.f32.mrf.mxu0
        %v4290 = vadd.f32 %v2740, %v4289
        %4291 = vmatmul.bf16.gmra.mxu0 %v2876
        %v4292 = vpop.f32.mrf.mxu0
        %v4293 = vadd.f32 %v2745, %v4292
        %v4294 = vpop.f32.mrf.mxu0
        %v4295 = vadd.f32 %v2750, %v4294
        %4296 = vmatmul.bf16.gmra.mxu0 %v2877
        %v4297 = vpop.f32.mrf.mxu0
        %v4298 = vadd.f32 %v2755, %v4297
        %v4299 = vpop.f32.mrf.mxu0
        %v4300 = vadd.f32 %v2760, %v4299
        %4301 = vmatmul.bf16.gmra.mxu0 %v2878
        %v4302 = vpop.f32.mrf.mxu0
        %v4303 = vadd.f32 %v2765, %v4302
        %v4304 = vpop.f32.mrf.mxu0
        %v4305 = vadd.f32 %v2770, %v4304
        %4306 = vmatmul.bf16.gmra.mxu0 %v2879
        %v4307 = vpop.f32.mrf.mxu0
        %v4308 = vadd.f32 %v2775, %v4307
        %v4309 = vpop.f32.mrf.mxu0
        %v4310 = vadd.f32 %v2780, %v4309
        %4311 = vmatmul.bf16.gmra.mxu0 %v2880
        %v4312 = vpop.f32.mrf.mxu0
        %v4313 = vadd.f32 %v2785, %v4312
        %v4314 = vpop.f32.mrf.mxu0
        %v4315 = vadd.f32 %v2790, %v4314
        %4316 = vmatmul.bf16.gmra.mxu0 %v2881
        %v4317 = vpop.f32.mrf.mxu0
        %v4318 = vadd.f32 %v2795, %v4317
        %v4319 = vpop.f32.mrf.mxu0
        %v4320 = vadd.f32 %v2800, %v4319
        %4321 = vdwg.mxu0
        %v4322 = vmax.f32 %v2908, 0.0
        %v4323 = vmax.f32 %v2997, 0.0
        %v4324 = vmax.f32 %v3086, 0.0
        %v4325 = vmax.f32 %v3175, 0.0
        %v4326 = vmax.f32 %v3264, 0.0
        %v4327 = vmax.f32 %v3353, 0.0
        %v4328 = vmax.f32 %v3442, 0.0
        %v4329 = vmax.f32 %v3531, 0.0
        %v4330 = vmax.f32 %v3620, 0.0
        %v4331 = vmax.f32 %v3709, 0.0
        %v4332 = vmax.f32 %v3798, 0.0
        %v4333 = vmax.f32 %v3887, 0.0
        %v4334 = vmax.f32 %v3976, 0.0
        %v4335 = vmax.f32 %v4065, 0.0
        %v4336 = vmax.f32 %v4154, 0.0
        %v4337 = vmax.f32 %v4243, 0.0
        %v4338 = vmax.f32 %v2910, 0.0
        %v4339 = vmax.f32 %v2999, 0.0
        %v4340 = vmax.f32 %v3088, 0.0
        %v4341 = vmax.f32 %v3177, 0.0
        %v4342 = vmax.f32 %v3266, 0.0
        %v4343 = vmax.f32 %v3355, 0.0
        %v4344 = vmax.f32 %v3444, 0.0
        %v4345 = vmax.f32 %v3533, 0.0
        %v4346 = vmax.f32 %v3622, 0.0
        %v4347 = vmax.f32 %v3711, 0.0
        %v4348 = vmax.f32 %v3800, 0.0
        %v4349 = vmax.f32 %v3889, 0.0
        %v4350 = vmax.f32 %v3978, 0.0
        %v4351 = vmax.f32 %v4067, 0.0
        %v4352 = vmax.f32 %v4156, 0.0
        %v4353 = vmax.f32 %v4245, 0.0
        %v4354 = vmax.f32 %v2913, 0.0
        %v4355 = vmax.f32 %v3002, 0.0
        %v4356 = vmax.f32 %v3091, 0.0
        %v4357 = vmax.f32 %v3180, 0.0
        %v4358 = vmax.f32 %v3269, 0.0
        %v4359 = vmax.f32 %v3358, 0.0
        %v4360 = vmax.f32 %v3447, 0.0
        %v4361 = vmax.f32 %v3536, 0.0
        %v4362 = vmax.f32 %v3625, 0.0
        %v4363 = vmax.f32 %v3714, 0.0
        %v4364 = vmax.f32 %v3803, 0.0
        %v4365 = vmax.f32 %v3892, 0.0
        %v4366 = vmax.f32 %v3981, 0.0
        %v4367 = vmax.f32 %v4070, 0.0
        %v4368 = vmax.f32 %v4159, 0.0
        %v4369 = vmax.f32 %v4248, 0.0
        %v4370 = vmax.f32 %v2915, 0.0
        %v4371 = vmax.f32 %v3004, 0.0
        %v4372 = vmax.f32 %v3093, 0.0
        %v4373 = vmax.f32 %v3182, 0.0
        %v4374 = vmax.f32 %v3271, 0.0
        %v4375 = vmax.f32 %v3360, 0.0
        %v4376 = vmax.f32 %v3449, 0.0
        %v4377 = vmax.f32 %v3538, 0.0
        %v4378 = vmax.f32 %v3627, 0.0
        %v4379 = vmax.f32 %v3716, 0.0
        %v4380 = vmax.f32 %v3805, 0.0
        %v4381 = vmax.f32 %v3894, 0.0
        %v4382 = vmax.f32 %v3983, 0.0
        %v4383 = vmax.f32 %v4072, 0.0
        %v4384 = vmax.f32 %v4161, 0.0
        %v4385 = vmax.f32 %v4250, 0.0
        %v4386 = vmax.f32 %v2918, 0.0
        %v4387 = vmax.f32 %v3007, 0.0
        %v4388 = vmax.f32 %v3096, 0.0
        %v4389 = vmax.f32 %v3185, 0.0
        %v4390 = vmax.f32 %v3274, 0.0
        %v4391 = vmax.f32 %v3363, 0.0
        %v4392 = vmax.f32 %v3452, 0.0
        %v4393 = vmax.f32 %v3541, 0.0
        %v4394 = vmax.f32 %v3630, 0.0
        %v4395 = vmax.f32 %v3719, 0.0
        %v4396 = vmax.f32 %v3808, 0.0
        %v4397 = vmax.f32 %v3897, 0.0
        %v4398 = vmax.f32 %v3986, 0.0
        %v4399 = vmax.f32 %v4075, 0.0
        %v4400 = vmax.f32 %v4164, 0.0
        %v4401 = vmax.f32 %v4253, 0.0
        %v4402 = vmax.f32 %v2920, 0.0
        %v4403 = vmax.f32 %v3009, 0.0
        %v4404 = vmax.f32 %v3098, 0.0
        %v4405 = vmax.f32 %v3187, 0.0
        %v4406 = vmax.f32 %v3276, 0.0
        %v4407 = vmax.f32 %v3365, 0.0
        %v4408 = vmax.f32 %v3454, 0.0
        %v4409 = vmax.f32 %v3543, 0.0
        %v4410 = vmax.f32 %v3632, 0.0
        %v4411 = vmax.f32 %v3721, 0.0
        %v4412 = vmax.f32 %v3810, 0.0
        %v4413 = vmax.f32 %v3899, 0.0
        %v4414 = vmax.f32 %v3988, 0.0
        %v4415 = vmax.f32 %v4077, 0.0
        %v4416 = vmax.f32 %v4166, 0.0
        %v4417 = vmax.f32 %v4255, 0.0
        %v4418 = vmax.f32 %v2923, 0.0
        %v4419 = vmax.f32 %v3012, 0.0
        %v4420 = vmax.f32 %v3101, 0.0
        %v4421 = vmax.f32 %v3190, 0.0
        %v4422 = vmax.f32 %v3279, 0.0
        %v4423 = vmax.f32 %v3368, 0.0
        %v4424 = vmax.f32 %v3457, 0.0
        %v4425 = vmax.f32 %v3546, 0.0
        %v4426 = vmax.f32 %v3635, 0.0
        %v4427 = vmax.f32 %v3724, 0.0
        %v4428 = vmax.f32 %v3813, 0.0
        %v4429 = vmax.f32 %v3902, 0.0
        %v4430 = vmax.f32 %v3991, 0.0
        %v4431 = vmax.f32 %v4080, 0.0
        %v4432 = vmax.f32 %v4169, 0.0
        %v4433 = vmax.f32 %v4258, 0.0
        %v4434 = vmax.f32 %v2925, 0.0
        %v4435 = vmax.f32 %v3014, 0.0
        %v4436 = vmax.f32 %v3103, 0.0
        %v4437 = vmax.f32 %v3192, 0.0
        %v4438 = vmax.f32 %v3281, 0.0
        %v4439 = vmax.f32 %v3370, 0.0
        %v4440 = vmax.f32 %v3459, 0.0
        %v4441 = vmax.f32 %v3548, 0.0
        %v4442 = vmax.f32 %v3637, 0.0
        %v4443 = vmax.f32 %v3726, 0.0
        %v4444 = vmax.f32 %v3815, 0.0
        %v4445 = vmax.f32 %v3904, 0.0
        %v4446 = vmax.f32 %v3993, 0.0
        %v4447 = vmax.f32 %v4082, 0.0
        %v4448 = vmax.f32 %v4171, 0.0
        %v4449 = vmax.f32 %v4260, 0.0
        %v4450 = vmax.f32 %v2928, 0.0
        %v4451 = vmax.f32 %v3017, 0.0
        %v4452 = vmax.f32 %v3106, 0.0
        %v4453 = vmax.f32 %v3195, 0.0
        %v4454 = vmax.f32 %v3284, 0.0
        %v4455 = vmax.f32 %v3373, 0.0
        %v4456 = vmax.f32 %v3462, 0.0
        %v4457 = vmax.f32 %v3551, 0.0
        %v4458 = vmax.f32 %v3640, 0.0
        %v4459 = vmax.f32 %v3729, 0.0
        %v4460 = vmax.f32 %v3818, 0.0
        %v4461 = vmax.f32 %v3907, 0.0
        %v4462 = vmax.f32 %v3996, 0.0
        %v4463 = vmax.f32 %v4085, 0.0
        %v4464 = vmax.f32 %v4174, 0.0
        %v4465 = vmax.f32 %v4263, 0.0
        %v4466 = vmax.f32 %v2930, 0.0
        %v4467 = vmax.f32 %v3019, 0.0
        %v4468 = vmax.f32 %v3108, 0.0
        %v4469 = vmax.f32 %v3197, 0.0
        %v4470 = vmax.f32 %v3286, 0.0
        %v4471 = vmax.f32 %v3375, 0.0
        %v4472 = vmax.f32 %v3464, 0.0
        %v4473 = vmax.f32 %v3553, 0.0
        %v4474 = vmax.f32 %v3642, 0.0
        %v4475 = vmax.f32 %v3731, 0.0
        %v4476 = vmax.f32 %v3820, 0.0
        %v4477 = vmax.f32 %v3909, 0.0
        %v4478 = vmax.f32 %v3998, 0.0
        %v4479 = vmax.f32 %v4087, 0.0
        %v4480 = vmax.f32 %v4176, 0.0
        %v4481 = vmax.f32 %v4265, 0.0
        %v4482 = vmax.f32 %v2933, 0.0
        %v4483 = vmax.f32 %v3022, 0.0
        %v4484 = vmax.f32 %v3111, 0.0
        %v4485 = vmax.f32 %v3200, 0.0
        %v4486 = vmax.f32 %v3289, 0.0
        %v4487 = vmax.f32 %v3378, 0.0
        %v4488 = vmax.f32 %v3467, 0.0
        %v4489 = vmax.f32 %v3556, 0.0
        %v4490 = vmax.f32 %v3645, 0.0
        %v4491 = vmax.f32 %v3734, 0.0
        %v4492 = vmax.f32 %v3823, 0.0
        %v4493 = vmax.f32 %v3912, 0.0
        %v4494 = vmax.f32 %v4001, 0.0
        %v4495 = vmax.f32 %v4090, 0.0
        %v4496 = vmax.f32 %v4179, 0.0
        %v4497 = vmax.f32 %v4268, 0.0
        %v4498 = vmax.f32 %v2935, 0.0
        %v4499 = vmax.f32 %v3024, 0.0
        %v4500 = vmax.f32 %v3113, 0.0
        %v4501 = vmax.f32 %v3202, 0.0
        %v4502 = vmax.f32 %v3291, 0.0
        %v4503 = vmax.f32 %v3380, 0.0
        %v4504 = vmax.f32 %v3469, 0.0
        %v4505 = vmax.f32 %v3558, 0.0
        %v4506 = vmax.f32 %v3647, 0.0
        %v4507 = vmax.f32 %v3736, 0.0
        %v4508 = vmax.f32 %v3825, 0.0
        %v4509 = vmax.f32 %v3914, 0.0
        %v4510 = vmax.f32 %v4003, 0.0
        %v4511 = vmax.f32 %v4092, 0.0
        %v4512 = vmax.f32 %v4181, 0.0
        %v4513 = vmax.f32 %v4270, 0.0
        %v4514 = vmax.f32 %v2938, 0.0
        %v4515 = vmax.f32 %v3027, 0.0
        %v4516 = vmax.f32 %v3116, 0.0
        %v4517 = vmax.f32 %v3205, 0.0
        %v4518 = vmax.f32 %v3294, 0.0
        %v4519 = vmax.f32 %v3383, 0.0
        %v4520 = vmax.f32 %v3472, 0.0
        %v4521 = vmax.f32 %v3561, 0.0
        %v4522 = vmax.f32 %v3650, 0.0
        %v4523 = vmax.f32 %v3739, 0.0
        %v4524 = vmax.f32 %v3828, 0.0
        %v4525 = vmax.f32 %v3917, 0.0
        %v4526 = vmax.f32 %v4006, 0.0
        %v4527 = vmax.f32 %v4095, 0.0
        %v4528 = vmax.f32 %v4184, 0.0
        %v4529 = vmax.f32 %v4273, 0.0
        %v4530 = vmax.f32 %v2940, 0.0
        %v4531 = vmax.f32 %v3029, 0.0
        %v4532 = vmax.f32 %v3118, 0.0
        %v4533 = vmax.f32 %v3207, 0.0
        %v4534 = vmax.f32 %v3296, 0.0
        %v4535 = vmax.f32 %v3385, 0.0
        %v4536 = vmax.f32 %v3474, 0.0
        %v4537 = vmax.f32 %v3563, 0.0
        %v4538 = vmax.f32 %v3652, 0.0
        %v4539 = vmax.f32 %v3741, 0.0
        %v4540 = vmax.f32 %v3830, 0.0
        %v4541 = vmax.f32 %v3919, 0.0
        %v4542 = vmax.f32 %v4008, 0.0
        %v4543 = vmax.f32 %v4097, 0.0
        %v4544 = vmax.f32 %v4186, 0.0
        %v4545 = vmax.f32 %v4275, 0.0
        %v4546 = vmax.f32 %v2943, 0.0
        %v4547 = vmax.f32 %v3032, 0.0
        %v4548 = vmax.f32 %v3121, 0.0
        %v4549 = vmax.f32 %v3210, 0.0
        %v4550 = vmax.f32 %v3299, 0.0
        %v4551 = vmax.f32 %v3388, 0.0
        %v4552 = vmax.f32 %v3477, 0.0
        %v4553 = vmax.f32 %v3566, 0.0
        %v4554 = vmax.f32 %v3655, 0.0
        %v4555 = vmax.f32 %v3744, 0.0
        %v4556 = vmax.f32 %v3833, 0.0
        %v4557 = vmax.f32 %v3922, 0.0
        %v4558 = vmax.f32 %v4011, 0.0
        %v4559 = vmax.f32 %v4100, 0.0
        %v4560 = vmax.f32 %v4189, 0.0
        %v4561 = vmax.f32 %v4278, 0.0
        %v4562 = vmax.f32 %v2945, 0.0
        %v4563 = vmax.f32 %v3034, 0.0
        %v4564 = vmax.f32 %v3123, 0.0
        %v4565 = vmax.f32 %v3212, 0.0
        %v4566 = vmax.f32 %v3301, 0.0
        %v4567 = vmax.f32 %v3390, 0.0
        %v4568 = vmax.f32 %v3479, 0.0
        %v4569 = vmax.f32 %v3568, 0.0
        %v4570 = vmax.f32 %v3657, 0.0
        %v4571 = vmax.f32 %v3746, 0.0
        %v4572 = vmax.f32 %v3835, 0.0
        %v4573 = vmax.f32 %v3924, 0.0
        %v4574 = vmax.f32 %v4013, 0.0
        %v4575 = vmax.f32 %v4102, 0.0
        %v4576 = vmax.f32 %v4191, 0.0
        %v4577 = vmax.f32 %v4280, 0.0
        %v4578 = vmax.f32 %v2948, 0.0
        %v4579 = vmax.f32 %v3037, 0.0
        %v4580 = vmax.f32 %v3126, 0.0
        %v4581 = vmax.f32 %v3215, 0.0
        %v4582 = vmax.f32 %v3304, 0.0
        %v4583 = vmax.f32 %v3393, 0.0
        %v4584 = vmax.f32 %v3482, 0.0
        %v4585 = vmax.f32 %v3571, 0.0
        %v4586 = vmax.f32 %v3660, 0.0
        %v4587 = vmax.f32 %v3749, 0.0
        %v4588 = vmax.f32 %v3838, 0.0
        %v4589 = vmax.f32 %v3927, 0.0
        %v4590 = vmax.f32 %v4016, 0.0
        %v4591 = vmax.f32 %v4105, 0.0
        %v4592 = vmax.f32 %v4194, 0.0
        %v4593 = vmax.f32 %v4283, 0.0
        %v4594 = vmax.f32 %v2950, 0.0
        %v4595 = vmax.f32 %v3039, 0.0
        %v4596 = vmax.f32 %v3128, 0.0
        %v4597 = vmax.f32 %v3217, 0.0
        %v4598 = vmax.f32 %v3306, 0.0
        %v4599 = vmax.f32 %v3395, 0.0
        %v4600 = vmax.f32 %v3484, 0.0
        %v4601 = vmax.f32 %v3573, 0.0
        %v4602 = vmax.f32 %v3662, 0.0
        %v4603 = vmax.f32 %v3751, 0.0
        %v4604 = vmax.f32 %v3840, 0.0
        %v4605 = vmax.f32 %v3929, 0.0
        %v4606 = vmax.f32 %v4018, 0.0
        %v4607 = vmax.f32 %v4107, 0.0
        %v4608 = vmax.f32 %v4196, 0.0
        %v4609 = vmax.f32 %v4285, 0.0
        %v4610 = vmax.f32 %v2953, 0.0
        %v4611 = vmax.f32 %v3042, 0.0
        %v4612 = vmax.f32 %v3131, 0.0
        %v4613 = vmax.f32 %v3220, 0.0
        %v4614 = vmax.f32 %v3309, 0.0
        %v4615 = vmax.f32 %v3398, 0.0
        %v4616 = vmax.f32 %v3487, 0.0
        %v4617 = vmax.f32 %v3576, 0.0
        %v4618 = vmax.f32 %v3665, 0.0
        %v4619 = vmax.f32 %v3754, 0.0
        %v4620 = vmax.f32 %v3843, 0.0
        %v4621 = vmax.f32 %v3932, 0.0
        %v4622 = vmax.f32 %v4021, 0.0
        %v4623 = vmax.f32 %v4110, 0.0
        %v4624 = vmax.f32 %v4199, 0.0
        %v4625 = vmax.f32 %v4288, 0.0
        %v4626 = vmax.f32 %v2955, 0.0
        %v4627 = vmax.f32 %v3044, 0.0
        %v4628 = vmax.f32 %v3133, 0.0
        %v4629 = vmax.f32 %v3222, 0.0
        %v4630 = vmax.f32 %v3311, 0.0
        %v4631 = vmax.f32 %v3400, 0.0
        %v4632 = vmax.f32 %v3489, 0.0
        %v4633 = vmax.f32 %v3578, 0.0
        %v4634 = vmax.f32 %v3667, 0.0
        %v4635 = vmax.f32 %v3756, 0.0
        %v4636 = vmax.f32 %v3845, 0.0
        %v4637 = vmax.f32 %v3934, 0.0
        %v4638 = vmax.f32 %v4023, 0.0
        %v4639 = vmax.f32 %v4112, 0.0
        %v4640 = vmax.f32 %v4201, 0.0
        %v4641 = vmax.f32 %v4290, 0.0
        %v4642 = vmax.f32 %v2958, 0.0
        %v4643 = vmax.f32 %v3047, 0.0
        %v4644 = vmax.f32 %v3136, 0.0
        %v4645 = vmax.f32 %v3225, 0.0
        %v4646 = vmax.f32 %v3314, 0.0
        %v4647 = vmax.f32 %v3403, 0.0
        %v4648 = vmax.f32 %v3492, 0.0
        %v4649 = vmax.f32 %v3581, 0.0
        %v4650 = vmax.f32 %v3670, 0.0
        %v4651 = vmax.f32 %v3759, 0.0
        %v4652 = vmax.f32 %v3848, 0.0
        %v4653 = vmax.f32 %v3937, 0.0
        %v4654 = vmax.f32 %v4026, 0.0
        %v4655 = vmax.f32 %v4115, 0.0
        %v4656 = vmax.f32 %v4204, 0.0
        %v4657 = vmax.f32 %v4293, 0.0
        %v4658 = vmax.f32 %v2960, 0.0
        %v4659 = vmax.f32 %v3049, 0.0
        %v4660 = vmax.f32 %v3138, 0.0
        %v4661 = vmax.f32 %v3227, 0.0
        %v4662 = vmax.f32 %v3316, 0.0
        %v4663 = vmax.f32 %v3405, 0.0
        %v4664 = vmax.f32 %v3494, 0.0
        %v4665 = vmax.f32 %v3583, 0.0
        %v4666 = vmax.f32 %v3672, 0.0
        %v4667 = vmax.f32 %v3761, 0.0
        %v4668 = vmax.f32 %v3850, 0.0
        %v4669 = vmax.f32 %v3939, 0.0
        %v4670 = vmax.f32 %v4028, 0.0
        %v4671 = vmax.f32 %v4117, 0.0
        %v4672 = vmax.f32 %v4206, 0.0
        %v4673 = vmax.f32 %v4295, 0.0
        %v4674 = vmax.f32 %v2963, 0.0
        %v4675 = vmax.f32 %v3052, 0.0
        %v4676 = vmax.f32 %v3141, 0.0
        %v4677 = vmax.f32 %v3230, 0.0
        %v4678 = vmax.f32 %v3319, 0.0
        %v4679 = vmax.f32 %v3408, 0.0
        %v4680 = vmax.f32 %v3497, 0.0
        %v4681 = vmax.f32 %v3586, 0.0
        %v4682 = vmax.f32 %v3675, 0.0
        %v4683 = vmax.f32 %v3764, 0.0
        %v4684 = vmax.f32 %v3853, 0.0
        %v4685 = vmax.f32 %v3942, 0.0
        %v4686 = vmax.f32 %v4031, 0.0
        %v4687 = vmax.f32 %v4120, 0.0
        %v4688 = vmax.f32 %v4209, 0.0
        %v4689 = vmax.f32 %v4298, 0.0
        %v4690 = vmax.f32 %v2965, 0.0
        %v4691 = vmax.f32 %v3054, 0.0
        %v4692 = vmax.f32 %v3143, 0.0
        %v4693 = vmax.f32 %v3232, 0.0
        %v4694 = vmax.f32 %v3321, 0.0
        %v4695 = vmax.f32 %v3410, 0.0
        %v4696 = vmax.f32 %v3499, 0.0
        %v4697 = vmax.f32 %v3588, 0.0
        %v4698 = vmax.f32 %v3677, 0.0
        %v4699 = vmax.f32 %v3766, 0.0
        %v4700 = vmax.f32 %v3855, 0.0
        %v4701 = vmax.f32 %v3944, 0.0
        %v4702 = vmax.f32 %v4033, 0.0
        %v4703 = vmax.f32 %v4122, 0.0
        %v4704 = vmax.f32 %v4211, 0.0
        %v4705 = vmax.f32 %v4300, 0.0
        %v4706 = vmax.f32 %v2968, 0.0
        %v4707 = vmax.f32 %v3057, 0.0
        %v4708 = vmax.f32 %v3146, 0.0
        %v4709 = vmax.f32 %v3235, 0.0
        %v4710 = vmax.f32 %v3324, 0.0
        %v4711 = vmax.f32 %v3413, 0.0
        %v4712 = vmax.f32 %v3502, 0.0
        %v4713 = vmax.f32 %v3591, 0.0
        %v4714 = vmax.f32 %v3680, 0.0
        %v4715 = vmax.f32 %v3769, 0.0
        %v4716 = vmax.f32 %v3858, 0.0
        %v4717 = vmax.f32 %v3947, 0.0
        %v4718 = vmax.f32 %v4036, 0.0
        %v4719 = vmax.f32 %v4125, 0.0
        %v4720 = vmax.f32 %v4214, 0.0
        %v4721 = vmax.f32 %v4303, 0.0
        %v4722 = vmax.f32 %v2970, 0.0
        %v4723 = vmax.f32 %v3059, 0.0
        %v4724 = vmax.f32 %v3148, 0.0
        %v4725 = vmax.f32 %v3237, 0.0
        %v4726 = vmax.f32 %v3326, 0.0
        %v4727 = vmax.f32 %v3415, 0.0
        %v4728 = vmax.f32 %v3504, 0.0
        %v4729 = vmax.f32 %v3593, 0.0
        %v4730 = vmax.f32 %v3682, 0.0
        %v4731 = vmax.f32 %v3771, 0.0
        %v4732 = vmax.f32 %v3860, 0.0
        %v4733 = vmax.f32 %v3949, 0.0
        %v4734 = vmax.f32 %v4038, 0.0
        %v4735 = vmax.f32 %v4127, 0.0
        %v4736 = vmax.f32 %v4216, 0.0
        %v4737 = vmax.f32 %v4305, 0.0
        %v4738 = vmax.f32 %v2973, 0.0
        %v4739 = vmax.f32 %v3062, 0.0
        %v4740 = vmax.f32 %v3151, 0.0
        %v4741 = vmax.f32 %v3240, 0.0
        %v4742 = vmax.f32 %v3329, 0.0
        %v4743 = vmax.f32 %v3418, 0.0
        %v4744 = vmax.f32 %v3507, 0.0
        %v4745 = vmax.f32 %v3596, 0.0
        %v4746 = vmax.f32 %v3685, 0.0
        %v4747 = vmax.f32 %v3774, 0.0
        %v4748 = vmax.f32 %v3863, 0.0
        %v4749 = vmax.f32 %v3952, 0.0
        %v4750 = vmax.f32 %v4041, 0.0
        %v4751 = vmax.f32 %v4130, 0.0
        %v4752 = vmax.f32 %v4219, 0.0
        %v4753 = vmax.f32 %v4308, 0.0
        %v4754 = vmax.f32 %v2975, 0.0
        %v4755 = vmax.f32 %v3064, 0.0
        %v4756 = vmax.f32 %v3153, 0.0
        %v4757 = vmax.f32 %v3242, 0.0
        %v4758 = vmax.f32 %v3331, 0.0
        %v4759 = vmax.f32 %v3420, 0.0
        %v4760 = vmax.f32 %v3509, 0.0
        %v4761 = vmax.f32 %v3598, 0.0
        %v4762 = vmax.f32 %v3687, 0.0
        %v4763 = vmax.f32 %v3776, 0.0
        %v4764 = vmax.f32 %v3865, 0.0
        %v4765 = vmax.f32 %v3954, 0.0
        %v4766 = vmax.f32 %v4043, 0.0
        %v4767 = vmax.f32 %v4132, 0.0
        %v4768 = vmax.f32 %v4221, 0.0
        %v4769 = vmax.f32 %v4310, 0.0
        %v4770 = vmax.f32 %v2978, 0.0
        %v4771 = vmax.f32 %v3067, 0.0
        %v4772 = vmax.f32 %v3156, 0.0
        %v4773 = vmax.f32 %v3245, 0.0
        %v4774 = vmax.f32 %v3334, 0.0
        %v4775 = vmax.f32 %v3423, 0.0
        %v4776 = vmax.f32 %v3512, 0.0
        %v4777 = vmax.f32 %v3601, 0.0
        %v4778 = vmax.f32 %v3690, 0.0
        %v4779 = vmax.f32 %v3779, 0.0
        %v4780 = vmax.f32 %v3868, 0.0
        %v4781 = vmax.f32 %v3957, 0.0
        %v4782 = vmax.f32 %v4046, 0.0
        %v4783 = vmax.f32 %v4135, 0.0
        %v4784 = vmax.f32 %v4224, 0.0
        %v4785 = vmax.f32 %v4313, 0.0
        %v4786 = vmax.f32 %v2980, 0.0
        %v4787 = vmax.f32 %v3069, 0.0
        %v4788 = vmax.f32 %v3158, 0.0
        %v4789 = vmax.f32 %v3247, 0.0
        %v4790 = vmax.f32 %v3336, 0.0
        %v4791 = vmax.f32 %v3425, 0.0
        %v4792 = vmax.f32 %v3514, 0.0
        %v4793 = vmax.f32 %v3603, 0.0
        %v4794 = vmax.f32 %v3692, 0.0
        %v4795 = vmax.f32 %v3781, 0.0
        %v4796 = vmax.f32 %v3870, 0.0
        %v4797 = vmax.f32 %v3959, 0.0
        %v4798 = vmax.f32 %v4048, 0.0
        %v4799 = vmax.f32 %v4137, 0.0
        %v4800 = vmax.f32 %v4226, 0.0
        %v4801 = vmax.f32 %v4315, 0.0
        %v4802 = vmax.f32 %v2983, 0.0
        %v4803 = vmax.f32 %v3072, 0.0
        %v4804 = vmax.f32 %v3161, 0.0
        %v4805 = vmax.f32 %v3250, 0.0
        %v4806 = vmax.f32 %v3339, 0.0
        %v4807 = vmax.f32 %v3428, 0.0
        %v4808 = vmax.f32 %v3517, 0.0
        %v4809 = vmax.f32 %v3606, 0.0
        %v4810 = vmax.f32 %v3695, 0.0
        %v4811 = vmax.f32 %v3784, 0.0
        %v4812 = vmax.f32 %v3873, 0.0
        %v4813 = vmax.f32 %v3962, 0.0
        %v4814 = vmax.f32 %v4051, 0.0
        %v4815 = vmax.f32 %v4140, 0.0
        %v4816 = vmax.f32 %v4229, 0.0
        %v4817 = vmax.f32 %v4318, 0.0
        %v4818 = vmax.f32 %v2985, 0.0
        %v4819 = vmax.f32 %v3074, 0.0
        %v4820 = vmax.f32 %v3163, 0.0
        %v4821 = vmax.f32 %v3252, 0.0
        %v4822 = vmax.f32 %v3341, 0.0
        %v4823 = vmax.f32 %v3430, 0.0
        %v4824 = vmax.f32 %v3519, 0.0
        %v4825 = vmax.f32 %v3608, 0.0
        %v4826 = vmax.f32 %v3697, 0.0
        %v4827 = vmax.f32 %v3786, 0.0
        %v4828 = vmax.f32 %v3875, 0.0
        %v4829 = vmax.f32 %v3964, 0.0
        %v4830 = vmax.f32 %v4053, 0.0
        %v4831 = vmax.f32 %v4142, 0.0
        %v4832 = vmax.f32 %v4231, 0.0
        %v4833 = vmax.f32 %v4320, 0.0
        %v4834 = vld [vmem:[%s7] sm:$0xff]
        %v4835 = vld [vmem:[%s7 + $0x8] sm:$0xff]
        %v4836 = vld [vmem:[%s7 + $0x10] sm:$0xff]
        %v4837 = vld [vmem:[%s7 + $0x18] sm:$0xff]
        %v4838 = vld [vmem:[%s7 + $0x20] sm:$0xff]
        %v4839 = vld [vmem:[%s7 + $0x28] sm:$0xff]
        %v4840 = vld [vmem:[%s7 + $0x30] sm:$0xff]
        %v4841 = vld [vmem:[%s7 + $0x38] sm:$0xff]
        %v4842 = vld [vmem:[%s7 + $0x40] sm:$0xff]
        %v4843 = vld [vmem:[%s7 + $0x48] sm:$0xff]
        %v4844 = vld [vmem:[%s7 + $0x50] sm:$0xff]
        %v4845 = vld [vmem:[%s7 + $0x58] sm:$0xff]
        %v4846 = vld [vmem:[%s7 + $0x60] sm:$0xff]
        %v4847 = vld [vmem:[%s7 + $0x68] sm:$0xff]
        %v4848 = vld [vmem:[%s7 + $0x70] sm:$0xff]
        %v4849 = vld [vmem:[%s7 + $0x78] sm:$0xff]
        %v4850 = vpack.c.bf16 %v4338, %v4322
        %v4851 = vpack.c.bf16 %v4339, %v4323
        %v4852 = vpack.c.bf16 %v4340, %v4324
        %v4853 = vpack.c.bf16 %v4341, %v4325
        %v4854 = vpack.c.bf16 %v4342, %v4326
        %v4855 = vpack.c.bf16 %v4343, %v4327
        %v4856 = vpack.c.bf16 %v4344, %v4328
        %v4857 = vpack.c.bf16 %v4345, %v4329
        %v4858 = vpack.c.bf16 %v4346, %v4330
        %v4859 = vpack.c.bf16 %v4347, %v4331
        %v4860 = vpack.c.bf16 %v4348, %v4332
        %v4861 = vpack.c.bf16 %v4349, %v4333
        %v4862 = vpack.c.bf16 %v4350, %v4334
        %v4863 = vpack.c.bf16 %v4351, %v4335
        %v4864 = vpack.c.bf16 %v4352, %v4336
        %v4865 = vpack.c.bf16 %v4353, %v4337
        %v4866 = vpack.c.bf16 %v4370, %v4354
        %v4867 = vpack.c.bf16 %v4371, %v4355
        %v4868 = vpack.c.bf16 %v4372, %v4356
        %v4869 = vpack.c.bf16 %v4373, %v4357
        %v4870 = vpack.c.bf16 %v4374, %v4358
        %v4871 = vpack.c.bf16 %v4375, %v4359
        %v4872 = vpack.c.bf16 %v4376, %v4360
        %v4873 = vpack.c.bf16 %v4377, %v4361
        %v4874 = vpack.c.bf16 %v4378, %v4362
        %v4875 = vpack.c.bf16 %v4379, %v4363
        %v4876 = vpack.c.bf16 %v4380, %v4364
        %v4877 = vpack.c.bf16 %v4381, %v4365
        %v4878 = vpack.c.bf16 %v4382, %v4366
        %v4879 = vpack.c.bf16 %v4383, %v4367
        %v4880 = vpack.c.bf16 %v4384, %v4368
        %v4881 = vpack.c.bf16 %v4385, %v4369
        %v4882 = vpack.c.bf16 %v4402, %v4386
        %v4883 = vpack.c.bf16 %v4403, %v4387
        %v4884 = vpack.c.bf16 %v4404, %v4388
        %v4885 = vpack.c.bf16 %v4405, %v4389
        %v4886 = vpack.c.bf16 %v4406, %v4390
        %v4887 = vpack.c.bf16 %v4407, %v4391
        %v4888 = vpack.c.bf16 %v4408, %v4392
        %v4889 = vpack.c.bf16 %v4409, %v4393
        %v4890 = vpack.c.bf16 %v4410, %v4394
        %v4891 = vpack.c.bf16 %v4411, %v4395
        %v4892 = vpack.c.bf16 %v4412, %v4396
        %v4893 = vpack.c.bf16 %v4413, %v4397
        %v4894 = vpack.c.bf16 %v4414, %v4398
        %v4895 = vpack.c.bf16 %v4415, %v4399
        %v4896 = vpack.c.bf16 %v4416, %v4400
        %v4897 = vpack.c.bf16 %v4417, %v4401
        %v4898 = vpack.c.bf16 %v4434, %v4418
        %v4899 = vpack.c.bf16 %v4435, %v4419
        %v4900 = vpack.c.bf16 %v4436, %v4420
        %v4901 = vpack.c.bf16 %v4437, %v4421
        %v4902 = vpack.c.bf16 %v4438, %v4422
        %v4903 = vpack.c.bf16 %v4439, %v4423
        %v4904 = vpack.c.bf16 %v4440, %v4424
        %v4905 = vpack.c.bf16 %v4441, %v4425
        %v4906 = vpack.c.bf16 %v4442, %v4426
        %v4907 = vpack.c.bf16 %v4443, %v4427
        %v4908 = vpack.c.bf16 %v4444, %v4428
        %v4909 = vpack.c.bf16 %v4445, %v4429
        %v4910 = vpack.c.bf16 %v4446, %v4430
        %v4911 = vpack.c.bf16 %v4447, %v4431
        %v4912 = vpack.c.bf16 %v4448, %v4432
        %v4913 = vpack.c.bf16 %v4449, %v4433
        %v4914 = vpack.c.bf16 %v4466, %v4450
        %v4915 = vpack.c.bf16 %v4467, %v4451
        %v4916 = vpack.c.bf16 %v4468, %v4452
        %v4917 = vpack.c.bf16 %v4469, %v4453
        %v4918 = vpack.c.bf16 %v4470, %v4454
        %v4919 = vpack.c.bf16 %v4471, %v4455
        %v4920 = vpack.c.bf16 %v4472, %v4456
        %v4921 = vpack.c.bf16 %v4473, %v4457
        %v4922 = vpack.c.bf16 %v4474, %v4458
        %v4923 = vpack.c.bf16 %v4475, %v4459
        %v4924 = vpack.c.bf16 %v4476, %v4460
        %v4925 = vpack.c.bf16 %v4477, %v4461
        %v4926 = vpack.c.bf16 %v4478, %v4462
        %v4927 = vpack.c.bf16 %v4479, %v4463
        %v4928 = vpack.c.bf16 %v4480, %v4464
        %v4929 = vpack.c.bf16 %v4481, %v4465
        %v4930 = vpack.c.bf16 %v4498, %v4482
        %v4931 = vpack.c.bf16 %v4499, %v4483
        %v4932 = vpack.c.bf16 %v4500, %v4484
        %v4933 = vpack.c.bf16 %v4501, %v4485
        %v4934 = vpack.c.bf16 %v4502, %v4486
        %v4935 = vpack.c.bf16 %v4503, %v4487
        %v4936 = vpack.c.bf16 %v4504, %v4488
        %v4937 = vpack.c.bf16 %v4505, %v4489
        %v4938 = vpack.c.bf16 %v4506, %v4490
        %v4939 = vpack.c.bf16 %v4507, %v4491
        %v4940 = vpack.c.bf16 %v4508, %v4492
        %v4941 = vpack.c.bf16 %v4509, %v4493
        %v4942 = vpack.c.bf16 %v4510, %v4494
        %v4943 = vpack.c.bf16 %v4511, %v4495
        %v4944 = vpack.c.bf16 %v4512, %v4496
        %v4945 = vpack.c.bf16 %v4513, %v4497
        %v4946 = vpack.c.bf16 %v4530, %v4514
        %v4947 = vpack.c.bf16 %v4531, %v4515
        %v4948 = vpack.c.bf16 %v4532, %v4516
        %v4949 = vpack.c.bf16 %v4533, %v4517
        %v4950 = vpack.c.bf16 %v4534, %v4518
        %v4951 = vpack.c.bf16 %v4535, %v4519
        %v4952 = vpack.c.bf16 %v4536, %v4520
        %v4953 = vpack.c.bf16 %v4537, %v4521
        %v4954 = vpack.c.bf16 %v4538, %v4522
        %v4955 = vpack.c.bf16 %v4539, %v4523
        %v4956 = vpack.c.bf16 %v4540, %v4524
        %v4957 = vpack.c.bf16 %v4541, %v4525
        %v4958 = vpack.c.bf16 %v4542, %v4526
        %v4959 = vpack.c.bf16 %v4543, %v4527
        %v4960 = vpack.c.bf16 %v4544, %v4528
        %v4961 = vpack.c.bf16 %v4545, %v4529
        %v4962 = vpack.c.bf16 %v4562, %v4546
        %v4963 = vpack.c.bf16 %v4563, %v4547
        %v4964 = vpack.c.bf16 %v4564, %v4548
        %v4965 = vpack.c.bf16 %v4565, %v4549
        %v4966 = vpack.c.bf16 %v4566, %v4550
        %v4967 = vpack.c.bf16 %v4567, %v4551
        %v4968 = vpack.c.bf16 %v4568, %v4552
        %v4969 = vpack.c.bf16 %v4569, %v4553
        %v4970 = vpack.c.bf16 %v4570, %v4554
        %v4971 = vpack.c.bf16 %v4571, %v4555
        %v4972 = vpack.c.bf16 %v4572, %v4556
        %v4973 = vpack.c.bf16 %v4573, %v4557
        %v4974 = vpack.c.bf16 %v4574, %v4558
        %v4975 = vpack.c.bf16 %v4575, %v4559
        %v4976 = vpack.c.bf16 %v4576, %v4560
        %v4977 = vpack.c.bf16 %v4577, %v4561
        %v4978 = vpack.c.bf16 %v4594, %v4578
        %v4979 = vpack.c.bf16 %v4595, %v4579
        %v4980 = vpack.c.bf16 %v4596, %v4580
        %v4981 = vpack.c.bf16 %v4597, %v4581
        %v4982 = vpack.c.bf16 %v4598, %v4582
        %v4983 = vpack.c.bf16 %v4599, %v4583
        %v4984 = vpack.c.bf16 %v4600, %v4584
        %v4985 = vpack.c.bf16 %v4601, %v4585
        %v4986 = vpack.c.bf16 %v4602, %v4586
        %v4987 = vpack.c.bf16 %v4603, %v4587
        %v4988 = vpack.c.bf16 %v4604, %v4588
        %v4989 = vpack.c.bf16 %v4605, %v4589
        %v4990 = vpack.c.bf16 %v4606, %v4590
        %v4991 = vpack.c.bf16 %v4607, %v4591
        %v4992 = vpack.c.bf16 %v4608, %v4592
        %v4993 = vpack.c.bf16 %v4609, %v4593
        %v4994 = vpack.c.bf16 %v4626, %v4610
        %v4995 = vpack.c.bf16 %v4627, %v4611
        %v4996 = vpack.c.bf16 %v4628, %v4612
        %v4997 = vpack.c.bf16 %v4629, %v4613
        %v4998 = vpack.c.bf16 %v4630, %v4614
        %v4999 = vpack.c.bf16 %v4631, %v4615
        %v5000 = vpack.c.bf16 %v4632, %v4616
        %v5001 = vpack.c.bf16 %v4633, %v4617
        %v5002 = vpack.c.bf16 %v4634, %v4618
        %v5003 = vpack.c.bf16 %v4635, %v4619
        %v5004 = vpack.c.bf16 %v4636, %v4620
        %v5005 = vpack.c.bf16 %v4637, %v4621
        %v5006 = vpack.c.bf16 %v4638, %v4622
        %v5007 = vpack.c.bf16 %v4639, %v4623
        %v5008 = vpack.c.bf16 %v4640, %v4624
        %v5009 = vpack.c.bf16 %v4641, %v4625
        %v5010 = vpack.c.bf16 %v4658, %v4642
        %v5011 = vpack.c.bf16 %v4659, %v4643
        %v5012 = vpack.c.bf16 %v4660, %v4644
        %v5013 = vpack.c.bf16 %v4661, %v4645
        %v5014 = vpack.c.bf16 %v4662, %v4646
        %v5015 = vpack.c.bf16 %v4663, %v4647
        %v5016 = vpack.c.bf16 %v4664, %v4648
        %v5017 = vpack.c.bf16 %v4665, %v4649
        %v5018 = vpack.c.bf16 %v4666, %v4650
        %v5019 = vpack.c.bf16 %v4667, %v4651
        %v5020 = vpack.c.bf16 %v4668, %v4652
        %v5021 = vpack.c.bf16 %v4669, %v4653
        %v5022 = vpack.c.bf16 %v4670, %v4654
        %v5023 = vpack.c.bf16 %v4671, %v4655
        %v5024 = vpack.c.bf16 %v4672, %v4656
        %v5025 = vpack.c.bf16 %v4673, %v4657
        %v5026 = vpack.c.bf16 %v4690, %v4674
        %v5027 = vpack.c.bf16 %v4691, %v4675
        %v5028 = vpack.c.bf16 %v4692, %v4676
        %v5029 = vpack.c.bf16 %v4693, %v4677
        %v5030 = vpack.c.bf16 %v4694, %v4678
        %v5031 = vpack.c.bf16 %v4695, %v4679
        %v5032 = vpack.c.bf16 %v4696, %v4680
        %v5033 = vpack.c.bf16 %v4697, %v4681
        %v5034 = vpack.c.bf16 %v4698, %v4682
        %v5035 = vpack.c.bf16 %v4699, %v4683
        %v5036 = vpack.c.bf16 %v4700, %v4684
        %v5037 = vpack.c.bf16 %v4701, %v4685
        %v5038 = vpack.c.bf16 %v4702, %v4686
        %v5039 = vpack.c.bf16 %v4703, %v4687
        %v5040 = vpack.c.bf16 %v4704, %v4688
        %v5041 = vpack.c.bf16 %v4705, %v4689
        %v5042 = vpack.c.bf16 %v4722, %v4706
        %v5043 = vpack.c.bf16 %v4723, %v4707
        %v5044 = vpack.c.bf16 %v4724, %v4708
        %v5045 = vpack.c.bf16 %v4725, %v4709
        %v5046 = vpack.c.bf16 %v4726, %v4710
        %v5047 = vpack.c.bf16 %v4727, %v4711
        %v5048 = vpack.c.bf16 %v4728, %v4712
        %v5049 = vpack.c.bf16 %v4729, %v4713
        %v5050 = vpack.c.bf16 %v4730, %v4714
        %v5051 = vpack.c.bf16 %v4731, %v4715
        %v5052 = vpack.c.bf16 %v4732, %v4716
        %v5053 = vpack.c.bf16 %v4733, %v4717
        %v5054 = vpack.c.bf16 %v4734, %v4718
        %v5055 = vpack.c.bf16 %v4735, %v4719
        %v5056 = vpack.c.bf16 %v4736, %v4720
        %v5057 = vpack.c.bf16 %v4737, %v4721
        %v5058 = vpack.c.bf16 %v4754, %v4738
        %v5059 = vpack.c.bf16 %v4755, %v4739
        %v5060 = vpack.c.bf16 %v4756, %v4740
        %v5061 = vpack.c.bf16 %v4757, %v4741
        %v5062 = vpack.c.bf16 %v4758, %v4742
        %v5063 = vpack.c.bf16 %v4759, %v4743
        %v5064 = vpack.c.bf16 %v4760, %v4744
        %v5065 = vpack.c.bf16 %v4761, %v4745
        %v5066 = vpack.c.bf16 %v4762, %v4746
        %v5067 = vpack.c.bf16 %v4763, %v4747
        %v5068 = vpack.c.bf16 %v4764, %v4748
        %v5069 = vpack.c.bf16 %v4765, %v4749
        %v5070 = vpack.c.bf16 %v4766, %v4750
        %v5071 = vpack.c.bf16 %v4767, %v4751
        %v5072 = vpack.c.bf16 %v4768, %v4752
        %v5073 = vpack.c.bf16 %v4769, %v4753
        %v5074 = vpack.c.bf16 %v4786, %v4770
        %v5075 = vpack.c.bf16 %v4787, %v4771
        %v5076 = vpack.c.bf16 %v4788, %v4772
        %v5077 = vpack.c.bf16 %v4789, %v4773
        %v5078 = vpack.c.bf16 %v4790, %v4774
        %v5079 = vpack.c.bf16 %v4791, %v4775
        %v5080 = vpack.c.bf16 %v4792, %v4776
        %v5081 = vpack.c.bf16 %v4793, %v4777
        %v5082 = vpack.c.bf16 %v4794, %v4778
        %v5083 = vpack.c.bf16 %v4795, %v4779
        %v5084 = vpack.c.bf16 %v4796, %v4780
        %v5085 = vpack.c.bf16 %v4797, %v4781
        %v5086 = vpack.c.bf16 %v4798, %v4782
        %v5087 = vpack.c.bf16 %v4799, %v4783
        %v5088 = vpack.c.bf16 %v4800, %v4784
        %v5089 = vpack.c.bf16 %v4801, %v4785
        %v5090 = vpack.c.bf16 %v4818, %v4802
        %v5091 = vpack.c.bf16 %v4819, %v4803
        %v5092 = vpack.c.bf16 %v4820, %v4804
        %v5093 = vpack.c.bf16 %v4821, %v4805
        %v5094 = vpack.c.bf16 %v4822, %v4806
        %v5095 = vpack.c.bf16 %v4823, %v4807
        %v5096 = vpack.c.bf16 %v4824, %v4808
        %v5097 = vpack.c.bf16 %v4825, %v4809
        %v5098 = vpack.c.bf16 %v4826, %v4810
        %v5099 = vpack.c.bf16 %v4827, %v4811
        %v5100 = vpack.c.bf16 %v4828, %v4812
        %v5101 = vpack.c.bf16 %v4829, %v4813
        %v5102 = vpack.c.bf16 %v4830, %v4814
        %v5103 = vpack.c.bf16 %v4831, %v4815
        %v5104 = vpack.c.bf16 %v4832, %v4816
        %v5105 = vpack.c.bf16 %v4833, %v4817
        %v5106 = vld [vmem:[%s8] sm:$0xff]
        %v5107 = vld [vmem:[%s8 + $0x8] sm:$0xff]
        %v5108 = vld [vmem:[%s8 + $0x10] sm:$0xff]
        %v5109 = vld [vmem:[%s8 + $0x18] sm:$0xff]
        %v5110 = vld [vmem:[%s8 + $0x20] sm:$0xff]
        %v5111 = vld [vmem:[%s8 + $0x28] sm:$0xff]
        %v5112 = vld [vmem:[%s8 + $0x30] sm:$0xff]
        %v5113 = vld [vmem:[%s8 + $0x38] sm:$0xff]
        %v5114 = vld [vmem:[%s8 + $0x40] sm:$0xff]
        %v5115 = vld [vmem:[%s8 + $0x48] sm:$0xff]
        %v5116 = vld [vmem:[%s8 + $0x50] sm:$0xff]
        %v5117 = vld [vmem:[%s8 + $0x58] sm:$0xff]
        %v5118 = vld [vmem:[%s8 + $0x60] sm:$0xff]
        %v5119 = vld [vmem:[%s8 + $0x68] sm:$0xff]
        %v5120 = vld [vmem:[%s8 + $0x70] sm:$0xff]
        %v5121 = vld [vmem:[%s8 + $0x78] sm:$0xff]
        %5123 = vset.pattern.permute.xlu0 0
        %5124 = vperm.xlu0 %5123, %v5106
        %v5125 = vpop.permute.xlu0 %5124
        %5128 = vset.pattern.permute.xlu0 0
        %5129 = vperm.xlu0 %5128, %v5107
        %v5130 = vpop.permute.xlu0 %5129
        %5133 = vset.pattern.permute.xlu0 0
        %5134 = vperm.xlu0 %5133, %v5108
        %v5135 = vpop.permute.xlu0 %5134
        %5138 = vset.pattern.permute.xlu0 0
        %5139 = vperm.xlu0 %5138, %v5109
        %v5140 = vpop.permute.xlu0 %5139
        %5143 = vset.pattern.permute.xlu0 0
        %5144 = vperm.xlu0 %5143, %v5110
        %v5145 = vpop.permute.xlu0 %5144
        %5148 = vset.pattern.permute.xlu0 0
        %5149 = vperm.xlu0 %5148, %v5111
        %v5150 = vpop.permute.xlu0 %5149
        %5153 = vset.pattern.permute.xlu0 0
        %5154 = vperm.xlu0 %5153, %v5112
        %v5155 = vpop.permute.xlu0 %5154
        %5158 = vset.pattern.permute.xlu0 0
        %5159 = vperm.xlu0 %5158, %v5113
        %v5160 = vpop.permute.xlu0 %5159
        %5163 = vset.pattern.permute.xlu0 0
        %5164 = vperm.xlu0 %5163, %v5114
        %v5165 = vpop.permute.xlu0 %5164
        %5168 = vset.pattern.permute.xlu0 0
        %5169 = vperm.xlu0 %5168, %v5115
        %v5170 = vpop.permute.xlu0 %5169
        %5173 = vset.pattern.permute.xlu0 0
        %5174 = vperm.xlu0 %5173, %v5116
        %v5175 = vpop.permute.xlu0 %5174
        %5178 = vset.pattern.permute.xlu0 0
        %5179 = vperm.xlu0 %5178, %v5117
        %v5180 = vpop.permute.xlu0 %5179
        %5183 = vset.pattern.permute.xlu0 0
        %5184 = vperm.xlu0 %5183, %v5118
        %v5185 = vpop.permute.xlu0 %5184
        %5188 = vset.pattern.permute.xlu0 0
        %5189 = vperm.xlu0 %5188, %v5119
        %v5190 = vpop.permute.xlu0 %5189
        %5193 = vset.pattern.permute.xlu0 0
        %5194 = vperm.xlu0 %5193, %v5120
        %v5195 = vpop.permute.xlu0 %5194
        %5198 = vset.pattern.permute.xlu0 0
        %5199 = vperm.xlu0 %5198, %v5121
        %v5200 = vpop.permute.xlu0 %5199
        %v5218 = vunpack.c.l.b16 %v4834
        %v5219 = vunpack.c.h.b16 %v4834
        %v5220 = vunpack.c.l.b16 %v4835
        %v5221 = vunpack.c.h.b16 %v4835
        %v5222 = vunpack.c.l.b16 %v4836
        %v5223 = vunpack.c.h.b16 %v4836
        %v5224 = vunpack.c.l.b16 %v4837
        %v5225 = vunpack.c.h.b16 %v4837
        %v5226 = vunpack.c.l.b16 %v4838
        %v5227 = vunpack.c.h.b16 %v4838
        %v5228 = vunpack.c.l.b16 %v4839
        %v5229 = vunpack.c.h.b16 %v4839
        %v5230 = vunpack.c.l.b16 %v4840
        %v5231 = vunpack.c.h.b16 %v4840
        %v5232 = vunpack.c.l.b16 %v4841
        %v5233 = vunpack.c.h.b16 %v4841
        %v5234 = vunpack.c.l.b16 %v4842
        %v5235 = vunpack.c.h.b16 %v4842
        %v5236 = vunpack.c.l.b16 %v4843
        %v5237 = vunpack.c.h.b16 %v4843
        %v5238 = vunpack.c.l.b16 %v4844
        %v5239 = vunpack.c.h.b16 %v4844
        %v5240 = vunpack.c.l.b16 %v4845
        %v5241 = vunpack.c.h.b16 %v4845
        %v5242 = vunpack.c.l.b16 %v4846
        %v5243 = vunpack.c.h.b16 %v4846
        %v5244 = vunpack.c.l.b16 %v4847
        %v5245 = vunpack.c.h.b16 %v4847
        %v5246 = vunpack.c.l.b16 %v4848
        %v5247 = vunpack.c.h.b16 %v4848
        %v5248 = vunpack.c.l.b16 %v4849
        %v5249 = vunpack.c.h.b16 %v4849
        %v5250 = vpack.c.b16 %v5220, %v5218
        %v5251 = vpack.c.b16 %v5221, %v5219
        %v5252 = vpack.c.b16 %v5224, %v5222
        %v5253 = vpack.c.b16 %v5225, %v5223
        %v5254 = vpack.c.b16 %v5228, %v5226
        %v5255 = vpack.c.b16 %v5229, %v5227
        %v5256 = vpack.c.b16 %v5232, %v5230
        %v5257 = vpack.c.b16 %v5233, %v5231
        %v5258 = vpack.c.b16 %v5236, %v5234
        %v5259 = vpack.c.b16 %v5237, %v5235
        %v5260 = vpack.c.b16 %v5240, %v5238
        %v5261 = vpack.c.b16 %v5241, %v5239
        %v5262 = vpack.c.b16 %v5244, %v5242
        %v5263 = vpack.c.b16 %v5245, %v5243
        %v5264 = vpack.c.b16 %v5248, %v5246
        %v5265 = vpack.c.b16 %v5249, %v5247
        %5282 = vmatpush.bf16.msra.mxu0 %v4962
        %5283 = vmatpush.bf16.msra.mxu0 %v4946
        %5284 = vmatpush.bf16.msra.mxu0 %v4930
        %5285 = vmatpush.bf16.msra.mxu0 %v4914
        %5286 = vmatpush.bf16.msra.mxu0 %v4898
        %5287 = vmatpush.bf16.msra.mxu0 %v4882
        %5288 = vmatpush.bf16.msra.mxu0 %v4866
        %5289 = vmatpush.bf16.msra.mxu0 %v4850
        %5290 = vmatmul.bf16.gmra.mxu0 %v5250
        %v5291 = vpop.f32.mrf.mxu0
        %v5292 = vadd.f32 %v5125, %v5291
        %v5293 = vpop.f32.mrf.mxu0
        %v5294 = vadd.f32 %v5130, %v5293
        %5295 = vmatmul.bf16.gmra.mxu0 %v5252
        %v5296 = vpop.f32.mrf.mxu0
        %v5297 = vadd.f32 %v5135, %v5296
        %v5298 = vpop.f32.mrf.mxu0
        %v5299 = vadd.f32 %v5140, %v5298
        %5300 = vmatmul.bf16.gmra.mxu0 %v5254
        %v5301 = vpop.f32.mrf.mxu0
        %v5302 = vadd.f32 %v5145, %v5301
        %v5303 = vpop.f32.mrf.mxu0
        %v5304 = vadd.f32 %v5150, %v5303
        %5305 = vmatmul.bf16.gmra.mxu0 %v5256
        %v5306 = vpop.f32.mrf.mxu0
        %v5307 = vadd.f32 %v5155, %v5306
        %v5308 = vpop.f32.mrf.mxu0
        %v5309 = vadd.f32 %v5160, %v5308
        %5310 = vmatmul.bf16.gmra.mxu0 %v5258
        %v5311 = vpop.f32.mrf.mxu0
        %v5312 = vadd.f32 %v5165, %v5311
        %v5313 = vpop.f32.mrf.mxu0
        %v5314 = vadd.f32 %v5170, %v5313
        %5315 = vmatmul.bf16.gmra.mxu0 %v5260
        %v5316 = vpop.f32.mrf.mxu0
        %v5317 = vadd.f32 %v5175, %v5316
        %v5318 = vpop.f32.mrf.mxu0
        %v5319 = vadd.f32 %v5180, %v5318
        %5320 = vmatmul.bf16.gmra.mxu0 %v5262
        %v5321 = vpop.f32.mrf.mxu0
        %v5322 = vadd.f32 %v5185, %v5321
        %v5323 = vpop.f32.mrf.mxu0
        %v5324 = vadd.f32 %v5190, %v5323
        %5325 = vmatmul.bf16.gmra.mxu0 %v5264
        %v5326 = vpop.f32.mrf.mxu0
        %v5327 = vadd.f32 %v5195, %v5326
        %v5328 = vpop.f32.mrf.mxu0
        %v5329 = vadd.f32 %v5200, %v5328
        %5330 = vdwg.mxu0
        %5331 = vmatpush.bf16.msra.mxu0 %v5090
        %5332 = vmatpush.bf16.msra.mxu0 %v5074
        %5333 = vmatpush.bf16.msra.mxu0 %v5058
        %5334 = vmatpush.bf16.msra.mxu0 %v5042
        %5335 = vmatpush.bf16.msra.mxu0 %v5026
        %5336 = vmatpush.bf16.msra.mxu0 %v5010
        %5337 = vmatpush.bf16.msra.mxu0 %v4994
        %5338 = vmatpush.bf16.msra.mxu0 %v4978
        %5339 = vmatmul.bf16.gmra.mxu0 %v5251
        %v5340 = vpop.f32.mrf.mxu0
        %v5341 = vadd.f32 %v5292, %v5340
        %v5342 = vpop.f32.mrf.mxu0
        %v5343 = vadd.f32 %v5294, %v5342
        %5344 = vmatmul.bf16.gmra.mxu0 %v5253
        %v5345 = vpop.f32.mrf.mxu0
        %v5346 = vadd.f32 %v5297, %v5345
        %v5347 = vpop.f32.mrf.mxu0
        %v5348 = vadd.f32 %v5299, %v5347
        %5349 = vmatmul.bf16.gmra.mxu0 %v5255
        %v5350 = vpop.f32.mrf.mxu0
        %v5351 = vadd.f32 %v5302, %v5350
        %v5352 = vpop.f32.mrf.mxu0
        %v5353 = vadd.f32 %v5304, %v5352
        %5354 = vmatmul.bf16.gmra.mxu0 %v5257
        %v5355 = vpop.f32.mrf.mxu0
        %v5356 = vadd.f32 %v5307, %v5355
        %v5357 = vpop.f32.mrf.mxu0
        %v5358 = vadd.f32 %v5309, %v5357
        %5359 = vmatmul.bf16.gmra.mxu0 %v5259
        %v5360 = vpop.f32.mrf.mxu0
        %v5361 = vadd.f32 %v5312, %v5360
        %v5362 = vpop.f32.mrf.mxu0
        %v5363 = vadd.f32 %v5314, %v5362
        %5364 = vmatmul.bf16.gmra.mxu0 %v5261
        %v5365 = vpop.f32.mrf.mxu0
        %v5366 = vadd.f32 %v5317, %v5365
        %v5367 = vpop.f32.mrf.mxu0
        %v5368 = vadd.f32 %v5319, %v5367
        %5369 = vmatmul.bf16.gmra.mxu0 %v5263
        %v5370 = vpop.f32.mrf.mxu0
        %v5371 = vadd.f32 %v5322, %v5370
        %v5372 = vpop.f32.mrf.mxu0
        %v5373 = vadd.f32 %v5324, %v5372
        %5374 = vmatmul.bf16.gmra.mxu0 %v5265
        %v5375 = vpop.f32.mrf.mxu0
        %v5376 = vadd.f32 %v5327, %v5375
        %v5377 = vpop.f32.mrf.mxu0
        %v5378 = vadd.f32 %v5329, %v5377
        %5379 = vdwg.mxu0
        %5380 = vmatpush.bf16.msra.mxu0 %v4963
        %5381 = vmatpush.bf16.msra.mxu0 %v4947
        %5382 = vmatpush.bf16.msra.mxu0 %v4931
        %5383 = vmatpush.bf16.msra.mxu0 %v4915
        %5384 = vmatpush.bf16.msra.mxu0 %v4899
        %5385 = vmatpush.bf16.msra.mxu0 %v4883
        %5386 = vmatpush.bf16.msra.mxu0 %v4867
        %5387 = vmatpush.bf16.msra.mxu0 %v4851
        %5388 = vmatmul.bf16.gmra.mxu0 %v5250
        %v5389 = vpop.f32.mrf.mxu0
        %v5390 = vadd.f32 %v5125, %v5389
        %v5391 = vpop.f32.mrf.mxu0
        %v5392 = vadd.f32 %v5130, %v5391
        %5393 = vmatmul.bf16.gmra.mxu0 %v5252
        %v5394 = vpop.f32.mrf.mxu0
        %v5395 = vadd.f32 %v5135, %v5394
        %v5396 = vpop.f32.mrf.mxu0
        %v5397 = vadd.f32 %v5140, %v5396
        %5398 = vmatmul.bf16.gmra.mxu0 %v5254
        %v5399 = vpop.f32.mrf.mxu0
        %v5400 = vadd.f32 %v5145, %v5399
        %v5401 = vpop.f32.mrf.mxu0
        %v5402 = vadd.f32 %v5150, %v5401
        %5403 = vmatmul.bf16.gmra.mxu0 %v5256
        %v5404 = vpop.f32.mrf.mxu0
        %v5405 = vadd.f32 %v5155, %v5404
        %v5406 = vpop.f32.mrf.mxu0
        %v5407 = vadd.f32 %v5160, %v5406
        %5408 = vmatmul.bf16.gmra.mxu0 %v5258
        %v5409 = vpop.f32.mrf.mxu0
        %v5410 = vadd.f32 %v5165, %v5409
        %v5411 = vpop.f32.mrf.mxu0
        %v5412 = vadd.f32 %v5170, %v5411
        %5413 = vmatmul.bf16.gmra.mxu0 %v5260
        %v5414 = vpop.f32.mrf.mxu0
        %v5415 = vadd.f32 %v5175, %v5414
        %v5416 = vpop.f32.mrf.mxu0
        %v5417 = vadd.f32 %v5180, %v5416
        %5418 = vmatmul.bf16.gmra.mxu0 %v5262
        %v5419 = vpop.f32.mrf.mxu0
        %v5420 = vadd.f32 %v5185, %v5419
        %v5421 = vpop.f32.mrf.mxu0
        %v5422 = vadd.f32 %v5190, %v5421
        %5423 = vmatmul.bf16.gmra.mxu0 %v5264
        %v5424 = vpop.f32.mrf.mxu0
        %v5425 = vadd.f32 %v5195, %v5424
        %v5426 = vpop.f32.mrf.mxu0
        %v5427 = vadd.f32 %v5200, %v5426
        %5428 = vdwg.mxu0
        %5429 = vmatpush.bf16.msra.mxu0 %v5091
        %5430 = vmatpush.bf16.msra.mxu0 %v5075
        %5431 = vmatpush.bf16.msra.mxu0 %v5059
        %5432 = vmatpush.bf16.msra.mxu0 %v5043
        %5433 = vmatpush.bf16.msra.mxu0 %v5027
        %5434 = vmatpush.bf16.msra.mxu0 %v5011
        %5435 = vmatpush.bf16.msra.mxu0 %v4995
        %5436 = vmatpush.bf16.msra.mxu0 %v4979
        %5437 = vmatmul.bf16.gmra.mxu0 %v5251
        %v5438 = vpop.f32.mrf.mxu0
        %v5439 = vadd.f32 %v5390, %v5438
        %v5440 = vpop.f32.mrf.mxu0
        %v5441 = vadd.f32 %v5392, %v5440
        %5442 = vmatmul.bf16.gmra.mxu0 %v5253
        %v5443 = vpop.f32.mrf.mxu0
        %v5444 = vadd.f32 %v5395, %v5443
        %v5445 = vpop.f32.mrf.mxu0
        %v5446 = vadd.f32 %v5397, %v5445
        %5447 = vmatmul.bf16.gmra.mxu0 %v5255
        %v5448 = vpop.f32.mrf.mxu0
        %v5449 = vadd.f32 %v5400, %v5448
        %v5450 = vpop.f32.mrf.mxu0
        %v5451 = vadd.f32 %v5402, %v5450
        %5452 = vmatmul.bf16.gmra.mxu0 %v5257
        %v5453 = vpop.f32.mrf.mxu0
        %v5454 = vadd.f32 %v5405, %v5453
        %v5455 = vpop.f32.mrf.mxu0
        %v5456 = vadd.f32 %v5407, %v5455
        %5457 = vmatmul.bf16.gmra.mxu0 %v5259
        %v5458 = vpop.f32.mrf.mxu0
        %v5459 = vadd.f32 %v5410, %v5458
        %v5460 = vpop.f32.mrf.mxu0
        %v5461 = vadd.f32 %v5412, %v5460
        %5462 = vmatmul.bf16.gmra.mxu0 %v5261
        %v5463 = vpop.f32.mrf.mxu0
        %v5464 = vadd.f32 %v5415, %v5463
        %v5465 = vpop.f32.mrf.mxu0
        %v5466 = vadd.f32 %v5417, %v5465
        %5467 = vmatmul.bf16.gmra.mxu0 %v5263
        %v5468 = vpop.f32.mrf.mxu0
        %v5469 = vadd.f32 %v5420, %v5468
        %v5470 = vpop.f32.mrf.mxu0
        %v5471 = vadd.f32 %v5422, %v5470
        %5472 = vmatmul.bf16.gmra.mxu0 %v5265
        %v5473 = vpop.f32.mrf.mxu0
        %v5474 = vadd.f32 %v5425, %v5473
        %v5475 = vpop.f32.mrf.mxu0
        %v5476 = vadd.f32 %v5427, %v5475
        %5477 = vdwg.mxu0
        %5478 = vmatpush.bf16.msra.mxu0 %v4964
        %5479 = vmatpush.bf16.msra.mxu0 %v4948
        %5480 = vmatpush.bf16.msra.mxu0 %v4932
        %5481 = vmatpush.bf16.msra.mxu0 %v4916
        %5482 = vmatpush.bf16.msra.mxu0 %v4900
        %5483 = vmatpush.bf16.msra.mxu0 %v4884
        %5484 = vmatpush.bf16.msra.mxu0 %v4868
        %5485 = vmatpush.bf16.msra.mxu0 %v4852
        %5486 = vmatmul.bf16.gmra.mxu0 %v5250
        %v5487 = vpop.f32.mrf.mxu0
        %v5488 = vadd.f32 %v5125, %v5487
        %v5489 = vpop.f32.mrf.mxu0
        %v5490 = vadd.f32 %v5130, %v5489
        %5491 = vmatmul.bf16.gmra.mxu0 %v5252
        %v5492 = vpop.f32.mrf.mxu0
        %v5493 = vadd.f32 %v5135, %v5492
        %v5494 = vpop.f32.mrf.mxu0
        %v5495 = vadd.f32 %v5140, %v5494
        %5496 = vmatmul.bf16.gmra.mxu0 %v5254
        %v5497 = vpop.f32.mrf.mxu0
        %v5498 = vadd.f32 %v5145, %v5497
        %v5499 = vpop.f32.mrf.mxu0
        %v5500 = vadd.f32 %v5150, %v5499
        %5501 = vmatmul.bf16.gmra.mxu0 %v5256
        %v5502 = vpop.f32.mrf.mxu0
        %v5503 = vadd.f32 %v5155, %v5502
        %v5504 = vpop.f32.mrf.mxu0
        %v5505 = vadd.f32 %v5160, %v5504
        %5506 = vmatmul.bf16.gmra.mxu0 %v5258
        %v5507 = vpop.f32.mrf.mxu0
        %v5508 = vadd.f32 %v5165, %v5507
        %v5509 = vpop.f32.mrf.mxu0
        %v5510 = vadd.f32 %v5170, %v5509
        %5511 = vmatmul.bf16.gmra.mxu0 %v5260
        %v5512 = vpop.f32.mrf.mxu0
        %v5513 = vadd.f32 %v5175, %v5512
        %v5514 = vpop.f32.mrf.mxu0
        %v5515 = vadd.f32 %v5180, %v5514
        %5516 = vmatmul.bf16.gmra.mxu0 %v5262
        %v5517 = vpop.f32.mrf.mxu0
        %v5518 = vadd.f32 %v5185, %v5517
        %v5519 = vpop.f32.mrf.mxu0
        %v5520 = vadd.f32 %v5190, %v5519
        %5521 = vmatmul.bf16.gmra.mxu0 %v5264
        %v5522 = vpop.f32.mrf.mxu0
        %v5523 = vadd.f32 %v5195, %v5522
        %v5524 = vpop.f32.mrf.mxu0
        %v5525 = vadd.f32 %v5200, %v5524
        %5526 = vdwg.mxu0
        %5527 = vmatpush.bf16.msra.mxu0 %v5092
        %5528 = vmatpush.bf16.msra.mxu0 %v5076
        %5529 = vmatpush.bf16.msra.mxu0 %v5060
        %5530 = vmatpush.bf16.msra.mxu0 %v5044
        %5531 = vmatpush.bf16.msra.mxu0 %v5028
        %5532 = vmatpush.bf16.msra.mxu0 %v5012
        %5533 = vmatpush.bf16.msra.mxu0 %v4996
        %5534 = vmatpush.bf16.msra.mxu0 %v4980
        %5535 = vmatmul.bf16.gmra.mxu0 %v5251
        %v5536 = vpop.f32.mrf.mxu0
        %v5537 = vadd.f32 %v5488, %v5536
        %v5538 = vpop.f32.mrf.mxu0
        %v5539 = vadd.f32 %v5490, %v5538
        %5540 = vmatmul.bf16.gmra.mxu0 %v5253
        %v5541 = vpop.f32.mrf.mxu0
        %v5542 = vadd.f32 %v5493, %v5541
        %v5543 = vpop.f32.mrf.mxu0
        %v5544 = vadd.f32 %v5495, %v5543
        %5545 = vmatmul.bf16.gmra.mxu0 %v5255
        %v5546 = vpop.f32.mrf.mxu0
        %v5547 = vadd.f32 %v5498, %v5546
        %v5548 = vpop.f32.mrf.mxu0
        %v5549 = vadd.f32 %v5500, %v5548
        %5550 = vmatmul.bf16.gmra.mxu0 %v5257
        %v5551 = vpop.f32.mrf.mxu0
        %v5552 = vadd.f32 %v5503, %v5551
        %v5553 = vpop.f32.mrf.mxu0
        %v5554 = vadd.f32 %v5505, %v5553
        %5555 = vmatmul.bf16.gmra.mxu0 %v5259
        %v5556 = vpop.f32.mrf.mxu0
        %v5557 = vadd.f32 %v5508, %v5556
        %v5558 = vpop.f32.mrf.mxu0
        %v5559 = vadd.f32 %v5510, %v5558
        %5560 = vmatmul.bf16.gmra.mxu0 %v5261
        %v5561 = vpop.f32.mrf.mxu0
        %v5562 = vadd.f32 %v5513, %v5561
        %v5563 = vpop.f32.mrf.mxu0
        %v5564 = vadd.f32 %v5515, %v5563
        %5565 = vmatmul.bf16.gmra.mxu0 %v5263
        %v5566 = vpop.f32.mrf.mxu0
        %v5567 = vadd.f32 %v5518, %v5566
        %v5568 = vpop.f32.mrf.mxu0
        %v5569 = vadd.f32 %v5520, %v5568
        %5570 = vmatmul.bf16.gmra.mxu0 %v5265
        %v5571 = vpop.f32.mrf.mxu0
        %v5572 = vadd.f32 %v5523, %v5571
        %v5573 = vpop.f32.mrf.mxu0
        %v5574 = vadd.f32 %v5525, %v5573
        %5575 = vdwg.mxu0
        %5576 = vmatpush.bf16.msra.mxu0 %v4965
        %5577 = vmatpush.bf16.msra.mxu0 %v4949
        %5578 = vmatpush.bf16.msra.mxu0 %v4933
        %5579 = vmatpush.bf16.msra.mxu0 %v4917
        %5580 = vmatpush.bf16.msra.mxu0 %v4901
        %5581 = vmatpush.bf16.msra.mxu0 %v4885
        %5582 = vmatpush.bf16.msra.mxu0 %v4869
        %5583 = vmatpush.bf16.msra.mxu0 %v4853
        %5584 = vmatmul.bf16.gmra.mxu0 %v5250
        %v5585 = vpop.f32.mrf.mxu0
        %v5586 = vadd.f32 %v5125, %v5585
        %v5587 = vpop.f32.mrf.mxu0
        %v5588 = vadd.f32 %v5130, %v5587
        %5589 = vmatmul.bf16.gmra.mxu0 %v5252
        %v5590 = vpop.f32.mrf.mxu0
        %v5591 = vadd.f32 %v5135, %v5590
        %v5592 = vpop.f32.mrf.mxu0
        %v5593 = vadd.f32 %v5140, %v5592
        %5594 = vmatmul.bf16.gmra.mxu0 %v5254
        %v5595 = vpop.f32.mrf.mxu0
        %v5596 = vadd.f32 %v5145, %v5595
        %v5597 = vpop.f32.mrf.mxu0
        %v5598 = vadd.f32 %v5150, %v5597
        %5599 = vmatmul.bf16.gmra.mxu0 %v5256
        %v5600 = vpop.f32.mrf.mxu0
        %v5601 = vadd.f32 %v5155, %v5600
        %v5602 = vpop.f32.mrf.mxu0
        %v5603 = vadd.f32 %v5160, %v5602
        %5604 = vmatmul.bf16.gmra.mxu0 %v5258
        %v5605 = vpop.f32.mrf.mxu0
        %v5606 = vadd.f32 %v5165, %v5605
        %v5607 = vpop.f32.mrf.mxu0
        %v5608 = vadd.f32 %v5170, %v5607
        %5609 = vmatmul.bf16.gmra.mxu0 %v5260
        %v5610 = vpop.f32.mrf.mxu0
        %v5611 = vadd.f32 %v5175, %v5610
        %v5612 = vpop.f32.mrf.mxu0
        %v5613 = vadd.f32 %v5180, %v5612
        %5614 = vmatmul.bf16.gmra.mxu0 %v5262
        %v5615 = vpop.f32.mrf.mxu0
        %v5616 = vadd.f32 %v5185, %v5615
        %v5617 = vpop.f32.mrf.mxu0
        %v5618 = vadd.f32 %v5190, %v5617
        %5619 = vmatmul.bf16.gmra.mxu0 %v5264
        %v5620 = vpop.f32.mrf.mxu0
        %v5621 = vadd.f32 %v5195, %v5620
        %v5622 = vpop.f32.mrf.mxu0
        %v5623 = vadd.f32 %v5200, %v5622
        %5624 = vdwg.mxu0
        %5625 = vmatpush.bf16.msra.mxu0 %v5093
        %5626 = vmatpush.bf16.msra.mxu0 %v5077
        %5627 = vmatpush.bf16.msra.mxu0 %v5061
        %5628 = vmatpush.bf16.msra.mxu0 %v5045
        %5629 = vmatpush.bf16.msra.mxu0 %v5029
        %5630 = vmatpush.bf16.msra.mxu0 %v5013
        %5631 = vmatpush.bf16.msra.mxu0 %v4997
        %5632 = vmatpush.bf16.msra.mxu0 %v4981
        %5633 = vmatmul.bf16.gmra.mxu0 %v5251
        %v5634 = vpop.f32.mrf.mxu0
        %v5635 = vadd.f32 %v5586, %v5634
        %v5636 = vpop.f32.mrf.mxu0
        %v5637 = vadd.f32 %v5588, %v5636
        %5638 = vmatmul.bf16.gmra.mxu0 %v5253
        %v5639 = vpop.f32.mrf.mxu0
        %v5640 = vadd.f32 %v5591, %v5639
        %v5641 = vpop.f32.mrf.mxu0
        %v5642 = vadd.f32 %v5593, %v5641
        %5643 = vmatmul.bf16.gmra.mxu0 %v5255
        %v5644 = vpop.f32.mrf.mxu0
        %v5645 = vadd.f32 %v5596, %v5644
        %v5646 = vpop.f32.mrf.mxu0
        %v5647 = vadd.f32 %v5598, %v5646
        %5648 = vmatmul.bf16.gmra.mxu0 %v5257
        %v5649 = vpop.f32.mrf.mxu0
        %v5650 = vadd.f32 %v5601, %v5649
        %v5651 = vpop.f32.mrf.mxu0
        %v5652 = vadd.f32 %v5603, %v5651
        %5653 = vmatmul.bf16.gmra.mxu0 %v5259
        %v5654 = vpop.f32.mrf.mxu0
        %v5655 = vadd.f32 %v5606, %v5654
        %v5656 = vpop.f32.mrf.mxu0
        %v5657 = vadd.f32 %v5608, %v5656
        %5658 = vmatmul.bf16.gmra.mxu0 %v5261
        %v5659 = vpop.f32.mrf.mxu0
        %v5660 = vadd.f32 %v5611, %v5659
        %v5661 = vpop.f32.mrf.mxu0
        %v5662 = vadd.f32 %v5613, %v5661
        %5663 = vmatmul.bf16.gmra.mxu0 %v5263
        %v5664 = vpop.f32.mrf.mxu0
        %v5665 = vadd.f32 %v5616, %v5664
        %v5666 = vpop.f32.mrf.mxu0
        %v5667 = vadd.f32 %v5618, %v5666
        %5668 = vmatmul.bf16.gmra.mxu0 %v5265
        %v5669 = vpop.f32.mrf.mxu0
        %v5670 = vadd.f32 %v5621, %v5669
        %v5671 = vpop.f32.mrf.mxu0
        %v5672 = vadd.f32 %v5623, %v5671
        %5673 = vdwg.mxu0
        %5674 = vmatpush.bf16.msra.mxu0 %v4966
        %5675 = vmatpush.bf16.msra.mxu0 %v4950
        %5676 = vmatpush.bf16.msra.mxu0 %v4934
        %5677 = vmatpush.bf16.msra.mxu0 %v4918
        %5678 = vmatpush.bf16.msra.mxu0 %v4902
        %5679 = vmatpush.bf16.msra.mxu0 %v4886
        %5680 = vmatpush.bf16.msra.mxu0 %v4870
        %5681 = vmatpush.bf16.msra.mxu0 %v4854
        %5682 = vmatmul.bf16.gmra.mxu0 %v5250
        %v5683 = vpop.f32.mrf.mxu0
        %v5684 = vadd.f32 %v5125, %v5683
        %v5685 = vpop.f32.mrf.mxu0
        %v5686 = vadd.f32 %v5130, %v5685
        %5687 = vmatmul.bf16.gmra.mxu0 %v5252
        %v5688 = vpop.f32.mrf.mxu0
        %v5689 = vadd.f32 %v5135, %v5688
        %v5690 = vpop.f32.mrf.mxu0
        %v5691 = vadd.f32 %v5140, %v5690
        %5692 = vmatmul.bf16.gmra.mxu0 %v5254
        %v5693 = vpop.f32.mrf.mxu0
        %v5694 = vadd.f32 %v5145, %v5693
        %v5695 = vpop.f32.mrf.mxu0
        %v5696 = vadd.f32 %v5150, %v5695
        %5697 = vmatmul.bf16.gmra.mxu0 %v5256
        %v5698 = vpop.f32.mrf.mxu0
        %v5699 = vadd.f32 %v5155, %v5698
        %v5700 = vpop.f32.mrf.mxu0
        %v5701 = vadd.f32 %v5160, %v5700
        %5702 = vmatmul.bf16.gmra.mxu0 %v5258
        %v5703 = vpop.f32.mrf.mxu0
        %v5704 = vadd.f32 %v5165, %v5703
        %v5705 = vpop.f32.mrf.mxu0
        %v5706 = vadd.f32 %v5170, %v5705
        %5707 = vmatmul.bf16.gmra.mxu0 %v5260
        %v5708 = vpop.f32.mrf.mxu0
        %v5709 = vadd.f32 %v5175, %v5708
        %v5710 = vpop.f32.mrf.mxu0
        %v5711 = vadd.f32 %v5180, %v5710
        %5712 = vmatmul.bf16.gmra.mxu0 %v5262
        %v5713 = vpop.f32.mrf.mxu0
        %v5714 = vadd.f32 %v5185, %v5713
        %v5715 = vpop.f32.mrf.mxu0
        %v5716 = vadd.f32 %v5190, %v5715
        %5717 = vmatmul.bf16.gmra.mxu0 %v5264
        %v5718 = vpop.f32.mrf.mxu0
        %v5719 = vadd.f32 %v5195, %v5718
        %v5720 = vpop.f32.mrf.mxu0
        %v5721 = vadd.f32 %v5200, %v5720
        %5722 = vdwg.mxu0
        %5723 = vmatpush.bf16.msra.mxu0 %v5094
        %5724 = vmatpush.bf16.msra.mxu0 %v5078
        %5725 = vmatpush.bf16.msra.mxu0 %v5062
        %5726 = vmatpush.bf16.msra.mxu0 %v5046
        %5727 = vmatpush.bf16.msra.mxu0 %v5030
        %5728 = vmatpush.bf16.msra.mxu0 %v5014
        %5729 = vmatpush.bf16.msra.mxu0 %v4998
        %5730 = vmatpush.bf16.msra.mxu0 %v4982
        %5731 = vmatmul.bf16.gmra.mxu0 %v5251
        %v5732 = vpop.f32.mrf.mxu0
        %v5733 = vadd.f32 %v5684, %v5732
        %v5734 = vpop.f32.mrf.mxu0
        %v5735 = vadd.f32 %v5686, %v5734
        %5736 = vmatmul.bf16.gmra.mxu0 %v5253
        %v5737 = vpop.f32.mrf.mxu0
        %v5738 = vadd.f32 %v5689, %v5737
        %v5739 = vpop.f32.mrf.mxu0
        %v5740 = vadd.f32 %v5691, %v5739
        %5741 = vmatmul.bf16.gmra.mxu0 %v5255
        %v5742 = vpop.f32.mrf.mxu0
        %v5743 = vadd.f32 %v5694, %v5742
        %v5744 = vpop.f32.mrf.mxu0
        %v5745 = vadd.f32 %v5696, %v5744
        %5746 = vmatmul.bf16.gmra.mxu0 %v5257
        %v5747 = vpop.f32.mrf.mxu0
        %v5748 = vadd.f32 %v5699, %v5747
        %v5749 = vpop.f32.mrf.mxu0
        %v5750 = vadd.f32 %v5701, %v5749
        %5751 = vmatmul.bf16.gmra.mxu0 %v5259
        %v5752 = vpop.f32.mrf.mxu0
        %v5753 = vadd.f32 %v5704, %v5752
        %v5754 = vpop.f32.mrf.mxu0
        %v5755 = vadd.f32 %v5706, %v5754
        %5756 = vmatmul.bf16.gmra.mxu0 %v5261
        %v5757 = vpop.f32.mrf.mxu0
        %v5758 = vadd.f32 %v5709, %v5757
        %v5759 = vpop.f32.mrf.mxu0
        %v5760 = vadd.f32 %v5711, %v5759
        %5761 = vmatmul.bf16.gmra.mxu0 %v5263
        %v5762 = vpop.f32.mrf.mxu0
        %v5763 = vadd.f32 %v5714, %v5762
        %v5764 = vpop.f32.mrf.mxu0
        %v5765 = vadd.f32 %v5716, %v5764
        %5766 = vmatmul.bf16.gmra.mxu0 %v5265
        %v5767 = vpop.f32.mrf.mxu0
        %v5768 = vadd.f32 %v5719, %v5767
        %v5769 = vpop.f32.mrf.mxu0
        %v5770 = vadd.f32 %v5721, %v5769
        %5771 = vdwg.mxu0
        %5772 = vmatpush.bf16.msra.mxu0 %v4967
        %5773 = vmatpush.bf16.msra.mxu0 %v4951
        %5774 = vmatpush.bf16.msra.mxu0 %v4935
        %5775 = vmatpush.bf16.msra.mxu0 %v4919
        %5776 = vmatpush.bf16.msra.mxu0 %v4903
        %5777 = vmatpush.bf16.msra.mxu0 %v4887
        %5778 = vmatpush.bf16.msra.mxu0 %v4871
        %5779 = vmatpush.bf16.msra.mxu0 %v4855
        %5780 = vmatmul.bf16.gmra.mxu0 %v5250
        %v5781 = vpop.f32.mrf.mxu0
        %v5782 = vadd.f32 %v5125, %v5781
        %v5783 = vpop.f32.mrf.mxu0
        %v5784 = vadd.f32 %v5130, %v5783
        %5785 = vmatmul.bf16.gmra.mxu0 %v5252
        %v5786 = vpop.f32.mrf.mxu0
        %v5787 = vadd.f32 %v5135, %v5786
        %v5788 = vpop.f32.mrf.mxu0
        %v5789 = vadd.f32 %v5140, %v5788
        %5790 = vmatmul.bf16.gmra.mxu0 %v5254
        %v5791 = vpop.f32.mrf.mxu0
        %v5792 = vadd.f32 %v5145, %v5791
        %v5793 = vpop.f32.mrf.mxu0
        %v5794 = vadd.f32 %v5150, %v5793
        %5795 = vmatmul.bf16.gmra.mxu0 %v5256
        %v5796 = vpop.f32.mrf.mxu0
        %v5797 = vadd.f32 %v5155, %v5796
        %v5798 = vpop.f32.mrf.mxu0
        %v5799 = vadd.f32 %v5160, %v5798
        %5800 = vmatmul.bf16.gmra.mxu0 %v5258
        %v5801 = vpop.f32.mrf.mxu0
        %v5802 = vadd.f32 %v5165, %v5801
        %v5803 = vpop.f32.mrf.mxu0
        %v5804 = vadd.f32 %v5170, %v5803
        %5805 = vmatmul.bf16.gmra.mxu0 %v5260
        %v5806 = vpop.f32.mrf.mxu0
        %v5807 = vadd.f32 %v5175, %v5806
        %v5808 = vpop.f32.mrf.mxu0
        %v5809 = vadd.f32 %v5180, %v5808
        %5810 = vmatmul.bf16.gmra.mxu0 %v5262
        %v5811 = vpop.f32.mrf.mxu0
        %v5812 = vadd.f32 %v5185, %v5811
        %v5813 = vpop.f32.mrf.mxu0
        %v5814 = vadd.f32 %v5190, %v5813
        %5815 = vmatmul.bf16.gmra.mxu0 %v5264
        %v5816 = vpop.f32.mrf.mxu0
        %v5817 = vadd.f32 %v5195, %v5816
        %v5818 = vpop.f32.mrf.mxu0
        %v5819 = vadd.f32 %v5200, %v5818
        %5820 = vdwg.mxu0
        %5821 = vmatpush.bf16.msra.mxu0 %v5095
        %5822 = vmatpush.bf16.msra.mxu0 %v5079
        %5823 = vmatpush.bf16.msra.mxu0 %v5063
        %5824 = vmatpush.bf16.msra.mxu0 %v5047
        %5825 = vmatpush.bf16.msra.mxu0 %v5031
        %5826 = vmatpush.bf16.msra.mxu0 %v5015
        %5827 = vmatpush.bf16.msra.mxu0 %v4999
        %5828 = vmatpush.bf16.msra.mxu0 %v4983
        %5829 = vmatmul.bf16.gmra.mxu0 %v5251
        %v5830 = vpop.f32.mrf.mxu0
        %v5831 = vadd.f32 %v5782, %v5830
        %v5832 = vpop.f32.mrf.mxu0
        %v5833 = vadd.f32 %v5784, %v5832
        %5834 = vmatmul.bf16.gmra.mxu0 %v5253
        %v5835 = vpop.f32.mrf.mxu0
        %v5836 = vadd.f32 %v5787, %v5835
        %v5837 = vpop.f32.mrf.mxu0
        %v5838 = vadd.f32 %v5789, %v5837
        %5839 = vmatmul.bf16.gmra.mxu0 %v5255
        %v5840 = vpop.f32.mrf.mxu0
        %v5841 = vadd.f32 %v5792, %v5840
        %v5842 = vpop.f32.mrf.mxu0
        %v5843 = vadd.f32 %v5794, %v5842
        %5844 = vmatmul.bf16.gmra.mxu0 %v5257
        %v5845 = vpop.f32.mrf.mxu0
        %v5846 = vadd.f32 %v5797, %v5845
        %v5847 = vpop.f32.mrf.mxu0
        %v5848 = vadd.f32 %v5799, %v5847
        %5849 = vmatmul.bf16.gmra.mxu0 %v5259
        %v5850 = vpop.f32.mrf.mxu0
        %v5851 = vadd.f32 %v5802, %v5850
        %v5852 = vpop.f32.mrf.mxu0
        %v5853 = vadd.f32 %v5804, %v5852
        %5854 = vmatmul.bf16.gmra.mxu0 %v5261
        %v5855 = vpop.f32.mrf.mxu0
        %v5856 = vadd.f32 %v5807, %v5855
        %v5857 = vpop.f32.mrf.mxu0
        %v5858 = vadd.f32 %v5809, %v5857
        %5859 = vmatmul.bf16.gmra.mxu0 %v5263
        %v5860 = vpop.f32.mrf.mxu0
        %v5861 = vadd.f32 %v5812, %v5860
        %v5862 = vpop.f32.mrf.mxu0
        %v5863 = vadd.f32 %v5814, %v5862
        %5864 = vmatmul.bf16.gmra.mxu0 %v5265
        %v5865 = vpop.f32.mrf.mxu0
        %v5866 = vadd.f32 %v5817, %v5865
        %v5867 = vpop.f32.mrf.mxu0
        %v5868 = vadd.f32 %v5819, %v5867
        %5869 = vdwg.mxu0
        %5870 = vmatpush.bf16.msra.mxu0 %v4968
        %5871 = vmatpush.bf16.msra.mxu0 %v4952
        %5872 = vmatpush.bf16.msra.mxu0 %v4936
        %5873 = vmatpush.bf16.msra.mxu0 %v4920
        %5874 = vmatpush.bf16.msra.mxu0 %v4904
        %5875 = vmatpush.bf16.msra.mxu0 %v4888
        %5876 = vmatpush.bf16.msra.mxu0 %v4872
        %5877 = vmatpush.bf16.msra.mxu0 %v4856
        %5878 = vmatmul.bf16.gmra.mxu0 %v5250
        %v5879 = vpop.f32.mrf.mxu0
        %v5880 = vadd.f32 %v5125, %v5879
        %v5881 = vpop.f32.mrf.mxu0
        %v5882 = vadd.f32 %v5130, %v5881
        %5883 = vmatmul.bf16.gmra.mxu0 %v5252
        %v5884 = vpop.f32.mrf.mxu0
        %v5885 = vadd.f32 %v5135, %v5884
        %v5886 = vpop.f32.mrf.mxu0
        %v5887 = vadd.f32 %v5140, %v5886
        %5888 = vmatmul.bf16.gmra.mxu0 %v5254
        %v5889 = vpop.f32.mrf.mxu0
        %v5890 = vadd.f32 %v5145, %v5889
        %v5891 = vpop.f32.mrf.mxu0
        %v5892 = vadd.f32 %v5150, %v5891
        %5893 = vmatmul.bf16.gmra.mxu0 %v5256
        %v5894 = vpop.f32.mrf.mxu0
        %v5895 = vadd.f32 %v5155, %v5894
        %v5896 = vpop.f32.mrf.mxu0
        %v5897 = vadd.f32 %v5160, %v5896
        %5898 = vmatmul.bf16.gmra.mxu0 %v5258
        %v5899 = vpop.f32.mrf.mxu0
        %v5900 = vadd.f32 %v5165, %v5899
        %v5901 = vpop.f32.mrf.mxu0
        %v5902 = vadd.f32 %v5170, %v5901
        %5903 = vmatmul.bf16.gmra.mxu0 %v5260
        %v5904 = vpop.f32.mrf.mxu0
        %v5905 = vadd.f32 %v5175, %v5904
        %v5906 = vpop.f32.mrf.mxu0
        %v5907 = vadd.f32 %v5180, %v5906
        %5908 = vmatmul.bf16.gmra.mxu0 %v5262
        %v5909 = vpop.f32.mrf.mxu0
        %v5910 = vadd.f32 %v5185, %v5909
        %v5911 = vpop.f32.mrf.mxu0
        %v5912 = vadd.f32 %v5190, %v5911
        %5913 = vmatmul.bf16.gmra.mxu0 %v5264
        %v5914 = vpop.f32.mrf.mxu0
        %v5915 = vadd.f32 %v5195, %v5914
        %v5916 = vpop.f32.mrf.mxu0
        %v5917 = vadd.f32 %v5200, %v5916
        %5918 = vdwg.mxu0
        %5919 = vmatpush.bf16.msra.mxu0 %v5096
        %5920 = vmatpush.bf16.msra.mxu0 %v5080
        %5921 = vmatpush.bf16.msra.mxu0 %v5064
        %5922 = vmatpush.bf16.msra.mxu0 %v5048
        %5923 = vmatpush.bf16.msra.mxu0 %v5032
        %5924 = vmatpush.bf16.msra.mxu0 %v5016
        %5925 = vmatpush.bf16.msra.mxu0 %v5000
        %5926 = vmatpush.bf16.msra.mxu0 %v4984
        %5927 = vmatmul.bf16.gmra.mxu0 %v5251
        %v5928 = vpop.f32.mrf.mxu0
        %v5929 = vadd.f32 %v5880, %v5928
        %v5930 = vpop.f32.mrf.mxu0
        %v5931 = vadd.f32 %v5882, %v5930
        %5932 = vmatmul.bf16.gmra.mxu0 %v5253
        %v5933 = vpop.f32.mrf.mxu0
        %v5934 = vadd.f32 %v5885, %v5933
        %v5935 = vpop.f32.mrf.mxu0
        %v5936 = vadd.f32 %v5887, %v5935
        %5937 = vmatmul.bf16.gmra.mxu0 %v5255
        %v5938 = vpop.f32.mrf.mxu0
        %v5939 = vadd.f32 %v5890, %v5938
        %v5940 = vpop.f32.mrf.mxu0
        %v5941 = vadd.f32 %v5892, %v5940
        %5942 = vmatmul.bf16.gmra.mxu0 %v5257
        %v5943 = vpop.f32.mrf.mxu0
        %v5944 = vadd.f32 %v5895, %v5943
        %v5945 = vpop.f32.mrf.mxu0
        %v5946 = vadd.f32 %v5897, %v5945
        %5947 = vmatmul.bf16.gmra.mxu0 %v5259
        %v5948 = vpop.f32.mrf.mxu0
        %v5949 = vadd.f32 %v5900, %v5948
        %v5950 = vpop.f32.mrf.mxu0
        %v5951 = vadd.f32 %v5902, %v5950
        %5952 = vmatmul.bf16.gmra.mxu0 %v5261
        %v5953 = vpop.f32.mrf.mxu0
        %v5954 = vadd.f32 %v5905, %v5953
        %v5955 = vpop.f32.mrf.mxu0
        %v5956 = vadd.f32 %v5907, %v5955
        %5957 = vmatmul.bf16.gmra.mxu0 %v5263
        %v5958 = vpop.f32.mrf.mxu0
        %v5959 = vadd.f32 %v5910, %v5958
        %v5960 = vpop.f32.mrf.mxu0
        %v5961 = vadd.f32 %v5912, %v5960
        %5962 = vmatmul.bf16.gmra.mxu0 %v5265
        %v5963 = vpop.f32.mrf.mxu0
        %v5964 = vadd.f32 %v5915, %v5963
        %v5965 = vpop.f32.mrf.mxu0
        %v5966 = vadd.f32 %v5917, %v5965
        %5967 = vdwg.mxu0
        %5968 = vmatpush.bf16.msra.mxu0 %v4969
        %5969 = vmatpush.bf16.msra.mxu0 %v4953
        %5970 = vmatpush.bf16.msra.mxu0 %v4937
        %5971 = vmatpush.bf16.msra.mxu0 %v4921
        %5972 = vmatpush.bf16.msra.mxu0 %v4905
        %5973 = vmatpush.bf16.msra.mxu0 %v4889
        %5974 = vmatpush.bf16.msra.mxu0 %v4873
        %5975 = vmatpush.bf16.msra.mxu0 %v4857
        %5976 = vmatmul.bf16.gmra.mxu0 %v5250
        %v5977 = vpop.f32.mrf.mxu0
        %v5978 = vadd.f32 %v5125, %v5977
        %v5979 = vpop.f32.mrf.mxu0
        %v5980 = vadd.f32 %v5130, %v5979
        %5981 = vmatmul.bf16.gmra.mxu0 %v5252
        %v5982 = vpop.f32.mrf.mxu0
        %v5983 = vadd.f32 %v5135, %v5982
        %v5984 = vpop.f32.mrf.mxu0
        %v5985 = vadd.f32 %v5140, %v5984
        %5986 = vmatmul.bf16.gmra.mxu0 %v5254
        %v5987 = vpop.f32.mrf.mxu0
        %v5988 = vadd.f32 %v5145, %v5987
        %v5989 = vpop.f32.mrf.mxu0
        %v5990 = vadd.f32 %v5150, %v5989
        %5991 = vmatmul.bf16.gmra.mxu0 %v5256
        %v5992 = vpop.f32.mrf.mxu0
        %v5993 = vadd.f32 %v5155, %v5992
        %v5994 = vpop.f32.mrf.mxu0
        %v5995 = vadd.f32 %v5160, %v5994
        %5996 = vmatmul.bf16.gmra.mxu0 %v5258
        %v5997 = vpop.f32.mrf.mxu0
        %v5998 = vadd.f32 %v5165, %v5997
        %v5999 = vpop.f32.mrf.mxu0
        %v6000 = vadd.f32 %v5170, %v5999
        %6001 = vmatmul.bf16.gmra.mxu0 %v5260
        %v6002 = vpop.f32.mrf.mxu0
        %v6003 = vadd.f32 %v5175, %v6002
        %v6004 = vpop.f32.mrf.mxu0
        %v6005 = vadd.f32 %v5180, %v6004
        %6006 = vmatmul.bf16.gmra.mxu0 %v5262
        %v6007 = vpop.f32.mrf.mxu0
        %v6008 = vadd.f32 %v5185, %v6007
        %v6009 = vpop.f32.mrf.mxu0
        %v6010 = vadd.f32 %v5190, %v6009
        %6011 = vmatmul.bf16.gmra.mxu0 %v5264
        %v6012 = vpop.f32.mrf.mxu0
        %v6013 = vadd.f32 %v5195, %v6012
        %v6014 = vpop.f32.mrf.mxu0
        %v6015 = vadd.f32 %v5200, %v6014
        %6016 = vdwg.mxu0
        %6017 = vmatpush.bf16.msra.mxu0 %v5097
        %6018 = vmatpush.bf16.msra.mxu0 %v5081
        %6019 = vmatpush.bf16.msra.mxu0 %v5065
        %6020 = vmatpush.bf16.msra.mxu0 %v5049
        %6021 = vmatpush.bf16.msra.mxu0 %v5033
        %6022 = vmatpush.bf16.msra.mxu0 %v5017
        %6023 = vmatpush.bf16.msra.mxu0 %v5001
        %6024 = vmatpush.bf16.msra.mxu0 %v4985
        %6025 = vmatmul.bf16.gmra.mxu0 %v5251
        %v6026 = vpop.f32.mrf.mxu0
        %v6027 = vadd.f32 %v5978, %v6026
        %v6028 = vpop.f32.mrf.mxu0
        %v6029 = vadd.f32 %v5980, %v6028
        %6030 = vmatmul.bf16.gmra.mxu0 %v5253
        %v6031 = vpop.f32.mrf.mxu0
        %v6032 = vadd.f32 %v5983, %v6031
        %v6033 = vpop.f32.mrf.mxu0
        %v6034 = vadd.f32 %v5985, %v6033
        %6035 = vmatmul.bf16.gmra.mxu0 %v5255
        %v6036 = vpop.f32.mrf.mxu0
        %v6037 = vadd.f32 %v5988, %v6036
        %v6038 = vpop.f32.mrf.mxu0
        %v6039 = vadd.f32 %v5990, %v6038
        %6040 = vmatmul.bf16.gmra.mxu0 %v5257
        %v6041 = vpop.f32.mrf.mxu0
        %v6042 = vadd.f32 %v5993, %v6041
        %v6043 = vpop.f32.mrf.mxu0
        %v6044 = vadd.f32 %v5995, %v6043
        %6045 = vmatmul.bf16.gmra.mxu0 %v5259
        %v6046 = vpop.f32.mrf.mxu0
        %v6047 = vadd.f32 %v5998, %v6046
        %v6048 = vpop.f32.mrf.mxu0
        %v6049 = vadd.f32 %v6000, %v6048
        %6050 = vmatmul.bf16.gmra.mxu0 %v5261
        %v6051 = vpop.f32.mrf.mxu0
        %v6052 = vadd.f32 %v6003, %v6051
        %v6053 = vpop.f32.mrf.mxu0
        %v6054 = vadd.f32 %v6005, %v6053
        %6055 = vmatmul.bf16.gmra.mxu0 %v5263
        %v6056 = vpop.f32.mrf.mxu0
        %v6057 = vadd.f32 %v6008, %v6056
        %v6058 = vpop.f32.mrf.mxu0
        %v6059 = vadd.f32 %v6010, %v6058
        %6060 = vmatmul.bf16.gmra.mxu0 %v5265
        %v6061 = vpop.f32.mrf.mxu0
        %v6062 = vadd.f32 %v6013, %v6061
        %v6063 = vpop.f32.mrf.mxu0
        %v6064 = vadd.f32 %v6015, %v6063
        %6065 = vdwg.mxu0
        %6066 = vmatpush.bf16.msra.mxu0 %v4970
        %6067 = vmatpush.bf16.msra.mxu0 %v4954
        %6068 = vmatpush.bf16.msra.mxu0 %v4938
        %6069 = vmatpush.bf16.msra.mxu0 %v4922
        %6070 = vmatpush.bf16.msra.mxu0 %v4906
        %6071 = vmatpush.bf16.msra.mxu0 %v4890
        %6072 = vmatpush.bf16.msra.mxu0 %v4874
        %6073 = vmatpush.bf16.msra.mxu0 %v4858
        %6074 = vmatmul.bf16.gmra.mxu0 %v5250
        %v6075 = vpop.f32.mrf.mxu0
        %v6076 = vadd.f32 %v5125, %v6075
        %v6077 = vpop.f32.mrf.mxu0
        %v6078 = vadd.f32 %v5130, %v6077
        %6079 = vmatmul.bf16.gmra.mxu0 %v5252
        %v6080 = vpop.f32.mrf.mxu0
        %v6081 = vadd.f32 %v5135, %v6080
        %v6082 = vpop.f32.mrf.mxu0
        %v6083 = vadd.f32 %v5140, %v6082
        %6084 = vmatmul.bf16.gmra.mxu0 %v5254
        %v6085 = vpop.f32.mrf.mxu0
        %v6086 = vadd.f32 %v5145, %v6085
        %v6087 = vpop.f32.mrf.mxu0
        %v6088 = vadd.f32 %v5150, %v6087
        %6089 = vmatmul.bf16.gmra.mxu0 %v5256
        %v6090 = vpop.f32.mrf.mxu0
        %v6091 = vadd.f32 %v5155, %v6090
        %v6092 = vpop.f32.mrf.mxu0
        %v6093 = vadd.f32 %v5160, %v6092
        %6094 = vmatmul.bf16.gmra.mxu0 %v5258
        %v6095 = vpop.f32.mrf.mxu0
        %v6096 = vadd.f32 %v5165, %v6095
        %v6097 = vpop.f32.mrf.mxu0
        %v6098 = vadd.f32 %v5170, %v6097
        %6099 = vmatmul.bf16.gmra.mxu0 %v5260
        %v6100 = vpop.f32.mrf.mxu0
        %v6101 = vadd.f32 %v5175, %v6100
        %v6102 = vpop.f32.mrf.mxu0
        %v6103 = vadd.f32 %v5180, %v6102
        %6104 = vmatmul.bf16.gmra.mxu0 %v5262
        %v6105 = vpop.f32.mrf.mxu0
        %v6106 = vadd.f32 %v5185, %v6105
        %v6107 = vpop.f32.mrf.mxu0
        %v6108 = vadd.f32 %v5190, %v6107
        %6109 = vmatmul.bf16.gmra.mxu0 %v5264
        %v6110 = vpop.f32.mrf.mxu0
        %v6111 = vadd.f32 %v5195, %v6110
        %v6112 = vpop.f32.mrf.mxu0
        %v6113 = vadd.f32 %v5200, %v6112
        %6114 = vdwg.mxu0
        %6115 = vmatpush.bf16.msra.mxu0 %v5098
        %6116 = vmatpush.bf16.msra.mxu0 %v5082
        %6117 = vmatpush.bf16.msra.mxu0 %v5066
        %6118 = vmatpush.bf16.msra.mxu0 %v5050
        %6119 = vmatpush.bf16.msra.mxu0 %v5034
        %6120 = vmatpush.bf16.msra.mxu0 %v5018
        %6121 = vmatpush.bf16.msra.mxu0 %v5002
        %6122 = vmatpush.bf16.msra.mxu0 %v4986
        %6123 = vmatmul.bf16.gmra.mxu0 %v5251
        %v6124 = vpop.f32.mrf.mxu0
        %v6125 = vadd.f32 %v6076, %v6124
        %v6126 = vpop.f32.mrf.mxu0
        %v6127 = vadd.f32 %v6078, %v6126
        %6128 = vmatmul.bf16.gmra.mxu0 %v5253
        %v6129 = vpop.f32.mrf.mxu0
        %v6130 = vadd.f32 %v6081, %v6129
        %v6131 = vpop.f32.mrf.mxu0
        %v6132 = vadd.f32 %v6083, %v6131
        %6133 = vmatmul.bf16.gmra.mxu0 %v5255
        %v6134 = vpop.f32.mrf.mxu0
        %v6135 = vadd.f32 %v6086, %v6134
        %v6136 = vpop.f32.mrf.mxu0
        %v6137 = vadd.f32 %v6088, %v6136
        %6138 = vmatmul.bf16.gmra.mxu0 %v5257
        %v6139 = vpop.f32.mrf.mxu0
        %v6140 = vadd.f32 %v6091, %v6139
        %v6141 = vpop.f32.mrf.mxu0
        %v6142 = vadd.f32 %v6093, %v6141
        %6143 = vmatmul.bf16.gmra.mxu0 %v5259
        %v6144 = vpop.f32.mrf.mxu0
        %v6145 = vadd.f32 %v6096, %v6144
        %v6146 = vpop.f32.mrf.mxu0
        %v6147 = vadd.f32 %v6098, %v6146
        %6148 = vmatmul.bf16.gmra.mxu0 %v5261
        %v6149 = vpop.f32.mrf.mxu0
        %v6150 = vadd.f32 %v6101, %v6149
        %v6151 = vpop.f32.mrf.mxu0
        %v6152 = vadd.f32 %v6103, %v6151
        %6153 = vmatmul.bf16.gmra.mxu0 %v5263
        %v6154 = vpop.f32.mrf.mxu0
        %v6155 = vadd.f32 %v6106, %v6154
        %v6156 = vpop.f32.mrf.mxu0
        %v6157 = vadd.f32 %v6108, %v6156
        %6158 = vmatmul.bf16.gmra.mxu0 %v5265
        %v6159 = vpop.f32.mrf.mxu0
        %v6160 = vadd.f32 %v6111, %v6159
        %v6161 = vpop.f32.mrf.mxu0
        %v6162 = vadd.f32 %v6113, %v6161
        %6163 = vdwg.mxu0
        %6164 = vmatpush.bf16.msra.mxu0 %v4971
        %6165 = vmatpush.bf16.msra.mxu0 %v4955
        %6166 = vmatpush.bf16.msra.mxu0 %v4939
        %6167 = vmatpush.bf16.msra.mxu0 %v4923
        %6168 = vmatpush.bf16.msra.mxu0 %v4907
        %6169 = vmatpush.bf16.msra.mxu0 %v4891
        %6170 = vmatpush.bf16.msra.mxu0 %v4875
        %6171 = vmatpush.bf16.msra.mxu0 %v4859
        %6172 = vmatmul.bf16.gmra.mxu0 %v5250
        %v6173 = vpop.f32.mrf.mxu0
        %v6174 = vadd.f32 %v5125, %v6173
        %v6175 = vpop.f32.mrf.mxu0
        %v6176 = vadd.f32 %v5130, %v6175
        %6177 = vmatmul.bf16.gmra.mxu0 %v5252
        %v6178 = vpop.f32.mrf.mxu0
        %v6179 = vadd.f32 %v5135, %v6178
        %v6180 = vpop.f32.mrf.mxu0
        %v6181 = vadd.f32 %v5140, %v6180
        %6182 = vmatmul.bf16.gmra.mxu0 %v5254
        %v6183 = vpop.f32.mrf.mxu0
        %v6184 = vadd.f32 %v5145, %v6183
        %v6185 = vpop.f32.mrf.mxu0
        %v6186 = vadd.f32 %v5150, %v6185
        %6187 = vmatmul.bf16.gmra.mxu0 %v5256
        %v6188 = vpop.f32.mrf.mxu0
        %v6189 = vadd.f32 %v5155, %v6188
        %v6190 = vpop.f32.mrf.mxu0
        %v6191 = vadd.f32 %v5160, %v6190
        %6192 = vmatmul.bf16.gmra.mxu0 %v5258
        %v6193 = vpop.f32.mrf.mxu0
        %v6194 = vadd.f32 %v5165, %v6193
        %v6195 = vpop.f32.mrf.mxu0
        %v6196 = vadd.f32 %v5170, %v6195
        %6197 = vmatmul.bf16.gmra.mxu0 %v5260
        %v6198 = vpop.f32.mrf.mxu0
        %v6199 = vadd.f32 %v5175, %v6198
        %v6200 = vpop.f32.mrf.mxu0
        %v6201 = vadd.f32 %v5180, %v6200
        %6202 = vmatmul.bf16.gmra.mxu0 %v5262
        %v6203 = vpop.f32.mrf.mxu0
        %v6204 = vadd.f32 %v5185, %v6203
        %v6205 = vpop.f32.mrf.mxu0
        %v6206 = vadd.f32 %v5190, %v6205
        %6207 = vmatmul.bf16.gmra.mxu0 %v5264
        %v6208 = vpop.f32.mrf.mxu0
        %v6209 = vadd.f32 %v5195, %v6208
        %v6210 = vpop.f32.mrf.mxu0
        %v6211 = vadd.f32 %v5200, %v6210
        %6212 = vdwg.mxu0
        %6213 = vmatpush.bf16.msra.mxu0 %v5099
        %6214 = vmatpush.bf16.msra.mxu0 %v5083
        %6215 = vmatpush.bf16.msra.mxu0 %v5067
        %6216 = vmatpush.bf16.msra.mxu0 %v5051
        %6217 = vmatpush.bf16.msra.mxu0 %v5035
        %6218 = vmatpush.bf16.msra.mxu0 %v5019
        %6219 = vmatpush.bf16.msra.mxu0 %v5003
        %6220 = vmatpush.bf16.msra.mxu0 %v4987
        %6221 = vmatmul.bf16.gmra.mxu0 %v5251
        %v6222 = vpop.f32.mrf.mxu0
        %v6223 = vadd.f32 %v6174, %v6222
        %v6224 = vpop.f32.mrf.mxu0
        %v6225 = vadd.f32 %v6176, %v6224
        %6226 = vmatmul.bf16.gmra.mxu0 %v5253
        %v6227 = vpop.f32.mrf.mxu0
        %v6228 = vadd.f32 %v6179, %v6227
        %v6229 = vpop.f32.mrf.mxu0
        %v6230 = vadd.f32 %v6181, %v6229
        %6231 = vmatmul.bf16.gmra.mxu0 %v5255
        %v6232 = vpop.f32.mrf.mxu0
        %v6233 = vadd.f32 %v6184, %v6232
        %v6234 = vpop.f32.mrf.mxu0
        %v6235 = vadd.f32 %v6186, %v6234
        %6236 = vmatmul.bf16.gmra.mxu0 %v5257
        %v6237 = vpop.f32.mrf.mxu0
        %v6238 = vadd.f32 %v6189, %v6237
        %v6239 = vpop.f32.mrf.mxu0
        %v6240 = vadd.f32 %v6191, %v6239
        %6241 = vmatmul.bf16.gmra.mxu0 %v5259
        %v6242 = vpop.f32.mrf.mxu0
        %v6243 = vadd.f32 %v6194, %v6242
        %v6244 = vpop.f32.mrf.mxu0
        %v6245 = vadd.f32 %v6196, %v6244
        %6246 = vmatmul.bf16.gmra.mxu0 %v5261
        %v6247 = vpop.f32.mrf.mxu0
        %v6248 = vadd.f32 %v6199, %v6247
        %v6249 = vpop.f32.mrf.mxu0
        %v6250 = vadd.f32 %v6201, %v6249
        %6251 = vmatmul.bf16.gmra.mxu0 %v5263
        %v6252 = vpop.f32.mrf.mxu0
        %v6253 = vadd.f32 %v6204, %v6252
        %v6254 = vpop.f32.mrf.mxu0
        %v6255 = vadd.f32 %v6206, %v6254
        %6256 = vmatmul.bf16.gmra.mxu0 %v5265
        %v6257 = vpop.f32.mrf.mxu0
        %v6258 = vadd.f32 %v6209, %v6257
        %v6259 = vpop.f32.mrf.mxu0
        %v6260 = vadd.f32 %v6211, %v6259
        %6261 = vdwg.mxu0
        %6262 = vmatpush.bf16.msra.mxu0 %v4972
        %6263 = vmatpush.bf16.msra.mxu0 %v4956
        %6264 = vmatpush.bf16.msra.mxu0 %v4940
        %6265 = vmatpush.bf16.msra.mxu0 %v4924
        %6266 = vmatpush.bf16.msra.mxu0 %v4908
        %6267 = vmatpush.bf16.msra.mxu0 %v4892
        %6268 = vmatpush.bf16.msra.mxu0 %v4876
        %6269 = vmatpush.bf16.msra.mxu0 %v4860
        %6270 = vmatmul.bf16.gmra.mxu0 %v5250
        %v6271 = vpop.f32.mrf.mxu0
        %v6272 = vadd.f32 %v5125, %v6271
        %v6273 = vpop.f32.mrf.mxu0
        %v6274 = vadd.f32 %v5130, %v6273
        %6275 = vmatmul.bf16.gmra.mxu0 %v5252
        %v6276 = vpop.f32.mrf.mxu0
        %v6277 = vadd.f32 %v5135, %v6276
        %v6278 = vpop.f32.mrf.mxu0
        %v6279 = vadd.f32 %v5140, %v6278
        %6280 = vmatmul.bf16.gmra.mxu0 %v5254
        %v6281 = vpop.f32.mrf.mxu0
        %v6282 = vadd.f32 %v5145, %v6281
        %v6283 = vpop.f32.mrf.mxu0
        %v6284 = vadd.f32 %v5150, %v6283
        %6285 = vmatmul.bf16.gmra.mxu0 %v5256
        %v6286 = vpop.f32.mrf.mxu0
        %v6287 = vadd.f32 %v5155, %v6286
        %v6288 = vpop.f32.mrf.mxu0
        %v6289 = vadd.f32 %v5160, %v6288
        %6290 = vmatmul.bf16.gmra.mxu0 %v5258
        %v6291 = vpop.f32.mrf.mxu0
        %v6292 = vadd.f32 %v5165, %v6291
        %v6293 = vpop.f32.mrf.mxu0
        %v6294 = vadd.f32 %v5170, %v6293
        %6295 = vmatmul.bf16.gmra.mxu0 %v5260
        %v6296 = vpop.f32.mrf.mxu0
        %v6297 = vadd.f32 %v5175, %v6296
        %v6298 = vpop.f32.mrf.mxu0
        %v6299 = vadd.f32 %v5180, %v6298
        %6300 = vmatmul.bf16.gmra.mxu0 %v5262
        %v6301 = vpop.f32.mrf.mxu0
        %v6302 = vadd.f32 %v5185, %v6301
        %v6303 = vpop.f32.mrf.mxu0
        %v6304 = vadd.f32 %v5190, %v6303
        %6305 = vmatmul.bf16.gmra.mxu0 %v5264
        %v6306 = vpop.f32.mrf.mxu0
        %v6307 = vadd.f32 %v5195, %v6306
        %v6308 = vpop.f32.mrf.mxu0
        %v6309 = vadd.f32 %v5200, %v6308
        %6310 = vdwg.mxu0
        %6311 = vmatpush.bf16.msra.mxu0 %v5100
        %6312 = vmatpush.bf16.msra.mxu0 %v5084
        %6313 = vmatpush.bf16.msra.mxu0 %v5068
        %6314 = vmatpush.bf16.msra.mxu0 %v5052
        %6315 = vmatpush.bf16.msra.mxu0 %v5036
        %6316 = vmatpush.bf16.msra.mxu0 %v5020
        %6317 = vmatpush.bf16.msra.mxu0 %v5004
        %6318 = vmatpush.bf16.msra.mxu0 %v4988
        %6319 = vmatmul.bf16.gmra.mxu0 %v5251
        %v6320 = vpop.f32.mrf.mxu0
        %v6321 = vadd.f32 %v6272, %v6320
        %v6322 = vpop.f32.mrf.mxu0
        %v6323 = vadd.f32 %v6274, %v6322
        %6324 = vmatmul.bf16.gmra.mxu0 %v5253
        %v6325 = vpop.f32.mrf.mxu0
        %v6326 = vadd.f32 %v6277, %v6325
        %v6327 = vpop.f32.mrf.mxu0
        %v6328 = vadd.f32 %v6279, %v6327
        %6329 = vmatmul.bf16.gmra.mxu0 %v5255
        %v6330 = vpop.f32.mrf.mxu0
        %v6331 = vadd.f32 %v6282, %v6330
        %v6332 = vpop.f32.mrf.mxu0
        %v6333 = vadd.f32 %v6284, %v6332
        %6334 = vmatmul.bf16.gmra.mxu0 %v5257
        %v6335 = vpop.f32.mrf.mxu0
        %v6336 = vadd.f32 %v6287, %v6335
        %v6337 = vpop.f32.mrf.mxu0
        %v6338 = vadd.f32 %v6289, %v6337
        %6339 = vmatmul.bf16.gmra.mxu0 %v5259
        %v6340 = vpop.f32.mrf.mxu0
        %v6341 = vadd.f32 %v6292, %v6340
        %v6342 = vpop.f32.mrf.mxu0
        %v6343 = vadd.f32 %v6294, %v6342
        %6344 = vmatmul.bf16.gmra.mxu0 %v5261
        %v6345 = vpop.f32.mrf.mxu0
        %v6346 = vadd.f32 %v6297, %v6345
        %v6347 = vpop.f32.mrf.mxu0
        %v6348 = vadd.f32 %v6299, %v6347
        %6349 = vmatmul.bf16.gmra.mxu0 %v5263
        %v6350 = vpop.f32.mrf.mxu0
        %v6351 = vadd.f32 %v6302, %v6350
        %v6352 = vpop.f32.mrf.mxu0
        %v6353 = vadd.f32 %v6304, %v6352
        %6354 = vmatmul.bf16.gmra.mxu0 %v5265
        %v6355 = vpop.f32.mrf.mxu0
        %v6356 = vadd.f32 %v6307, %v6355
        %v6357 = vpop.f32.mrf.mxu0
        %v6358 = vadd.f32 %v6309, %v6357
        %6359 = vdwg.mxu0
        %6360 = vmatpush.bf16.msra.mxu0 %v4973
        %6361 = vmatpush.bf16.msra.mxu0 %v4957
        %6362 = vmatpush.bf16.msra.mxu0 %v4941
        %6363 = vmatpush.bf16.msra.mxu0 %v4925
        %6364 = vmatpush.bf16.msra.mxu0 %v4909
        %6365 = vmatpush.bf16.msra.mxu0 %v4893
        %6366 = vmatpush.bf16.msra.mxu0 %v4877
        %6367 = vmatpush.bf16.msra.mxu0 %v4861
        %6368 = vmatmul.bf16.gmra.mxu0 %v5250
        %v6369 = vpop.f32.mrf.mxu0
        %v6370 = vadd.f32 %v5125, %v6369
        %v6371 = vpop.f32.mrf.mxu0
        %v6372 = vadd.f32 %v5130, %v6371
        %6373 = vmatmul.bf16.gmra.mxu0 %v5252
        %v6374 = vpop.f32.mrf.mxu0
        %v6375 = vadd.f32 %v5135, %v6374
        %v6376 = vpop.f32.mrf.mxu0
        %v6377 = vadd.f32 %v5140, %v6376
        %6378 = vmatmul.bf16.gmra.mxu0 %v5254
        %v6379 = vpop.f32.mrf.mxu0
        %v6380 = vadd.f32 %v5145, %v6379
        %v6381 = vpop.f32.mrf.mxu0
        %v6382 = vadd.f32 %v5150, %v6381
        %6383 = vmatmul.bf16.gmra.mxu0 %v5256
        %v6384 = vpop.f32.mrf.mxu0
        %v6385 = vadd.f32 %v5155, %v6384
        %v6386 = vpop.f32.mrf.mxu0
        %v6387 = vadd.f32 %v5160, %v6386
        %6388 = vmatmul.bf16.gmra.mxu0 %v5258
        %v6389 = vpop.f32.mrf.mxu0
        %v6390 = vadd.f32 %v5165, %v6389
        %v6391 = vpop.f32.mrf.mxu0
        %v6392 = vadd.f32 %v5170, %v6391
        %6393 = vmatmul.bf16.gmra.mxu0 %v5260
        %v6394 = vpop.f32.mrf.mxu0
        %v6395 = vadd.f32 %v5175, %v6394
        %v6396 = vpop.f32.mrf.mxu0
        %v6397 = vadd.f32 %v5180, %v6396
        %6398 = vmatmul.bf16.gmra.mxu0 %v5262
        %v6399 = vpop.f32.mrf.mxu0
        %v6400 = vadd.f32 %v5185, %v6399
        %v6401 = vpop.f32.mrf.mxu0
        %v6402 = vadd.f32 %v5190, %v6401
        %6403 = vmatmul.bf16.gmra.mxu0 %v5264
        %v6404 = vpop.f32.mrf.mxu0
        %v6405 = vadd.f32 %v5195, %v6404
        %v6406 = vpop.f32.mrf.mxu0
        %v6407 = vadd.f32 %v5200, %v6406
        %6408 = vdwg.mxu0
        %6409 = vmatpush.bf16.msra.mxu0 %v5101
        %6410 = vmatpush.bf16.msra.mxu0 %v5085
        %6411 = vmatpush.bf16.msra.mxu0 %v5069
        %6412 = vmatpush.bf16.msra.mxu0 %v5053
        %6413 = vmatpush.bf16.msra.mxu0 %v5037
        %6414 = vmatpush.bf16.msra.mxu0 %v5021
        %6415 = vmatpush.bf16.msra.mxu0 %v5005
        %6416 = vmatpush.bf16.msra.mxu0 %v4989
        %6417 = vmatmul.bf16.gmra.mxu0 %v5251
        %v6418 = vpop.f32.mrf.mxu0
        %v6419 = vadd.f32 %v6370, %v6418
        %v6420 = vpop.f32.mrf.mxu0
        %v6421 = vadd.f32 %v6372, %v6420
        %6422 = vmatmul.bf16.gmra.mxu0 %v5253
        %v6423 = vpop.f32.mrf.mxu0
        %v6424 = vadd.f32 %v6375, %v6423
        %v6425 = vpop.f32.mrf.mxu0
        %v6426 = vadd.f32 %v6377, %v6425
        %6427 = vmatmul.bf16.gmra.mxu0 %v5255
        %v6428 = vpop.f32.mrf.mxu0
        %v6429 = vadd.f32 %v6380, %v6428
        %v6430 = vpop.f32.mrf.mxu0
        %v6431 = vadd.f32 %v6382, %v6430
        %6432 = vmatmul.bf16.gmra.mxu0 %v5257
        %v6433 = vpop.f32.mrf.mxu0
        %v6434 = vadd.f32 %v6385, %v6433
        %v6435 = vpop.f32.mrf.mxu0
        %v6436 = vadd.f32 %v6387, %v6435
        %6437 = vmatmul.bf16.gmra.mxu0 %v5259
        %v6438 = vpop.f32.mrf.mxu0
        %v6439 = vadd.f32 %v6390, %v6438
        %v6440 = vpop.f32.mrf.mxu0
        %v6441 = vadd.f32 %v6392, %v6440
        %6442 = vmatmul.bf16.gmra.mxu0 %v5261
        %v6443 = vpop.f32.mrf.mxu0
        %v6444 = vadd.f32 %v6395, %v6443
        %v6445 = vpop.f32.mrf.mxu0
        %v6446 = vadd.f32 %v6397, %v6445
        %6447 = vmatmul.bf16.gmra.mxu0 %v5263
        %v6448 = vpop.f32.mrf.mxu0
        %v6449 = vadd.f32 %v6400, %v6448
        %v6450 = vpop.f32.mrf.mxu0
        %v6451 = vadd.f32 %v6402, %v6450
        %6452 = vmatmul.bf16.gmra.mxu0 %v5265
        %v6453 = vpop.f32.mrf.mxu0
        %v6454 = vadd.f32 %v6405, %v6453
        %v6455 = vpop.f32.mrf.mxu0
        %v6456 = vadd.f32 %v6407, %v6455
        %6457 = vdwg.mxu0
        %6458 = vmatpush.bf16.msra.mxu0 %v4974
        %6459 = vmatpush.bf16.msra.mxu0 %v4958
        %6460 = vmatpush.bf16.msra.mxu0 %v4942
        %6461 = vmatpush.bf16.msra.mxu0 %v4926
        %6462 = vmatpush.bf16.msra.mxu0 %v4910
        %6463 = vmatpush.bf16.msra.mxu0 %v4894
        %6464 = vmatpush.bf16.msra.mxu0 %v4878
        %6465 = vmatpush.bf16.msra.mxu0 %v4862
        %6466 = vmatmul.bf16.gmra.mxu0 %v5250
        %v6467 = vpop.f32.mrf.mxu0
        %v6468 = vadd.f32 %v5125, %v6467
        %v6469 = vpop.f32.mrf.mxu0
        %v6470 = vadd.f32 %v5130, %v6469
        %6471 = vmatmul.bf16.gmra.mxu0 %v5252
        %v6472 = vpop.f32.mrf.mxu0
        %v6473 = vadd.f32 %v5135, %v6472
        %v6474 = vpop.f32.mrf.mxu0
        %v6475 = vadd.f32 %v5140, %v6474
        %6476 = vmatmul.bf16.gmra.mxu0 %v5254
        %v6477 = vpop.f32.mrf.mxu0
        %v6478 = vadd.f32 %v5145, %v6477
        %v6479 = vpop.f32.mrf.mxu0
        %v6480 = vadd.f32 %v5150, %v6479
        %6481 = vmatmul.bf16.gmra.mxu0 %v5256
        %v6482 = vpop.f32.mrf.mxu0
        %v6483 = vadd.f32 %v5155, %v6482
        %v6484 = vpop.f32.mrf.mxu0
        %v6485 = vadd.f32 %v5160, %v6484
        %6486 = vmatmul.bf16.gmra.mxu0 %v5258
        %v6487 = vpop.f32.mrf.mxu0
        %v6488 = vadd.f32 %v5165, %v6487
        %v6489 = vpop.f32.mrf.mxu0
        %v6490 = vadd.f32 %v5170, %v6489
        %6491 = vmatmul.bf16.gmra.mxu0 %v5260
        %v6492 = vpop.f32.mrf.mxu0
        %v6493 = vadd.f32 %v5175, %v6492
        %v6494 = vpop.f32.mrf.mxu0
        %v6495 = vadd.f32 %v5180, %v6494
        %6496 = vmatmul.bf16.gmra.mxu0 %v5262
        %v6497 = vpop.f32.mrf.mxu0
        %v6498 = vadd.f32 %v5185, %v6497
        %v6499 = vpop.f32.mrf.mxu0
        %v6500 = vadd.f32 %v5190, %v6499
        %6501 = vmatmul.bf16.gmra.mxu0 %v5264
        %v6502 = vpop.f32.mrf.mxu0
        %v6503 = vadd.f32 %v5195, %v6502
        %v6504 = vpop.f32.mrf.mxu0
        %v6505 = vadd.f32 %v5200, %v6504
        %6506 = vdwg.mxu0
        %6507 = vmatpush.bf16.msra.mxu0 %v5102
        %6508 = vmatpush.bf16.msra.mxu0 %v5086
        %6509 = vmatpush.bf16.msra.mxu0 %v5070
        %6510 = vmatpush.bf16.msra.mxu0 %v5054
        %6511 = vmatpush.bf16.msra.mxu0 %v5038
        %6512 = vmatpush.bf16.msra.mxu0 %v5022
        %6513 = vmatpush.bf16.msra.mxu0 %v5006
        %6514 = vmatpush.bf16.msra.mxu0 %v4990
        %6515 = vmatmul.bf16.gmra.mxu0 %v5251
        %v6516 = vpop.f32.mrf.mxu0
        %v6517 = vadd.f32 %v6468, %v6516
        %v6518 = vpop.f32.mrf.mxu0
        %v6519 = vadd.f32 %v6470, %v6518
        %6520 = vmatmul.bf16.gmra.mxu0 %v5253
        %v6521 = vpop.f32.mrf.mxu0
        %v6522 = vadd.f32 %v6473, %v6521
        %v6523 = vpop.f32.mrf.mxu0
        %v6524 = vadd.f32 %v6475, %v6523
        %6525 = vmatmul.bf16.gmra.mxu0 %v5255
        %v6526 = vpop.f32.mrf.mxu0
        %v6527 = vadd.f32 %v6478, %v6526
        %v6528 = vpop.f32.mrf.mxu0
        %v6529 = vadd.f32 %v6480, %v6528
        %6530 = vmatmul.bf16.gmra.mxu0 %v5257
        %v6531 = vpop.f32.mrf.mxu0
        %v6532 = vadd.f32 %v6483, %v6531
        %v6533 = vpop.f32.mrf.mxu0
        %v6534 = vadd.f32 %v6485, %v6533
        %6535 = vmatmul.bf16.gmra.mxu0 %v5259
        %v6536 = vpop.f32.mrf.mxu0
        %v6537 = vadd.f32 %v6488, %v6536
        %v6538 = vpop.f32.mrf.mxu0
        %v6539 = vadd.f32 %v6490, %v6538
        %6540 = vmatmul.bf16.gmra.mxu0 %v5261
        %v6541 = vpop.f32.mrf.mxu0
        %v6542 = vadd.f32 %v6493, %v6541
        %v6543 = vpop.f32.mrf.mxu0
        %v6544 = vadd.f32 %v6495, %v6543
        %6545 = vmatmul.bf16.gmra.mxu0 %v5263
        %v6546 = vpop.f32.mrf.mxu0
        %v6547 = vadd.f32 %v6498, %v6546
        %v6548 = vpop.f32.mrf.mxu0
        %v6549 = vadd.f32 %v6500, %v6548
        %6550 = vmatmul.bf16.gmra.mxu0 %v5265
        %v6551 = vpop.f32.mrf.mxu0
        %v6552 = vadd.f32 %v6503, %v6551
        %v6553 = vpop.f32.mrf.mxu0
        %v6554 = vadd.f32 %v6505, %v6553
        %6555 = vdwg.mxu0
        %6556 = vmatpush.bf16.msra.mxu0 %v4975
        %6557 = vmatpush.bf16.msra.mxu0 %v4959
        %6558 = vmatpush.bf16.msra.mxu0 %v4943
        %6559 = vmatpush.bf16.msra.mxu0 %v4927
        %6560 = vmatpush.bf16.msra.mxu0 %v4911
        %6561 = vmatpush.bf16.msra.mxu0 %v4895
        %6562 = vmatpush.bf16.msra.mxu0 %v4879
        %6563 = vmatpush.bf16.msra.mxu0 %v4863
        %6564 = vmatmul.bf16.gmra.mxu0 %v5250
        %v6565 = vpop.f32.mrf.mxu0
        %v6566 = vadd.f32 %v5125, %v6565
        %v6567 = vpop.f32.mrf.mxu0
        %v6568 = vadd.f32 %v5130, %v6567
        %6569 = vmatmul.bf16.gmra.mxu0 %v5252
        %v6570 = vpop.f32.mrf.mxu0
        %v6571 = vadd.f32 %v5135, %v6570
        %v6572 = vpop.f32.mrf.mxu0
        %v6573 = vadd.f32 %v5140, %v6572
        %6574 = vmatmul.bf16.gmra.mxu0 %v5254
        %v6575 = vpop.f32.mrf.mxu0
        %v6576 = vadd.f32 %v5145, %v6575
        %v6577 = vpop.f32.mrf.mxu0
        %v6578 = vadd.f32 %v5150, %v6577
        %6579 = vmatmul.bf16.gmra.mxu0 %v5256
        %v6580 = vpop.f32.mrf.mxu0
        %v6581 = vadd.f32 %v5155, %v6580
        %v6582 = vpop.f32.mrf.mxu0
        %v6583 = vadd.f32 %v5160, %v6582
        %6584 = vmatmul.bf16.gmra.mxu0 %v5258
        %v6585 = vpop.f32.mrf.mxu0
        %v6586 = vadd.f32 %v5165, %v6585
        %v6587 = vpop.f32.mrf.mxu0
        %v6588 = vadd.f32 %v5170, %v6587
        %6589 = vmatmul.bf16.gmra.mxu0 %v5260
        %v6590 = vpop.f32.mrf.mxu0
        %v6591 = vadd.f32 %v5175, %v6590
        %v6592 = vpop.f32.mrf.mxu0
        %v6593 = vadd.f32 %v5180, %v6592
        %6594 = vmatmul.bf16.gmra.mxu0 %v5262
        %v6595 = vpop.f32.mrf.mxu0
        %v6596 = vadd.f32 %v5185, %v6595
        %v6597 = vpop.f32.mrf.mxu0
        %v6598 = vadd.f32 %v5190, %v6597
        %6599 = vmatmul.bf16.gmra.mxu0 %v5264
        %v6600 = vpop.f32.mrf.mxu0
        %v6601 = vadd.f32 %v5195, %v6600
        %v6602 = vpop.f32.mrf.mxu0
        %v6603 = vadd.f32 %v5200, %v6602
        %6604 = vdwg.mxu0
        %6605 = vmatpush.bf16.msra.mxu0 %v5103
        %6606 = vmatpush.bf16.msra.mxu0 %v5087
        %6607 = vmatpush.bf16.msra.mxu0 %v5071
        %6608 = vmatpush.bf16.msra.mxu0 %v5055
        %6609 = vmatpush.bf16.msra.mxu0 %v5039
        %6610 = vmatpush.bf16.msra.mxu0 %v5023
        %6611 = vmatpush.bf16.msra.mxu0 %v5007
        %6612 = vmatpush.bf16.msra.mxu0 %v4991
        %6613 = vmatmul.bf16.gmra.mxu0 %v5251
        %v6614 = vpop.f32.mrf.mxu0
        %v6615 = vadd.f32 %v6566, %v6614
        %v6616 = vpop.f32.mrf.mxu0
        %v6617 = vadd.f32 %v6568, %v6616
        %6618 = vmatmul.bf16.gmra.mxu0 %v5253
        %v6619 = vpop.f32.mrf.mxu0
        %v6620 = vadd.f32 %v6571, %v6619
        %v6621 = vpop.f32.mrf.mxu0
        %v6622 = vadd.f32 %v6573, %v6621
        %6623 = vmatmul.bf16.gmra.mxu0 %v5255
        %v6624 = vpop.f32.mrf.mxu0
        %v6625 = vadd.f32 %v6576, %v6624
        %v6626 = vpop.f32.mrf.mxu0
        %v6627 = vadd.f32 %v6578, %v6626
        %6628 = vmatmul.bf16.gmra.mxu0 %v5257
        %v6629 = vpop.f32.mrf.mxu0
        %v6630 = vadd.f32 %v6581, %v6629
        %v6631 = vpop.f32.mrf.mxu0
        %v6632 = vadd.f32 %v6583, %v6631
        %6633 = vmatmul.bf16.gmra.mxu0 %v5259
        %v6634 = vpop.f32.mrf.mxu0
        %v6635 = vadd.f32 %v6586, %v6634
        %v6636 = vpop.f32.mrf.mxu0
        %v6637 = vadd.f32 %v6588, %v6636
        %6638 = vmatmul.bf16.gmra.mxu0 %v5261
        %v6639 = vpop.f32.mrf.mxu0
        %v6640 = vadd.f32 %v6591, %v6639
        %v6641 = vpop.f32.mrf.mxu0
        %v6642 = vadd.f32 %v6593, %v6641
        %6643 = vmatmul.bf16.gmra.mxu0 %v5263
        %v6644 = vpop.f32.mrf.mxu0
        %v6645 = vadd.f32 %v6596, %v6644
        %v6646 = vpop.f32.mrf.mxu0
        %v6647 = vadd.f32 %v6598, %v6646
        %6648 = vmatmul.bf16.gmra.mxu0 %v5265
        %v6649 = vpop.f32.mrf.mxu0
        %v6650 = vadd.f32 %v6601, %v6649
        %v6651 = vpop.f32.mrf.mxu0
        %v6652 = vadd.f32 %v6603, %v6651
        %6653 = vdwg.mxu0
        %6654 = vmatpush.bf16.msra.mxu0 %v4976
        %6655 = vmatpush.bf16.msra.mxu0 %v4960
        %6656 = vmatpush.bf16.msra.mxu0 %v4944
        %6657 = vmatpush.bf16.msra.mxu0 %v4928
        %6658 = vmatpush.bf16.msra.mxu0 %v4912
        %6659 = vmatpush.bf16.msra.mxu0 %v4896
        %6660 = vmatpush.bf16.msra.mxu0 %v4880
        %6661 = vmatpush.bf16.msra.mxu0 %v4864
        %6662 = vmatmul.bf16.gmra.mxu0 %v5250
        %v6663 = vpop.f32.mrf.mxu0
        %v6664 = vadd.f32 %v5125, %v6663
        %v6665 = vpop.f32.mrf.mxu0
        %v6666 = vadd.f32 %v5130, %v6665
        %6667 = vmatmul.bf16.gmra.mxu0 %v5252
        %v6668 = vpop.f32.mrf.mxu0
        %v6669 = vadd.f32 %v5135, %v6668
        %v6670 = vpop.f32.mrf.mxu0
        %v6671 = vadd.f32 %v5140, %v6670
        %6672 = vmatmul.bf16.gmra.mxu0 %v5254
        %v6673 = vpop.f32.mrf.mxu0
        %v6674 = vadd.f32 %v5145, %v6673
        %v6675 = vpop.f32.mrf.mxu0
        %v6676 = vadd.f32 %v5150, %v6675
        %6677 = vmatmul.bf16.gmra.mxu0 %v5256
        %v6678 = vpop.f32.mrf.mxu0
        %v6679 = vadd.f32 %v5155, %v6678
        %v6680 = vpop.f32.mrf.mxu0
        %v6681 = vadd.f32 %v5160, %v6680
        %6682 = vmatmul.bf16.gmra.mxu0 %v5258
        %v6683 = vpop.f32.mrf.mxu0
        %v6684 = vadd.f32 %v5165, %v6683
        %v6685 = vpop.f32.mrf.mxu0
        %v6686 = vadd.f32 %v5170, %v6685
        %6687 = vmatmul.bf16.gmra.mxu0 %v5260
        %v6688 = vpop.f32.mrf.mxu0
        %v6689 = vadd.f32 %v5175, %v6688
        %v6690 = vpop.f32.mrf.mxu0
        %v6691 = vadd.f32 %v5180, %v6690
        %6692 = vmatmul.bf16.gmra.mxu0 %v5262
        %v6693 = vpop.f32.mrf.mxu0
        %v6694 = vadd.f32 %v5185, %v6693
        %v6695 = vpop.f32.mrf.mxu0
        %v6696 = vadd.f32 %v5190, %v6695
        %6697 = vmatmul.bf16.gmra.mxu0 %v5264
        %v6698 = vpop.f32.mrf.mxu0
        %v6699 = vadd.f32 %v5195, %v6698
        %v6700 = vpop.f32.mrf.mxu0
        %v6701 = vadd.f32 %v5200, %v6700
        %6702 = vdwg.mxu0
        %6703 = vmatpush.bf16.msra.mxu0 %v5104
        %6704 = vmatpush.bf16.msra.mxu0 %v5088
        %6705 = vmatpush.bf16.msra.mxu0 %v5072
        %6706 = vmatpush.bf16.msra.mxu0 %v5056
        %6707 = vmatpush.bf16.msra.mxu0 %v5040
        %6708 = vmatpush.bf16.msra.mxu0 %v5024
        %6709 = vmatpush.bf16.msra.mxu0 %v5008
        %6710 = vmatpush.bf16.msra.mxu0 %v4992
        %6711 = vmatmul.bf16.gmra.mxu0 %v5251
        %v6712 = vpop.f32.mrf.mxu0
        %v6713 = vadd.f32 %v6664, %v6712
        %v6714 = vpop.f32.mrf.mxu0
        %v6715 = vadd.f32 %v6666, %v6714
        %6716 = vmatmul.bf16.gmra.mxu0 %v5253
        %v6717 = vpop.f32.mrf.mxu0
        %v6718 = vadd.f32 %v6669, %v6717
        %v6719 = vpop.f32.mrf.mxu0
        %v6720 = vadd.f32 %v6671, %v6719
        %6721 = vmatmul.bf16.gmra.mxu0 %v5255
        %v6722 = vpop.f32.mrf.mxu0
        %v6723 = vadd.f32 %v6674, %v6722
        %v6724 = vpop.f32.mrf.mxu0
        %v6725 = vadd.f32 %v6676, %v6724
        %6726 = vmatmul.bf16.gmra.mxu0 %v5257
        %v6727 = vpop.f32.mrf.mxu0
        %v6728 = vadd.f32 %v6679, %v6727
        %v6729 = vpop.f32.mrf.mxu0
        %v6730 = vadd.f32 %v6681, %v6729
        %6731 = vmatmul.bf16.gmra.mxu0 %v5259
        %v6732 = vpop.f32.mrf.mxu0
        %v6733 = vadd.f32 %v6684, %v6732
        %v6734 = vpop.f32.mrf.mxu0
        %v6735 = vadd.f32 %v6686, %v6734
        %6736 = vmatmul.bf16.gmra.mxu0 %v5261
        %v6737 = vpop.f32.mrf.mxu0
        %v6738 = vadd.f32 %v6689, %v6737
        %v6739 = vpop.f32.mrf.mxu0
        %v6740 = vadd.f32 %v6691, %v6739
        %6741 = vmatmul.bf16.gmra.mxu0 %v5263
        %v6742 = vpop.f32.mrf.mxu0
        %v6743 = vadd.f32 %v6694, %v6742
        %v6744 = vpop.f32.mrf.mxu0
        %v6745 = vadd.f32 %v6696, %v6744
        %6746 = vmatmul.bf16.gmra.mxu0 %v5265
        %v6747 = vpop.f32.mrf.mxu0
        %v6748 = vadd.f32 %v6699, %v6747
        %v6749 = vpop.f32.mrf.mxu0
        %v6750 = vadd.f32 %v6701, %v6749
        %6751 = vdwg.mxu0
        %6752 = vmatpush.bf16.msra.mxu0 %v4977
        %6753 = vmatpush.bf16.msra.mxu0 %v4961
        %6754 = vmatpush.bf16.msra.mxu0 %v4945
        %6755 = vmatpush.bf16.msra.mxu0 %v4929
        %6756 = vmatpush.bf16.msra.mxu0 %v4913
        %6757 = vmatpush.bf16.msra.mxu0 %v4897
        %6758 = vmatpush.bf16.msra.mxu0 %v4881
        %6759 = vmatpush.bf16.msra.mxu0 %v4865
        %6760 = vmatmul.bf16.gmra.mxu0 %v5250
        %v6761 = vpop.f32.mrf.mxu0
        %v6762 = vadd.f32 %v5125, %v6761
        %v6763 = vpop.f32.mrf.mxu0
        %v6764 = vadd.f32 %v5130, %v6763
        %6765 = vmatmul.bf16.gmra.mxu0 %v5252
        %v6766 = vpop.f32.mrf.mxu0
        %v6767 = vadd.f32 %v5135, %v6766
        %v6768 = vpop.f32.mrf.mxu0
        %v6769 = vadd.f32 %v5140, %v6768
        %6770 = vmatmul.bf16.gmra.mxu0 %v5254
        %v6771 = vpop.f32.mrf.mxu0
        %v6772 = vadd.f32 %v5145, %v6771
        %v6773 = vpop.f32.mrf.mxu0
        %v6774 = vadd.f32 %v5150, %v6773
        %6775 = vmatmul.bf16.gmra.mxu0 %v5256
        %v6776 = vpop.f32.mrf.mxu0
        %v6777 = vadd.f32 %v5155, %v6776
        %v6778 = vpop.f32.mrf.mxu0
        %v6779 = vadd.f32 %v5160, %v6778
        %6780 = vmatmul.bf16.gmra.mxu0 %v5258
        %v6781 = vpop.f32.mrf.mxu0
        %v6782 = vadd.f32 %v5165, %v6781
        %v6783 = vpop.f32.mrf.mxu0
        %v6784 = vadd.f32 %v5170, %v6783
        %6785 = vmatmul.bf16.gmra.mxu0 %v5260
        %v6786 = vpop.f32.mrf.mxu0
        %v6787 = vadd.f32 %v5175, %v6786
        %v6788 = vpop.f32.mrf.mxu0
        %v6789 = vadd.f32 %v5180, %v6788
        %6790 = vmatmul.bf16.gmra.mxu0 %v5262
        %v6791 = vpop.f32.mrf.mxu0
        %v6792 = vadd.f32 %v5185, %v6791
        %v6793 = vpop.f32.mrf.mxu0
        %v6794 = vadd.f32 %v5190, %v6793
        %6795 = vmatmul.bf16.gmra.mxu0 %v5264
        %v6796 = vpop.f32.mrf.mxu0
        %v6797 = vadd.f32 %v5195, %v6796
        %v6798 = vpop.f32.mrf.mxu0
        %v6799 = vadd.f32 %v5200, %v6798
        %6800 = vdwg.mxu0
        %6801 = vmatpush.bf16.msra.mxu0 %v5105
        %6802 = vmatpush.bf16.msra.mxu0 %v5089
        %6803 = vmatpush.bf16.msra.mxu0 %v5073
        %6804 = vmatpush.bf16.msra.mxu0 %v5057
        %6805 = vmatpush.bf16.msra.mxu0 %v5041
        %6806 = vmatpush.bf16.msra.mxu0 %v5025
        %6807 = vmatpush.bf16.msra.mxu0 %v5009
        %6808 = vmatpush.bf16.msra.mxu0 %v4993
        %6809 = vmatmul.bf16.gmra.mxu0 %v5251
        %v6810 = vpop.f32.mrf.mxu0
        %v6811 = vadd.f32 %v6762, %v6810
        %v6812 = vpop.f32.mrf.mxu0
        %v6813 = vadd.f32 %v6764, %v6812
        %6814 = vmatmul.bf16.gmra.mxu0 %v5253
        %v6815 = vpop.f32.mrf.mxu0
        %v6816 = vadd.f32 %v6767, %v6815
        %v6817 = vpop.f32.mrf.mxu0
        %v6818 = vadd.f32 %v6769, %v6817
        %6819 = vmatmul.bf16.gmra.mxu0 %v5255
        %v6820 = vpop.f32.mrf.mxu0
        %v6821 = vadd.f32 %v6772, %v6820
        %v6822 = vpop.f32.mrf.mxu0
        %v6823 = vadd.f32 %v6774, %v6822
        %6824 = vmatmul.bf16.gmra.mxu0 %v5257
        %v6825 = vpop.f32.mrf.mxu0
        %v6826 = vadd.f32 %v6777, %v6825
        %v6827 = vpop.f32.mrf.mxu0
        %v6828 = vadd.f32 %v6779, %v6827
        %6829 = vmatmul.bf16.gmra.mxu0 %v5259
        %v6830 = vpop.f32.mrf.mxu0
        %v6831 = vadd.f32 %v6782, %v6830
        %v6832 = vpop.f32.mrf.mxu0
        %v6833 = vadd.f32 %v6784, %v6832
        %6834 = vmatmul.bf16.gmra.mxu0 %v5261
        %v6835 = vpop.f32.mrf.mxu0
        %v6836 = vadd.f32 %v6787, %v6835
        %v6837 = vpop.f32.mrf.mxu0
        %v6838 = vadd.f32 %v6789, %v6837
        %6839 = vmatmul.bf16.gmra.mxu0 %v5263
        %v6840 = vpop.f32.mrf.mxu0
        %v6841 = vadd.f32 %v6792, %v6840
        %v6842 = vpop.f32.mrf.mxu0
        %v6843 = vadd.f32 %v6794, %v6842
        %6844 = vmatmul.bf16.gmra.mxu0 %v5265
        %v6845 = vpop.f32.mrf.mxu0
        %v6846 = vadd.f32 %v6797, %v6845
        %v6847 = vpop.f32.mrf.mxu0
        %v6848 = vadd.f32 %v6799, %v6847
        %6849 = vdwg.mxu0
        %v6850 = vmax.f32 %v5341, %v5439
        %v6851 = vmax.f32 %v6850, %v5537
        %v6852 = vmax.f32 %v6851, %v5635
        %v6853 = vmax.f32 %v6852, %v5733
        %v6854 = vmax.f32 %v6853, %v5831
        %v6855 = vmax.f32 %v6854, %v5929
        %v6856 = vmax.f32 %v6855, %v6027
        %v6857 = vmax.f32 %v6856, %v6125
        %v6858 = vmax.f32 %v6857, %v6223
        %v6859 = vmax.f32 %v6858, %v6321
        %v6860 = vmax.f32 %v6859, %v6419
        %v6861 = vmax.f32 %v6860, %v6517
        %v6862 = vmax.f32 %v6861, %v6615
        %v6863 = vmax.f32 %v6862, %v6713
        %v6864 = vmax.f32 %v6863, %v6811
        %6865 = vmax.xlane.f32.xlu0 %v6864
        %v6866 = vpop.xlane.xlu0 %6865
        %v6867 = vmax.f32 %v5343, %v5441
        %v6868 = vmax.f32 %v6867, %v5539
        %v6869 = vmax.f32 %v6868, %v5637
        %v6870 = vmax.f32 %v6869, %v5735
        %v6871 = vmax.f32 %v6870, %v5833
        %v6872 = vmax.f32 %v6871, %v5931
        %v6873 = vmax.f32 %v6872, %v6029
        %v6874 = vmax.f32 %v6873, %v6127
        %v6875 = vmax.f32 %v6874, %v6225
        %v6876 = vmax.f32 %v6875, %v6323
        %v6877 = vmax.f32 %v6876, %v6421
        %v6878 = vmax.f32 %v6877, %v6519
        %v6879 = vmax.f32 %v6878, %v6617
        %v6880 = vmax.f32 %v6879, %v6715
        %v6881 = vmax.f32 %v6880, %v6813
        %6882 = vmax.xlane.f32.xlu0 %v6881
        %v6883 = vpop.xlane.xlu0 %6882
        %v6884 = vmax.f32 %v5346, %v5444
        %v6885 = vmax.f32 %v6884, %v5542
        %v6886 = vmax.f32 %v6885, %v5640
        %v6887 = vmax.f32 %v6886, %v5738
        %v6888 = vmax.f32 %v6887, %v5836
        %v6889 = vmax.f32 %v6888, %v5934
        %v6890 = vmax.f32 %v6889, %v6032
        %v6891 = vmax.f32 %v6890, %v6130
        %v6892 = vmax.f32 %v6891, %v6228
        %v6893 = vmax.f32 %v6892, %v6326
        %v6894 = vmax.f32 %v6893, %v6424
        %v6895 = vmax.f32 %v6894, %v6522
        %v6896 = vmax.f32 %v6895, %v6620
        %v6897 = vmax.f32 %v6896, %v6718
        %v6898 = vmax.f32 %v6897, %v6816
        %6899 = vmax.xlane.f32.xlu0 %v6898
        %v6900 = vpop.xlane.xlu0 %6899
        %v6901 = vmax.f32 %v5348, %v5446
        %v6902 = vmax.f32 %v6901, %v5544
        %v6903 = vmax.f32 %v6902, %v5642
        %v6904 = vmax.f32 %v6903, %v5740
        %v6905 = vmax.f32 %v6904, %v5838
        %v6906 = vmax.f32 %v6905, %v5936
        %v6907 = vmax.f32 %v6906, %v6034
        %v6908 = vmax.f32 %v6907, %v6132
        %v6909 = vmax.f32 %v6908, %v6230
        %v6910 = vmax.f32 %v6909, %v6328
        %v6911 = vmax.f32 %v6910, %v6426
        %v6912 = vmax.f32 %v6911, %v6524
        %v6913 = vmax.f32 %v6912, %v6622
        %v6914 = vmax.f32 %v6913, %v6720
        %v6915 = vmax.f32 %v6914, %v6818
        %6916 = vmax.xlane.f32.xlu0 %v6915
        %v6917 = vpop.xlane.xlu0 %6916
        %v6918 = vmax.f32 %v5351, %v5449
        %v6919 = vmax.f32 %v6918, %v5547
        %v6920 = vmax.f32 %v6919, %v5645
        %v6921 = vmax.f32 %v6920, %v5743
        %v6922 = vmax.f32 %v6921, %v5841
        %v6923 = vmax.f32 %v6922, %v5939
        %v6924 = vmax.f32 %v6923, %v6037
        %v6925 = vmax.f32 %v6924, %v6135
        %v6926 = vmax.f32 %v6925, %v6233
        %v6927 = vmax.f32 %v6926, %v6331
        %v6928 = vmax.f32 %v6927, %v6429
        %v6929 = vmax.f32 %v6928, %v6527
        %v6930 = vmax.f32 %v6929, %v6625
        %v6931 = vmax.f32 %v6930, %v6723
        %v6932 = vmax.f32 %v6931, %v6821
        %6933 = vmax.xlane.f32.xlu0 %v6932
        %v6934 = vpop.xlane.xlu0 %6933
        %v6935 = vmax.f32 %v5353, %v5451
        %v6936 = vmax.f32 %v6935, %v5549
        %v6937 = vmax.f32 %v6936, %v5647
        %v6938 = vmax.f32 %v6937, %v5745
        %v6939 = vmax.f32 %v6938, %v5843
        %v6940 = vmax.f32 %v6939, %v5941
        %v6941 = vmax.f32 %v6940, %v6039
        %v6942 = vmax.f32 %v6941, %v6137
        %v6943 = vmax.f32 %v6942, %v6235
        %v6944 = vmax.f32 %v6943, %v6333
        %v6945 = vmax.f32 %v6944, %v6431
        %v6946 = vmax.f32 %v6945, %v6529
        %v6947 = vmax.f32 %v6946, %v6627
        %v6948 = vmax.f32 %v6947, %v6725
        %v6949 = vmax.f32 %v6948, %v6823
        %6950 = vmax.xlane.f32.xlu0 %v6949
        %v6951 = vpop.xlane.xlu0 %6950
        %v6952 = vmax.f32 %v5356, %v5454
        %v6953 = vmax.f32 %v6952, %v5552
        %v6954 = vmax.f32 %v6953, %v5650
        %v6955 = vmax.f32 %v6954, %v5748
        %v6956 = vmax.f32 %v6955, %v5846
        %v6957 = vmax.f32 %v6956, %v5944
        %v6958 = vmax.f32 %v6957, %v6042
        %v6959 = vmax.f32 %v6958, %v6140
        %v6960 = vmax.f32 %v6959, %v6238
        %v6961 = vmax.f32 %v6960, %v6336
        %v6962 = vmax.f32 %v6961, %v6434
        %v6963 = vmax.f32 %v6962, %v6532
        %v6964 = vmax.f32 %v6963, %v6630
        %v6965 = vmax.f32 %v6964, %v6728
        %v6966 = vmax.f32 %v6965, %v6826
        %6967 = vmax.xlane.f32.xlu0 %v6966
        %v6968 = vpop.xlane.xlu0 %6967
        %v6969 = vmax.f32 %v5358, %v5456
        %v6970 = vmax.f32 %v6969, %v5554
        %v6971 = vmax.f32 %v6970, %v5652
        %v6972 = vmax.f32 %v6971, %v5750
        %v6973 = vmax.f32 %v6972, %v5848
        %v6974 = vmax.f32 %v6973, %v5946
        %v6975 = vmax.f32 %v6974, %v6044
        %v6976 = vmax.f32 %v6975, %v6142
        %v6977 = vmax.f32 %v6976, %v6240
        %v6978 = vmax.f32 %v6977, %v6338
        %v6979 = vmax.f32 %v6978, %v6436
        %v6980 = vmax.f32 %v6979, %v6534
        %v6981 = vmax.f32 %v6980, %v6632
        %v6982 = vmax.f32 %v6981, %v6730
        %v6983 = vmax.f32 %v6982, %v6828
        %6984 = vmax.xlane.f32.xlu0 %v6983
        %v6985 = vpop.xlane.xlu0 %6984
        %v6986 = vmax.f32 %v5361, %v5459
        %v6987 = vmax.f32 %v6986, %v5557
        %v6988 = vmax.f32 %v6987, %v5655
        %v6989 = vmax.f32 %v6988, %v5753
        %v6990 = vmax.f32 %v6989, %v5851
        %v6991 = vmax.f32 %v6990, %v5949
        %v6992 = vmax.f32 %v6991, %v6047
        %v6993 = vmax.f32 %v6992, %v6145
        %v6994 = vmax.f32 %v6993, %v6243
        %v6995 = vmax.f32 %v6994, %v6341
        %v6996 = vmax.f32 %v6995, %v6439
        %v6997 = vmax.f32 %v6996, %v6537
        %v6998 = vmax.f32 %v6997, %v6635
        %v6999 = vmax.f32 %v6998, %v6733
        %v7000 = vmax.f32 %v6999, %v6831
        %7001 = vmax.xlane.f32.xlu0 %v7000
        %v7002 = vpop.xlane.xlu0 %7001
        %v7003 = vmax.f32 %v5363, %v5461
        %v7004 = vmax.f32 %v7003, %v5559
        %v7005 = vmax.f32 %v7004, %v5657
        %v7006 = vmax.f32 %v7005, %v5755
        %v7007 = vmax.f32 %v7006, %v5853
        %v7008 = vmax.f32 %v7007, %v5951
        %v7009 = vmax.f32 %v7008, %v6049
        %v7010 = vmax.f32 %v7009, %v6147
        %v7011 = vmax.f32 %v7010, %v6245
        %v7012 = vmax.f32 %v7011, %v6343
        %v7013 = vmax.f32 %v7012, %v6441
        %v7014 = vmax.f32 %v7013, %v6539
        %v7015 = vmax.f32 %v7014, %v6637
        %v7016 = vmax.f32 %v7015, %v6735
        %v7017 = vmax.f32 %v7016, %v6833
        %7018 = vmax.xlane.f32.xlu0 %v7017
        %v7019 = vpop.xlane.xlu0 %7018
        %v7020 = vmax.f32 %v5366, %v5464
        %v7021 = vmax.f32 %v7020, %v5562
        %v7022 = vmax.f32 %v7021, %v5660
        %v7023 = vmax.f32 %v7022, %v5758
        %v7024 = vmax.f32 %v7023, %v5856
        %v7025 = vmax.f32 %v7024, %v5954
        %v7026 = vmax.f32 %v7025, %v6052
        %v7027 = vmax.f32 %v7026, %v6150
        %v7028 = vmax.f32 %v7027, %v6248
        %v7029 = vmax.f32 %v7028, %v6346
        %v7030 = vmax.f32 %v7029, %v6444
        %v7031 = vmax.f32 %v7030, %v6542
        %v7032 = vmax.f32 %v7031, %v6640
        %v7033 = vmax.f32 %v7032, %v6738
        %v7034 = vmax.f32 %v7033, %v6836
        %7035 = vmax.xlane.f32.xlu0 %v7034
        %v7036 = vpop.xlane.xlu0 %7035
        %v7037 = vmax.f32 %v5368, %v5466
        %v7038 = vmax.f32 %v7037, %v5564
        %v7039 = vmax.f32 %v7038, %v5662
        %v7040 = vmax.f32 %v7039, %v5760
        %v7041 = vmax.f32 %v7040, %v5858
        %v7042 = vmax.f32 %v7041, %v5956
        %v7043 = vmax.f32 %v7042, %v6054
        %v7044 = vmax.f32 %v7043, %v6152
        %v7045 = vmax.f32 %v7044, %v6250
        %v7046 = vmax.f32 %v7045, %v6348
        %v7047 = vmax.f32 %v7046, %v6446
        %v7048 = vmax.f32 %v7047, %v6544
        %v7049 = vmax.f32 %v7048, %v6642
        %v7050 = vmax.f32 %v7049, %v6740
        %v7051 = vmax.f32 %v7050, %v6838
        %7052 = vmax.xlane.f32.xlu0 %v7051
        %v7053 = vpop.xlane.xlu0 %7052
        %v7054 = vmax.f32 %v5371, %v5469
        %v7055 = vmax.f32 %v7054, %v5567
        %v7056 = vmax.f32 %v7055, %v5665
        %v7057 = vmax.f32 %v7056, %v5763
        %v7058 = vmax.f32 %v7057, %v5861
        %v7059 = vmax.f32 %v7058, %v5959
        %v7060 = vmax.f32 %v7059, %v6057
        %v7061 = vmax.f32 %v7060, %v6155
        %v7062 = vmax.f32 %v7061, %v6253
        %v7063 = vmax.f32 %v7062, %v6351
        %v7064 = vmax.f32 %v7063, %v6449
        %v7065 = vmax.f32 %v7064, %v6547
        %v7066 = vmax.f32 %v7065, %v6645
        %v7067 = vmax.f32 %v7066, %v6743
        %v7068 = vmax.f32 %v7067, %v6841
        %7069 = vmax.xlane.f32.xlu0 %v7068
        %v7070 = vpop.xlane.xlu0 %7069
        %v7071 = vmax.f32 %v5373, %v5471
        %v7072 = vmax.f32 %v7071, %v5569
        %v7073 = vmax.f32 %v7072, %v5667
        %v7074 = vmax.f32 %v7073, %v5765
        %v7075 = vmax.f32 %v7074, %v5863
        %v7076 = vmax.f32 %v7075, %v5961
        %v7077 = vmax.f32 %v7076, %v6059
        %v7078 = vmax.f32 %v7077, %v6157
        %v7079 = vmax.f32 %v7078, %v6255
        %v7080 = vmax.f32 %v7079, %v6353
        %v7081 = vmax.f32 %v7080, %v6451
        %v7082 = vmax.f32 %v7081, %v6549
        %v7083 = vmax.f32 %v7082, %v6647
        %v7084 = vmax.f32 %v7083, %v6745
        %v7085 = vmax.f32 %v7084, %v6843
        %7086 = vmax.xlane.f32.xlu0 %v7085
        %v7087 = vpop.xlane.xlu0 %7086
        %v7088 = vmax.f32 %v5376, %v5474
        %v7089 = vmax.f32 %v7088, %v5572
        %v7090 = vmax.f32 %v7089, %v5670
        %v7091 = vmax.f32 %v7090, %v5768
        %v7092 = vmax.f32 %v7091, %v5866
        %v7093 = vmax.f32 %v7092, %v5964
        %v7094 = vmax.f32 %v7093, %v6062
        %v7095 = vmax.f32 %v7094, %v6160
        %v7096 = vmax.f32 %v7095, %v6258
        %v7097 = vmax.f32 %v7096, %v6356
        %v7098 = vmax.f32 %v7097, %v6454
        %v7099 = vmax.f32 %v7098, %v6552
        %v7100 = vmax.f32 %v7099, %v6650
        %v7101 = vmax.f32 %v7100, %v6748
        %v7102 = vmax.f32 %v7101, %v6846
        %7103 = vmax.xlane.f32.xlu0 %v7102
        %v7104 = vpop.xlane.xlu0 %7103
        %v7105 = vmax.f32 %v5378, %v5476
        %v7106 = vmax.f32 %v7105, %v5574
        %v7107 = vmax.f32 %v7106, %v5672
        %v7108 = vmax.f32 %v7107, %v5770
        %v7109 = vmax.f32 %v7108, %v5868
        %v7110 = vmax.f32 %v7109, %v5966
        %v7111 = vmax.f32 %v7110, %v6064
        %v7112 = vmax.f32 %v7111, %v6162
        %v7113 = vmax.f32 %v7112, %v6260
        %v7114 = vmax.f32 %v7113, %v6358
        %v7115 = vmax.f32 %v7114, %v6456
        %v7116 = vmax.f32 %v7115, %v6554
        %v7117 = vmax.f32 %v7116, %v6652
        %v7118 = vmax.f32 %v7117, %v6750
        %v7119 = vmax.f32 %v7118, %v6848
        %7120 = vmax.xlane.f32.xlu0 %v7119
        %v7121 = vpop.xlane.xlu0 %7120
        %7122 = vxpose.xlu0.b32.start [1/16] %v6866, 128
        %7123 = vxpose.xlu0.b32.cont [2/16] %v6883, 128
        %7124 = vxpose.xlu0.b32.cont [3/16] %v6900, 128
        %7125 = vxpose.xlu0.b32.cont [4/16] %v6917, 128
        %7126 = vxpose.xlu0.b32.cont [5/16] %v6934, 128
        %7127 = vxpose.xlu0.b32.cont [6/16] %v6951, 128
        %7128 = vxpose.xlu0.b32.cont [7/16] %v6968, 128
        %7129 = vxpose.xlu0.b32.cont [8/16] %v6985, 128
        %7130 = vxpose.xlu0.b32.cont [9/16] %v7002, 128
        %7131 = vxpose.xlu0.b32.cont [10/16] %v7019, 128
        %7132 = vxpose.xlu0.b32.cont [11/16] %v7036, 128
        %7133 = vxpose.xlu0.b32.cont [12/16] %v7053, 128
        %7134 = vxpose.xlu0.b32.cont [13/16] %v7070, 128
        %7135 = vxpose.xlu0.b32.cont [14/16] %v7087, 128
        %7136 = vxpose.xlu0.b32.cont [15/16] %v7104, 128
        %7137 = vxpose.xlu0.b32.end [16/16] %v7121, 128
        %v7138 = vpop.trf.xlu0
        %v7139 = vpop.trf.xlu0
        %v7140 = vpop.trf.xlu0
        %v7141 = vpop.trf.xlu0
        %v7142 = vpop.trf.xlu0
        %v7143 = vpop.trf.xlu0
        %v7144 = vpop.trf.xlu0
        %v7145 = vpop.trf.xlu0
        %v7146 = vpop.trf.xlu0
        %v7147 = vpop.trf.xlu0
        %v7148 = vpop.trf.xlu0
        %v7149 = vpop.trf.xlu0
        %v7150 = vpop.trf.xlu0
        %v7151 = vpop.trf.xlu0
        %v7152 = vpop.trf.xlu0
        %v7153 = vpop.trf.xlu0
        %7154 = vst [vmem:[%s349] sm:$0x1] %v7138
        %s7155 = sand.u32 %s241, 1
        %s7156 = scalar_lea.sflag [#allocation3], %s7155
        %s7157 = sand.u32 %s241, 1
        %s7158 = scalar_lea.vmem [#allocation2], %s7157
        // Predicated region
        $region57: #{tpu_custom_call.1} parent=55 // pred_check
          %p7159 = pneg %p251
        $region58: #{tpu_custom_call.1} parent=55 // pred_check_branch
          %7161 = sbr.rel (%p7159) target = $region60
        $region59: #{tpu_custom_call.1} parent=55 // pred_region
          %7163 = vsyncadd %s7156, 0
          %s7164 = sadd.s32 %s28, %s27
          %s7165 = scalar_lea.hbm %s9, %s7164
          %s7167 = sshll.u32 %s7158, 4
          %s7168 = int_to_ptr.vmem [resolvable:$true] %s7167
          %s7169 = sshll.u32 %s7165, 4
          %s7170 = int_to_ptr.hbm [resolvable:$true] %s7169
          %7172 = dma.vmem_to_hbm [thread:$0]  %s7168, 16, %s7170, %s7156
        $region60: #{tpu_custom_call.1} parent=55 // pred_fallthru
          _
      $region56: #{tpu_custom_call.1} parent=5 // pred_fallthru
        _
      %p7173 = scmp.le.s32.totalorder 2, %s18
      // Predicated region
      $region61: #{tpu_custom_call.1} parent=5 // pred_check
        %p7174 = pneg %p7173
      $region62: #{tpu_custom_call.1} parent=5 // pred_check_branch
        %7176 = sbr.rel (%p7174) target = $region64
      $region63: #{tpu_custom_call.1} parent=5 // pred_region
        %s7177 = ssub.s32 %s18, 2
        // Predicated region
        $region65: #{tpu_custom_call.1} parent=63 // pred_check
          %p7178 = pneg %p257
        $region66: #{tpu_custom_call.1} parent=63 // pred_check_branch
          %7180 = sbr.rel (%p7178) target = $region68
        $region67: #{tpu_custom_call.1} parent=63 // pred_region
          %s7181 = sand.u32 %s242, 1
          %s7182 = scalar_lea.sflag [#allocation3], %s7181
          %s7183 = sand.u32 %s242, 1
          %s7184 = scalar_lea.vmem [#allocation2], %s7183
          %7186 = dma.done %s7182, 16
        $region68: #{tpu_custom_call.1} parent=63 // pred_fallthru
          _
      $region64: #{tpu_custom_call.1} parent=5 // pred_fallthru
        _
    $region6: #{tpu_custom_call.1} parent=1 // loop_footer
      %s22 = sadd.s32 1, %s18
    $region7: #{tpu_custom_call.1} parent=1 // loop_footer_branch
      %17 = sbr.rel target = $region3
    $region8: #{tpu_custom_call.1} parent=1 // loop_exit
      _
    %7187 = vsyncpa [#allocation3], 1
    %s7188 = scalar_lea.sflag [#allocation3], 1
    %7189 = vsyncpa %s7188, 1

</llo_original>
